<compile_context>
chip_gen: v7x
topology: tpu7x:2x2x1
jax: 0.10.0
libtpu: 0.0.40
codegen_flags: <defaults>
</compile_context>

<pallas_src>
import jax
import jax.numpy as jnp
import numpy as np
from jax.experimental import pallas as pl
from jax.experimental.pallas import tpu as pltpu

LRELU_SLOPE = 0.2
BN_EPS = 1e-5
LANE = 128       # TPU lane width; C_out is padded up to a multiple of this.
TILE_M = 1024    # Large M tile to amortize per-grid-step overhead; at
                 # K <= 1024 (bf16) + a 128-wide f32/bf16 output this stays
                 # well under every generation's scoped-VMEM default even
                 # with double buffering.


def _round_up(x, m):
    return ((x + m - 1) // m) * m


# ----------------------------- Pallas kernels ------------------------------

def _mm_bias_lrelu_kernel(p_ref, w_ref, b_ref, o_ref):
    # conv-as-matmul (bf16 MXU inputs, f32 accumulate) + bias + LeakyReLU.
    y = jnp.dot(p_ref[...], w_ref[...], preferred_element_type=jnp.float32)
    y = y + b_ref[...]
    o_ref[...] = jnp.where(y > 0, y, LRELU_SLOPE * y).astype(o_ref.dtype)


def _make_bn_lrelu_kernel(m_true):
    """Two-sweep conv + BatchNorm (train-mode batch stats) + LeakyReLU.

    grid = (2, num_m_tiles), both axes 'arbitrary' (sequential):
      sweep 0: y = patches @ W per tile; accumulate per-channel sum / sum-sq
               across all tiles in a VMEM scratch (full-M statistics).
      sweep 1: recompute y per tile (cheaper than bouncing y through HBM
               since K <= padded C_out here) and apply BN + LeakyReLU.
    Zero-padded M rows contribute exactly 0 to both sums (the conv has no
    bias), so dividing by the true M keeps the statistics exact.
    """
    inv_m = 1.0 / float(m_true)

    def kernel(p_ref, w_ref, g_ref, be_ref, o_ref, stats_ref):
        sweep = pl.program_id(0)
        tile = pl.program_id(1)
        y = jnp.dot(p_ref[...], w_ref[...], preferred_element_type=jnp.float32)

        @pl.when((sweep == 0) & (tile == 0))
        def _():
            stats_ref[...] = jnp.zeros_like(stats_ref)

        @pl.when(sweep == 0)
        def _():
            stats_ref[0:1, :] = stats_ref[0:1, :] + jnp.sum(y, axis=0,
                                                            keepdims=True)
            stats_ref[1:2, :] = stats_ref[1:2, :] + jnp.sum(y * y, axis=0,
                                                            keepdims=True)

        @pl.when(sweep == 1)
        def _():
            mean = stats_ref[0:1, :] * inv_m
            var = stats_ref[1:2, :] * inv_m - mean * mean
            z = ((y - mean) * jax.lax.rsqrt(var + BN_EPS) * g_ref[...]
                 + be_ref[...])
            o_ref[...] = jnp.where(z > 0, z, LRELU_SLOPE * z).astype(o_ref.dtype)

    return kernel


def _tail_kernel(p4_ref, w4_ref, g4_ref, be4_ref, w5_ref, b5_ref, o_ref):
    """Fused tail: conv4 + BN + LeakyReLU, then conv5 + bias + sigmoid.

    p4_ref rows are ordered spatial-major / batch-minor (r = i*4 + j, then n),
    so layer 5's "im2col" is just the 16 contiguous row groups of the
    in-VMEM layer-4 activation, each matched against w5_ref[r] (one
    (Cin_pad, Cout_pad) weight slab per spatial tap).  The 4x4 activation
    never touches HBM.
    """
    nb = o_ref.shape[0]          # batch
    taps = w5_ref.shape[0]       # 16 = 4*4 layer-5 kernel taps

    y4 = jnp.dot(p4_ref[...], w4_ref[...], preferred_element_type=jnp.float32)
    mean = jnp.mean(y4, axis=0, keepdims=True)
    var = jnp.mean(y4 * y4, axis=0, keepdims=True) - mean * mean
    z4 = (y4 - mean) * jax.lax.rsqrt(var + BN_EPS) * g4_ref[...] + be4_ref[...]
    z4 = jnp.where(z4 > 0, z4, LRELU_SLOPE * z4)
    a4 = z4.astype(jnp.bfloat16)

    y5 = jnp.zeros((nb, o_ref.shape[1]), jnp.float32)
    for r in range(taps):        # 16 tiny MXU matmuls, fully unrolled
        y5 = y5 + jnp.dot(a4[r * nb:(r + 1) * nb, :], w5_ref[r],
                          preferred_element_type=jnp.float32)
    y5 = y5 + b5_ref[...]
    o_ref[...] = jax.nn.sigmoid(y5)


# ------------------------------ JAX glue -----------------------------------

def _im2col(x_nhwc, k, stride, pad, batch_minor=False):
    """Conv patches, (rows, k*k*C) bf16, patch-element order (kh, kw, ci).

    Row order is (n, i, j) by default, or (i, j, n) when batch_minor=True
    (used by the fused tail so layer-5 taps are contiguous row groups).
    """
    if pad:
        x_nhwc = jnp.pad(x_nhwc, ((0, 0), (pad, pad), (pad, pad), (0, 0)))
    n, h, w, c = x_nhwc.shape
    ho = (h - k) // stride + 1
    wo = (w - k) // stride + 1
    taps = []
    for kh in range(k):
        for kw in range(k):
            taps.append(x_nhwc[:, kh:kh + stride * ho:stride,
                               kw:kw + stride * wo:stride, :])
    patches = jnp.stack(taps, axis=3)                   # (N, Ho, Wo, k*k, C)
    if batch_minor:
        patches = jnp.transpose(patches, (1, 2, 0, 3, 4))
        patches = patches.reshape(ho * wo * n, k * k * c)
    else:
        patches = patches.reshape(n * ho * wo, k * k * c)
    return patches.astype(jnp.bfloat16), (n, ho, wo)


def _oihw_to_mat(w_oihw):
    # (C_out, C_in, KH, KW) -> (KH*KW*C_in, Cpad) bf16, lane-dense columns.
    co, ci, kh, kw = w_oihw.shape
    w = jnp.transpose(w_oihw, (2, 3, 1, 0)).reshape(kh * kw * ci, co)
    w = jnp.pad(w, ((0, 0), (0, _round_up(co, LANE) - co)))
    return w.astype(jnp.bfloat16)


def _w5_to_cube(w_oihw):
    # (1, C_in, 4, 4) -> (16, Cin_pad, Cout_pad) bf16: one weight slab per
    # spatial tap r = kh*4 + kw; C_in padded to match the lane-padded layer-4
    # activation, C_out padded to a full lane.
    co, ci, kh, kw = w_oihw.shape
    w = jnp.transpose(w_oihw, (2, 3, 1, 0)).reshape(kh * kw, ci, co)
    w = jnp.pad(w, ((0, 0), (0, _round_up(ci, LANE) - ci),
                    (0, _round_up(co, LANE) - co)))
    return w.astype(jnp.bfloat16)


def _pad_vec(v):
    # 1-D parameter -> (1, Cpad) f32 row (zero-padded lanes).
    c = v.shape[0]
    return jnp.pad(v, (0, _round_up(c, LANE) - c)).reshape(1, -1).astype(jnp.float32)


def conv_bias_lrelu(x_nhwc, w_mat, b_row, cout, k, stride, pad):
    patches, (n, ho, wo) = _im2col(x_nhwc, k, stride, pad)
    m, kk = patches.shape
    cpad = w_mat.shape[1]
    tm = min(TILE_M, _round_up(m, 8))
    m_pad = _round_up(m, tm)
    if m_pad != m:
        patches = jnp.pad(patches, ((0, m_pad - m), (0, 0)))
    out = pl.pallas_call(
        _mm_bias_lrelu_kernel,
        out_shape=jax.ShapeDtypeStruct((m_pad, cpad), jnp.bfloat16),
        grid=(m_pad // tm,),
        in_specs=[pl.BlockSpec((tm, kk), lambda i: (i, 0)),
                  pl.BlockSpec((kk, cpad), lambda i: (0, 0)),
                  pl.BlockSpec((1, cpad), lambda i: (0, 0))],
        out_specs=pl.BlockSpec((tm, cpad), lambda i: (i, 0)),
        compiler_params=pltpu.CompilerParams(
            dimension_semantics=("parallel",)),
    )(patches, w_mat, b_row)
    # TODO(synk): layer-1 patches are still materialized in HBM (~4x the input
    # bytes); an overlapping/halo BlockSpec that builds the k*k taps in-kernel
    # would remove that duplicated read traffic.
    return out[:m, :cout].reshape(n, ho, wo, cout)


def conv_bn_lrelu(x_nhwc, w_mat, g_row, be_row, cout, k, stride, pad):
    patches, (n, ho, wo) = _im2col(x_nhwc, k, stride, pad)
    m, kk = patches.shape
    cpad = w_mat.shape[1]
    tm = min(TILE_M, _round_up(m, 8))
    m_pad = _round_up(m, tm)
    if m_pad != m:
        patches = jnp.pad(patches, ((0, m_pad - m), (0, 0)))
    nt = m_pad // tm
    out = pl.pallas_call(
        _make_bn_lrelu_kernel(m),
        out_shape=jax.ShapeDtypeStruct((m_pad, cpad), jnp.bfloat16),
        grid=(2, nt),
        in_specs=[pl.BlockSpec((tm, kk), lambda p, i: (i, 0)),
                  pl.BlockSpec((kk, cpad), lambda p, i: (0, 0)),
                  pl.BlockSpec((1, cpad), lambda p, i: (0, 0)),
                  pl.BlockSpec((1, cpad), lambda p, i: (0, 0))],
        out_specs=pl.BlockSpec((tm, cpad), lambda p, i: (i, 0)),
        scratch_shapes=[pltpu.VMEM((2, cpad), jnp.float32)],
        compiler_params=pltpu.CompilerParams(
            dimension_semantics=("arbitrary", "arbitrary")),
    )(patches, w_mat, g_row, be_row)
    return out[:m, :cout].reshape(n, ho, wo, cout)


def fused_tail(x_nhwc, w4_mat, g4_row, be4_row, w5_cube, b5_row):
    # conv4 (k4,s2,p1) + BN + LReLU on the (N,8,8,C3) activation, then
    # conv5 (k4,s2,p0) + bias + sigmoid on the resulting (N,4,4,C4),
    # all inside one pallas_call (whole tail is a few KiB of VMEM).
    n = x_nhwc.shape[0]
    patches4, (_, ho, wo) = _im2col(x_nhwc, 4, 2, 1, batch_minor=True)
    assert (ho, wo) == (4, 4), (ho, wo)
    cpad_out = w5_cube.shape[2]
    out = pl.pallas_call(
        _tail_kernel,
        out_shape=jax.ShapeDtypeStruct((n, cpad_out), jnp.float32),
    )(patches4, w4_mat, g4_row, be4_row, w5_cube, b5_row)
    return out[:, :1].reshape(n, 1, 1, 1)


def discriminator_forward(x_nchw, p):
    x = jnp.transpose(x_nchw, (0, 2, 3, 1)).astype(jnp.bfloat16)  # NCHW->NHWC
    x = conv_bias_lrelu(x, _oihw_to_mat(p['w1']), _pad_vec(p['b1']),
                        p['w1'].shape[0], 4, 2, 1)
    x = conv_bn_lrelu(x, _oihw_to_mat(p['w2']), _pad_vec(p['g2']),
                      _pad_vec(p['be2']), p['w2'].shape[0], 4, 2, 1)
    x = conv_bn_lrelu(x, _oihw_to_mat(p['w3']), _pad_vec(p['g3']),
                      _pad_vec(p['be3']), p['w3'].shape[0], 4, 2, 1)
    # TODO(synk): layer 3 could also be folded into the fused tail, but that
    # requires an in-kernel strided (stride-2 sublane) im2col; kept as a
    # separate tiled kernel for lowering robustness.
    return fused_tail(x, _oihw_to_mat(p['w4']), _pad_vec(p['g4']),
                      _pad_vec(p['be4']), _w5_to_cube(p['w5']),
                      _pad_vec(p['b5']))


# --------------------------- pure-JAX reference -----------------------------

def _ref_forward(x, p):
    def conv(x, w, stride, pad, b=None):
        y = jax.lax.conv_general_dilated(
            x, w, (stride, stride), [(pad, pad), (pad, pad)],
            dimension_numbers=('NCHW', 'OIHW', 'NCHW'))
        if b is not None:
            y = y + b.reshape(1, -1, 1, 1)
        return y

    def lrelu(v):
        return jnp.where(v > 0, v, LRELU_SLOPE * v)

    def bn(v, g, be):
        mean = jnp.mean(v, axis=(0, 2, 3), keepdims=True)
        var = jnp.mean(jnp.square(v - mean), axis=(0, 2, 3), keepdims=True)
        return ((v - mean) * jax.lax.rsqrt(var + BN_EPS)
                * g.reshape(1, -1, 1, 1) + be.reshape(1, -1, 1, 1))

    x = lrelu(conv(x, p['w1'], 2, 1, p['b1']))
    x = lrelu(bn(conv(x, p['w2'], 2, 1), p['g2'], p['be2']))
    x = lrelu(bn(conv(x, p['w3'], 2, 1), p['g3'], p['be3']))
    x = lrelu(bn(conv(x, p['w4'], 2, 1), p['g4'], p['be4']))
    return jax.nn.sigmoid(conv(x, p['w5'], 2, 0, p['b5']))


# --------------------------------- main -------------------------------------

def _init_params(key, fd):
    ks = jax.random.split(key, 12)

    def w(k, shape):  # deterministic small-scale weights (PyTorch OIHW shape)
        return 0.05 * jax.random.normal(k, shape, jnp.float32)

    p = {
        'w1': w(ks[0], (fd, 3, 4, 4)),
        'b1': 0.05 * jax.random.normal(ks[1], (fd,), jnp.float32),
        'w2': w(ks[2], (2 * fd, fd, 4, 4)),
        'g2': 1.0 + 0.1 * jax.random.normal(ks[3], (2 * fd,), jnp.float32),
        'be2': 0.1 * jax.random.normal(ks[4], (2 * fd,), jnp.float32),
        'w3': w(ks[5], (4 * fd, 2 * fd, 4, 4)),
        'g3': 1.0 + 0.1 * jax.random.normal(ks[6], (4 * fd,), jnp.float32),
        'be3': 0.1 * jax.random.normal(ks[7], (4 * fd,), jnp.float32),
        'w4': w(ks[8], (8 * fd, 4 * fd, 4, 4)),
        'g4': 1.0 + 0.1 * jax.random.normal(ks[9], (8 * fd,), jnp.float32),
        'be4': 0.1 * jax.random.normal(ks[10], (8 * fd,), jnp.float32),
        'w5': w(ks[11], (1, 8 * fd, 4, 4)),
        'b5': jnp.zeros((1,), jnp.float32),
    }
    return p


if __name__ == "__main__":
    # Small shapes: batch=2, features_d=4; 64x64 input is required by the
    # architecture (5 stride-2 convs -> 1x1 output).
    key = jax.random.PRNGKey(0)
    k_x, k_p = jax.random.split(key)
    x = jax.random.normal(k_x, (2, 3, 64, 64), jnp.float32)  # NCHW like PyTorch
    params = _init_params(k_p, fd=4)

    # TODO(synk): BatchNorm running-stat updates (a training-mode side effect)
    # are not modeled; forward math uses batch statistics exactly as PyTorch
    # train-mode does.

    out = jax.block_until_ready(jax.jit(discriminator_forward)(x, params))
    ref = jax.block_until_ready(jax.jit(_ref_forward)(x, params))

    assert out.shape == (2, 1, 1, 1), out.shape
    # Tolerance widened from 2e-3 because matmul inputs / stored activations
    # are bf16 (per the perf review); the reference path stays f32.
    np.testing.assert_allclose(np.asarray(out), np.asarray(ref),
                               rtol=1e-2, atol=1e-2)
    print("KERNEL_OK")
</pallas_src>

<mosaic_0001>
module attributes {stable_mosaic.version = 11 : i64} {
  func.func @_mm_bias_lrelu_kernel(%arg0: i32, %arg1: memref<1024x48xbf16, #tpu.memory_space<vmem>>, %arg2: memref<48x128xbf16, #tpu.memory_space<vmem>>, %arg3: memref<1x128xf32, #tpu.memory_space<vmem>>, %arg4: memref<1024x128xbf16, #tpu.memory_space<vmem>>) attributes {dimension_semantics = [#tpu.dimension_semantics<parallel>], iteration_bounds = array<i64: 2>, scalar_prefetch = 0 : i64, scratch_operands = 0 : i64, tpu.core_type = #tpu.core_type<tc>, window_params = [{transform_indices = @transform_0, window_bounds = array<i64: 1024, 48>}, {pipeline_mode = #tpu.pipeline_mode<synchronous>, transform_indices = @transform_1, window_bounds = array<i64: 48, 128>}, {pipeline_mode = #tpu.pipeline_mode<synchronous>, transform_indices = @transform_2, window_bounds = array<i64: 1, 128>}, {transform_indices = @transform_3, window_bounds = array<i64: 1024, 128>}]} {
    %c0 = arith.constant 0 : index
    %c0_0 = arith.constant 0 : index
    %0 = vector.load %arg1[%c0, %c0_0] : memref<1024x48xbf16, #tpu.memory_space<vmem>>, vector<1024x48xbf16>
    %c0_1 = arith.constant 0 : index
    %c0_2 = arith.constant 0 : index
    %1 = vector.load %arg2[%c0_1, %c0_2] : memref<48x128xbf16, #tpu.memory_space<vmem>>, vector<48x128xbf16>
    %cst = arith.constant dense<0.000000e+00> : vector<1024x128xf32>
    %2 = tpu.matmul %0, %1, %cst {dimension_numbers = #tpu.dot_dimension_numbers<[1], [0], [0], [1], [0, 0, 1, 1], [], []>} : vector<1024x48xbf16>, vector<48x128xbf16>, vector<1024x128xf32> -> vector<1024x128xf32>
    %c0_3 = arith.constant 0 : index
    %c0_4 = arith.constant 0 : index
    %3 = vector.load %arg3[%c0_3, %c0_4] : memref<1x128xf32, #tpu.memory_space<vmem>>, vector<1x128xf32>
    %4 = vector.broadcast %3 : vector<1x128xf32> to vector<1024x128xf32>
    %5 = arith.addf %2, %4 : vector<1024x128xf32>
    %cst_5 = arith.constant 0.000000e+00 : f32
    %6 = vector.broadcast %cst_5 : f32 to vector<1024x128xf32>
    %7 = arith.cmpf ogt, %5, %6 : vector<1024x128xf32>
    %cst_6 = arith.constant 2.000000e-01 : f32
    %8 = vector.broadcast %cst_6 : f32 to vector<1024x128xf32>
    %9 = arith.mulf %8, %5 : vector<1024x128xf32>
    %10 = arith.select %7, %5, %9 : vector<1024x128xi1>, vector<1024x128xf32>
    %11 = arith.truncf %10 : vector<1024x128xf32> to vector<1024x128xbf16>
    %c0_7 = arith.constant 0 : index
    %c0_8 = arith.constant 0 : index
    %12 = vector.load %arg4[%c0_7, %c0_8] : memref<1024x128xbf16, #tpu.memory_space<vmem>>, vector<1024x128xbf16>
    tpu.vector_store %arg4[%c0_7, %c0_8], %11 {strides = array<i32>} : memref<1024x128xbf16, #tpu.memory_space<vmem>>, vector<1024x128xbf16>,
    return
  }
  func.func @transform_0(%arg0: i32) -> (i32, i32) {
    %c0_i32 = arith.constant 0 : i32
    %c0_i32_0 = arith.constant 0 : i32
    return %arg0, %c0_i32 : i32, i32
  }
  func.func @transform_1(%arg0: i32) -> (i32, i32) {
    %c0_i32 = arith.constant 0 : i32
    %c0_i32_0 = arith.constant 0 : i32
    %c0_i32_1 = arith.constant 0 : i32
    return %c0_i32, %c0_i32_0 : i32, i32
  }
  func.func @transform_2(%arg0: i32) -> (i32, i32) {
    %c0_i32 = arith.constant 0 : i32
    %c0_i32_0 = arith.constant 0 : i32
    %c0_i32_1 = arith.constant 0 : i32
    return %c0_i32, %c0_i32_0 : i32, i32
  }
  func.func @transform_3(%arg0: i32) -> (i32, i32) {
    %c0_i32 = arith.constant 0 : i32
    %c0_i32_0 = arith.constant 0 : i32
    return %arg0, %c0_i32 : i32, i32
  }
}

module attributes {stable_mosaic.version = 11 : i64} {
  func.func @kernel(%arg0: i32, %arg1: i32, %arg2: memref<512x64xbf16, #tpu.memory_space<vmem>>, %arg3: memref<64x128xbf16, #tpu.memory_space<vmem>>, %arg4: memref<1x128xf32, #tpu.memory_space<vmem>>, %arg5: memref<1x128xf32, #tpu.memory_space<vmem>>, %arg6: memref<512x128xbf16, #tpu.memory_space<vmem>>, %arg7: memref<2x128xf32, #tpu.memory_space<vmem>>) attributes {dimension_semantics = [#tpu.dimension_semantics<arbitrary>, #tpu.dimension_semantics<arbitrary>], iteration_bounds = array<i64: 2, 1>, scalar_prefetch = 0 : i64, scratch_operands = 1 : i64, tpu.core_type = #tpu.core_type<tc>, window_params = [{transform_indices = @transform_0, window_bounds = array<i64: 512, 64>}, {pipeline_mode = #tpu.pipeline_mode<synchronous>, transform_indices = @transform_1, window_bounds = array<i64: 64, 128>}, {pipeline_mode = #tpu.pipeline_mode<synchronous>, transform_indices = @transform_2, window_bounds = array<i64: 1, 128>}, {pipeline_mode = #tpu.pipeline_mode<synchronous>, transform_indices = @transform_3, window_bounds = array<i64: 1, 128>}, {transform_indices = @transform_4, window_bounds = array<i64: 512, 128>}]} {
    %c0 = arith.constant 0 : index
    %c0_0 = arith.constant 0 : index
    %0 = vector.load %arg2[%c0, %c0_0] : memref<512x64xbf16, #tpu.memory_space<vmem>>, vector<512x64xbf16>
    %c0_1 = arith.constant 0 : index
    %c0_2 = arith.constant 0 : index
    %1 = vector.load %arg3[%c0_1, %c0_2] : memref<64x128xbf16, #tpu.memory_space<vmem>>, vector<64x128xbf16>
    %cst = arith.constant dense<0.000000e+00> : vector<512x128xf32>
    %2 = tpu.matmul %0, %1, %cst {dimension_numbers = #tpu.dot_dimension_numbers<[1], [0], [0], [1], [0, 0, 1, 1], [], []>} : vector<512x64xbf16>, vector<64x128xbf16>, vector<512x128xf32> -> vector<512x128xf32>
    %c0_i32 = arith.constant 0 : i32
    %3 = arith.cmpi eq, %arg0, %c0_i32 : i32
    %c0_i32_3 = arith.constant 0 : i32
    %4 = arith.cmpi eq, %arg1, %c0_i32_3 : i32
    %5 = arith.andi %3, %4 : i1
    %6 = arith.extui %5 : i1 to i32
    %c0_i32_4 = arith.constant 0 : i32
    %7 = arith.cmpi ne, %6, %c0_i32_4 : i32
    scf.if %7 {
      %cst_8 = arith.constant 0.000000e+00 : f32
      %14 = vector.broadcast %cst_8 : f32 to vector<2x128xf32>
      %c0_9 = arith.constant 0 : index
      %c0_10 = arith.constant 0 : index
      %15 = vector.load %arg7[%c0_9, %c0_10] : memref<2x128xf32, #tpu.memory_space<vmem>>, vector<2x128xf32>
      tpu.vector_store %arg7[%c0_9, %c0_10], %14 {strides = array<i32>} : memref<2x128xf32, #tpu.memory_space<vmem>>, vector<2x128xf32>,
    } else {
    }
    %c0_i32_5 = arith.constant 0 : i32
    %8 = arith.cmpi eq, %arg0, %c0_i32_5 : i32
    %9 = arith.extui %8 : i1 to i32
    %c0_i32_6 = arith.constant 0 : i32
    %10 = arith.cmpi ne, %9, %c0_i32_6 : i32
    scf.if %10 {
      %c0_8 = arith.constant 0 : index
      %c0_9 = arith.constant 0 : index
      %14 = vector.load %arg7[%c0_8, %c0_9] : memref<2x128xf32, #tpu.memory_space<vmem>>, vector<1x128xf32>
      %cst_10 = arith.constant dense<0.000000e+00> : vector<128xf32>
      %15 = vector.multi_reduction <add>, %2, %cst_10 [0] : vector<512x128xf32> to vector<128xf32>
      %16 = vector.shape_cast %15 : vector<128xf32> to vector<1x128xf32>
      %17 = arith.addf %14, %16 : vector<1x128xf32>
      %c0_11 = arith.constant 0 : index
      %c0_12 = arith.constant 0 : index
      %18 = vector.load %arg7[%c0_11, %c0_12] : memref<2x128xf32, #tpu.memory_space<vmem>>, vector<1x128xf32>
      tpu.vector_store %arg7[%c0_11, %c0_12], %17 {strides = array<i32>} : memref<2x128xf32, #tpu.memory_space<vmem>>, vector<1x128xf32>,
      %c1 = arith.constant 1 : index
      %c0_13 = arith.constant 0 : index
      %19 = vector.load %arg7[%c1, %c0_13] : memref<2x128xf32, #tpu.memory_space<vmem>>, vector<1x128xf32>
      %20 = arith.mulf %2, %2 : vector<512x128xf32>
      %cst_14 = arith.constant dense<0.000000e+00> : vector<128xf32>
      %21 = vector.multi_reduction <add>, %20, %cst_14 [0] : vector<512x128xf32> to vector<128xf32>
      %22 = vector.shape_cast %21 : vector<128xf32> to vector<1x128xf32>
      %23 = arith.addf %19, %22 : vector<1x128xf32>
      %c1_15 = arith.constant 1 : index
      %c0_16 = arith.constant 0 : index
      %24 = vector.load %arg7[%c1_15, %c0_16] : memref<2x128xf32, #tpu.memory_space<vmem>>, vector<1x128xf32>
      tpu.vector_store %arg7[%c1_15, %c0_16], %23 {strides = array<i32>} : memref<2x128xf32, #tpu.memory_space<vmem>>, vector<1x128xf32>,
    } else {
    }
    %c1_i32 = arith.constant 1 : i32
    %11 = arith.cmpi eq, %arg0, %c1_i32 : i32
    %12 = arith.extui %11 : i1 to i32
    %c0_i32_7 = arith.constant 0 : i32
    %13 = arith.cmpi ne, %12, %c0_i32_7 : i32
    scf.if %13 {
      %c0_8 = arith.constant 0 : index
      %c0_9 = arith.constant 0 : index
      %14 = vector.load %arg7[%c0_8, %c0_9] : memref<2x128xf32, #tpu.memory_space<vmem>>, vector<1x128xf32>
      %cst_10 = arith.constant 0.001953125 : f32
      %15 = vector.broadcast %cst_10 : f32 to vector<1x128xf32>
      %16 = arith.mulf %14, %15 : vector<1x128xf32>
      %c1 = arith.constant 1 : index
      %c0_11 = arith.constant 0 : index
      %17 = vector.load %arg7[%c1, %c0_11] : memref<2x128xf32, #tpu.memory_space<vmem>>, vector<1x128xf32>
      %cst_12 = arith.constant 0.001953125 : f32
      %18 = vector.broadcast %cst_12 : f32 to vector<1x128xf32>
      %19 = arith.mulf %17, %18 : vector<1x128xf32>
      %20 = arith.mulf %16, %16 : vector<1x128xf32>
      %21 = arith.subf %19, %20 : vector<1x128xf32>
      %22 = vector.broadcast %16 : vector<1x128xf32> to vector<512x128xf32>
      %23 = arith.subf %2, %22 : vector<512x128xf32>
      %cst_13 = arith.constant 9.99999974E-6 : f32
      %24 = vector.broadcast %cst_13 : f32 to vector<1x128xf32>
      %25 = arith.addf %21, %24 : vector<1x128xf32>
      %26 = math.rsqrt %25 : vector<1x128xf32>
      %27 = vector.broadcast %26 : vector<1x128xf32> to vector<512x128xf32>
      %28 = arith.mulf %23, %27 : vector<512x128xf32>
      %c0_14 = arith.constant 0 : index
      %c0_15 = arith.constant 0 : index
      %29 = vector.load %arg4[%c0_14, %c0_15] : memref<1x128xf32, #tpu.memory_space<vmem>>, vector<1x128xf32>
      %30 = vector.broadcast %29 : vector<1x128xf32> to vector<512x128xf32>
      %31 = arith.mulf %28, %30 : vector<512x128xf32>
      %c0_16 = arith.constant 0 : index
      %c0_17 = arith.constant 0 : index
      %32 = vector.load %arg5[%c0_16, %c0_17] : memref<1x128xf32, #tpu.memory_space<vmem>>, vector<1x128xf32>
      %33 = vector.broadcast %32 : vector<1x128xf32> to vector<512x128xf32>
      %34 = arith.addf %31, %33 : vector<512x128xf32>
      %cst_18 = arith.constant 0.000000e+00 : f32
      %35 = vector.broadcast %cst_18 : f32 to vector<512x128xf32>
      %36 = arith.cmpf ogt, %34, %35 : vector<512x128xf32>
      %cst_19 = arith.constant 2.000000e-01 : f32
      %37 = vector.broadcast %cst_19 : f32 to vector<512x128xf32>
      %38 = arith.mulf %37, %34 : vector<512x128xf32>
      %39 = arith.select %36, %34, %38 : vector<512x128xi1>, vector<512x128xf32>
      %40 = arith.truncf %39 : vector<512x128xf32> to vector<512x128xbf16>
      %c0_20 = arith.constant 0 : index
      %c0_21 = arith.constant 0 : index
      %41 = vector.load %arg6[%c0_20, %c0_21] : memref<512x128xbf16, #tpu.memory_space<vmem>>, vector<512x128xbf16>
      tpu.vector_store %arg6[%c0_20, %c0_21], %40 {strides = array<i32>} : memref<512x128xbf16, #tpu.memory_space<vmem>>, vector<512x128xbf16>,
    } else {
    }
    return
  }
  func.func @transform_0(%arg0: i32, %arg1: i32) -> (i32, i32) {
    %c0_i32 = arith.constant 0 : i32
    %c0_i32_0 = arith.constant 0 : i32
    return %arg1, %c0_i32 : i32, i32
  }
  func.func @transform_1(%arg0: i32, %arg1: i32) -> (i32, i32) {
    %c0_i32 = arith.constant 0 : i32
    %c0_i32_0 = arith.constant 0 : i32
    %c0_i32_1 = arith.constant 0 : i32
    return %c0_i32, %c0_i32_0 : i32, i32
  }
  func.func @transform_2(%arg0: i32, %arg1: i32) -> (i32, i32) {
    %c0_i32 = arith.constant 0 : i32
    %c0_i32_0 = arith.constant 0 : i32
    %c0_i32_1 = arith.constant 0 : i32
    return %c0_i32, %c0_i32_0 : i32, i32
  }
  func.func @transform_3(%arg0: i32, %arg1: i32) -> (i32, i32) {
    %c0_i32 = arith.constant 0 : i32
    %c0_i32_0 = arith.constant 0 : i32
    %c0_i32_1 = arith.constant 0 : i32
    return %c0_i32, %c0_i32_0 : i32, i32
  }
  func.func @transform_4(%arg0: i32, %arg1: i32) -> (i32, i32) {
    %c0_i32 = arith.constant 0 : i32
    %c0_i32_0 = arith.constant 0 : i32
    return %arg1, %c0_i32 : i32, i32
  }
}

module attributes {stable_mosaic.version = 11 : i64} {
  func.func @kernel(%arg0: i32, %arg1: i32, %arg2: memref<128x128xbf16, #tpu.memory_space<vmem>>, %arg3: memref<128x128xbf16, #tpu.memory_space<vmem>>, %arg4: memref<1x128xf32, #tpu.memory_space<vmem>>, %arg5: memref<1x128xf32, #tpu.memory_space<vmem>>, %arg6: memref<128x128xbf16, #tpu.memory_space<vmem>>, %arg7: memref<2x128xf32, #tpu.memory_space<vmem>>) attributes {dimension_semantics = [#tpu.dimension_semantics<arbitrary>, #tpu.dimension_semantics<arbitrary>], iteration_bounds = array<i64: 2, 1>, scalar_prefetch = 0 : i64, scratch_operands = 1 : i64, tpu.core_type = #tpu.core_type<tc>, window_params = [{transform_indices = @transform_0, window_bounds = array<i64: 128, 128>}, {pipeline_mode = #tpu.pipeline_mode<synchronous>, transform_indices = @transform_1, window_bounds = array<i64: 128, 128>}, {pipeline_mode = #tpu.pipeline_mode<synchronous>, transform_indices = @transform_2, window_bounds = array<i64: 1, 128>}, {pipeline_mode = #tpu.pipeline_mode<synchronous>, transform_indices = @transform_3, window_bounds = array<i64: 1, 128>}, {transform_indices = @transform_4, window_bounds = array<i64: 128, 128>}]} {
    %c0 = arith.constant 0 : index
    %c0_0 = arith.constant 0 : index
    %0 = vector.load %arg2[%c0, %c0_0] : memref<128x128xbf16, #tpu.memory_space<vmem>>, vector<128x128xbf16>
    %c0_1 = arith.constant 0 : index
    %c0_2 = arith.constant 0 : index
    %1 = vector.load %arg3[%c0_1, %c0_2] : memref<128x128xbf16, #tpu.memory_space<vmem>>, vector<128x128xbf16>
    %cst = arith.constant dense<0.000000e+00> : vector<128x128xf32>
    %2 = tpu.matmul %0, %1, %cst {dimension_numbers = #tpu.dot_dimension_numbers<[1], [0], [0], [1], [0, 0, 1, 1], [], []>} : vector<128x128xbf16>, vector<128x128xbf16>, vector<128x128xf32> -> vector<128x128xf32>
    %c0_i32 = arith.constant 0 : i32
    %3 = arith.cmpi eq, %arg0, %c0_i32 : i32
    %c0_i32_3 = arith.constant 0 : i32
    %4 = arith.cmpi eq, %arg1, %c0_i32_3 : i32
    %5 = arith.andi %3, %4 : i1
    %6 = arith.extui %5 : i1 to i32
    %c0_i32_4 = arith.constant 0 : i32
    %7 = arith.cmpi ne, %6, %c0_i32_4 : i32
    scf.if %7 {
      %cst_8 = arith.constant 0.000000e+00 : f32
      %14 = vector.broadcast %cst_8 : f32 to vector<2x128xf32>
      %c0_9 = arith.constant 0 : index
      %c0_10 = arith.constant 0 : index
      %15 = vector.load %arg7[%c0_9, %c0_10] : memref<2x128xf32, #tpu.memory_space<vmem>>, vector<2x128xf32>
      tpu.vector_store %arg7[%c0_9, %c0_10], %14 {strides = array<i32>} : memref<2x128xf32, #tpu.memory_space<vmem>>, vector<2x128xf32>,
    } else {
    }
    %c0_i32_5 = arith.constant 0 : i32
    %8 = arith.cmpi eq, %arg0, %c0_i32_5 : i32
    %9 = arith.extui %8 : i1 to i32
    %c0_i32_6 = arith.constant 0 : i32
    %10 = arith.cmpi ne, %9, %c0_i32_6 : i32
    scf.if %10 {
      %c0_8 = arith.constant 0 : index
      %c0_9 = arith.constant 0 : index
      %14 = vector.load %arg7[%c0_8, %c0_9] : memref<2x128xf32, #tpu.memory_space<vmem>>, vector<1x128xf32>
      %cst_10 = arith.constant dense<0.000000e+00> : vector<128xf32>
      %15 = vector.multi_reduction <add>, %2, %cst_10 [0] : vector<128x128xf32> to vector<128xf32>
      %16 = vector.shape_cast %15 : vector<128xf32> to vector<1x128xf32>
      %17 = arith.addf %14, %16 : vector<1x128xf32>
      %c0_11 = arith.constant 0 : index
      %c0_12 = arith.constant 0 : index
      %18 = vector.load %arg7[%c0_11, %c0_12] : memref<2x128xf32, #tpu.memory_space<vmem>>, vector<1x128xf32>
      tpu.vector_store %arg7[%c0_11, %c0_12], %17 {strides = array<i32>} : memref<2x128xf32, #tpu.memory_space<vmem>>, vector<1x128xf32>,
      %c1 = arith.constant 1 : index
      %c0_13 = arith.constant 0 : index
      %19 = vector.load %arg7[%c1, %c0_13] : memref<2x128xf32, #tpu.memory_space<vmem>>, vector<1x128xf32>
      %20 = arith.mulf %2, %2 : vector<128x128xf32>
      %cst_14 = arith.constant dense<0.000000e+00> : vector<128xf32>
      %21 = vector.multi_reduction <add>, %20, %cst_14 [0] : vector<128x128xf32> to vector<128xf32>
      %22 = vector.shape_cast %21 : vector<128xf32> to vector<1x128xf32>
      %23 = arith.addf %19, %22 : vector<1x128xf32>
      %c1_15 = arith.constant 1 : index
      %c0_16 = arith.constant 0 : index
      %24 = vector.load %arg7[%c1_15, %c0_16] : memref<2x128xf32, #tpu.memory_space<vmem>>, vector<1x128xf32>
      tpu.vector_store %arg7[%c1_15, %c0_16], %23 {strides = array<i32>} : memref<2x128xf32, #tpu.memory_space<vmem>>, vector<1x128xf32>,
    } else {
    }
    %c1_i32 = arith.constant 1 : i32
    %11 = arith.cmpi eq, %arg0, %c1_i32 : i32
    %12 = arith.extui %11 : i1 to i32
    %c0_i32_7 = arith.constant 0 : i32
    %13 = arith.cmpi ne, %12, %c0_i32_7 : i32
    scf.if %13 {
      %c0_8 = arith.constant 0 : index
      %c0_9 = arith.constant 0 : index
      %14 = vector.load %arg7[%c0_8, %c0_9] : memref<2x128xf32, #tpu.memory_space<vmem>>, vector<1x128xf32>
      %cst_10 = arith.constant 7.812500e-03 : f32
      %15 = vector.broadcast %cst_10 : f32 to vector<1x128xf32>
      %16 = arith.mulf %14, %15 : vector<1x128xf32>
      %c1 = arith.constant 1 : index
      %c0_11 = arith.constant 0 : index
      %17 = vector.load %arg7[%c1, %c0_11] : memref<2x128xf32, #tpu.memory_space<vmem>>, vector<1x128xf32>
      %cst_12 = arith.constant 7.812500e-03 : f32
      %18 = vector.broadcast %cst_12 : f32 to vector<1x128xf32>
      %19 = arith.mulf %17, %18 : vector<1x128xf32>
      %20 = arith.mulf %16, %16 : vector<1x128xf32>
      %21 = arith.subf %19, %20 : vector<1x128xf32>
      %22 = vector.broadcast %16 : vector<1x128xf32> to vector<128x128xf32>
      %23 = arith.subf %2, %22 : vector<128x128xf32>
      %cst_13 = arith.constant 9.99999974E-6 : f32
      %24 = vector.broadcast %cst_13 : f32 to vector<1x128xf32>
      %25 = arith.addf %21, %24 : vector<1x128xf32>
      %26 = math.rsqrt %25 : vector<1x128xf32>
      %27 = vector.broadcast %26 : vector<1x128xf32> to vector<128x128xf32>
      %28 = arith.mulf %23, %27 : vector<128x128xf32>
      %c0_14 = arith.constant 0 : index
      %c0_15 = arith.constant 0 : index
      %29 = vector.load %arg4[%c0_14, %c0_15] : memref<1x128xf32, #tpu.memory_space<vmem>>, vector<1x128xf32>
      %30 = vector.broadcast %29 : vector<1x128xf32> to vector<128x128xf32>
      %31 = arith.mulf %28, %30 : vector<128x128xf32>
      %c0_16 = arith.constant 0 : index
      %c0_17 = arith.constant 0 : index
      %32 = vector.load %arg5[%c0_16, %c0_17] : memref<1x128xf32, #tpu.memory_space<vmem>>, vector<1x128xf32>
      %33 = vector.broadcast %32 : vector<1x128xf32> to vector<128x128xf32>
      %34 = arith.addf %31, %33 : vector<128x128xf32>
      %cst_18 = arith.constant 0.000000e+00 : f32
      %35 = vector.broadcast %cst_18 : f32 to vector<128x128xf32>
      %36 = arith.cmpf ogt, %34, %35 : vector<128x128xf32>
      %cst_19 = arith.constant 2.000000e-01 : f32
      %37 = vector.broadcast %cst_19 : f32 to vector<128x128xf32>
      %38 = arith.mulf %37, %34 : vector<128x128xf32>
      %39 = arith.select %36, %34, %38 : vector<128x128xi1>, vector<128x128xf32>
      %40 = arith.truncf %39 : vector<128x128xf32> to vector<128x128xbf16>
      %c0_20 = arith.constant 0 : index
      %c0_21 = arith.constant 0 : index
      %41 = vector.load %arg6[%c0_20, %c0_21] : memref<128x128xbf16, #tpu.memory_space<vmem>>, vector<128x128xbf16>
      tpu.vector_store %arg6[%c0_20, %c0_21], %40 {strides = array<i32>} : memref<128x128xbf16, #tpu.memory_space<vmem>>, vector<128x128xbf16>,
    } else {
    }
    return
  }
  func.func @transform_0(%arg0: i32, %arg1: i32) -> (i32, i32) {
    %c0_i32 = arith.constant 0 : i32
    %c0_i32_0 = arith.constant 0 : i32
    return %arg1, %c0_i32 : i32, i32
  }
  func.func @transform_1(%arg0: i32, %arg1: i32) -> (i32, i32) {
    %c0_i32 = arith.constant 0 : i32
    %c0_i32_0 = arith.constant 0 : i32
    %c0_i32_1 = arith.constant 0 : i32
    return %c0_i32, %c0_i32_0 : i32, i32
  }
  func.func @transform_2(%arg0: i32, %arg1: i32) -> (i32, i32) {
    %c0_i32 = arith.constant 0 : i32
    %c0_i32_0 = arith.constant 0 : i32
    %c0_i32_1 = arith.constant 0 : i32
    return %c0_i32, %c0_i32_0 : i32, i32
  }
  func.func @transform_3(%arg0: i32, %arg1: i32) -> (i32, i32) {
    %c0_i32 = arith.constant 0 : i32
    %c0_i32_0 = arith.constant 0 : i32
    %c0_i32_1 = arith.constant 0 : i32
    return %c0_i32, %c0_i32_0 : i32, i32
  }
  func.func @transform_4(%arg0: i32, %arg1: i32) -> (i32, i32) {
    %c0_i32 = arith.constant 0 : i32
    %c0_i32_0 = arith.constant 0 : i32
    return %arg1, %c0_i32 : i32, i32
  }
}

module attributes {stable_mosaic.version = 11 : i64} {
  func.func @_tail_kernel(%arg0: memref<32x256xbf16, #tpu.memory_space<vmem>>, %arg1: memref<256x128xbf16, #tpu.memory_space<vmem>>, %arg2: memref<1x128xf32, #tpu.memory_space<vmem>>, %arg3: memref<1x128xf32, #tpu.memory_space<vmem>>, %arg4: memref<16x128x128xbf16, #tpu.memory_space<vmem>>, %arg5: memref<1x128xf32, #tpu.memory_space<vmem>>, %arg6: memref<2x128xf32, #tpu.memory_space<vmem>>) attributes {dimension_semantics = [], scalar_prefetch = 0 : i64, scratch_operands = 0 : i64, tpu.core_type = #tpu.core_type<tc>} {
    %c0 = arith.constant 0 : index
    %c0_0 = arith.constant 0 : index
    %0 = vector.load %arg0[%c0, %c0_0] : memref<32x256xbf16, #tpu.memory_space<vmem>>, vector<32x256xbf16>
    %c0_1 = arith.constant 0 : index
    %c0_2 = arith.constant 0 : index
    %1 = vector.load %arg1[%c0_1, %c0_2] : memref<256x128xbf16, #tpu.memory_space<vmem>>, vector<256x128xbf16>
    %cst = arith.constant dense<0.000000e+00> : vector<32x128xf32>
    %2 = tpu.matmul %0, %1, %cst {dimension_numbers = #tpu.dot_dimension_numbers<[1], [0], [0], [1], [0, 0, 1, 1], [], []>} : vector<32x256xbf16>, vector<256x128xbf16>, vector<32x128xf32> -> vector<32x128xf32>
    %cst_3 = arith.constant dense<0.000000e+00> : vector<128xf32>
    %3 = vector.multi_reduction <add>, %2, %cst_3 [0] : vector<32x128xf32> to vector<128xf32>
    %4 = vector.shape_cast %3 : vector<128xf32> to vector<1x128xf32>
    %cst_4 = arith.constant 3.200000e+01 : f32
    %5 = vector.broadcast %cst_4 : f32 to vector<1x128xf32>
    %6 = arith.divf %4, %5 : vector<1x128xf32>
    %7 = arith.mulf %2, %2 : vector<32x128xf32>
    %cst_5 = arith.constant dense<0.000000e+00> : vector<128xf32>
    %8 = vector.multi_reduction <add>, %7, %cst_5 [0] : vector<32x128xf32> to vector<128xf32>
    %9 = vector.shape_cast %8 : vector<128xf32> to vector<1x128xf32>
    %cst_6 = arith.constant 3.200000e+01 : f32
    %10 = vector.broadcast %cst_6 : f32 to vector<1x128xf32>
    %11 = arith.divf %9, %10 : vector<1x128xf32>
    %12 = arith.mulf %6, %6 : vector<1x128xf32>
    %13 = arith.subf %11, %12 : vector<1x128xf32>
    %14 = vector.broadcast %6 : vector<1x128xf32> to vector<32x128xf32>
    %15 = arith.subf %2, %14 : vector<32x128xf32>
    %cst_7 = arith.constant 9.99999974E-6 : f32
    %16 = vector.broadcast %cst_7 : f32 to vector<1x128xf32>
    %17 = arith.addf %13, %16 : vector<1x128xf32>
    %18 = math.rsqrt %17 : vector<1x128xf32>
    %19 = vector.broadcast %18 : vector<1x128xf32> to vector<32x128xf32>
    %20 = arith.mulf %15, %19 : vector<32x128xf32>
    %c0_8 = arith.constant 0 : index
    %c0_9 = arith.constant 0 : index
    %21 = vector.load %arg2[%c0_8, %c0_9] : memref<1x128xf32, #tpu.memory_space<vmem>>, vector<1x128xf32>
    %22 = vector.broadcast %21 : vector<1x128xf32> to vector<32x128xf32>
    %23 = arith.mulf %20, %22 : vector<32x128xf32>
    %c0_10 = arith.constant 0 : index
    %c0_11 = arith.constant 0 : index
    %24 = vector.load %arg3[%c0_10, %c0_11] : memref<1x128xf32, #tpu.memory_space<vmem>>, vector<1x128xf32>
    %25 = vector.broadcast %24 : vector<1x128xf32> to vector<32x128xf32>
    %26 = arith.addf %23, %25 : vector<32x128xf32>
    %cst_12 = arith.constant 0.000000e+00 : f32
    %27 = vector.broadcast %cst_12 : f32 to vector<32x128xf32>
    %28 = arith.cmpf ogt, %26, %27 : vector<32x128xf32>
    %cst_13 = arith.constant 2.000000e-01 : f32
    %29 = vector.broadcast %cst_13 : f32 to vector<32x128xf32>
    %30 = arith.mulf %29, %26 : vector<32x128xf32>
    %31 = arith.select %28, %26, %30 : vector<32x128xi1>, vector<32x128xf32>
    %32 = arith.truncf %31 : vector<32x128xf32> to vector<32x128xbf16>
    %cst_14 = arith.constant 0.000000e+00 : f32
    %33 = vector.broadcast %cst_14 : f32 to vector<2x128xf32>
    %34 = vector.extract_strided_slice %32 {offsets = [0, 0], sizes = [2, 128], strides = [1, 1]} : vector<32x128xbf16> to vector<2x128xbf16>
    %c0_15 = arith.constant 0 : index
    %c0_16 = arith.constant 0 : index
    %c0_17 = arith.constant 0 : index
    %35 = vector.load %arg4[%c0_15, %c0_16, %c0_17] : memref<16x128x128xbf16, #tpu.memory_space<vmem>>, vector<1x128x128xbf16>
    %36 = vector.shape_cast %35 : vector<1x128x128xbf16> to vector<128x128xbf16>
    %cst_18 = arith.constant dense<0.000000e+00> : vector<2x128xf32>
    %37 = tpu.matmul %34, %36, %cst_18 {dimension_numbers = #tpu.dot_dimension_numbers<[1], [0], [0], [1], [0, 0, 1, 1], [], []>} : vector<2x128xbf16>, vector<128x128xbf16>, vector<2x128xf32> -> vector<2x128xf32>
    %38 = arith.addf %33, %37 : vector<2x128xf32>
    %39 = vector.extract_strided_slice %32 {offsets = [2, 0], sizes = [2, 128], strides = [1, 1]} : vector<32x128xbf16> to vector<2x128xbf16>
    %c1 = arith.constant 1 : index
    %c0_19 = arith.constant 0 : index
    %c0_20 = arith.constant 0 : index
    %40 = vector.load %arg4[%c1, %c0_19, %c0_20] : memref<16x128x128xbf16, #tpu.memory_space<vmem>>, vector<1x128x128xbf16>
    %41 = vector.shape_cast %40 : vector<1x128x128xbf16> to vector<128x128xbf16>
    %cst_21 = arith.constant dense<0.000000e+00> : vector<2x128xf32>
    %42 = tpu.matmul %39, %41, %cst_21 {dimension_numbers = #tpu.dot_dimension_numbers<[1], [0], [0], [1], [0, 0, 1, 1], [], []>} : vector<2x128xbf16>, vector<128x128xbf16>, vector<2x128xf32> -> vector<2x128xf32>
    %43 = arith.addf %38, %42 : vector<2x128xf32>
    %44 = vector.extract_strided_slice %32 {offsets = [4, 0], sizes = [2, 128], strides = [1, 1]} : vector<32x128xbf16> to vector<2x128xbf16>
    %c2 = arith.constant 2 : index
    %c0_22 = arith.constant 0 : index
    %c0_23 = arith.constant 0 : index
    %45 = vector.load %arg4[%c2, %c0_22, %c0_23] : memref<16x128x128xbf16, #tpu.memory_space<vmem>>, vector<1x128x128xbf16>
    %46 = vector.shape_cast %45 : vector<1x128x128xbf16> to vector<128x128xbf16>
    %cst_24 = arith.constant dense<0.000000e+00> : vector<2x128xf32>
    %47 = tpu.matmul %44, %46, %cst_24 {dimension_numbers = #tpu.dot_dimension_numbers<[1], [0], [0], [1], [0, 0, 1, 1], [], []>} : vector<2x128xbf16>, vector<128x128xbf16>, vector<2x128xf32> -> vector<2x128xf32>
    %48 = arith.addf %43, %47 : vector<2x128xf32>
    %49 = vector.extract_strided_slice %32 {offsets = [6, 0], sizes = [2, 128], strides = [1, 1]} : vector<32x128xbf16> to vector<2x128xbf16>
    %c3 = arith.constant 3 : index
    %c0_25 = arith.constant 0 : index
    %c0_26 = arith.constant 0 : index
    %50 = vector.load %arg4[%c3, %c0_25, %c0_26] : memref<16x128x128xbf16, #tpu.memory_space<vmem>>, vector<1x128x128xbf16>
    %51 = vector.shape_cast %50 : vector<1x128x128xbf16> to vector<128x128xbf16>
    %cst_27 = arith.constant dense<0.000000e+00> : vector<2x128xf32>
    %52 = tpu.matmul %49, %51, %cst_27 {dimension_numbers = #tpu.dot_dimension_numbers<[1], [0], [0], [1], [0, 0, 1, 1], [], []>} : vector<2x128xbf16>, vector<128x128xbf16>, vector<2x128xf32> -> vector<2x128xf32>
    %53 = arith.addf %48, %52 : vector<2x128xf32>
    %54 = vector.extract_strided_slice %32 {offsets = [8, 0], sizes = [2, 128], strides = [1, 1]} : vector<32x128xbf16> to vector<2x128xbf16>
    %c4 = arith.constant 4 : index
    %c0_28 = arith.constant 0 : index
    %c0_29 = arith.constant 0 : index
    %55 = vector.load %arg4[%c4, %c0_28, %c0_29] : memref<16x128x128xbf16, #tpu.memory_space<vmem>>, vector<1x128x128xbf16>
    %56 = vector.shape_cast %55 : vector<1x128x128xbf16> to vector<128x128xbf16>
    %cst_30 = arith.constant dense<0.000000e+00> : vector<2x128xf32>
    %57 = tpu.matmul %54, %56, %cst_30 {dimension_numbers = #tpu.dot_dimension_numbers<[1], [0], [0], [1], [0, 0, 1, 1], [], []>} : vector<2x128xbf16>, vector<128x128xbf16>, vector<2x128xf32> -> vector<2x128xf32>
    %58 = arith.addf %53, %57 : vector<2x128xf32>
    %59 = vector.extract_strided_slice %32 {offsets = [10, 0], sizes = [2, 128], strides = [1, 1]} : vector<32x128xbf16> to vector<2x128xbf16>
    %c5 = arith.constant 5 : index
    %c0_31 = arith.constant 0 : index
    %c0_32 = arith.constant 0 : index
    %60 = vector.load %arg4[%c5, %c0_31, %c0_32] : memref<16x128x128xbf16, #tpu.memory_space<vmem>>, vector<1x128x128xbf16>
    %61 = vector.shape_cast %60 : vector<1x128x128xbf16> to vector<128x128xbf16>
    %cst_33 = arith.constant dense<0.000000e+00> : vector<2x128xf32>
    %62 = tpu.matmul %59, %61, %cst_33 {dimension_numbers = #tpu.dot_dimension_numbers<[1], [0], [0], [1], [0, 0, 1, 1], [], []>} : vector<2x128xbf16>, vector<128x128xbf16>, vector<2x128xf32> -> vector<2x128xf32>
    %63 = arith.addf %58, %62 : vector<2x128xf32>
    %64 = vector.extract_strided_slice %32 {offsets = [12, 0], sizes = [2, 128], strides = [1, 1]} : vector<32x128xbf16> to vector<2x128xbf16>
    %c6 = arith.constant 6 : index
    %c0_34 = arith.constant 0 : index
    %c0_35 = arith.constant 0 : index
    %65 = vector.load %arg4[%c6, %c0_34, %c0_35] : memref<16x128x128xbf16, #tpu.memory_space<vmem>>, vector<1x128x128xbf16>
    %66 = vector.shape_cast %65 : vector<1x128x128xbf16> to vector<128x128xbf16>
    %cst_36 = arith.constant dense<0.000000e+00> : vector<2x128xf32>
    %67 = tpu.matmul %64, %66, %cst_36 {dimension_numbers = #tpu.dot_dimension_numbers<[1], [0], [0], [1], [0, 0, 1, 1], [], []>} : vector<2x128xbf16>, vector<128x128xbf16>, vector<2x128xf32> -> vector<2x128xf32>
    %68 = arith.addf %63, %67 : vector<2x128xf32>
    %69 = vector.extract_strided_slice %32 {offsets = [14, 0], sizes = [2, 128], strides = [1, 1]} : vector<32x128xbf16> to vector<2x128xbf16>
    %c7 = arith.constant 7 : index
    %c0_37 = arith.constant 0 : index
    %c0_38 = arith.constant 0 : index
    %70 = vector.load %arg4[%c7, %c0_37, %c0_38] : memref<16x128x128xbf16, #tpu.memory_space<vmem>>, vector<1x128x128xbf16>
    %71 = vector.shape_cast %70 : vector<1x128x128xbf16> to vector<128x128xbf16>
    %cst_39 = arith.constant dense<0.000000e+00> : vector<2x128xf32>
    %72 = tpu.matmul %69, %71, %cst_39 {dimension_numbers = #tpu.dot_dimension_numbers<[1], [0], [0], [1], [0, 0, 1, 1], [], []>} : vector<2x128xbf16>, vector<128x128xbf16>, vector<2x128xf32> -> vector<2x128xf32>
    %73 = arith.addf %68, %72 : vector<2x128xf32>
    %74 = vector.extract_strided_slice %32 {offsets = [16, 0], sizes = [2, 128], strides = [1, 1]} : vector<32x128xbf16> to vector<2x128xbf16>
    %c8 = arith.constant 8 : index
    %c0_40 = arith.constant 0 : index
    %c0_41 = arith.constant 0 : index
    %75 = vector.load %arg4[%c8, %c0_40, %c0_41] : memref<16x128x128xbf16, #tpu.memory_space<vmem>>, vector<1x128x128xbf16>
    %76 = vector.shape_cast %75 : vector<1x128x128xbf16> to vector<128x128xbf16>
    %cst_42 = arith.constant dense<0.000000e+00> : vector<2x128xf32>
    %77 = tpu.matmul %74, %76, %cst_42 {dimension_numbers = #tpu.dot_dimension_numbers<[1], [0], [0], [1], [0, 0, 1, 1], [], []>} : vector<2x128xbf16>, vector<128x128xbf16>, vector<2x128xf32> -> vector<2x128xf32>
    %78 = arith.addf %73, %77 : vector<2x128xf32>
    %79 = vector.extract_strided_slice %32 {offsets = [18, 0], sizes = [2, 128], strides = [1, 1]} : vector<32x128xbf16> to vector<2x128xbf16>
    %c9 = arith.constant 9 : index
    %c0_43 = arith.constant 0 : index
    %c0_44 = arith.constant 0 : index
    %80 = vector.load %arg4[%c9, %c0_43, %c0_44] : memref<16x128x128xbf16, #tpu.memory_space<vmem>>, vector<1x128x128xbf16>
    %81 = vector.shape_cast %80 : vector<1x128x128xbf16> to vector<128x128xbf16>
    %cst_45 = arith.constant dense<0.000000e+00> : vector<2x128xf32>
    %82 = tpu.matmul %79, %81, %cst_45 {dimension_numbers = #tpu.dot_dimension_numbers<[1], [0], [0], [1], [0, 0, 1, 1], [], []>} : vector<2x128xbf16>, vector<128x128xbf16>, vector<2x128xf32> -> vector<2x128xf32>
    %83 = arith.addf %78, %82 : vector<2x128xf32>
    %84 = vector.extract_strided_slice %32 {offsets = [20, 0], sizes = [2, 128], strides = [1, 1]} : vector<32x128xbf16> to vector<2x128xbf16>
    %c10 = arith.constant 10 : index
    %c0_46 = arith.constant 0 : index
    %c0_47 = arith.constant 0 : index
    %85 = vector.load %arg4[%c10, %c0_46, %c0_47] : memref<16x128x128xbf16, #tpu.memory_space<vmem>>, vector<1x128x128xbf16>
    %86 = vector.shape_cast %85 : vector<1x128x128xbf16> to vector<128x128xbf16>
    %cst_48 = arith.constant dense<0.000000e+00> : vector<2x128xf32>
    %87 = tpu.matmul %84, %86, %cst_48 {dimension_numbers = #tpu.dot_dimension_numbers<[1], [0], [0], [1], [0, 0, 1, 1], [], []>} : vector<2x128xbf16>, vector<128x128xbf16>, vector<2x128xf32> -> vector<2x128xf32>
    %88 = arith.addf %83, %87 : vector<2x128xf32>
    %89 = vector.extract_strided_slice %32 {offsets = [22, 0], sizes = [2, 128], strides = [1, 1]} : vector<32x128xbf16> to vector<2x128xbf16>
    %c11 = arith.constant 11 : index
    %c0_49 = arith.constant 0 : index
    %c0_50 = arith.constant 0 : index
    %90 = vector.load %arg4[%c11, %c0_49, %c0_50] : memref<16x128x128xbf16, #tpu.memory_space<vmem>>, vector<1x128x128xbf16>
    %91 = vector.shape_cast %90 : vector<1x128x128xbf16> to vector<128x128xbf16>
    %cst_51 = arith.constant dense<0.000000e+00> : vector<2x128xf32>
    %92 = tpu.matmul %89, %91, %cst_51 {dimension_numbers = #tpu.dot_dimension_numbers<[1], [0], [0], [1], [0, 0, 1, 1], [], []>} : vector<2x128xbf16>, vector<128x128xbf16>, vector<2x128xf32> -> vector<2x128xf32>
    %93 = arith.addf %88, %92 : vector<2x128xf32>
    %94 = vector.extract_strided_slice %32 {offsets = [24, 0], sizes = [2, 128], strides = [1, 1]} : vector<32x128xbf16> to vector<2x128xbf16>
    %c12 = arith.constant 12 : index
    %c0_52 = arith.constant 0 : index
    %c0_53 = arith.constant 0 : index
    %95 = vector.load %arg4[%c12, %c0_52, %c0_53] : memref<16x128x128xbf16, #tpu.memory_space<vmem>>, vector<1x128x128xbf16>
    %96 = vector.shape_cast %95 : vector<1x128x128xbf16> to vector<128x128xbf16>
    %cst_54 = arith.constant dense<0.000000e+00> : vector<2x128xf32>
    %97 = tpu.matmul %94, %96, %cst_54 {dimension_numbers = #tpu.dot_dimension_numbers<[1], [0], [0], [1], [0, 0, 1, 1], [], []>} : vector<2x128xbf16>, vector<128x128xbf16>, vector<2x128xf32> -> vector<2x128xf32>
    %98 = arith.addf %93, %97 : vector<2x128xf32>
    %99 = vector.extract_strided_slice %32 {offsets = [26, 0], sizes = [2, 128], strides = [1, 1]} : vector<32x128xbf16> to vector<2x128xbf16>
    %c13 = arith.constant 13 : index
    %c0_55 = arith.constant 0 : index
    %c0_56 = arith.constant 0 : index
    %100 = vector.load %arg4[%c13, %c0_55, %c0_56] : memref<16x128x128xbf16, #tpu.memory_space<vmem>>, vector<1x128x128xbf16>
    %101 = vector.shape_cast %100 : vector<1x128x128xbf16> to vector<128x128xbf16>
    %cst_57 = arith.constant dense<0.000000e+00> : vector<2x128xf32>
    %102 = tpu.matmul %99, %101, %cst_57 {dimension_numbers = #tpu.dot_dimension_numbers<[1], [0], [0], [1], [0, 0, 1, 1], [], []>} : vector<2x128xbf16>, vector<128x128xbf16>, vector<2x128xf32> -> vector<2x128xf32>
    %103 = arith.addf %98, %102 : vector<2x128xf32>
    %104 = vector.extract_strided_slice %32 {offsets = [28, 0], sizes = [2, 128], strides = [1, 1]} : vector<32x128xbf16> to vector<2x128xbf16>
    %c14 = arith.constant 14 : index
    %c0_58 = arith.constant 0 : index
    %c0_59 = arith.constant 0 : index
    %105 = vector.load %arg4[%c14, %c0_58, %c0_59] : memref<16x128x128xbf16, #tpu.memory_space<vmem>>, vector<1x128x128xbf16>
    %106 = vector.shape_cast %105 : vector<1x128x128xbf16> to vector<128x128xbf16>
    %cst_60 = arith.constant dense<0.000000e+00> : vector<2x128xf32>
    %107 = tpu.matmul %104, %106, %cst_60 {dimension_numbers = #tpu.dot_dimension_numbers<[1], [0], [0], [1], [0, 0, 1, 1], [], []>} : vector<2x128xbf16>, vector<128x128xbf16>, vector<2x128xf32> -> vector<2x128xf32>
    %108 = arith.addf %103, %107 : vector<2x128xf32>
    %109 = vector.extract_strided_slice %32 {offsets = [30, 0], sizes = [2, 128], strides = [1, 1]} : vector<32x128xbf16> to vector<2x128xbf16>
    %c15 = arith.constant 15 : index
    %c0_61 = arith.constant 0 : index
    %c0_62 = arith.constant 0 : index
    %110 = vector.load %arg4[%c15, %c0_61, %c0_62] : memref<16x128x128xbf16, #tpu.memory_space<vmem>>, vector<1x128x128xbf16>
    %111 = vector.shape_cast %110 : vector<1x128x128xbf16> to vector<128x128xbf16>
    %cst_63 = arith.constant dense<0.000000e+00> : vector<2x128xf32>
    %112 = tpu.matmul %109, %111, %cst_63 {dimension_numbers = #tpu.dot_dimension_numbers<[1], [0], [0], [1], [0, 0, 1, 1], [], []>} : vector<2x128xbf16>, vector<128x128xbf16>, vector<2x128xf32> -> vector<2x128xf32>
    %113 = arith.addf %108, %112 : vector<2x128xf32>
    %c0_64 = arith.constant 0 : index
    %c0_65 = arith.constant 0 : index
    %114 = vector.load %arg5[%c0_64, %c0_65] : memref<1x128xf32, #tpu.memory_space<vmem>>, vector<1x128xf32>
    %115 = vector.broadcast %114 : vector<1x128xf32> to vector<2x128xf32>
    %116 = arith.addf %113, %115 : vector<2x128xf32>
    %117 = arith.negf %116 : vector<2x128xf32>
    %118 = math.exp %117 : vector<2x128xf32>
    %cst_66 = arith.constant 1.000000e+00 : f32
    %119 = vector.broadcast %cst_66 : f32 to vector<2x128xf32>
    %120 = arith.addf %119, %118 : vector<2x128xf32>
    %121 = arith.divf %119, %120 : vector<2x128xf32>
    %c0_67 = arith.constant 0 : index
    %c0_68 = arith.constant 0 : index
    %122 = vector.load %arg6[%c0_67, %c0_68] : memref<2x128xf32, #tpu.memory_space<vmem>>, vector<2x128xf32>
    tpu.vector_store %arg6[%c0_67, %c0_68], %121 {strides = array<i32>} : memref<2x128xf32, #tpu.memory_space<vmem>>, vector<2x128xf32>,
    return
  }
}

</mosaic_0001>

<llo_original>
// kernel: discriminator_forward.4
$region0: #{discriminator_forward.4}
  #allocation0 [shape = 'u32[]', space=smem, size = 0x4, offset = 0x4, fixed_abs, tag = 'smem constant byte address 0x4 - core index']
  #allocation1 [shape = 'u32[144,128]{1,0:T(1,128)}', space=vmem, size = 0x12000, scoped, tag = 'internal scratch']
  %s0 = inlined_call_operand.vmem [shape: bf16[2048,48], index: 0, kind: input, shape index: {}]
  %s1 = inlined_call_operand.vmem [shape: bf16[48,128], index: 1, kind: input, shape index: {}]
  %s2 = inlined_call_operand.vmem [shape: f32[1,128], index: 2, kind: input, shape index: {}]
  %s3 = inlined_call_operand.vmem [shape: bf16[2048,128], index: 3, kind: output, shape index: {}]
  %s4 = sld [smem:[#allocation0]]
  $region45: #{discriminator_forward.4} parent=0
    _
  %s6 = ssub.s32 1, %s4
  %s7 = scalar_select 0, %s6, %s4
  loop: start=0, step=1, limit=4
  $region2: #{discriminator_forward.4} parent=0 // loop_pre_header
    _
  $region3: #{discriminator_forward.4} parent=0 // loop_header
    %s9 = sphi 0, %s13
    %p10 = scmp.ge.s32.totalorder %s9, 4
    %s19 = sphi 0, %s21
    %s22 = sphi 0, %s19
    %s23 = sphi 0, %s22
    %s39 = sphi 0, %s23
    %s43 = sphi 0, %s43
    %s45 = sphi 0, %s43
    %s46 = sphi 0, %s45
    %s60 = sphi 0, %s46
    %s64 = sphi 0, %s64
    %s66 = sphi 0, %s64
    %s67 = sphi 0, %s66
    %s81 = sphi 0, %s67
    %s87 = sphi 0, %s89
    %s90 = sphi 0, %s87
    %s91 = sphi 0, %s90
    %s107 = sphi 0, %s91
  $region4: #{discriminator_forward.4} parent=0 // loop_header_branch
    %12 = sbr.rel (%p10) target = $region8
  $region5: #{discriminator_forward.4} parent=0 // loop_body
    %s14 = ssub.s32 %s9, 1
    %s15 = ssub.s32 %s9, 2
    %s16 = sadd.s32 %s9, 1
    %s17 = ssub.s32 %s9, %s16
    %p18 = scmp.eq.s32.totalorder %s17, 0
    %s20 = sadd.s32 %s19, 1
    %s21 = scalar_select %p18, %s19, %s20
    %p24 = pneg %p18
    %p25 = scmp.eq.s32.totalorder %s9, 1
    %p26 = por %p24, %p25
    %p27 = scmp.ne.s32.totalorder %s19, %s22
    %p28 = scmp.eq.s32.totalorder %s9, 0
    %p29 = por %p27, %p28
    %p30 = scmp.ne.s32.totalorder %s19, %s22
    %p31 = scmp.eq.s32.totalorder %s14, 1
    %p32 = por %p30, %p31
    %p33 = scmp.ne.s32.totalorder %s22, %s23
    %p34 = scmp.eq.s32.totalorder %s14, 0
    %p35 = por %p33, %p34
    %p36 = scmp.ne.s32.totalorder %s22, %s23
    %p37 = scmp.eq.s32.totalorder %s15, 1
    %p38 = por %p36, %p37
    %p40 = scmp.ne.s32.totalorder %s23, %s39
    %p41 = scmp.eq.s32.totalorder %s15, 0
    %p42 = por %p40, %p41
    %s44 = sadd.s32 %s43, 1
    %p47 = scmp.eq.s32.totalorder %s9, 1
    %p48 = scmp.ne.s32.totalorder %s43, %s45
    %p49 = scmp.eq.s32.totalorder %s9, 0
    %p50 = por %p48, %p49
    %p51 = scmp.ne.s32.totalorder %s43, %s45
    %p52 = scmp.eq.s32.totalorder %s14, 1
    %p53 = por %p51, %p52
    %p54 = scmp.ne.s32.totalorder %s45, %s46
    %p55 = scmp.eq.s32.totalorder %s14, 0
    %p56 = por %p54, %p55
    %p57 = scmp.ne.s32.totalorder %s45, %s46
    %p58 = scmp.eq.s32.totalorder %s15, 1
    %p59 = por %p57, %p58
    %p61 = scmp.ne.s32.totalorder %s46, %s60
    %p62 = scmp.eq.s32.totalorder %s15, 0
    %p63 = por %p61, %p62
    %s65 = sadd.s32 %s64, 1
    %p68 = scmp.eq.s32.totalorder %s9, 1
    %p69 = scmp.ne.s32.totalorder %s64, %s66
    %p70 = scmp.eq.s32.totalorder %s9, 0
    %p71 = por %p69, %p70
    %p72 = scmp.ne.s32.totalorder %s64, %s66
    %p73 = scmp.eq.s32.totalorder %s14, 1
    %p74 = por %p72, %p73
    %p75 = scmp.ne.s32.totalorder %s66, %s67
    %p76 = scmp.eq.s32.totalorder %s14, 0
    %p77 = por %p75, %p76
    %p78 = scmp.ne.s32.totalorder %s66, %s67
    %p79 = scmp.eq.s32.totalorder %s15, 1
    %p80 = por %p78, %p79
    %p82 = scmp.ne.s32.totalorder %s67, %s81
    %p83 = scmp.eq.s32.totalorder %s15, 0
    %p84 = por %p82, %p83
    %s85 = ssub.s32 %s9, %s16
    %p86 = scmp.eq.s32.totalorder %s85, 0
    %s88 = sadd.s32 %s87, 1
    %s89 = scalar_select %p86, %s87, %s88
    %p92 = pneg %p86
    %p93 = scmp.eq.s32.totalorder %s9, 1
    %p94 = por %p92, %p93
    %p95 = scmp.ne.s32.totalorder %s87, %s90
    %p96 = scmp.eq.s32.totalorder %s9, 0
    %p97 = por %p95, %p96
    %p98 = scmp.ne.s32.totalorder %s87, %s90
    %p99 = scmp.eq.s32.totalorder %s14, 1
    %p100 = por %p98, %p99
    %p101 = scmp.ne.s32.totalorder %s90, %s91
    %p102 = scmp.eq.s32.totalorder %s14, 0
    %p103 = por %p101, %p102
    %p104 = scmp.ne.s32.totalorder %s90, %s91
    %p105 = scmp.eq.s32.totalorder %s15, 1
    %p106 = por %p104, %p105
    %p108 = scmp.ne.s32.totalorder %s91, %s107
    %p109 = scmp.eq.s32.totalorder %s15, 0
    %p110 = por %p108, %p109
    %p111 = scmp.le.s32.totalorder 1, %s9
    %p112 = scmp.lt.s32.totalorder %s9, 3
    %p113 = pnand %p111, %p112
    %p114 = pneg %p113
    // Predicated region
    $region9: #{discriminator_forward.4} parent=5 // pred_check
      _
    $region10: #{discriminator_forward.4} parent=5 // pred_check_branch
      %116 = sbr.rel (%p113) target = $region12
    $region11: #{discriminator_forward.4} parent=5 // pred_region
      %s117 = ssub.s32 %s9, 1
      // Predicated region
      $region13: #{discriminator_forward.4} parent=11 // pred_check
        %p118 = pneg %p56
      $region14: #{discriminator_forward.4} parent=11 // pred_check_branch
        %120 = sbr.rel (%p118) target = $region16
      $region15: #{discriminator_forward.4} parent=11 // pred_region
        _
      $region16: #{discriminator_forward.4} parent=11 // pred_fallthru
        _
      // Predicated region
      $region17: #{discriminator_forward.4} parent=11 // pred_check
        %p121 = pneg %p77
      $region18: #{discriminator_forward.4} parent=11 // pred_check_branch
        %123 = sbr.rel (%p121) target = $region20
      $region19: #{discriminator_forward.4} parent=11 // pred_region
        _
      $region20: #{discriminator_forward.4} parent=11 // pred_fallthru
        _
    $region12: #{discriminator_forward.4} parent=5 // pred_fallthru
      _
    %p124 = scmp.lt.s32.totalorder %s9, 2
    // Predicated region
    $region21: #{discriminator_forward.4} parent=5 // pred_check
      %p125 = pneg %p124
    $region22: #{discriminator_forward.4} parent=5 // pred_check_branch
      %127 = sbr.rel (%p125) target = $region24
    $region23: #{discriminator_forward.4} parent=5 // pred_region
      // Predicated region
      $region25: #{discriminator_forward.4} parent=23 // pred_check
        %p128 = pneg %p29
      $region26: #{discriminator_forward.4} parent=23 // pred_check_branch
        %130 = sbr.rel (%p128) target = $region28
      $region27: #{discriminator_forward.4} parent=23 // pred_region
        %s131 = smul.u32 128, %s9
        %p132 = scmp.lt.s32.totalorder %s131, 255
        %s133 = scalar_select %p132, %s131, 255
        %s134 = smul.addr %s133, 4
        %s135 = scalar_lea.vmem %s0, %s134
        %s136 = smul.u32 128, %s9
      $region28: #{discriminator_forward.4} parent=23 // pred_fallthru
        _
    $region24: #{discriminator_forward.4} parent=5 // pred_fallthru
      _
    %p137 = scmp.le.s32.totalorder 1, %s9
    %p138 = scmp.lt.s32.totalorder %s9, 3
    %p139 = pnand %p137, %p138
    %p140 = pneg %p139
    // Predicated region
    $region29: #{discriminator_forward.4} parent=5 // pred_check
      _
    $region30: #{discriminator_forward.4} parent=5 // pred_check_branch
      %142 = sbr.rel (%p139) target = $region32
    $region31: #{discriminator_forward.4} parent=5 // pred_region
      %s143 = ssub.s32 %s9, 1
      %s144 = smul.u32 128, %s14
      %p145 = scmp.lt.s32.totalorder %s144, 255
      %s146 = scalar_select %p145, %s144, 255
      %s147 = smul.addr %s146, 4
      %s148 = scalar_lea.vmem %s0, %s147
      %p149 = pneg %p35
      %p150 = pneg %p32
      %p151 = pneg %p56
      %p152 = pneg %p53
      %p153 = pneg %p77
      %p154 = pneg %p74
      %p155 = pneg %p103
      %p156 = pneg %p100
      %s157 = smul.u32 128, %s14
      %p158 = scmp.lt.s32.totalorder %s157, 255
      %s159 = scalar_select %p158, %s157, 255
      %s160 = smul.addr %s159, 4
      %s161 = scalar_lea.vmem %s3, %s160
      %s162 = smul.u32 128, %s14
      %p163 = scmp.lt.s32.totalorder %s162, 255
      %s164 = scalar_select %p163, %s162, 255
      %s165 = smul.addr %s164, 4
      %s166 = scalar_lea.vmem %s0, %s165
      %s167 = smul.u32 128, %s14
      %s168 = smul.u32 128, %s14
      %p169 = scmp.lt.s32.totalorder %s168, 255
      %s170 = scalar_select %p169, %s168, 255
      %s171 = smul.addr %s170, 4
      %s172 = scalar_lea.vmem %s3, %s171
      %s173 = smul.u32 128, %s14
      %v175 = vld [vmem:[%s166] sm:$0xf]
      %v176 = vld [vmem:[%s166 + $0x4] sm:$0xf]
      %v177 = vld [vmem:[%s166 + $0x8] sm:$0xf]
      %v178 = vld [vmem:[%s166 + $0xc] sm:$0xf]
      %v179 = vld [vmem:[%s166 + $0x10] sm:$0xf]
      %v180 = vld [vmem:[%s166 + $0x14] sm:$0xf]
      %v181 = vld [vmem:[%s166 + $0x18] sm:$0xf]
      %v182 = vld [vmem:[%s166 + $0x1c] sm:$0xf]
      %v183 = vld [vmem:[%s166 + $0x20] sm:$0xf]
      %v184 = vld [vmem:[%s166 + $0x24] sm:$0xf]
      %v185 = vld [vmem:[%s166 + $0x28] sm:$0xf]
      %v186 = vld [vmem:[%s166 + $0x2c] sm:$0xf]
      %v187 = vld [vmem:[%s166 + $0x30] sm:$0xf]
      %v188 = vld [vmem:[%s166 + $0x34] sm:$0xf]
      %v189 = vld [vmem:[%s166 + $0x38] sm:$0xf]
      %v190 = vld [vmem:[%s166 + $0x3c] sm:$0xf]
      %v191 = vld [vmem:[%s166 + $0x40] sm:$0xf]
      %v192 = vld [vmem:[%s166 + $0x44] sm:$0xf]
      %v193 = vld [vmem:[%s166 + $0x48] sm:$0xf]
      %v194 = vld [vmem:[%s166 + $0x4c] sm:$0xf]
      %v195 = vld [vmem:[%s166 + $0x50] sm:$0xf]
      %v196 = vld [vmem:[%s166 + $0x54] sm:$0xf]
      %v197 = vld [vmem:[%s166 + $0x58] sm:$0xf]
      %v198 = vld [vmem:[%s166 + $0x5c] sm:$0xf]
      %v199 = vld [vmem:[%s166 + $0x60] sm:$0xf]
      %v200 = vld [vmem:[%s166 + $0x64] sm:$0xf]
      %v201 = vld [vmem:[%s166 + $0x68] sm:$0xf]
      %v202 = vld [vmem:[%s166 + $0x6c] sm:$0xf]
      %v203 = vld [vmem:[%s166 + $0x70] sm:$0xf]
      %v204 = vld [vmem:[%s166 + $0x74] sm:$0xf]
      %v205 = vld [vmem:[%s166 + $0x78] sm:$0xf]
      %v206 = vld [vmem:[%s166 + $0x7c] sm:$0xf]
      %v207 = vld [vmem:[%s166 + $0x80] sm:$0xf]
      %v208 = vld [vmem:[%s166 + $0x84] sm:$0xf]
      %v209 = vld [vmem:[%s166 + $0x88] sm:$0xf]
      %v210 = vld [vmem:[%s166 + $0x8c] sm:$0xf]
      %v211 = vld [vmem:[%s166 + $0x90] sm:$0xf]
      %v212 = vld [vmem:[%s166 + $0x94] sm:$0xf]
      %v213 = vld [vmem:[%s166 + $0x98] sm:$0xf]
      %v214 = vld [vmem:[%s166 + $0x9c] sm:$0xf]
      %v215 = vld [vmem:[%s166 + $0xa0] sm:$0xf]
      %v216 = vld [vmem:[%s166 + $0xa4] sm:$0xf]
      %v217 = vld [vmem:[%s166 + $0xa8] sm:$0xf]
      %v218 = vld [vmem:[%s166 + $0xac] sm:$0xf]
      %v219 = vld [vmem:[%s166 + $0xb0] sm:$0xf]
      %v220 = vld [vmem:[%s166 + $0xb4] sm:$0xf]
      %v221 = vld [vmem:[%s166 + $0xb8] sm:$0xf]
      %v222 = vld [vmem:[%s166 + $0xbc] sm:$0xf]
      %v223 = vld [vmem:[%s166 + $0xc0] sm:$0xf]
      %v224 = vld [vmem:[%s166 + $0xc4] sm:$0xf]
      %v225 = vld [vmem:[%s166 + $0xc8] sm:$0xf]
      %v226 = vld [vmem:[%s166 + $0xcc] sm:$0xf]
      %v227 = vld [vmem:[%s166 + $0xd0] sm:$0xf]
      %v228 = vld [vmem:[%s166 + $0xd4] sm:$0xf]
      %v229 = vld [vmem:[%s166 + $0xd8] sm:$0xf]
      %v230 = vld [vmem:[%s166 + $0xdc] sm:$0xf]
      %v231 = vld [vmem:[%s166 + $0xe0] sm:$0xf]
      %v232 = vld [vmem:[%s166 + $0xe4] sm:$0xf]
      %v233 = vld [vmem:[%s166 + $0xe8] sm:$0xf]
      %v234 = vld [vmem:[%s166 + $0xec] sm:$0xf]
      %v235 = vld [vmem:[%s166 + $0xf0] sm:$0xf]
      %v236 = vld [vmem:[%s166 + $0xf4] sm:$0xf]
      %v237 = vld [vmem:[%s166 + $0xf8] sm:$0xf]
      %v238 = vld [vmem:[%s166 + $0xfc] sm:$0xf]
      %v239 = vld [vmem:[%s166 + $0x100] sm:$0xf]
      %v240 = vld [vmem:[%s166 + $0x104] sm:$0xf]
      %v241 = vld [vmem:[%s166 + $0x108] sm:$0xf]
      %v242 = vld [vmem:[%s166 + $0x10c] sm:$0xf]
      %v243 = vld [vmem:[%s166 + $0x110] sm:$0xf]
      %v244 = vld [vmem:[%s166 + $0x114] sm:$0xf]
      %v245 = vld [vmem:[%s166 + $0x118] sm:$0xf]
      %v246 = vld [vmem:[%s166 + $0x11c] sm:$0xf]
      %v247 = vld [vmem:[%s166 + $0x120] sm:$0xf]
      %v248 = vld [vmem:[%s166 + $0x124] sm:$0xf]
      %v249 = vld [vmem:[%s166 + $0x128] sm:$0xf]
      %v250 = vld [vmem:[%s166 + $0x12c] sm:$0xf]
      %v251 = vld [vmem:[%s166 + $0x130] sm:$0xf]
      %v252 = vld [vmem:[%s166 + $0x134] sm:$0xf]
      %v253 = vld [vmem:[%s166 + $0x138] sm:$0xf]
      %v254 = vld [vmem:[%s166 + $0x13c] sm:$0xf]
      %v255 = vld [vmem:[%s166 + $0x140] sm:$0xf]
      %v256 = vld [vmem:[%s166 + $0x144] sm:$0xf]
      %v257 = vld [vmem:[%s166 + $0x148] sm:$0xf]
      %v258 = vld [vmem:[%s166 + $0x14c] sm:$0xf]
      %v259 = vld [vmem:[%s166 + $0x150] sm:$0xf]
      %v260 = vld [vmem:[%s166 + $0x154] sm:$0xf]
      %v261 = vld [vmem:[%s166 + $0x158] sm:$0xf]
      %v262 = vld [vmem:[%s166 + $0x15c] sm:$0xf]
      %v263 = vld [vmem:[%s166 + $0x160] sm:$0xf]
      %v264 = vld [vmem:[%s166 + $0x164] sm:$0xf]
      %v265 = vld [vmem:[%s166 + $0x168] sm:$0xf]
      %v266 = vld [vmem:[%s166 + $0x16c] sm:$0xf]
      %v267 = vld [vmem:[%s166 + $0x170] sm:$0xf]
      %v268 = vld [vmem:[%s166 + $0x174] sm:$0xf]
      %v269 = vld [vmem:[%s166 + $0x178] sm:$0xf]
      %v270 = vld [vmem:[%s166 + $0x17c] sm:$0xf]
      %v271 = vld [vmem:[%s166 + $0x180] sm:$0xf]
      %v272 = vld [vmem:[%s166 + $0x184] sm:$0xf]
      %v273 = vld [vmem:[%s166 + $0x188] sm:$0xf]
      %v274 = vld [vmem:[%s166 + $0x18c] sm:$0xf]
      %v275 = vld [vmem:[%s166 + $0x190] sm:$0xf]
      %v276 = vld [vmem:[%s166 + $0x194] sm:$0xf]
      %v277 = vld [vmem:[%s166 + $0x198] sm:$0xf]
      %v278 = vld [vmem:[%s166 + $0x19c] sm:$0xf]
      %v279 = vld [vmem:[%s166 + $0x1a0] sm:$0xf]
      %v280 = vld [vmem:[%s166 + $0x1a4] sm:$0xf]
      %v281 = vld [vmem:[%s166 + $0x1a8] sm:$0xf]
      %v282 = vld [vmem:[%s166 + $0x1ac] sm:$0xf]
      %v283 = vld [vmem:[%s166 + $0x1b0] sm:$0xf]
      %v284 = vld [vmem:[%s166 + $0x1b4] sm:$0xf]
      %v285 = vld [vmem:[%s166 + $0x1b8] sm:$0xf]
      %v286 = vld [vmem:[%s166 + $0x1bc] sm:$0xf]
      %v287 = vld [vmem:[%s166 + $0x1c0] sm:$0xf]
      %v288 = vld [vmem:[%s166 + $0x1c4] sm:$0xf]
      %v289 = vld [vmem:[%s166 + $0x1c8] sm:$0xf]
      %v290 = vld [vmem:[%s166 + $0x1cc] sm:$0xf]
      %v291 = vld [vmem:[%s166 + $0x1d0] sm:$0xf]
      %v292 = vld [vmem:[%s166 + $0x1d4] sm:$0xf]
      %v293 = vld [vmem:[%s166 + $0x1d8] sm:$0xf]
      %v294 = vld [vmem:[%s166 + $0x1dc] sm:$0xf]
      %v295 = vld [vmem:[%s166 + $0x1e0] sm:$0xf]
      %v296 = vld [vmem:[%s166 + $0x1e4] sm:$0xf]
      %v297 = vld [vmem:[%s166 + $0x1e8] sm:$0xf]
      %v298 = vld [vmem:[%s166 + $0x1ec] sm:$0xf]
      %v299 = vld [vmem:[%s166 + $0x1f0] sm:$0xf]
      %v300 = vld [vmem:[%s166 + $0x1f4] sm:$0xf]
      %v301 = vld [vmem:[%s166 + $0x1f8] sm:$0xf]
      %v302 = vld [vmem:[%s166 + $0x1fc] sm:$0xf]
      %v303 = vld [vmem:[%s1] sm:$0xf]
      %v304 = vld [vmem:[%s1 + $0x4] sm:$0xf]
      %v305 = vld [vmem:[%s1 + $0x8] sm:$0xf]
      %v306 = vld [vmem:[%s1 + $0xc] sm:$0xf]
      %v307 = vld [vmem:[%s1 + $0x10] sm:$0xf]
      %v308 = vld [vmem:[%s1 + $0x14] sm:$0xf]
      %v309 = vld [vmem:[%s2] sm:$0x1]
      %v311 = vlaneseq
      %v312 = vshrl.u32 %v311, 7
      %v313 = vsub.s32 0, %v312
      %v314 = vrot.slane %v309, %v313
      %v444 = vunpack.c.l.b16 %v175
      %v445 = vunpack.c.l.b16 %v176
      %v446 = vunpack.c.l.b16 %v177
      %v447 = vunpack.c.l.b16 %v178
      %v448 = vunpack.c.l.b16 %v179
      %v449 = vunpack.c.l.b16 %v180
      %v450 = vunpack.c.l.b16 %v181
      %v451 = vunpack.c.l.b16 %v182
      %v452 = vunpack.c.l.b16 %v183
      %v453 = vunpack.c.l.b16 %v184
      %v454 = vunpack.c.l.b16 %v185
      %v455 = vunpack.c.l.b16 %v186
      %v456 = vunpack.c.l.b16 %v187
      %v457 = vunpack.c.l.b16 %v188
      %v458 = vunpack.c.l.b16 %v189
      %v459 = vunpack.c.l.b16 %v190
      %v460 = vunpack.c.l.b16 %v191
      %v461 = vunpack.c.l.b16 %v192
      %v462 = vunpack.c.l.b16 %v193
      %v463 = vunpack.c.l.b16 %v194
      %v464 = vunpack.c.l.b16 %v195
      %v465 = vunpack.c.l.b16 %v196
      %v466 = vunpack.c.l.b16 %v197
      %v467 = vunpack.c.l.b16 %v198
      %v468 = vunpack.c.l.b16 %v199
      %v469 = vunpack.c.l.b16 %v200
      %v470 = vunpack.c.l.b16 %v201
      %v471 = vunpack.c.l.b16 %v202
      %v472 = vunpack.c.l.b16 %v203
      %v473 = vunpack.c.l.b16 %v204
      %v474 = vunpack.c.l.b16 %v205
      %v475 = vunpack.c.l.b16 %v206
      %v476 = vunpack.c.l.b16 %v207
      %v477 = vunpack.c.l.b16 %v208
      %v478 = vunpack.c.l.b16 %v209
      %v479 = vunpack.c.l.b16 %v210
      %v480 = vunpack.c.l.b16 %v211
      %v481 = vunpack.c.l.b16 %v212
      %v482 = vunpack.c.l.b16 %v213
      %v483 = vunpack.c.l.b16 %v214
      %v484 = vunpack.c.l.b16 %v215
      %v485 = vunpack.c.l.b16 %v216
      %v486 = vunpack.c.l.b16 %v217
      %v487 = vunpack.c.l.b16 %v218
      %v488 = vunpack.c.l.b16 %v219
      %v489 = vunpack.c.l.b16 %v220
      %v490 = vunpack.c.l.b16 %v221
      %v491 = vunpack.c.l.b16 %v222
      %v492 = vunpack.c.l.b16 %v223
      %v493 = vunpack.c.l.b16 %v224
      %v494 = vunpack.c.l.b16 %v225
      %v495 = vunpack.c.l.b16 %v226
      %v496 = vunpack.c.l.b16 %v227
      %v497 = vunpack.c.l.b16 %v228
      %v498 = vunpack.c.l.b16 %v229
      %v499 = vunpack.c.l.b16 %v230
      %v500 = vunpack.c.l.b16 %v231
      %v501 = vunpack.c.l.b16 %v232
      %v502 = vunpack.c.l.b16 %v233
      %v503 = vunpack.c.l.b16 %v234
      %v504 = vunpack.c.l.b16 %v235
      %v505 = vunpack.c.l.b16 %v236
      %v506 = vunpack.c.l.b16 %v237
      %v507 = vunpack.c.l.b16 %v238
      %v508 = vunpack.c.l.b16 %v239
      %v509 = vunpack.c.l.b16 %v240
      %v510 = vunpack.c.l.b16 %v241
      %v511 = vunpack.c.l.b16 %v242
      %v512 = vunpack.c.l.b16 %v243
      %v513 = vunpack.c.l.b16 %v244
      %v514 = vunpack.c.l.b16 %v245
      %v515 = vunpack.c.l.b16 %v246
      %v516 = vunpack.c.l.b16 %v247
      %v517 = vunpack.c.l.b16 %v248
      %v518 = vunpack.c.l.b16 %v249
      %v519 = vunpack.c.l.b16 %v250
      %v520 = vunpack.c.l.b16 %v251
      %v521 = vunpack.c.l.b16 %v252
      %v522 = vunpack.c.l.b16 %v253
      %v523 = vunpack.c.l.b16 %v254
      %v524 = vunpack.c.l.b16 %v255
      %v525 = vunpack.c.l.b16 %v256
      %v526 = vunpack.c.l.b16 %v257
      %v527 = vunpack.c.l.b16 %v258
      %v528 = vunpack.c.l.b16 %v259
      %v529 = vunpack.c.l.b16 %v260
      %v530 = vunpack.c.l.b16 %v261
      %v531 = vunpack.c.l.b16 %v262
      %v532 = vunpack.c.l.b16 %v263
      %v533 = vunpack.c.l.b16 %v264
      %v534 = vunpack.c.l.b16 %v265
      %v535 = vunpack.c.l.b16 %v266
      %v536 = vunpack.c.l.b16 %v267
      %v537 = vunpack.c.l.b16 %v268
      %v538 = vunpack.c.l.b16 %v269
      %v539 = vunpack.c.l.b16 %v270
      %v540 = vunpack.c.l.b16 %v271
      %v541 = vunpack.c.l.b16 %v272
      %v542 = vunpack.c.l.b16 %v273
      %v543 = vunpack.c.l.b16 %v274
      %v544 = vunpack.c.l.b16 %v275
      %v545 = vunpack.c.l.b16 %v276
      %v546 = vunpack.c.l.b16 %v277
      %v547 = vunpack.c.l.b16 %v278
      %v548 = vunpack.c.l.b16 %v279
      %v549 = vunpack.c.l.b16 %v280
      %v550 = vunpack.c.l.b16 %v281
      %v551 = vunpack.c.l.b16 %v282
      %v552 = vunpack.c.l.b16 %v283
      %v553 = vunpack.c.l.b16 %v284
      %v554 = vunpack.c.l.b16 %v285
      %v555 = vunpack.c.l.b16 %v286
      %v556 = vunpack.c.l.b16 %v287
      %v557 = vunpack.c.l.b16 %v288
      %v558 = vunpack.c.l.b16 %v289
      %v559 = vunpack.c.l.b16 %v290
      %v560 = vunpack.c.l.b16 %v291
      %v561 = vunpack.c.l.b16 %v292
      %v562 = vunpack.c.l.b16 %v293
      %v563 = vunpack.c.l.b16 %v294
      %v564 = vunpack.c.l.b16 %v295
      %v565 = vunpack.c.l.b16 %v296
      %v566 = vunpack.c.l.b16 %v297
      %v567 = vunpack.c.l.b16 %v298
      %v568 = vunpack.c.l.b16 %v299
      %v569 = vunpack.c.l.b16 %v300
      %v570 = vunpack.c.l.b16 %v301
      %v571 = vunpack.c.l.b16 %v302
      %v572 = vpack.c.b16 %v445, %v444
      %v573 = vpack.c.b16 %v447, %v446
      %v574 = vpack.c.b16 %v449, %v448
      %v575 = vpack.c.b16 %v451, %v450
      %v576 = vpack.c.b16 %v453, %v452
      %v577 = vpack.c.b16 %v455, %v454
      %v578 = vpack.c.b16 %v457, %v456
      %v579 = vpack.c.b16 %v459, %v458
      %v580 = vpack.c.b16 %v461, %v460
      %v581 = vpack.c.b16 %v463, %v462
      %v582 = vpack.c.b16 %v465, %v464
      %v583 = vpack.c.b16 %v467, %v466
      %v584 = vpack.c.b16 %v469, %v468
      %v585 = vpack.c.b16 %v471, %v470
      %v586 = vpack.c.b16 %v473, %v472
      %v587 = vpack.c.b16 %v475, %v474
      %v588 = vpack.c.b16 %v477, %v476
      %v589 = vpack.c.b16 %v479, %v478
      %v590 = vpack.c.b16 %v481, %v480
      %v591 = vpack.c.b16 %v483, %v482
      %v592 = vpack.c.b16 %v485, %v484
      %v593 = vpack.c.b16 %v487, %v486
      %v594 = vpack.c.b16 %v489, %v488
      %v595 = vpack.c.b16 %v491, %v490
      %v596 = vpack.c.b16 %v493, %v492
      %v597 = vpack.c.b16 %v495, %v494
      %v598 = vpack.c.b16 %v497, %v496
      %v599 = vpack.c.b16 %v499, %v498
      %v600 = vpack.c.b16 %v501, %v500
      %v601 = vpack.c.b16 %v503, %v502
      %v602 = vpack.c.b16 %v505, %v504
      %v603 = vpack.c.b16 %v507, %v506
      %v604 = vpack.c.b16 %v509, %v508
      %v605 = vpack.c.b16 %v511, %v510
      %v606 = vpack.c.b16 %v513, %v512
      %v607 = vpack.c.b16 %v515, %v514
      %v608 = vpack.c.b16 %v517, %v516
      %v609 = vpack.c.b16 %v519, %v518
      %v610 = vpack.c.b16 %v521, %v520
      %v611 = vpack.c.b16 %v523, %v522
      %v612 = vpack.c.b16 %v525, %v524
      %v613 = vpack.c.b16 %v527, %v526
      %v614 = vpack.c.b16 %v529, %v528
      %v615 = vpack.c.b16 %v531, %v530
      %v616 = vpack.c.b16 %v533, %v532
      %v617 = vpack.c.b16 %v535, %v534
      %v618 = vpack.c.b16 %v537, %v536
      %v619 = vpack.c.b16 %v539, %v538
      %v620 = vpack.c.b16 %v541, %v540
      %v621 = vpack.c.b16 %v543, %v542
      %v622 = vpack.c.b16 %v545, %v544
      %v623 = vpack.c.b16 %v547, %v546
      %v624 = vpack.c.b16 %v549, %v548
      %v625 = vpack.c.b16 %v551, %v550
      %v626 = vpack.c.b16 %v553, %v552
      %v627 = vpack.c.b16 %v555, %v554
      %v628 = vpack.c.b16 %v557, %v556
      %v629 = vpack.c.b16 %v559, %v558
      %v630 = vpack.c.b16 %v561, %v560
      %v631 = vpack.c.b16 %v563, %v562
      %v632 = vpack.c.b16 %v565, %v564
      %v633 = vpack.c.b16 %v567, %v566
      %v634 = vpack.c.b16 %v569, %v568
      %v635 = vpack.c.b16 %v571, %v570
      %v642 = vunpack.c.l.b16 %v303
      %v643 = vunpack.c.l.b16 %v304
      %v644 = vunpack.c.l.b16 %v305
      %v645 = vunpack.c.l.b16 %v306
      %v646 = vunpack.c.l.b16 %v307
      %v647 = vunpack.c.l.b16 %v308
      %v648 = vpack.c.b16 %v643, %v642
      %v649 = vpack.c.b16 %v645, %v644
      %v650 = vpack.c.b16 %v647, %v646
      %vm654 = vcmask 392192
      %v656 = vsel %vm654, %v572, 0
      %v659 = vsel %vm654, %v573, 0
      %v662 = vsel %vm654, %v574, 0
      %v665 = vsel %vm654, %v575, 0
      %v668 = vsel %vm654, %v576, 0
      %v671 = vsel %vm654, %v577, 0
      %v674 = vsel %vm654, %v578, 0
      %v677 = vsel %vm654, %v579, 0
      %v680 = vsel %vm654, %v580, 0
      %v683 = vsel %vm654, %v581, 0
      %v686 = vsel %vm654, %v582, 0
      %v689 = vsel %vm654, %v583, 0
      %v692 = vsel %vm654, %v584, 0
      %v695 = vsel %vm654, %v585, 0
      %v698 = vsel %vm654, %v586, 0
      %v701 = vsel %vm654, %v587, 0
      %v704 = vsel %vm654, %v588, 0
      %v707 = vsel %vm654, %v589, 0
      %v710 = vsel %vm654, %v590, 0
      %v713 = vsel %vm654, %v591, 0
      %v716 = vsel %vm654, %v592, 0
      %v719 = vsel %vm654, %v593, 0
      %v722 = vsel %vm654, %v594, 0
      %v725 = vsel %vm654, %v595, 0
      %v728 = vsel %vm654, %v596, 0
      %v731 = vsel %vm654, %v597, 0
      %v734 = vsel %vm654, %v598, 0
      %v737 = vsel %vm654, %v599, 0
      %v740 = vsel %vm654, %v600, 0
      %v743 = vsel %vm654, %v601, 0
      %v746 = vsel %vm654, %v602, 0
      %v749 = vsel %vm654, %v603, 0
      %v752 = vsel %vm654, %v604, 0
      %v755 = vsel %vm654, %v605, 0
      %v758 = vsel %vm654, %v606, 0
      %v761 = vsel %vm654, %v607, 0
      %v764 = vsel %vm654, %v608, 0
      %v767 = vsel %vm654, %v609, 0
      %v770 = vsel %vm654, %v610, 0
      %v773 = vsel %vm654, %v611, 0
      %v776 = vsel %vm654, %v612, 0
      %v779 = vsel %vm654, %v613, 0
      %v782 = vsel %vm654, %v614, 0
      %v785 = vsel %vm654, %v615, 0
      %v788 = vsel %vm654, %v616, 0
      %v791 = vsel %vm654, %v617, 0
      %v794 = vsel %vm654, %v618, 0
      %v797 = vsel %vm654, %v619, 0
      %v800 = vsel %vm654, %v620, 0
      %v803 = vsel %vm654, %v621, 0
      %v806 = vsel %vm654, %v622, 0
      %v809 = vsel %vm654, %v623, 0
      %v812 = vsel %vm654, %v624, 0
      %v815 = vsel %vm654, %v625, 0
      %v818 = vsel %vm654, %v626, 0
      %v821 = vsel %vm654, %v627, 0
      %v824 = vsel %vm654, %v628, 0
      %v827 = vsel %vm654, %v629, 0
      %v830 = vsel %vm654, %v630, 0
      %v833 = vsel %vm654, %v631, 0
      %v836 = vsel %vm654, %v632, 0
      %v839 = vsel %vm654, %v633, 0
      %v842 = vsel %vm654, %v634, 0
      %v845 = vsel %vm654, %v635, 0
      %847 = vmatprep.subr.bf16.mxu0 0
      %848 = vmatpush1.bf16.msra.mxu0 %v648
      %849 = vmatprep.subr.bf16.mxu0 0
      %850 = vmatpush1.bf16.msra.mxu0 %v649
      %851 = vmatprep.subr.bf16.mxu0 0
      %852 = vmatpush1.bf16.msra.mxu0 %v650
      %853 = vmatprep.subr.bf16.mxu0 0
      %854 = vmatpush1.bf16.msra.mxu0 0
      %855 = vmatprep.subr.bf16.mxu0 0
      %856 = vmatpush1.bf16.msra.mxu0 0
      %857 = vmatprep.subr.bf16.mxu0 0
      %858 = vmatpush1.bf16.msra.mxu0 0
      %859 = vmatprep.subr.bf16.mxu0 0
      %860 = vmatpush1.bf16.msra.mxu0 0
      %861 = vmatprep.subr.bf16.mxu0 0
      %862 = vmatpush1.bf16.msra.mxu0 0
      %863 = vmatprep.subr.bf16.mxu0 0
      %864 = vmatpush1.bf16.msra.mxu0 0
      %865 = vmatprep.subr.bf16.mxu0 0
      %866 = vmatpush1.bf16.msra.mxu0 0
      %867 = vmatprep.subr.bf16.mxu0 0
      %868 = vmatpush1.bf16.msra.mxu0 0
      %869 = vmatprep.subr.bf16.mxu0 0
      %870 = vmatpush1.bf16.msra.mxu0 0
      %871 = vmatprep.subr.bf16.mxu0 0
      %872 = vmatpush1.bf16.msra.mxu0 0
      %873 = vmatprep.subr.bf16.mxu0 0
      %874 = vmatpush1.bf16.msra.mxu0 0
      %875 = vmatprep.subr.bf16.mxu0 0
      %876 = vmatpush1.bf16.msra.mxu0 0
      %877 = vmatprep.subr.bf16.mxu0 0
      %878 = vmatpush1.bf16.msra.mxu0 0
      %879 = vmatprep.mubr.bf16.mxu0 0
      %880 = vmatmul.mubr.bf16.gmra.mrb[0].mxu0 %v656
      %v881 = vpop.f32.mrb[0].mxu0
      %v882 = vadd.f32 %v314, %v881
      %v883 = vpop.f32.mrb[0].mxu0
      %v884 = vpop.f32.mrb[0].mxu0
      %v885 = vadd.f32 %v314, %v884
      %v886 = vpop.f32.mrb[0].mxu0
      %887 = vmatprep.mubr.bf16.mxu0 0
      %888 = vmatmul.mubr.bf16.gmra.mrb[0].mxu0 %v659
      %v889 = vpop.f32.mrb[0].mxu0
      %v890 = vadd.f32 %v314, %v889
      %v891 = vpop.f32.mrb[0].mxu0
      %v892 = vpop.f32.mrb[0].mxu0
      %v893 = vadd.f32 %v314, %v892
      %v894 = vpop.f32.mrb[0].mxu0
      %895 = vmatprep.mubr.bf16.mxu0 0
      %896 = vmatmul.mubr.bf16.gmra.mrb[0].mxu0 %v662
      %v897 = vpop.f32.mrb[0].mxu0
      %v898 = vadd.f32 %v314, %v897
      %v899 = vpop.f32.mrb[0].mxu0
      %v900 = vpop.f32.mrb[0].mxu0
      %v901 = vadd.f32 %v314, %v900
      %v902 = vpop.f32.mrb[0].mxu0
      %903 = vmatprep.mubr.bf16.mxu0 0
      %904 = vmatmul.mubr.bf16.gmra.mrb[0].mxu0 %v665
      %v905 = vpop.f32.mrb[0].mxu0
      %v906 = vadd.f32 %v314, %v905
      %v907 = vpop.f32.mrb[0].mxu0
      %v908 = vpop.f32.mrb[0].mxu0
      %v909 = vadd.f32 %v314, %v908
      %v910 = vpop.f32.mrb[0].mxu0
      %911 = vmatprep.mubr.bf16.mxu0 0
      %912 = vmatmul.mubr.bf16.gmra.mrb[0].mxu0 %v668
      %v913 = vpop.f32.mrb[0].mxu0
      %v914 = vadd.f32 %v314, %v913
      %v915 = vpop.f32.mrb[0].mxu0
      %v916 = vpop.f32.mrb[0].mxu0
      %v917 = vadd.f32 %v314, %v916
      %v918 = vpop.f32.mrb[0].mxu0
      %919 = vmatprep.mubr.bf16.mxu0 0
      %920 = vmatmul.mubr.bf16.gmra.mrb[0].mxu0 %v671
      %v921 = vpop.f32.mrb[0].mxu0
      %v922 = vadd.f32 %v314, %v921
      %v923 = vpop.f32.mrb[0].mxu0
      %v924 = vpop.f32.mrb[0].mxu0
      %v925 = vadd.f32 %v314, %v924
      %v926 = vpop.f32.mrb[0].mxu0
      %927 = vmatprep.mubr.bf16.mxu0 0
      %928 = vmatmul.mubr.bf16.gmra.mrb[0].mxu0 %v674
      %v929 = vpop.f32.mrb[0].mxu0
      %v930 = vadd.f32 %v314, %v929
      %v931 = vpop.f32.mrb[0].mxu0
      %v932 = vpop.f32.mrb[0].mxu0
      %v933 = vadd.f32 %v314, %v932
      %v934 = vpop.f32.mrb[0].mxu0
      %935 = vmatprep.mubr.bf16.mxu0 0
      %936 = vmatmul.mubr.bf16.gmra.mrb[0].mxu0 %v677
      %v937 = vpop.f32.mrb[0].mxu0
      %v938 = vadd.f32 %v314, %v937
      %v939 = vpop.f32.mrb[0].mxu0
      %v940 = vpop.f32.mrb[0].mxu0
      %v941 = vadd.f32 %v314, %v940
      %v942 = vpop.f32.mrb[0].mxu0
      %943 = vmatprep.mubr.bf16.mxu0 0
      %944 = vmatmul.mubr.bf16.gmra.mrb[0].mxu0 %v680
      %v945 = vpop.f32.mrb[0].mxu0
      %v946 = vadd.f32 %v314, %v945
      %v947 = vpop.f32.mrb[0].mxu0
      %v948 = vpop.f32.mrb[0].mxu0
      %v949 = vadd.f32 %v314, %v948
      %v950 = vpop.f32.mrb[0].mxu0
      %951 = vmatprep.mubr.bf16.mxu0 0
      %952 = vmatmul.mubr.bf16.gmra.mrb[0].mxu0 %v683
      %v953 = vpop.f32.mrb[0].mxu0
      %v954 = vadd.f32 %v314, %v953
      %v955 = vpop.f32.mrb[0].mxu0
      %v956 = vpop.f32.mrb[0].mxu0
      %v957 = vadd.f32 %v314, %v956
      %v958 = vpop.f32.mrb[0].mxu0
      %959 = vmatprep.mubr.bf16.mxu0 0
      %960 = vmatmul.mubr.bf16.gmra.mrb[0].mxu0 %v686
      %v961 = vpop.f32.mrb[0].mxu0
      %v962 = vadd.f32 %v314, %v961
      %v963 = vpop.f32.mrb[0].mxu0
      %v964 = vpop.f32.mrb[0].mxu0
      %v965 = vadd.f32 %v314, %v964
      %v966 = vpop.f32.mrb[0].mxu0
      %967 = vmatprep.mubr.bf16.mxu0 0
      %968 = vmatmul.mubr.bf16.gmra.mrb[0].mxu0 %v689
      %v969 = vpop.f32.mrb[0].mxu0
      %v970 = vadd.f32 %v314, %v969
      %v971 = vpop.f32.mrb[0].mxu0
      %v972 = vpop.f32.mrb[0].mxu0
      %v973 = vadd.f32 %v314, %v972
      %v974 = vpop.f32.mrb[0].mxu0
      %975 = vmatprep.mubr.bf16.mxu0 0
      %976 = vmatmul.mubr.bf16.gmra.mrb[0].mxu0 %v692
      %v977 = vpop.f32.mrb[0].mxu0
      %v978 = vadd.f32 %v314, %v977
      %v979 = vpop.f32.mrb[0].mxu0
      %v980 = vpop.f32.mrb[0].mxu0
      %v981 = vadd.f32 %v314, %v980
      %v982 = vpop.f32.mrb[0].mxu0
      %983 = vmatprep.mubr.bf16.mxu0 0
      %984 = vmatmul.mubr.bf16.gmra.mrb[0].mxu0 %v695
      %v985 = vpop.f32.mrb[0].mxu0
      %v986 = vadd.f32 %v314, %v985
      %v987 = vpop.f32.mrb[0].mxu0
      %v988 = vpop.f32.mrb[0].mxu0
      %v989 = vadd.f32 %v314, %v988
      %v990 = vpop.f32.mrb[0].mxu0
      %991 = vmatprep.mubr.bf16.mxu0 0
      %992 = vmatmul.mubr.bf16.gmra.mrb[0].mxu0 %v698
      %v993 = vpop.f32.mrb[0].mxu0
      %v994 = vadd.f32 %v314, %v993
      %v995 = vpop.f32.mrb[0].mxu0
      %v996 = vpop.f32.mrb[0].mxu0
      %v997 = vadd.f32 %v314, %v996
      %v998 = vpop.f32.mrb[0].mxu0
      %999 = vmatprep.mubr.bf16.mxu0 0
      %1000 = vmatmul.mubr.bf16.gmra.mrb[0].mxu0 %v701
      %v1001 = vpop.f32.mrb[0].mxu0
      %v1002 = vadd.f32 %v314, %v1001
      %v1003 = vpop.f32.mrb[0].mxu0
      %v1004 = vpop.f32.mrb[0].mxu0
      %v1005 = vadd.f32 %v314, %v1004
      %v1006 = vpop.f32.mrb[0].mxu0
      %1007 = vmatprep.mubr.bf16.mxu0 0
      %1008 = vmatmul.mubr.bf16.gmra.mrb[0].mxu0 %v704
      %v1009 = vpop.f32.mrb[0].mxu0
      %v1010 = vadd.f32 %v314, %v1009
      %v1011 = vpop.f32.mrb[0].mxu0
      %v1012 = vpop.f32.mrb[0].mxu0
      %v1013 = vadd.f32 %v314, %v1012
      %v1014 = vpop.f32.mrb[0].mxu0
      %1015 = vmatprep.mubr.bf16.mxu0 0
      %1016 = vmatmul.mubr.bf16.gmra.mrb[0].mxu0 %v707
      %v1017 = vpop.f32.mrb[0].mxu0
      %v1018 = vadd.f32 %v314, %v1017
      %v1019 = vpop.f32.mrb[0].mxu0
      %v1020 = vpop.f32.mrb[0].mxu0
      %v1021 = vadd.f32 %v314, %v1020
      %v1022 = vpop.f32.mrb[0].mxu0
      %1023 = vmatprep.mubr.bf16.mxu0 0
      %1024 = vmatmul.mubr.bf16.gmra.mrb[0].mxu0 %v710
      %v1025 = vpop.f32.mrb[0].mxu0
      %v1026 = vadd.f32 %v314, %v1025
      %v1027 = vpop.f32.mrb[0].mxu0
      %v1028 = vpop.f32.mrb[0].mxu0
      %v1029 = vadd.f32 %v314, %v1028
      %v1030 = vpop.f32.mrb[0].mxu0
      %1031 = vmatprep.mubr.bf16.mxu0 0
      %1032 = vmatmul.mubr.bf16.gmra.mrb[0].mxu0 %v713
      %v1033 = vpop.f32.mrb[0].mxu0
      %v1034 = vadd.f32 %v314, %v1033
      %v1035 = vpop.f32.mrb[0].mxu0
      %v1036 = vpop.f32.mrb[0].mxu0
      %v1037 = vadd.f32 %v314, %v1036
      %v1038 = vpop.f32.mrb[0].mxu0
      %1039 = vmatprep.mubr.bf16.mxu0 0
      %1040 = vmatmul.mubr.bf16.gmra.mrb[0].mxu0 %v716
      %v1041 = vpop.f32.mrb[0].mxu0
      %v1042 = vadd.f32 %v314, %v1041
      %v1043 = vpop.f32.mrb[0].mxu0
      %v1044 = vpop.f32.mrb[0].mxu0
      %v1045 = vadd.f32 %v314, %v1044
      %v1046 = vpop.f32.mrb[0].mxu0
      %1047 = vmatprep.mubr.bf16.mxu0 0
      %1048 = vmatmul.mubr.bf16.gmra.mrb[0].mxu0 %v719
      %v1049 = vpop.f32.mrb[0].mxu0
      %v1050 = vadd.f32 %v314, %v1049
      %v1051 = vpop.f32.mrb[0].mxu0
      %v1052 = vpop.f32.mrb[0].mxu0
      %v1053 = vadd.f32 %v314, %v1052
      %v1054 = vpop.f32.mrb[0].mxu0
      %1055 = vmatprep.mubr.bf16.mxu0 0
      %1056 = vmatmul.mubr.bf16.gmra.mrb[0].mxu0 %v722
      %v1057 = vpop.f32.mrb[0].mxu0
      %v1058 = vadd.f32 %v314, %v1057
      %v1059 = vpop.f32.mrb[0].mxu0
      %v1060 = vpop.f32.mrb[0].mxu0
      %v1061 = vadd.f32 %v314, %v1060
      %v1062 = vpop.f32.mrb[0].mxu0
      %1063 = vmatprep.mubr.bf16.mxu0 0
      %1064 = vmatmul.mubr.bf16.gmra.mrb[0].mxu0 %v725
      %v1065 = vpop.f32.mrb[0].mxu0
      %v1066 = vadd.f32 %v314, %v1065
      %v1067 = vpop.f32.mrb[0].mxu0
      %v1068 = vpop.f32.mrb[0].mxu0
      %v1069 = vadd.f32 %v314, %v1068
      %v1070 = vpop.f32.mrb[0].mxu0
      %1071 = vmatprep.mubr.bf16.mxu0 0
      %1072 = vmatmul.mubr.bf16.gmra.mrb[0].mxu0 %v728
      %v1073 = vpop.f32.mrb[0].mxu0
      %v1074 = vadd.f32 %v314, %v1073
      %v1075 = vpop.f32.mrb[0].mxu0
      %v1076 = vpop.f32.mrb[0].mxu0
      %v1077 = vadd.f32 %v314, %v1076
      %v1078 = vpop.f32.mrb[0].mxu0
      %1079 = vmatprep.mubr.bf16.mxu0 0
      %1080 = vmatmul.mubr.bf16.gmra.mrb[0].mxu0 %v731
      %v1081 = vpop.f32.mrb[0].mxu0
      %v1082 = vadd.f32 %v314, %v1081
      %v1083 = vpop.f32.mrb[0].mxu0
      %v1084 = vpop.f32.mrb[0].mxu0
      %v1085 = vadd.f32 %v314, %v1084
      %v1086 = vpop.f32.mrb[0].mxu0
      %1087 = vmatprep.mubr.bf16.mxu0 0
      %1088 = vmatmul.mubr.bf16.gmra.mrb[0].mxu0 %v734
      %v1089 = vpop.f32.mrb[0].mxu0
      %v1090 = vadd.f32 %v314, %v1089
      %v1091 = vpop.f32.mrb[0].mxu0
      %v1092 = vpop.f32.mrb[0].mxu0
      %v1093 = vadd.f32 %v314, %v1092
      %v1094 = vpop.f32.mrb[0].mxu0
      %1095 = vmatprep.mubr.bf16.mxu0 0
      %1096 = vmatmul.mubr.bf16.gmra.mrb[0].mxu0 %v737
      %v1097 = vpop.f32.mrb[0].mxu0
      %v1098 = vadd.f32 %v314, %v1097
      %v1099 = vpop.f32.mrb[0].mxu0
      %v1100 = vpop.f32.mrb[0].mxu0
      %v1101 = vadd.f32 %v314, %v1100
      %v1102 = vpop.f32.mrb[0].mxu0
      %1103 = vmatprep.mubr.bf16.mxu0 0
      %1104 = vmatmul.mubr.bf16.gmra.mrb[0].mxu0 %v740
      %v1105 = vpop.f32.mrb[0].mxu0
      %v1106 = vadd.f32 %v314, %v1105
      %v1107 = vpop.f32.mrb[0].mxu0
      %v1108 = vpop.f32.mrb[0].mxu0
      %v1109 = vadd.f32 %v314, %v1108
      %v1110 = vpop.f32.mrb[0].mxu0
      %1111 = vmatprep.mubr.bf16.mxu0 0
      %1112 = vmatmul.mubr.bf16.gmra.mrb[0].mxu0 %v743
      %v1113 = vpop.f32.mrb[0].mxu0
      %v1114 = vadd.f32 %v314, %v1113
      %v1115 = vpop.f32.mrb[0].mxu0
      %v1116 = vpop.f32.mrb[0].mxu0
      %v1117 = vadd.f32 %v314, %v1116
      %v1118 = vpop.f32.mrb[0].mxu0
      %1119 = vmatprep.mubr.bf16.mxu0 0
      %1120 = vmatmul.mubr.bf16.gmra.mrb[0].mxu0 %v746
      %v1121 = vpop.f32.mrb[0].mxu0
      %v1122 = vadd.f32 %v314, %v1121
      %v1123 = vpop.f32.mrb[0].mxu0
      %v1124 = vpop.f32.mrb[0].mxu0
      %v1125 = vadd.f32 %v314, %v1124
      %v1126 = vpop.f32.mrb[0].mxu0
      %1127 = vmatprep.mubr.bf16.mxu0 0
      %1128 = vmatmul.mubr.bf16.gmra.mrb[0].mxu0 %v749
      %v1129 = vpop.f32.mrb[0].mxu0
      %v1130 = vadd.f32 %v314, %v1129
      %v1131 = vpop.f32.mrb[0].mxu0
      %v1132 = vpop.f32.mrb[0].mxu0
      %v1133 = vadd.f32 %v314, %v1132
      %v1134 = vpop.f32.mrb[0].mxu0
      %1135 = vmatprep.mubr.bf16.mxu0 0
      %1136 = vmatmul.mubr.bf16.gmra.mrb[0].mxu0 %v752
      %v1137 = vpop.f32.mrb[0].mxu0
      %v1138 = vadd.f32 %v314, %v1137
      %v1139 = vpop.f32.mrb[0].mxu0
      %v1140 = vpop.f32.mrb[0].mxu0
      %v1141 = vadd.f32 %v314, %v1140
      %v1142 = vpop.f32.mrb[0].mxu0
      %1143 = vmatprep.mubr.bf16.mxu0 0
      %1144 = vmatmul.mubr.bf16.gmra.mrb[0].mxu0 %v755
      %v1145 = vpop.f32.mrb[0].mxu0
      %v1146 = vadd.f32 %v314, %v1145
      %v1147 = vpop.f32.mrb[0].mxu0
      %v1148 = vpop.f32.mrb[0].mxu0
      %v1149 = vadd.f32 %v314, %v1148
      %v1150 = vpop.f32.mrb[0].mxu0
      %1151 = vmatprep.mubr.bf16.mxu0 0
      %1152 = vmatmul.mubr.bf16.gmra.mrb[0].mxu0 %v758
      %v1153 = vpop.f32.mrb[0].mxu0
      %v1154 = vadd.f32 %v314, %v1153
      %v1155 = vpop.f32.mrb[0].mxu0
      %v1156 = vpop.f32.mrb[0].mxu0
      %v1157 = vadd.f32 %v314, %v1156
      %v1158 = vpop.f32.mrb[0].mxu0
      %1159 = vmatprep.mubr.bf16.mxu0 0
      %1160 = vmatmul.mubr.bf16.gmra.mrb[0].mxu0 %v761
      %v1161 = vpop.f32.mrb[0].mxu0
      %v1162 = vadd.f32 %v314, %v1161
      %v1163 = vpop.f32.mrb[0].mxu0
      %v1164 = vpop.f32.mrb[0].mxu0
      %v1165 = vadd.f32 %v314, %v1164
      %v1166 = vpop.f32.mrb[0].mxu0
      %1167 = vmatprep.mubr.bf16.mxu0 0
      %1168 = vmatmul.mubr.bf16.gmra.mrb[0].mxu0 %v764
      %v1169 = vpop.f32.mrb[0].mxu0
      %v1170 = vadd.f32 %v314, %v1169
      %v1171 = vpop.f32.mrb[0].mxu0
      %v1172 = vpop.f32.mrb[0].mxu0
      %v1173 = vadd.f32 %v314, %v1172
      %v1174 = vpop.f32.mrb[0].mxu0
      %1175 = vmatprep.mubr.bf16.mxu0 0
      %1176 = vmatmul.mubr.bf16.gmra.mrb[0].mxu0 %v767
      %v1177 = vpop.f32.mrb[0].mxu0
      %v1178 = vadd.f32 %v314, %v1177
      %v1179 = vpop.f32.mrb[0].mxu0
      %v1180 = vpop.f32.mrb[0].mxu0
      %v1181 = vadd.f32 %v314, %v1180
      %v1182 = vpop.f32.mrb[0].mxu0
      %1183 = vmatprep.mubr.bf16.mxu0 0
      %1184 = vmatmul.mubr.bf16.gmra.mrb[0].mxu0 %v770
      %v1185 = vpop.f32.mrb[0].mxu0
      %v1186 = vadd.f32 %v314, %v1185
      %v1187 = vpop.f32.mrb[0].mxu0
      %v1188 = vpop.f32.mrb[0].mxu0
      %v1189 = vadd.f32 %v314, %v1188
      %v1190 = vpop.f32.mrb[0].mxu0
      %1191 = vmatprep.mubr.bf16.mxu0 0
      %1192 = vmatmul.mubr.bf16.gmra.mrb[0].mxu0 %v773
      %v1193 = vpop.f32.mrb[0].mxu0
      %v1194 = vadd.f32 %v314, %v1193
      %v1195 = vpop.f32.mrb[0].mxu0
      %v1196 = vpop.f32.mrb[0].mxu0
      %v1197 = vadd.f32 %v314, %v1196
      %v1198 = vpop.f32.mrb[0].mxu0
      %1199 = vmatprep.mubr.bf16.mxu0 0
      %1200 = vmatmul.mubr.bf16.gmra.mrb[0].mxu0 %v776
      %v1201 = vpop.f32.mrb[0].mxu0
      %v1202 = vadd.f32 %v314, %v1201
      %v1203 = vpop.f32.mrb[0].mxu0
      %v1204 = vpop.f32.mrb[0].mxu0
      %v1205 = vadd.f32 %v314, %v1204
      %v1206 = vpop.f32.mrb[0].mxu0
      %1207 = vmatprep.mubr.bf16.mxu0 0
      %1208 = vmatmul.mubr.bf16.gmra.mrb[0].mxu0 %v779
      %v1209 = vpop.f32.mrb[0].mxu0
      %v1210 = vadd.f32 %v314, %v1209
      %v1211 = vpop.f32.mrb[0].mxu0
      %v1212 = vpop.f32.mrb[0].mxu0
      %v1213 = vadd.f32 %v314, %v1212
      %v1214 = vpop.f32.mrb[0].mxu0
      %1215 = vmatprep.mubr.bf16.mxu0 0
      %1216 = vmatmul.mubr.bf16.gmra.mrb[0].mxu0 %v782
      %v1217 = vpop.f32.mrb[0].mxu0
      %v1218 = vadd.f32 %v314, %v1217
      %v1219 = vpop.f32.mrb[0].mxu0
      %v1220 = vpop.f32.mrb[0].mxu0
      %v1221 = vadd.f32 %v314, %v1220
      %v1222 = vpop.f32.mrb[0].mxu0
      %1223 = vmatprep.mubr.bf16.mxu0 0
      %1224 = vmatmul.mubr.bf16.gmra.mrb[0].mxu0 %v785
      %v1225 = vpop.f32.mrb[0].mxu0
      %v1226 = vadd.f32 %v314, %v1225
      %v1227 = vpop.f32.mrb[0].mxu0
      %v1228 = vpop.f32.mrb[0].mxu0
      %v1229 = vadd.f32 %v314, %v1228
      %v1230 = vpop.f32.mrb[0].mxu0
      %1231 = vmatprep.mubr.bf16.mxu0 0
      %1232 = vmatmul.mubr.bf16.gmra.mrb[0].mxu0 %v788
      %v1233 = vpop.f32.mrb[0].mxu0
      %v1234 = vadd.f32 %v314, %v1233
      %v1235 = vpop.f32.mrb[0].mxu0
      %v1236 = vpop.f32.mrb[0].mxu0
      %v1237 = vadd.f32 %v314, %v1236
      %v1238 = vpop.f32.mrb[0].mxu0
      %1239 = vmatprep.mubr.bf16.mxu0 0
      %1240 = vmatmul.mubr.bf16.gmra.mrb[0].mxu0 %v791
      %v1241 = vpop.f32.mrb[0].mxu0
      %v1242 = vadd.f32 %v314, %v1241
      %v1243 = vpop.f32.mrb[0].mxu0
      %v1244 = vpop.f32.mrb[0].mxu0
      %v1245 = vadd.f32 %v314, %v1244
      %v1246 = vpop.f32.mrb[0].mxu0
      %1247 = vmatprep.mubr.bf16.mxu0 0
      %1248 = vmatmul.mubr.bf16.gmra.mrb[0].mxu0 %v794
      %v1249 = vpop.f32.mrb[0].mxu0
      %v1250 = vadd.f32 %v314, %v1249
      %v1251 = vpop.f32.mrb[0].mxu0
      %v1252 = vpop.f32.mrb[0].mxu0
      %v1253 = vadd.f32 %v314, %v1252
      %v1254 = vpop.f32.mrb[0].mxu0
      %1255 = vmatprep.mubr.bf16.mxu0 0
      %1256 = vmatmul.mubr.bf16.gmra.mrb[0].mxu0 %v797
      %v1257 = vpop.f32.mrb[0].mxu0
      %v1258 = vadd.f32 %v314, %v1257
      %v1259 = vpop.f32.mrb[0].mxu0
      %v1260 = vpop.f32.mrb[0].mxu0
      %v1261 = vadd.f32 %v314, %v1260
      %v1262 = vpop.f32.mrb[0].mxu0
      %1263 = vmatprep.mubr.bf16.mxu0 0
      %1264 = vmatmul.mubr.bf16.gmra.mrb[0].mxu0 %v800
      %v1265 = vpop.f32.mrb[0].mxu0
      %v1266 = vadd.f32 %v314, %v1265
      %v1267 = vpop.f32.mrb[0].mxu0
      %v1268 = vpop.f32.mrb[0].mxu0
      %v1269 = vadd.f32 %v314, %v1268
      %v1270 = vpop.f32.mrb[0].mxu0
      %1271 = vmatprep.mubr.bf16.mxu0 0
      %1272 = vmatmul.mubr.bf16.gmra.mrb[0].mxu0 %v803
      %v1273 = vpop.f32.mrb[0].mxu0
      %v1274 = vadd.f32 %v314, %v1273
      %v1275 = vpop.f32.mrb[0].mxu0
      %v1276 = vpop.f32.mrb[0].mxu0
      %v1277 = vadd.f32 %v314, %v1276
      %v1278 = vpop.f32.mrb[0].mxu0
      %1279 = vmatprep.mubr.bf16.mxu0 0
      %1280 = vmatmul.mubr.bf16.gmra.mrb[0].mxu0 %v806
      %v1281 = vpop.f32.mrb[0].mxu0
      %v1282 = vadd.f32 %v314, %v1281
      %v1283 = vpop.f32.mrb[0].mxu0
      %v1284 = vpop.f32.mrb[0].mxu0
      %v1285 = vadd.f32 %v314, %v1284
      %v1286 = vpop.f32.mrb[0].mxu0
      %1287 = vmatprep.mubr.bf16.mxu0 0
      %1288 = vmatmul.mubr.bf16.gmra.mrb[0].mxu0 %v809
      %v1289 = vpop.f32.mrb[0].mxu0
      %v1290 = vadd.f32 %v314, %v1289
      %v1291 = vpop.f32.mrb[0].mxu0
      %v1292 = vpop.f32.mrb[0].mxu0
      %v1293 = vadd.f32 %v314, %v1292
      %v1294 = vpop.f32.mrb[0].mxu0
      %1295 = vmatprep.mubr.bf16.mxu0 0
      %1296 = vmatmul.mubr.bf16.gmra.mrb[0].mxu0 %v812
      %v1297 = vpop.f32.mrb[0].mxu0
      %v1298 = vadd.f32 %v314, %v1297
      %v1299 = vpop.f32.mrb[0].mxu0
      %v1300 = vpop.f32.mrb[0].mxu0
      %v1301 = vadd.f32 %v314, %v1300
      %v1302 = vpop.f32.mrb[0].mxu0
      %1303 = vmatprep.mubr.bf16.mxu0 0
      %1304 = vmatmul.mubr.bf16.gmra.mrb[0].mxu0 %v815
      %v1305 = vpop.f32.mrb[0].mxu0
      %v1306 = vadd.f32 %v314, %v1305
      %v1307 = vpop.f32.mrb[0].mxu0
      %v1308 = vpop.f32.mrb[0].mxu0
      %v1309 = vadd.f32 %v314, %v1308
      %v1310 = vpop.f32.mrb[0].mxu0
      %1311 = vmatprep.mubr.bf16.mxu0 0
      %1312 = vmatmul.mubr.bf16.gmra.mrb[0].mxu0 %v818
      %v1313 = vpop.f32.mrb[0].mxu0
      %v1314 = vadd.f32 %v314, %v1313
      %v1315 = vpop.f32.mrb[0].mxu0
      %v1316 = vpop.f32.mrb[0].mxu0
      %v1317 = vadd.f32 %v314, %v1316
      %v1318 = vpop.f32.mrb[0].mxu0
      %1319 = vmatprep.mubr.bf16.mxu0 0
      %1320 = vmatmul.mubr.bf16.gmra.mrb[0].mxu0 %v821
      %v1321 = vpop.f32.mrb[0].mxu0
      %v1322 = vadd.f32 %v314, %v1321
      %v1323 = vpop.f32.mrb[0].mxu0
      %v1324 = vpop.f32.mrb[0].mxu0
      %v1325 = vadd.f32 %v314, %v1324
      %v1326 = vpop.f32.mrb[0].mxu0
      %1327 = vmatprep.mubr.bf16.mxu0 0
      %1328 = vmatmul.mubr.bf16.gmra.mrb[0].mxu0 %v824
      %v1329 = vpop.f32.mrb[0].mxu0
      %v1330 = vadd.f32 %v314, %v1329
      %v1331 = vpop.f32.mrb[0].mxu0
      %v1332 = vpop.f32.mrb[0].mxu0
      %v1333 = vadd.f32 %v314, %v1332
      %v1334 = vpop.f32.mrb[0].mxu0
      %1335 = vmatprep.mubr.bf16.mxu0 0
      %1336 = vmatmul.mubr.bf16.gmra.mrb[0].mxu0 %v827
      %v1337 = vpop.f32.mrb[0].mxu0
      %v1338 = vadd.f32 %v314, %v1337
      %v1339 = vpop.f32.mrb[0].mxu0
      %v1340 = vpop.f32.mrb[0].mxu0
      %v1341 = vadd.f32 %v314, %v1340
      %v1342 = vpop.f32.mrb[0].mxu0
      %1343 = vmatprep.mubr.bf16.mxu0 0
      %1344 = vmatmul.mubr.bf16.gmra.mrb[0].mxu0 %v830
      %v1345 = vpop.f32.mrb[0].mxu0
      %v1346 = vadd.f32 %v314, %v1345
      %v1347 = vpop.f32.mrb[0].mxu0
      %v1348 = vpop.f32.mrb[0].mxu0
      %v1349 = vadd.f32 %v314, %v1348
      %v1350 = vpop.f32.mrb[0].mxu0
      %1351 = vmatprep.mubr.bf16.mxu0 0
      %1352 = vmatmul.mubr.bf16.gmra.mrb[0].mxu0 %v833
      %v1353 = vpop.f32.mrb[0].mxu0
      %v1354 = vadd.f32 %v314, %v1353
      %v1355 = vpop.f32.mrb[0].mxu0
      %v1356 = vpop.f32.mrb[0].mxu0
      %v1357 = vadd.f32 %v314, %v1356
      %v1358 = vpop.f32.mrb[0].mxu0
      %1359 = vmatprep.mubr.bf16.mxu0 0
      %1360 = vmatmul.mubr.bf16.gmra.mrb[0].mxu0 %v836
      %v1361 = vpop.f32.mrb[0].mxu0
      %v1362 = vadd.f32 %v314, %v1361
      %v1363 = vpop.f32.mrb[0].mxu0
      %v1364 = vpop.f32.mrb[0].mxu0
      %v1365 = vadd.f32 %v314, %v1364
      %v1366 = vpop.f32.mrb[0].mxu0
      %1367 = vmatprep.mubr.bf16.mxu0 0
      %1368 = vmatmul.mubr.bf16.gmra.mrb[0].mxu0 %v839
      %v1369 = vpop.f32.mrb[0].mxu0
      %v1370 = vadd.f32 %v314, %v1369
      %v1371 = vpop.f32.mrb[0].mxu0
      %v1372 = vpop.f32.mrb[0].mxu0
      %v1373 = vadd.f32 %v314, %v1372
      %v1374 = vpop.f32.mrb[0].mxu0
      %1375 = vmatprep.mubr.bf16.mxu0 0
      %1376 = vmatmul.mubr.bf16.gmra.mrb[0].mxu0 %v842
      %v1377 = vpop.f32.mrb[0].mxu0
      %v1378 = vadd.f32 %v314, %v1377
      %v1379 = vpop.f32.mrb[0].mxu0
      %v1380 = vpop.f32.mrb[0].mxu0
      %v1381 = vadd.f32 %v314, %v1380
      %v1382 = vpop.f32.mrb[0].mxu0
      %1383 = vmatprep.mubr.bf16.mxu0 0
      %1384 = vmatmul.mubr.bf16.gmra.mrb[0].mxu0 %v845
      %v1385 = vpop.f32.mrb[0].mxu0
      %v1386 = vadd.f32 %v314, %v1385
      %v1387 = vpop.f32.mrb[0].mxu0
      %v1388 = vpop.f32.mrb[0].mxu0
      %v1389 = vadd.f32 %v314, %v1388
      %v1390 = vpop.f32.mrb[0].mxu0
      %1391 = vdwg.mxu0
      %vm1392 = vcmp.gt.f32.partialorder %v882, 0.0
      %vm1393 = vcmp.gt.f32.partialorder %v885, 0.0
      %vm1394 = vcmp.gt.f32.partialorder %v890, 0.0
      %vm1395 = vcmp.gt.f32.partialorder %v893, 0.0
      %vm1396 = vcmp.gt.f32.partialorder %v898, 0.0
      %vm1397 = vcmp.gt.f32.partialorder %v901, 0.0
      %vm1398 = vcmp.gt.f32.partialorder %v906, 0.0
      %vm1399 = vcmp.gt.f32.partialorder %v909, 0.0
      %vm1400 = vcmp.gt.f32.partialorder %v914, 0.0
      %vm1401 = vcmp.gt.f32.partialorder %v917, 0.0
      %vm1402 = vcmp.gt.f32.partialorder %v922, 0.0
      %vm1403 = vcmp.gt.f32.partialorder %v925, 0.0
      %vm1404 = vcmp.gt.f32.partialorder %v930, 0.0
      %vm1405 = vcmp.gt.f32.partialorder %v933, 0.0
      %vm1406 = vcmp.gt.f32.partialorder %v938, 0.0
      %vm1407 = vcmp.gt.f32.partialorder %v941, 0.0
      %vm1408 = vcmp.gt.f32.partialorder %v946, 0.0
      %vm1409 = vcmp.gt.f32.partialorder %v949, 0.0
      %vm1410 = vcmp.gt.f32.partialorder %v954, 0.0
      %vm1411 = vcmp.gt.f32.partialorder %v957, 0.0
      %vm1412 = vcmp.gt.f32.partialorder %v962, 0.0
      %vm1413 = vcmp.gt.f32.partialorder %v965, 0.0
      %vm1414 = vcmp.gt.f32.partialorder %v970, 0.0
      %vm1415 = vcmp.gt.f32.partialorder %v973, 0.0
      %vm1416 = vcmp.gt.f32.partialorder %v978, 0.0
      %vm1417 = vcmp.gt.f32.partialorder %v981, 0.0
      %vm1418 = vcmp.gt.f32.partialorder %v986, 0.0
      %vm1419 = vcmp.gt.f32.partialorder %v989, 0.0
      %vm1420 = vcmp.gt.f32.partialorder %v994, 0.0
      %vm1421 = vcmp.gt.f32.partialorder %v997, 0.0
      %vm1422 = vcmp.gt.f32.partialorder %v1002, 0.0
      %vm1423 = vcmp.gt.f32.partialorder %v1005, 0.0
      %vm1424 = vcmp.gt.f32.partialorder %v1010, 0.0
      %vm1425 = vcmp.gt.f32.partialorder %v1013, 0.0
      %vm1426 = vcmp.gt.f32.partialorder %v1018, 0.0
      %vm1427 = vcmp.gt.f32.partialorder %v1021, 0.0
      %vm1428 = vcmp.gt.f32.partialorder %v1026, 0.0
      %vm1429 = vcmp.gt.f32.partialorder %v1029, 0.0
      %vm1430 = vcmp.gt.f32.partialorder %v1034, 0.0
      %vm1431 = vcmp.gt.f32.partialorder %v1037, 0.0
      %vm1432 = vcmp.gt.f32.partialorder %v1042, 0.0
      %vm1433 = vcmp.gt.f32.partialorder %v1045, 0.0
      %vm1434 = vcmp.gt.f32.partialorder %v1050, 0.0
      %vm1435 = vcmp.gt.f32.partialorder %v1053, 0.0
      %vm1436 = vcmp.gt.f32.partialorder %v1058, 0.0
      %vm1437 = vcmp.gt.f32.partialorder %v1061, 0.0
      %vm1438 = vcmp.gt.f32.partialorder %v1066, 0.0
      %vm1439 = vcmp.gt.f32.partialorder %v1069, 0.0
      %vm1440 = vcmp.gt.f32.partialorder %v1074, 0.0
      %vm1441 = vcmp.gt.f32.partialorder %v1077, 0.0
      %vm1442 = vcmp.gt.f32.partialorder %v1082, 0.0
      %vm1443 = vcmp.gt.f32.partialorder %v1085, 0.0
      %vm1444 = vcmp.gt.f32.partialorder %v1090, 0.0
      %vm1445 = vcmp.gt.f32.partialorder %v1093, 0.0
      %vm1446 = vcmp.gt.f32.partialorder %v1098, 0.0
      %vm1447 = vcmp.gt.f32.partialorder %v1101, 0.0
      %vm1448 = vcmp.gt.f32.partialorder %v1106, 0.0
      %vm1449 = vcmp.gt.f32.partialorder %v1109, 0.0
      %vm1450 = vcmp.gt.f32.partialorder %v1114, 0.0
      %vm1451 = vcmp.gt.f32.partialorder %v1117, 0.0
      %vm1452 = vcmp.gt.f32.partialorder %v1122, 0.0
      %vm1453 = vcmp.gt.f32.partialorder %v1125, 0.0
      %vm1454 = vcmp.gt.f32.partialorder %v1130, 0.0
      %vm1455 = vcmp.gt.f32.partialorder %v1133, 0.0
      %vm1456 = vcmp.gt.f32.partialorder %v1138, 0.0
      %vm1457 = vcmp.gt.f32.partialorder %v1141, 0.0
      %vm1458 = vcmp.gt.f32.partialorder %v1146, 0.0
      %vm1459 = vcmp.gt.f32.partialorder %v1149, 0.0
      %vm1460 = vcmp.gt.f32.partialorder %v1154, 0.0
      %vm1461 = vcmp.gt.f32.partialorder %v1157, 0.0
      %vm1462 = vcmp.gt.f32.partialorder %v1162, 0.0
      %vm1463 = vcmp.gt.f32.partialorder %v1165, 0.0
      %vm1464 = vcmp.gt.f32.partialorder %v1170, 0.0
      %vm1465 = vcmp.gt.f32.partialorder %v1173, 0.0
      %vm1466 = vcmp.gt.f32.partialorder %v1178, 0.0
      %vm1467 = vcmp.gt.f32.partialorder %v1181, 0.0
      %vm1468 = vcmp.gt.f32.partialorder %v1186, 0.0
      %vm1469 = vcmp.gt.f32.partialorder %v1189, 0.0
      %vm1470 = vcmp.gt.f32.partialorder %v1194, 0.0
      %vm1471 = vcmp.gt.f32.partialorder %v1197, 0.0
      %vm1472 = vcmp.gt.f32.partialorder %v1202, 0.0
      %vm1473 = vcmp.gt.f32.partialorder %v1205, 0.0
      %vm1474 = vcmp.gt.f32.partialorder %v1210, 0.0
      %vm1475 = vcmp.gt.f32.partialorder %v1213, 0.0
      %vm1476 = vcmp.gt.f32.partialorder %v1218, 0.0
      %vm1477 = vcmp.gt.f32.partialorder %v1221, 0.0
      %vm1478 = vcmp.gt.f32.partialorder %v1226, 0.0
      %vm1479 = vcmp.gt.f32.partialorder %v1229, 0.0
      %vm1480 = vcmp.gt.f32.partialorder %v1234, 0.0
      %vm1481 = vcmp.gt.f32.partialorder %v1237, 0.0
      %vm1482 = vcmp.gt.f32.partialorder %v1242, 0.0
      %vm1483 = vcmp.gt.f32.partialorder %v1245, 0.0
      %vm1484 = vcmp.gt.f32.partialorder %v1250, 0.0
      %vm1485 = vcmp.gt.f32.partialorder %v1253, 0.0
      %vm1486 = vcmp.gt.f32.partialorder %v1258, 0.0
      %vm1487 = vcmp.gt.f32.partialorder %v1261, 0.0
      %vm1488 = vcmp.gt.f32.partialorder %v1266, 0.0
      %vm1489 = vcmp.gt.f32.partialorder %v1269, 0.0
      %vm1490 = vcmp.gt.f32.partialorder %v1274, 0.0
      %vm1491 = vcmp.gt.f32.partialorder %v1277, 0.0
      %vm1492 = vcmp.gt.f32.partialorder %v1282, 0.0
      %vm1493 = vcmp.gt.f32.partialorder %v1285, 0.0
      %vm1494 = vcmp.gt.f32.partialorder %v1290, 0.0
      %vm1495 = vcmp.gt.f32.partialorder %v1293, 0.0
      %vm1496 = vcmp.gt.f32.partialorder %v1298, 0.0
      %vm1497 = vcmp.gt.f32.partialorder %v1301, 0.0
      %vm1498 = vcmp.gt.f32.partialorder %v1306, 0.0
      %vm1499 = vcmp.gt.f32.partialorder %v1309, 0.0
      %vm1500 = vcmp.gt.f32.partialorder %v1314, 0.0
      %vm1501 = vcmp.gt.f32.partialorder %v1317, 0.0
      %vm1502 = vcmp.gt.f32.partialorder %v1322, 0.0
      %vm1503 = vcmp.gt.f32.partialorder %v1325, 0.0
      %vm1504 = vcmp.gt.f32.partialorder %v1330, 0.0
      %vm1505 = vcmp.gt.f32.partialorder %v1333, 0.0
      %vm1506 = vcmp.gt.f32.partialorder %v1338, 0.0
      %vm1507 = vcmp.gt.f32.partialorder %v1341, 0.0
      %vm1508 = vcmp.gt.f32.partialorder %v1346, 0.0
      %vm1509 = vcmp.gt.f32.partialorder %v1349, 0.0
      %vm1510 = vcmp.gt.f32.partialorder %v1354, 0.0
      %vm1511 = vcmp.gt.f32.partialorder %v1357, 0.0
      %vm1512 = vcmp.gt.f32.partialorder %v1362, 0.0
      %vm1513 = vcmp.gt.f32.partialorder %v1365, 0.0
      %vm1514 = vcmp.gt.f32.partialorder %v1370, 0.0
      %vm1515 = vcmp.gt.f32.partialorder %v1373, 0.0
      %vm1516 = vcmp.gt.f32.partialorder %v1378, 0.0
      %vm1517 = vcmp.gt.f32.partialorder %v1381, 0.0
      %vm1518 = vcmp.gt.f32.partialorder %v1386, 0.0
      %vm1519 = vcmp.gt.f32.partialorder %v1389, 0.0
      %v1520 = vmul.f32 %v882, 0.2
      %v1521 = vmul.f32 %v885, 0.2
      %v1522 = vmul.f32 %v890, 0.2
      %v1523 = vmul.f32 %v893, 0.2
      %v1524 = vmul.f32 %v898, 0.2
      %v1525 = vmul.f32 %v901, 0.2
      %v1526 = vmul.f32 %v906, 0.2
      %v1527 = vmul.f32 %v909, 0.2
      %v1528 = vmul.f32 %v914, 0.2
      %v1529 = vmul.f32 %v917, 0.2
      %v1530 = vmul.f32 %v922, 0.2
      %v1531 = vmul.f32 %v925, 0.2
      %v1532 = vmul.f32 %v930, 0.2
      %v1533 = vmul.f32 %v933, 0.2
      %v1534 = vmul.f32 %v938, 0.2
      %v1535 = vmul.f32 %v941, 0.2
      %v1536 = vmul.f32 %v946, 0.2
      %v1537 = vmul.f32 %v949, 0.2
      %v1538 = vmul.f32 %v954, 0.2
      %v1539 = vmul.f32 %v957, 0.2
      %v1540 = vmul.f32 %v962, 0.2
      %v1541 = vmul.f32 %v965, 0.2
      %v1542 = vmul.f32 %v970, 0.2
      %v1543 = vmul.f32 %v973, 0.2
      %v1544 = vmul.f32 %v978, 0.2
      %v1545 = vmul.f32 %v981, 0.2
      %v1546 = vmul.f32 %v986, 0.2
      %v1547 = vmul.f32 %v989, 0.2
      %v1548 = vmul.f32 %v994, 0.2
      %v1549 = vmul.f32 %v997, 0.2
      %v1550 = vmul.f32 %v1002, 0.2
      %v1551 = vmul.f32 %v1005, 0.2
      %v1552 = vmul.f32 %v1010, 0.2
      %v1553 = vmul.f32 %v1013, 0.2
      %v1554 = vmul.f32 %v1018, 0.2
      %v1555 = vmul.f32 %v1021, 0.2
      %v1556 = vmul.f32 %v1026, 0.2
      %v1557 = vmul.f32 %v1029, 0.2
      %v1558 = vmul.f32 %v1034, 0.2
      %v1559 = vmul.f32 %v1037, 0.2
      %v1560 = vmul.f32 %v1042, 0.2
      %v1561 = vmul.f32 %v1045, 0.2
      %v1562 = vmul.f32 %v1050, 0.2
      %v1563 = vmul.f32 %v1053, 0.2
      %v1564 = vmul.f32 %v1058, 0.2
      %v1565 = vmul.f32 %v1061, 0.2
      %v1566 = vmul.f32 %v1066, 0.2
      %v1567 = vmul.f32 %v1069, 0.2
      %v1568 = vmul.f32 %v1074, 0.2
      %v1569 = vmul.f32 %v1077, 0.2
      %v1570 = vmul.f32 %v1082, 0.2
      %v1571 = vmul.f32 %v1085, 0.2
      %v1572 = vmul.f32 %v1090, 0.2
      %v1573 = vmul.f32 %v1093, 0.2
      %v1574 = vmul.f32 %v1098, 0.2
      %v1575 = vmul.f32 %v1101, 0.2
      %v1576 = vmul.f32 %v1106, 0.2
      %v1577 = vmul.f32 %v1109, 0.2
      %v1578 = vmul.f32 %v1114, 0.2
      %v1579 = vmul.f32 %v1117, 0.2
      %v1580 = vmul.f32 %v1122, 0.2
      %v1581 = vmul.f32 %v1125, 0.2
      %v1582 = vmul.f32 %v1130, 0.2
      %v1583 = vmul.f32 %v1133, 0.2
      %v1584 = vmul.f32 %v1138, 0.2
      %v1585 = vmul.f32 %v1141, 0.2
      %v1586 = vmul.f32 %v1146, 0.2
      %v1587 = vmul.f32 %v1149, 0.2
      %v1588 = vmul.f32 %v1154, 0.2
      %v1589 = vmul.f32 %v1157, 0.2
      %v1590 = vmul.f32 %v1162, 0.2
      %v1591 = vmul.f32 %v1165, 0.2
      %v1592 = vmul.f32 %v1170, 0.2
      %v1593 = vmul.f32 %v1173, 0.2
      %v1594 = vmul.f32 %v1178, 0.2
      %v1595 = vmul.f32 %v1181, 0.2
      %v1596 = vmul.f32 %v1186, 0.2
      %v1597 = vmul.f32 %v1189, 0.2
      %v1598 = vmul.f32 %v1194, 0.2
      %v1599 = vmul.f32 %v1197, 0.2
      %v1600 = vmul.f32 %v1202, 0.2
      %v1601 = vmul.f32 %v1205, 0.2
      %v1602 = vmul.f32 %v1210, 0.2
      %v1603 = vmul.f32 %v1213, 0.2
      %v1604 = vmul.f32 %v1218, 0.2
      %v1605 = vmul.f32 %v1221, 0.2
      %v1606 = vmul.f32 %v1226, 0.2
      %v1607 = vmul.f32 %v1229, 0.2
      %v1608 = vmul.f32 %v1234, 0.2
      %v1609 = vmul.f32 %v1237, 0.2
      %v1610 = vmul.f32 %v1242, 0.2
      %v1611 = vmul.f32 %v1245, 0.2
      %v1612 = vmul.f32 %v1250, 0.2
      %v1613 = vmul.f32 %v1253, 0.2
      %v1614 = vmul.f32 %v1258, 0.2
      %v1615 = vmul.f32 %v1261, 0.2
      %v1616 = vmul.f32 %v1266, 0.2
      %v1617 = vmul.f32 %v1269, 0.2
      %v1618 = vmul.f32 %v1274, 0.2
      %v1619 = vmul.f32 %v1277, 0.2
      %v1620 = vmul.f32 %v1282, 0.2
      %v1621 = vmul.f32 %v1285, 0.2
      %v1622 = vmul.f32 %v1290, 0.2
      %v1623 = vmul.f32 %v1293, 0.2
      %v1624 = vmul.f32 %v1298, 0.2
      %v1625 = vmul.f32 %v1301, 0.2
      %v1626 = vmul.f32 %v1306, 0.2
      %v1627 = vmul.f32 %v1309, 0.2
      %v1628 = vmul.f32 %v1314, 0.2
      %v1629 = vmul.f32 %v1317, 0.2
      %v1630 = vmul.f32 %v1322, 0.2
      %v1631 = vmul.f32 %v1325, 0.2
      %v1632 = vmul.f32 %v1330, 0.2
      %v1633 = vmul.f32 %v1333, 0.2
      %v1634 = vmul.f32 %v1338, 0.2
      %v1635 = vmul.f32 %v1341, 0.2
      %v1636 = vmul.f32 %v1346, 0.2
      %v1637 = vmul.f32 %v1349, 0.2
      %v1638 = vmul.f32 %v1354, 0.2
      %v1639 = vmul.f32 %v1357, 0.2
      %v1640 = vmul.f32 %v1362, 0.2
      %v1641 = vmul.f32 %v1365, 0.2
      %v1642 = vmul.f32 %v1370, 0.2
      %v1643 = vmul.f32 %v1373, 0.2
      %v1644 = vmul.f32 %v1378, 0.2
      %v1645 = vmul.f32 %v1381, 0.2
      %v1646 = vmul.f32 %v1386, 0.2
      %v1647 = vmul.f32 %v1389, 0.2
      %v1648 = vsel %vm1392, %v882, %v1520
      %v1649 = vsel %vm1393, %v885, %v1521
      %v1650 = vsel %vm1394, %v890, %v1522
      %v1651 = vsel %vm1395, %v893, %v1523
      %v1652 = vsel %vm1396, %v898, %v1524
      %v1653 = vsel %vm1397, %v901, %v1525
      %v1654 = vsel %vm1398, %v906, %v1526
      %v1655 = vsel %vm1399, %v909, %v1527
      %v1656 = vsel %vm1400, %v914, %v1528
      %v1657 = vsel %vm1401, %v917, %v1529
      %v1658 = vsel %vm1402, %v922, %v1530
      %v1659 = vsel %vm1403, %v925, %v1531
      %v1660 = vsel %vm1404, %v930, %v1532
      %v1661 = vsel %vm1405, %v933, %v1533
      %v1662 = vsel %vm1406, %v938, %v1534
      %v1663 = vsel %vm1407, %v941, %v1535
      %v1664 = vsel %vm1408, %v946, %v1536
      %v1665 = vsel %vm1409, %v949, %v1537
      %v1666 = vsel %vm1410, %v954, %v1538
      %v1667 = vsel %vm1411, %v957, %v1539
      %v1668 = vsel %vm1412, %v962, %v1540
      %v1669 = vsel %vm1413, %v965, %v1541
      %v1670 = vsel %vm1414, %v970, %v1542
      %v1671 = vsel %vm1415, %v973, %v1543
      %v1672 = vsel %vm1416, %v978, %v1544
      %v1673 = vsel %vm1417, %v981, %v1545
      %v1674 = vsel %vm1418, %v986, %v1546
      %v1675 = vsel %vm1419, %v989, %v1547
      %v1676 = vsel %vm1420, %v994, %v1548
      %v1677 = vsel %vm1421, %v997, %v1549
      %v1678 = vsel %vm1422, %v1002, %v1550
      %v1679 = vsel %vm1423, %v1005, %v1551
      %v1680 = vsel %vm1424, %v1010, %v1552
      %v1681 = vsel %vm1425, %v1013, %v1553
      %v1682 = vsel %vm1426, %v1018, %v1554
      %v1683 = vsel %vm1427, %v1021, %v1555
      %v1684 = vsel %vm1428, %v1026, %v1556
      %v1685 = vsel %vm1429, %v1029, %v1557
      %v1686 = vsel %vm1430, %v1034, %v1558
      %v1687 = vsel %vm1431, %v1037, %v1559
      %v1688 = vsel %vm1432, %v1042, %v1560
      %v1689 = vsel %vm1433, %v1045, %v1561
      %v1690 = vsel %vm1434, %v1050, %v1562
      %v1691 = vsel %vm1435, %v1053, %v1563
      %v1692 = vsel %vm1436, %v1058, %v1564
      %v1693 = vsel %vm1437, %v1061, %v1565
      %v1694 = vsel %vm1438, %v1066, %v1566
      %v1695 = vsel %vm1439, %v1069, %v1567
      %v1696 = vsel %vm1440, %v1074, %v1568
      %v1697 = vsel %vm1441, %v1077, %v1569
      %v1698 = vsel %vm1442, %v1082, %v1570
      %v1699 = vsel %vm1443, %v1085, %v1571
      %v1700 = vsel %vm1444, %v1090, %v1572
      %v1701 = vsel %vm1445, %v1093, %v1573
      %v1702 = vsel %vm1446, %v1098, %v1574
      %v1703 = vsel %vm1447, %v1101, %v1575
      %v1704 = vsel %vm1448, %v1106, %v1576
      %v1705 = vsel %vm1449, %v1109, %v1577
      %v1706 = vsel %vm1450, %v1114, %v1578
      %v1707 = vsel %vm1451, %v1117, %v1579
      %v1708 = vsel %vm1452, %v1122, %v1580
      %v1709 = vsel %vm1453, %v1125, %v1581
      %v1710 = vsel %vm1454, %v1130, %v1582
      %v1711 = vsel %vm1455, %v1133, %v1583
      %v1712 = vsel %vm1456, %v1138, %v1584
      %v1713 = vsel %vm1457, %v1141, %v1585
      %v1714 = vsel %vm1458, %v1146, %v1586
      %v1715 = vsel %vm1459, %v1149, %v1587
      %v1716 = vsel %vm1460, %v1154, %v1588
      %v1717 = vsel %vm1461, %v1157, %v1589
      %v1718 = vsel %vm1462, %v1162, %v1590
      %v1719 = vsel %vm1463, %v1165, %v1591
      %v1720 = vsel %vm1464, %v1170, %v1592
      %v1721 = vsel %vm1465, %v1173, %v1593
      %v1722 = vsel %vm1466, %v1178, %v1594
      %v1723 = vsel %vm1467, %v1181, %v1595
      %v1724 = vsel %vm1468, %v1186, %v1596
      %v1725 = vsel %vm1469, %v1189, %v1597
      %v1726 = vsel %vm1470, %v1194, %v1598
      %v1727 = vsel %vm1471, %v1197, %v1599
      %v1728 = vsel %vm1472, %v1202, %v1600
      %v1729 = vsel %vm1473, %v1205, %v1601
      %v1730 = vsel %vm1474, %v1210, %v1602
      %v1731 = vsel %vm1475, %v1213, %v1603
      %v1732 = vsel %vm1476, %v1218, %v1604
      %v1733 = vsel %vm1477, %v1221, %v1605
      %v1734 = vsel %vm1478, %v1226, %v1606
      %v1735 = vsel %vm1479, %v1229, %v1607
      %v1736 = vsel %vm1480, %v1234, %v1608
      %v1737 = vsel %vm1481, %v1237, %v1609
      %v1738 = vsel %vm1482, %v1242, %v1610
      %v1739 = vsel %vm1483, %v1245, %v1611
      %v1740 = vsel %vm1484, %v1250, %v1612
      %v1741 = vsel %vm1485, %v1253, %v1613
      %v1742 = vsel %vm1486, %v1258, %v1614
      %v1743 = vsel %vm1487, %v1261, %v1615
      %v1744 = vsel %vm1488, %v1266, %v1616
      %v1745 = vsel %vm1489, %v1269, %v1617
      %v1746 = vsel %vm1490, %v1274, %v1618
      %v1747 = vsel %vm1491, %v1277, %v1619
      %v1748 = vsel %vm1492, %v1282, %v1620
      %v1749 = vsel %vm1493, %v1285, %v1621
      %v1750 = vsel %vm1494, %v1290, %v1622
      %v1751 = vsel %vm1495, %v1293, %v1623
      %v1752 = vsel %vm1496, %v1298, %v1624
      %v1753 = vsel %vm1497, %v1301, %v1625
      %v1754 = vsel %vm1498, %v1306, %v1626
      %v1755 = vsel %vm1499, %v1309, %v1627
      %v1756 = vsel %vm1500, %v1314, %v1628
      %v1757 = vsel %vm1501, %v1317, %v1629
      %v1758 = vsel %vm1502, %v1322, %v1630
      %v1759 = vsel %vm1503, %v1325, %v1631
      %v1760 = vsel %vm1504, %v1330, %v1632
      %v1761 = vsel %vm1505, %v1333, %v1633
      %v1762 = vsel %vm1506, %v1338, %v1634
      %v1763 = vsel %vm1507, %v1341, %v1635
      %v1764 = vsel %vm1508, %v1346, %v1636
      %v1765 = vsel %vm1509, %v1349, %v1637
      %v1766 = vsel %vm1510, %v1354, %v1638
      %v1767 = vsel %vm1511, %v1357, %v1639
      %v1768 = vsel %vm1512, %v1362, %v1640
      %v1769 = vsel %vm1513, %v1365, %v1641
      %v1770 = vsel %vm1514, %v1370, %v1642
      %v1771 = vsel %vm1515, %v1373, %v1643
      %v1772 = vsel %vm1516, %v1378, %v1644
      %v1773 = vsel %vm1517, %v1381, %v1645
      %v1774 = vsel %vm1518, %v1386, %v1646
      %v1775 = vsel %vm1519, %v1389, %v1647
      %v1776 = vpack.c.bf16 %v1649, %v1648
      %v1777 = vpack.c.bf16 %v1651, %v1650
      %v1778 = vpack.c.bf16 %v1653, %v1652
      %v1779 = vpack.c.bf16 %v1655, %v1654
      %v1780 = vpack.c.bf16 %v1657, %v1656
      %v1781 = vpack.c.bf16 %v1659, %v1658
      %v1782 = vpack.c.bf16 %v1661, %v1660
      %v1783 = vpack.c.bf16 %v1663, %v1662
      %v1784 = vpack.c.bf16 %v1665, %v1664
      %v1785 = vpack.c.bf16 %v1667, %v1666
      %v1786 = vpack.c.bf16 %v1669, %v1668
      %v1787 = vpack.c.bf16 %v1671, %v1670
      %v1788 = vpack.c.bf16 %v1673, %v1672
      %v1789 = vpack.c.bf16 %v1675, %v1674
      %v1790 = vpack.c.bf16 %v1677, %v1676
      %v1791 = vpack.c.bf16 %v1679, %v1678
      %v1792 = vpack.c.bf16 %v1681, %v1680
      %v1793 = vpack.c.bf16 %v1683, %v1682
      %v1794 = vpack.c.bf16 %v1685, %v1684
      %v1795 = vpack.c.bf16 %v1687, %v1686
      %v1796 = vpack.c.bf16 %v1689, %v1688
      %v1797 = vpack.c.bf16 %v1691, %v1690
      %v1798 = vpack.c.bf16 %v1693, %v1692
      %v1799 = vpack.c.bf16 %v1695, %v1694
      %v1800 = vpack.c.bf16 %v1697, %v1696
      %v1801 = vpack.c.bf16 %v1699, %v1698
      %v1802 = vpack.c.bf16 %v1701, %v1700
      %v1803 = vpack.c.bf16 %v1703, %v1702
      %v1804 = vpack.c.bf16 %v1705, %v1704
      %v1805 = vpack.c.bf16 %v1707, %v1706
      %v1806 = vpack.c.bf16 %v1709, %v1708
      %v1807 = vpack.c.bf16 %v1711, %v1710
      %v1808 = vpack.c.bf16 %v1713, %v1712
      %v1809 = vpack.c.bf16 %v1715, %v1714
      %v1810 = vpack.c.bf16 %v1717, %v1716
      %v1811 = vpack.c.bf16 %v1719, %v1718
      %v1812 = vpack.c.bf16 %v1721, %v1720
      %v1813 = vpack.c.bf16 %v1723, %v1722
      %v1814 = vpack.c.bf16 %v1725, %v1724
      %v1815 = vpack.c.bf16 %v1727, %v1726
      %v1816 = vpack.c.bf16 %v1729, %v1728
      %v1817 = vpack.c.bf16 %v1731, %v1730
      %v1818 = vpack.c.bf16 %v1733, %v1732
      %v1819 = vpack.c.bf16 %v1735, %v1734
      %v1820 = vpack.c.bf16 %v1737, %v1736
      %v1821 = vpack.c.bf16 %v1739, %v1738
      %v1822 = vpack.c.bf16 %v1741, %v1740
      %v1823 = vpack.c.bf16 %v1743, %v1742
      %v1824 = vpack.c.bf16 %v1745, %v1744
      %v1825 = vpack.c.bf16 %v1747, %v1746
      %v1826 = vpack.c.bf16 %v1749, %v1748
      %v1827 = vpack.c.bf16 %v1751, %v1750
      %v1828 = vpack.c.bf16 %v1753, %v1752
      %v1829 = vpack.c.bf16 %v1755, %v1754
      %v1830 = vpack.c.bf16 %v1757, %v1756
      %v1831 = vpack.c.bf16 %v1759, %v1758
      %v1832 = vpack.c.bf16 %v1761, %v1760
      %v1833 = vpack.c.bf16 %v1763, %v1762
      %v1834 = vpack.c.bf16 %v1765, %v1764
      %v1835 = vpack.c.bf16 %v1767, %v1766
      %v1836 = vpack.c.bf16 %v1769, %v1768
      %v1837 = vpack.c.bf16 %v1771, %v1770
      %v1838 = vpack.c.bf16 %v1773, %v1772
      %v1839 = vpack.c.bf16 %v1775, %v1774
      %v1904 = vunpack.c.l.b16 %v1776
      %v1905 = vunpack.c.h.b16 %v1776
      %v1906 = vunpack.c.l.b16 %v1777
      %v1907 = vunpack.c.h.b16 %v1777
      %v1908 = vunpack.c.l.b16 %v1778
      %v1909 = vunpack.c.h.b16 %v1778
      %v1910 = vunpack.c.l.b16 %v1779
      %v1911 = vunpack.c.h.b16 %v1779
      %v1912 = vunpack.c.l.b16 %v1780
      %v1913 = vunpack.c.h.b16 %v1780
      %v1914 = vunpack.c.l.b16 %v1781
      %v1915 = vunpack.c.h.b16 %v1781
      %v1916 = vunpack.c.l.b16 %v1782
      %v1917 = vunpack.c.h.b16 %v1782
      %v1918 = vunpack.c.l.b16 %v1783
      %v1919 = vunpack.c.h.b16 %v1783
      %v1920 = vunpack.c.l.b16 %v1784
      %v1921 = vunpack.c.h.b16 %v1784
      %v1922 = vunpack.c.l.b16 %v1785
      %v1923 = vunpack.c.h.b16 %v1785
      %v1924 = vunpack.c.l.b16 %v1786
      %v1925 = vunpack.c.h.b16 %v1786
      %v1926 = vunpack.c.l.b16 %v1787
      %v1927 = vunpack.c.h.b16 %v1787
      %v1928 = vunpack.c.l.b16 %v1788
      %v1929 = vunpack.c.h.b16 %v1788
      %v1930 = vunpack.c.l.b16 %v1789
      %v1931 = vunpack.c.h.b16 %v1789
      %v1932 = vunpack.c.l.b16 %v1790
      %v1933 = vunpack.c.h.b16 %v1790
      %v1934 = vunpack.c.l.b16 %v1791
      %v1935 = vunpack.c.h.b16 %v1791
      %v1936 = vunpack.c.l.b16 %v1792
      %v1937 = vunpack.c.h.b16 %v1792
      %v1938 = vunpack.c.l.b16 %v1793
      %v1939 = vunpack.c.h.b16 %v1793
      %v1940 = vunpack.c.l.b16 %v1794
      %v1941 = vunpack.c.h.b16 %v1794
      %v1942 = vunpack.c.l.b16 %v1795
      %v1943 = vunpack.c.h.b16 %v1795
      %v1944 = vunpack.c.l.b16 %v1796
      %v1945 = vunpack.c.h.b16 %v1796
      %v1946 = vunpack.c.l.b16 %v1797
      %v1947 = vunpack.c.h.b16 %v1797
      %v1948 = vunpack.c.l.b16 %v1798
      %v1949 = vunpack.c.h.b16 %v1798
      %v1950 = vunpack.c.l.b16 %v1799
      %v1951 = vunpack.c.h.b16 %v1799
      %v1952 = vunpack.c.l.b16 %v1800
      %v1953 = vunpack.c.h.b16 %v1800
      %v1954 = vunpack.c.l.b16 %v1801
      %v1955 = vunpack.c.h.b16 %v1801
      %v1956 = vunpack.c.l.b16 %v1802
      %v1957 = vunpack.c.h.b16 %v1802
      %v1958 = vunpack.c.l.b16 %v1803
      %v1959 = vunpack.c.h.b16 %v1803
      %v1960 = vunpack.c.l.b16 %v1804
      %v1961 = vunpack.c.h.b16 %v1804
      %v1962 = vunpack.c.l.b16 %v1805
      %v1963 = vunpack.c.h.b16 %v1805
      %v1964 = vunpack.c.l.b16 %v1806
      %v1965 = vunpack.c.h.b16 %v1806
      %v1966 = vunpack.c.l.b16 %v1807
      %v1967 = vunpack.c.h.b16 %v1807
      %v1968 = vunpack.c.l.b16 %v1808
      %v1969 = vunpack.c.h.b16 %v1808
      %v1970 = vunpack.c.l.b16 %v1809
      %v1971 = vunpack.c.h.b16 %v1809
      %v1972 = vunpack.c.l.b16 %v1810
      %v1973 = vunpack.c.h.b16 %v1810
      %v1974 = vunpack.c.l.b16 %v1811
      %v1975 = vunpack.c.h.b16 %v1811
      %v1976 = vunpack.c.l.b16 %v1812
      %v1977 = vunpack.c.h.b16 %v1812
      %v1978 = vunpack.c.l.b16 %v1813
      %v1979 = vunpack.c.h.b16 %v1813
      %v1980 = vunpack.c.l.b16 %v1814
      %v1981 = vunpack.c.h.b16 %v1814
      %v1982 = vunpack.c.l.b16 %v1815
      %v1983 = vunpack.c.h.b16 %v1815
      %v1984 = vunpack.c.l.b16 %v1816
      %v1985 = vunpack.c.h.b16 %v1816
      %v1986 = vunpack.c.l.b16 %v1817
      %v1987 = vunpack.c.h.b16 %v1817
      %v1988 = vunpack.c.l.b16 %v1818
      %v1989 = vunpack.c.h.b16 %v1818
      %v1990 = vunpack.c.l.b16 %v1819
      %v1991 = vunpack.c.h.b16 %v1819
      %v1992 = vunpack.c.l.b16 %v1820
      %v1993 = vunpack.c.h.b16 %v1820
      %v1994 = vunpack.c.l.b16 %v1821
      %v1995 = vunpack.c.h.b16 %v1821
      %v1996 = vunpack.c.l.b16 %v1822
      %v1997 = vunpack.c.h.b16 %v1822
      %v1998 = vunpack.c.l.b16 %v1823
      %v1999 = vunpack.c.h.b16 %v1823
      %v2000 = vunpack.c.l.b16 %v1824
      %v2001 = vunpack.c.h.b16 %v1824
      %v2002 = vunpack.c.l.b16 %v1825
      %v2003 = vunpack.c.h.b16 %v1825
      %v2004 = vunpack.c.l.b16 %v1826
      %v2005 = vunpack.c.h.b16 %v1826
      %v2006 = vunpack.c.l.b16 %v1827
      %v2007 = vunpack.c.h.b16 %v1827
      %v2008 = vunpack.c.l.b16 %v1828
      %v2009 = vunpack.c.h.b16 %v1828
      %v2010 = vunpack.c.l.b16 %v1829
      %v2011 = vunpack.c.h.b16 %v1829
      %v2012 = vunpack.c.l.b16 %v1830
      %v2013 = vunpack.c.h.b16 %v1830
      %v2014 = vunpack.c.l.b16 %v1831
      %v2015 = vunpack.c.h.b16 %v1831
      %v2016 = vunpack.c.l.b16 %v1832
      %v2017 = vunpack.c.h.b16 %v1832
      %v2018 = vunpack.c.l.b16 %v1833
      %v2019 = vunpack.c.h.b16 %v1833
      %v2020 = vunpack.c.l.b16 %v1834
      %v2021 = vunpack.c.h.b16 %v1834
      %v2022 = vunpack.c.l.b16 %v1835
      %v2023 = vunpack.c.h.b16 %v1835
      %v2024 = vunpack.c.l.b16 %v1836
      %v2025 = vunpack.c.h.b16 %v1836
      %v2026 = vunpack.c.l.b16 %v1837
      %v2027 = vunpack.c.h.b16 %v1837
      %v2028 = vunpack.c.l.b16 %v1838
      %v2029 = vunpack.c.h.b16 %v1838
      %v2030 = vunpack.c.l.b16 %v1839
      %v2031 = vunpack.c.h.b16 %v1839
      %v2032 = vpack.c.b16 %v1904, %v1904
      %v2033 = vpack.c.b16 %v1905, %v1905
      %v2034 = vpack.c.b16 %v1906, %v1906
      %v2035 = vpack.c.b16 %v1907, %v1907
      %v2036 = vpack.c.b16 %v1908, %v1908
      %v2037 = vpack.c.b16 %v1909, %v1909
      %v2038 = vpack.c.b16 %v1910, %v1910
      %v2039 = vpack.c.b16 %v1911, %v1911
      %v2040 = vpack.c.b16 %v1912, %v1912
      %v2041 = vpack.c.b16 %v1913, %v1913
      %v2042 = vpack.c.b16 %v1914, %v1914
      %v2043 = vpack.c.b16 %v1915, %v1915
      %v2044 = vpack.c.b16 %v1916, %v1916
      %v2045 = vpack.c.b16 %v1917, %v1917
      %v2046 = vpack.c.b16 %v1918, %v1918
      %v2047 = vpack.c.b16 %v1919, %v1919
      %v2048 = vpack.c.b16 %v1920, %v1920
      %v2049 = vpack.c.b16 %v1921, %v1921
      %v2050 = vpack.c.b16 %v1922, %v1922
      %v2051 = vpack.c.b16 %v1923, %v1923
      %v2052 = vpack.c.b16 %v1924, %v1924
      %v2053 = vpack.c.b16 %v1925, %v1925
      %v2054 = vpack.c.b16 %v1926, %v1926
      %v2055 = vpack.c.b16 %v1927, %v1927
      %v2056 = vpack.c.b16 %v1928, %v1928
      %v2057 = vpack.c.b16 %v1929, %v1929
      %v2058 = vpack.c.b16 %v1930, %v1930
      %v2059 = vpack.c.b16 %v1931, %v1931
      %v2060 = vpack.c.b16 %v1932, %v1932
      %v2061 = vpack.c.b16 %v1933, %v1933
      %v2062 = vpack.c.b16 %v1934, %v1934
      %v2063 = vpack.c.b16 %v1935, %v1935
      %v2064 = vpack.c.b16 %v1936, %v1936
      %v2065 = vpack.c.b16 %v1937, %v1937
      %v2066 = vpack.c.b16 %v1938, %v1938
      %v2067 = vpack.c.b16 %v1939, %v1939
      %v2068 = vpack.c.b16 %v1940, %v1940
      %v2069 = vpack.c.b16 %v1941, %v1941
      %v2070 = vpack.c.b16 %v1942, %v1942
      %v2071 = vpack.c.b16 %v1943, %v1943
      %v2072 = vpack.c.b16 %v1944, %v1944
      %v2073 = vpack.c.b16 %v1945, %v1945
      %v2074 = vpack.c.b16 %v1946, %v1946
      %v2075 = vpack.c.b16 %v1947, %v1947
      %v2076 = vpack.c.b16 %v1948, %v1948
      %v2077 = vpack.c.b16 %v1949, %v1949
      %v2078 = vpack.c.b16 %v1950, %v1950
      %v2079 = vpack.c.b16 %v1951, %v1951
      %v2080 = vpack.c.b16 %v1952, %v1952
      %v2081 = vpack.c.b16 %v1953, %v1953
      %v2082 = vpack.c.b16 %v1954, %v1954
      %v2083 = vpack.c.b16 %v1955, %v1955
      %v2084 = vpack.c.b16 %v1956, %v1956
      %v2085 = vpack.c.b16 %v1957, %v1957
      %v2086 = vpack.c.b16 %v1958, %v1958
      %v2087 = vpack.c.b16 %v1959, %v1959
      %v2088 = vpack.c.b16 %v1960, %v1960
      %v2089 = vpack.c.b16 %v1961, %v1961
      %v2090 = vpack.c.b16 %v1962, %v1962
      %v2091 = vpack.c.b16 %v1963, %v1963
      %v2092 = vpack.c.b16 %v1964, %v1964
      %v2093 = vpack.c.b16 %v1965, %v1965
      %v2094 = vpack.c.b16 %v1966, %v1966
      %v2095 = vpack.c.b16 %v1967, %v1967
      %v2096 = vpack.c.b16 %v1968, %v1968
      %v2097 = vpack.c.b16 %v1969, %v1969
      %v2098 = vpack.c.b16 %v1970, %v1970
      %v2099 = vpack.c.b16 %v1971, %v1971
      %v2100 = vpack.c.b16 %v1972, %v1972
      %v2101 = vpack.c.b16 %v1973, %v1973
      %v2102 = vpack.c.b16 %v1974, %v1974
      %v2103 = vpack.c.b16 %v1975, %v1975
      %v2104 = vpack.c.b16 %v1976, %v1976
      %v2105 = vpack.c.b16 %v1977, %v1977
      %v2106 = vpack.c.b16 %v1978, %v1978
      %v2107 = vpack.c.b16 %v1979, %v1979
      %v2108 = vpack.c.b16 %v1980, %v1980
      %v2109 = vpack.c.b16 %v1981, %v1981
      %v2110 = vpack.c.b16 %v1982, %v1982
      %v2111 = vpack.c.b16 %v1983, %v1983
      %v2112 = vpack.c.b16 %v1984, %v1984
      %v2113 = vpack.c.b16 %v1985, %v1985
      %v2114 = vpack.c.b16 %v1986, %v1986
      %v2115 = vpack.c.b16 %v1987, %v1987
      %v2116 = vpack.c.b16 %v1988, %v1988
      %v2117 = vpack.c.b16 %v1989, %v1989
      %v2118 = vpack.c.b16 %v1990, %v1990
      %v2119 = vpack.c.b16 %v1991, %v1991
      %v2120 = vpack.c.b16 %v1992, %v1992
      %v2121 = vpack.c.b16 %v1993, %v1993
      %v2122 = vpack.c.b16 %v1994, %v1994
      %v2123 = vpack.c.b16 %v1995, %v1995
      %v2124 = vpack.c.b16 %v1996, %v1996
      %v2125 = vpack.c.b16 %v1997, %v1997
      %v2126 = vpack.c.b16 %v1998, %v1998
      %v2127 = vpack.c.b16 %v1999, %v1999
      %v2128 = vpack.c.b16 %v2000, %v2000
      %v2129 = vpack.c.b16 %v2001, %v2001
      %v2130 = vpack.c.b16 %v2002, %v2002
      %v2131 = vpack.c.b16 %v2003, %v2003
      %v2132 = vpack.c.b16 %v2004, %v2004
      %v2133 = vpack.c.b16 %v2005, %v2005
      %v2134 = vpack.c.b16 %v2006, %v2006
      %v2135 = vpack.c.b16 %v2007, %v2007
      %v2136 = vpack.c.b16 %v2008, %v2008
      %v2137 = vpack.c.b16 %v2009, %v2009
      %v2138 = vpack.c.b16 %v2010, %v2010
      %v2139 = vpack.c.b16 %v2011, %v2011
      %v2140 = vpack.c.b16 %v2012, %v2012
      %v2141 = vpack.c.b16 %v2013, %v2013
      %v2142 = vpack.c.b16 %v2014, %v2014
      %v2143 = vpack.c.b16 %v2015, %v2015
      %v2144 = vpack.c.b16 %v2016, %v2016
      %v2145 = vpack.c.b16 %v2017, %v2017
      %v2146 = vpack.c.b16 %v2018, %v2018
      %v2147 = vpack.c.b16 %v2019, %v2019
      %v2148 = vpack.c.b16 %v2020, %v2020
      %v2149 = vpack.c.b16 %v2021, %v2021
      %v2150 = vpack.c.b16 %v2022, %v2022
      %v2151 = vpack.c.b16 %v2023, %v2023
      %v2152 = vpack.c.b16 %v2024, %v2024
      %v2153 = vpack.c.b16 %v2025, %v2025
      %v2154 = vpack.c.b16 %v2026, %v2026
      %v2155 = vpack.c.b16 %v2027, %v2027
      %v2156 = vpack.c.b16 %v2028, %v2028
      %v2157 = vpack.c.b16 %v2029, %v2029
      %v2158 = vpack.c.b16 %v2030, %v2030
      %v2159 = vpack.c.b16 %v2031, %v2031
      %2288 = vst [vmem:[%s172] sm:$0xf] %v2032
      %2289 = vst [vmem:[%s172 + $0x4] sm:$0xf] %v2033
      %2290 = vst [vmem:[%s172 + $0x8] sm:$0xf] %v2034
      %2291 = vst [vmem:[%s172 + $0xc] sm:$0xf] %v2035
      %2292 = vst [vmem:[%s172 + $0x10] sm:$0xf] %v2036
      %2293 = vst [vmem:[%s172 + $0x14] sm:$0xf] %v2037
      %2294 = vst [vmem:[%s172 + $0x18] sm:$0xf] %v2038
      %2295 = vst [vmem:[%s172 + $0x1c] sm:$0xf] %v2039
      %2296 = vst [vmem:[%s172 + $0x20] sm:$0xf] %v2040
      %2297 = vst [vmem:[%s172 + $0x24] sm:$0xf] %v2041
      %2298 = vst [vmem:[%s172 + $0x28] sm:$0xf] %v2042
      %2299 = vst [vmem:[%s172 + $0x2c] sm:$0xf] %v2043
      %2300 = vst [vmem:[%s172 + $0x30] sm:$0xf] %v2044
      %2301 = vst [vmem:[%s172 + $0x34] sm:$0xf] %v2045
      %2302 = vst [vmem:[%s172 + $0x38] sm:$0xf] %v2046
      %2303 = vst [vmem:[%s172 + $0x3c] sm:$0xf] %v2047
      %2304 = vst [vmem:[%s172 + $0x40] sm:$0xf] %v2048
      %2305 = vst [vmem:[%s172 + $0x44] sm:$0xf] %v2049
      %2306 = vst [vmem:[%s172 + $0x48] sm:$0xf] %v2050
      %2307 = vst [vmem:[%s172 + $0x4c] sm:$0xf] %v2051
      %2308 = vst [vmem:[%s172 + $0x50] sm:$0xf] %v2052
      %2309 = vst [vmem:[%s172 + $0x54] sm:$0xf] %v2053
      %2310 = vst [vmem:[%s172 + $0x58] sm:$0xf] %v2054
      %2311 = vst [vmem:[%s172 + $0x5c] sm:$0xf] %v2055
      %2312 = vst [vmem:[%s172 + $0x60] sm:$0xf] %v2056
      %2313 = vst [vmem:[%s172 + $0x64] sm:$0xf] %v2057
      %2314 = vst [vmem:[%s172 + $0x68] sm:$0xf] %v2058
      %2315 = vst [vmem:[%s172 + $0x6c] sm:$0xf] %v2059
      %2316 = vst [vmem:[%s172 + $0x70] sm:$0xf] %v2060
      %2317 = vst [vmem:[%s172 + $0x74] sm:$0xf] %v2061
      %2318 = vst [vmem:[%s172 + $0x78] sm:$0xf] %v2062
      %2319 = vst [vmem:[%s172 + $0x7c] sm:$0xf] %v2063
      %2320 = vst [vmem:[%s172 + $0x80] sm:$0xf] %v2064
      %2321 = vst [vmem:[%s172 + $0x84] sm:$0xf] %v2065
      %2322 = vst [vmem:[%s172 + $0x88] sm:$0xf] %v2066
      %2323 = vst [vmem:[%s172 + $0x8c] sm:$0xf] %v2067
      %2324 = vst [vmem:[%s172 + $0x90] sm:$0xf] %v2068
      %2325 = vst [vmem:[%s172 + $0x94] sm:$0xf] %v2069
      %2326 = vst [vmem:[%s172 + $0x98] sm:$0xf] %v2070
      %2327 = vst [vmem:[%s172 + $0x9c] sm:$0xf] %v2071
      %2328 = vst [vmem:[%s172 + $0xa0] sm:$0xf] %v2072
      %2329 = vst [vmem:[%s172 + $0xa4] sm:$0xf] %v2073
      %2330 = vst [vmem:[%s172 + $0xa8] sm:$0xf] %v2074
      %2331 = vst [vmem:[%s172 + $0xac] sm:$0xf] %v2075
      %2332 = vst [vmem:[%s172 + $0xb0] sm:$0xf] %v2076
      %2333 = vst [vmem:[%s172 + $0xb4] sm:$0xf] %v2077
      %2334 = vst [vmem:[%s172 + $0xb8] sm:$0xf] %v2078
      %2335 = vst [vmem:[%s172 + $0xbc] sm:$0xf] %v2079
      %2336 = vst [vmem:[%s172 + $0xc0] sm:$0xf] %v2080
      %2337 = vst [vmem:[%s172 + $0xc4] sm:$0xf] %v2081
      %2338 = vst [vmem:[%s172 + $0xc8] sm:$0xf] %v2082
      %2339 = vst [vmem:[%s172 + $0xcc] sm:$0xf] %v2083
      %2340 = vst [vmem:[%s172 + $0xd0] sm:$0xf] %v2084
      %2341 = vst [vmem:[%s172 + $0xd4] sm:$0xf] %v2085
      %2342 = vst [vmem:[%s172 + $0xd8] sm:$0xf] %v2086
      %2343 = vst [vmem:[%s172 + $0xdc] sm:$0xf] %v2087
      %2344 = vst [vmem:[%s172 + $0xe0] sm:$0xf] %v2088
      %2345 = vst [vmem:[%s172 + $0xe4] sm:$0xf] %v2089
      %2346 = vst [vmem:[%s172 + $0xe8] sm:$0xf] %v2090
      %2347 = vst [vmem:[%s172 + $0xec] sm:$0xf] %v2091
      %2348 = vst [vmem:[%s172 + $0xf0] sm:$0xf] %v2092
      %2349 = vst [vmem:[%s172 + $0xf4] sm:$0xf] %v2093
      %2350 = vst [vmem:[%s172 + $0xf8] sm:$0xf] %v2094
      %2351 = vst [vmem:[%s172 + $0xfc] sm:$0xf] %v2095
      %2352 = vst [vmem:[%s172 + $0x100] sm:$0xf] %v2096
      %2353 = vst [vmem:[%s172 + $0x104] sm:$0xf] %v2097
      %2354 = vst [vmem:[%s172 + $0x108] sm:$0xf] %v2098
      %2355 = vst [vmem:[%s172 + $0x10c] sm:$0xf] %v2099
      %2356 = vst [vmem:[%s172 + $0x110] sm:$0xf] %v2100
      %2357 = vst [vmem:[%s172 + $0x114] sm:$0xf] %v2101
      %2358 = vst [vmem:[%s172 + $0x118] sm:$0xf] %v2102
      %2359 = vst [vmem:[%s172 + $0x11c] sm:$0xf] %v2103
      %2360 = vst [vmem:[%s172 + $0x120] sm:$0xf] %v2104
      %2361 = vst [vmem:[%s172 + $0x124] sm:$0xf] %v2105
      %2362 = vst [vmem:[%s172 + $0x128] sm:$0xf] %v2106
      %2363 = vst [vmem:[%s172 + $0x12c] sm:$0xf] %v2107
      %2364 = vst [vmem:[%s172 + $0x130] sm:$0xf] %v2108
      %2365 = vst [vmem:[%s172 + $0x134] sm:$0xf] %v2109
      %2366 = vst [vmem:[%s172 + $0x138] sm:$0xf] %v2110
      %2367 = vst [vmem:[%s172 + $0x13c] sm:$0xf] %v2111
      %2368 = vst [vmem:[%s172 + $0x140] sm:$0xf] %v2112
      %2369 = vst [vmem:[%s172 + $0x144] sm:$0xf] %v2113
      %2370 = vst [vmem:[%s172 + $0x148] sm:$0xf] %v2114
      %2371 = vst [vmem:[%s172 + $0x14c] sm:$0xf] %v2115
      %2372 = vst [vmem:[%s172 + $0x150] sm:$0xf] %v2116
      %2373 = vst [vmem:[%s172 + $0x154] sm:$0xf] %v2117
      %2374 = vst [vmem:[%s172 + $0x158] sm:$0xf] %v2118
      %2375 = vst [vmem:[%s172 + $0x15c] sm:$0xf] %v2119
      %2376 = vst [vmem:[%s172 + $0x160] sm:$0xf] %v2120
      %2377 = vst [vmem:[%s172 + $0x164] sm:$0xf] %v2121
      %2378 = vst [vmem:[%s172 + $0x168] sm:$0xf] %v2122
      %2379 = vst [vmem:[%s172 + $0x16c] sm:$0xf] %v2123
      %2380 = vst [vmem:[%s172 + $0x170] sm:$0xf] %v2124
      %2381 = vst [vmem:[%s172 + $0x174] sm:$0xf] %v2125
      %2382 = vst [vmem:[%s172 + $0x178] sm:$0xf] %v2126
      %2383 = vst [vmem:[%s172 + $0x17c] sm:$0xf] %v2127
      %2384 = vst [vmem:[%s172 + $0x180] sm:$0xf] %v2128
      %2385 = vst [vmem:[%s172 + $0x184] sm:$0xf] %v2129
      %2386 = vst [vmem:[%s172 + $0x188] sm:$0xf] %v2130
      %2387 = vst [vmem:[%s172 + $0x18c] sm:$0xf] %v2131
      %2388 = vst [vmem:[%s172 + $0x190] sm:$0xf] %v2132
      %2389 = vst [vmem:[%s172 + $0x194] sm:$0xf] %v2133
      %2390 = vst [vmem:[%s172 + $0x198] sm:$0xf] %v2134
      %2391 = vst [vmem:[%s172 + $0x19c] sm:$0xf] %v2135
      %2392 = vst [vmem:[%s172 + $0x1a0] sm:$0xf] %v2136
      %2393 = vst [vmem:[%s172 + $0x1a4] sm:$0xf] %v2137
      %2394 = vst [vmem:[%s172 + $0x1a8] sm:$0xf] %v2138
      %2395 = vst [vmem:[%s172 + $0x1ac] sm:$0xf] %v2139
      %2396 = vst [vmem:[%s172 + $0x1b0] sm:$0xf] %v2140
      %2397 = vst [vmem:[%s172 + $0x1b4] sm:$0xf] %v2141
      %2398 = vst [vmem:[%s172 + $0x1b8] sm:$0xf] %v2142
      %2399 = vst [vmem:[%s172 + $0x1bc] sm:$0xf] %v2143
      %2400 = vst [vmem:[%s172 + $0x1c0] sm:$0xf] %v2144
      %2401 = vst [vmem:[%s172 + $0x1c4] sm:$0xf] %v2145
      %2402 = vst [vmem:[%s172 + $0x1c8] sm:$0xf] %v2146
      %2403 = vst [vmem:[%s172 + $0x1cc] sm:$0xf] %v2147
      %2404 = vst [vmem:[%s172 + $0x1d0] sm:$0xf] %v2148
      %2405 = vst [vmem:[%s172 + $0x1d4] sm:$0xf] %v2149
      %2406 = vst [vmem:[%s172 + $0x1d8] sm:$0xf] %v2150
      %2407 = vst [vmem:[%s172 + $0x1dc] sm:$0xf] %v2151
      %2408 = vst [vmem:[%s172 + $0x1e0] sm:$0xf] %v2152
      %2409 = vst [vmem:[%s172 + $0x1e4] sm:$0xf] %v2153
      %2410 = vst [vmem:[%s172 + $0x1e8] sm:$0xf] %v2154
      %2411 = vst [vmem:[%s172 + $0x1ec] sm:$0xf] %v2155
      %2412 = vst [vmem:[%s172 + $0x1f0] sm:$0xf] %v2156
      %2413 = vst [vmem:[%s172 + $0x1f4] sm:$0xf] %v2157
      %2414 = vst [vmem:[%s172 + $0x1f8] sm:$0xf] %v2158
      %2415 = vst [vmem:[%s172 + $0x1fc] sm:$0xf] %v2159
      %s2416 = smul.u32 128, %s14
      %p2417 = scmp.lt.s32.totalorder %s2416, 255
      %s2418 = scalar_select %p2417, %s2416, 255
      %s2419 = smul.addr %s2418, 4
      %s2420 = scalar_lea.vmem %s3, %s2419
      // Predicated region
      $region33: #{discriminator_forward.4} parent=31 // pred_check
        %p2421 = pneg %p100
      $region34: #{discriminator_forward.4} parent=31 // pred_check_branch
        %2423 = sbr.rel (%p2421) target = $region36
      $region35: #{discriminator_forward.4} parent=31 // pred_region
        %s2424 = smul.u32 128, %s14
      $region36: #{discriminator_forward.4} parent=31 // pred_fallthru
        _
    $region32: #{discriminator_forward.4} parent=5 // pred_fallthru
      _
    %p2425 = scmp.le.s32.totalorder 2, %s9
    // Predicated region
    $region37: #{discriminator_forward.4} parent=5 // pred_check
      %p2426 = pneg %p2425
    $region38: #{discriminator_forward.4} parent=5 // pred_check_branch
      %2428 = sbr.rel (%p2426) target = $region40
    $region39: #{discriminator_forward.4} parent=5 // pred_region
      %s2429 = ssub.s32 %s9, 2
      // Predicated region
      $region41: #{discriminator_forward.4} parent=39 // pred_check
        %p2430 = pneg %p106
      $region42: #{discriminator_forward.4} parent=39 // pred_check_branch
        %2432 = sbr.rel (%p2430) target = $region44
      $region43: #{discriminator_forward.4} parent=39 // pred_region
        %s2433 = smul.u32 128, %s15
        %p2434 = scmp.lt.s32.totalorder %s2433, 255
        %s2435 = scalar_select %p2434, %s2433, 255
        %s2436 = smul.addr %s2435, 4
        %s2437 = scalar_lea.vmem %s3, %s2436
      $region44: #{discriminator_forward.4} parent=39 // pred_fallthru
        _
    $region40: #{discriminator_forward.4} parent=5 // pred_fallthru
      _
  $region6: #{discriminator_forward.4} parent=0 // loop_footer
    %s13 = sadd.s32 1, %s9
  $region7: #{discriminator_forward.4} parent=0 // loop_footer_branch
    %8 = sbr.rel target = $region3
  $region8: #{discriminator_forward.4} parent=0 // loop_exit
    _

// kernel: discriminator_forward.5
$region0: #{discriminator_forward.5}
  #allocation0 [shape = 'u32[]', space=smem, size = 0x4, offset = 0x4, fixed_abs, tag = 'smem constant byte address 0x4 - core index']
  #allocation1 [shape = 'u32[144,128]{1,0:T(1,128)}', space=vmem, size = 0x12000, scoped, tag = 'internal scratch']
  #allocation2 [shape = 'f32[2,128]{1,0:T(2,128)}', space=vmem, size = 0x400, scoped, tag = 'scratch operand']
  %s0 = inlined_call_operand.vmem [shape: bf16[512,64], index: 0, kind: input, shape index: {}]
  %s1 = inlined_call_operand.vmem [shape: bf16[64,128], index: 1, kind: input, shape index: {}]
  %s2 = inlined_call_operand.vmem [shape: f32[1,128], index: 2, kind: input, shape index: {}]
  %s3 = inlined_call_operand.vmem [shape: f32[1,128], index: 3, kind: input, shape index: {}]
  %s4 = inlined_call_operand.vmem [shape: bf16[512,128], index: 4, kind: output, shape index: {}]
  %s5 = sld [smem:[#allocation0]]
  $region61: #{discriminator_forward.5} parent=0
    _
  %s7 = ssub.s32 1, %s5
  %s8 = scalar_select 0, %s7, %s5
  loop: start=0, step=1, limit=4
  $region2: #{discriminator_forward.5} parent=0 // loop_pre_header
    _
  $region3: #{discriminator_forward.5} parent=0 // loop_header
    %s10 = sphi 0, %s14
    %p11 = scmp.ge.s32.totalorder %s10, 4
    %s17 = sphi 0, %s29
    %s18 = sphi 0, %s25
    %s19 = sphi 0, %s17
    %s20 = sphi 0, %s18
    %s21 = sphi 0, %s19
    %s22 = sphi 0, %s20
    %s32 = sphi 0, %s34
    %s35 = sphi 0, %s32
    %s36 = sphi 0, %s35
    %s52 = sphi 0, %s36
    %s56 = sphi 0, %s56
    %s58 = sphi 0, %s56
    %s59 = sphi 0, %s58
    %s73 = sphi 0, %s59
    %s77 = sphi 0, %s77
    %s79 = sphi 0, %s77
    %s80 = sphi 0, %s79
    %s94 = sphi 0, %s80
    %s98 = sphi 0, %s98
    %s100 = sphi 0, %s98
    %s101 = sphi 0, %s100
    %s115 = sphi 0, %s101
    %s121 = sphi 0, %s123
    %s124 = sphi 0, %s121
    %s125 = sphi 0, %s124
    %s141 = sphi 0, %s125
  $region4: #{discriminator_forward.5} parent=0 // loop_header_branch
    %13 = sbr.rel (%p11) target = $region8
  $region5: #{discriminator_forward.5} parent=0 // loop_body
    %s15 = ssub.s32 %s10, 1
    %s16 = ssub.s32 %s10, 2
    %s23 = sadd.s32 1, %s18
    %p24 = scmp.ge.s32.totalorder %s23, 1
    %s25 = scalar_select %p24, 0, %s23
    %s26 = sadd.s32 1, %s17
    %s27 = scalar_select %p24, %s26, %s17
    %p28 = scmp.ge.s32.totalorder %s27, 2
    %s29 = scalar_select %p28, 0, %s27
    %s30 = ssub.s32 %s18, %s25
    %p31 = scmp.eq.s32.totalorder %s30, 0
    %s33 = sadd.s32 %s32, 1
    %s34 = scalar_select %p31, %s32, %s33
    %p37 = pneg %p31
    %p38 = scmp.eq.s32.totalorder %s10, 1
    %p39 = por %p37, %p38
    %p40 = scmp.ne.s32.totalorder %s32, %s35
    %p41 = scmp.eq.s32.totalorder %s10, 0
    %p42 = por %p40, %p41
    %p43 = scmp.ne.s32.totalorder %s32, %s35
    %p44 = scmp.eq.s32.totalorder %s15, 1
    %p45 = por %p43, %p44
    %p46 = scmp.ne.s32.totalorder %s35, %s36
    %p47 = scmp.eq.s32.totalorder %s15, 0
    %p48 = por %p46, %p47
    %p49 = scmp.ne.s32.totalorder %s35, %s36
    %p50 = scmp.eq.s32.totalorder %s16, 1
    %p51 = por %p49, %p50
    %p53 = scmp.ne.s32.totalorder %s36, %s52
    %p54 = scmp.eq.s32.totalorder %s16, 0
    %p55 = por %p53, %p54
    %s57 = sadd.s32 %s56, 1
    %p60 = scmp.eq.s32.totalorder %s10, 1
    %p61 = scmp.ne.s32.totalorder %s56, %s58
    %p62 = scmp.eq.s32.totalorder %s10, 0
    %p63 = por %p61, %p62
    %p64 = scmp.ne.s32.totalorder %s56, %s58
    %p65 = scmp.eq.s32.totalorder %s15, 1
    %p66 = por %p64, %p65
    %p67 = scmp.ne.s32.totalorder %s58, %s59
    %p68 = scmp.eq.s32.totalorder %s15, 0
    %p69 = por %p67, %p68
    %p70 = scmp.ne.s32.totalorder %s58, %s59
    %p71 = scmp.eq.s32.totalorder %s16, 1
    %p72 = por %p70, %p71
    %p74 = scmp.ne.s32.totalorder %s59, %s73
    %p75 = scmp.eq.s32.totalorder %s16, 0
    %p76 = por %p74, %p75
    %s78 = sadd.s32 %s77, 1
    %p81 = scmp.eq.s32.totalorder %s10, 1
    %p82 = scmp.ne.s32.totalorder %s77, %s79
    %p83 = scmp.eq.s32.totalorder %s10, 0
    %p84 = por %p82, %p83
    %p85 = scmp.ne.s32.totalorder %s77, %s79
    %p86 = scmp.eq.s32.totalorder %s15, 1
    %p87 = por %p85, %p86
    %p88 = scmp.ne.s32.totalorder %s79, %s80
    %p89 = scmp.eq.s32.totalorder %s15, 0
    %p90 = por %p88, %p89
    %p91 = scmp.ne.s32.totalorder %s79, %s80
    %p92 = scmp.eq.s32.totalorder %s16, 1
    %p93 = por %p91, %p92
    %p95 = scmp.ne.s32.totalorder %s80, %s94
    %p96 = scmp.eq.s32.totalorder %s16, 0
    %p97 = por %p95, %p96
    %s99 = sadd.s32 %s98, 1
    %p102 = scmp.eq.s32.totalorder %s10, 1
    %p103 = scmp.ne.s32.totalorder %s98, %s100
    %p104 = scmp.eq.s32.totalorder %s10, 0
    %p105 = por %p103, %p104
    %p106 = scmp.ne.s32.totalorder %s98, %s100
    %p107 = scmp.eq.s32.totalorder %s15, 1
    %p108 = por %p106, %p107
    %p109 = scmp.ne.s32.totalorder %s100, %s101
    %p110 = scmp.eq.s32.totalorder %s15, 0
    %p111 = por %p109, %p110
    %p112 = scmp.ne.s32.totalorder %s100, %s101
    %p113 = scmp.eq.s32.totalorder %s16, 1
    %p114 = por %p112, %p113
    %p116 = scmp.ne.s32.totalorder %s101, %s115
    %p117 = scmp.eq.s32.totalorder %s16, 0
    %p118 = por %p116, %p117
    %s119 = ssub.s32 %s18, %s25
    %p120 = scmp.eq.s32.totalorder %s119, 0
    %s122 = sadd.s32 %s121, 1
    %s123 = scalar_select %p120, %s121, %s122
    %p126 = pneg %p120
    %p127 = scmp.eq.s32.totalorder %s10, 1
    %p128 = por %p126, %p127
    %p129 = scmp.ne.s32.totalorder %s121, %s124
    %p130 = scmp.eq.s32.totalorder %s10, 0
    %p131 = por %p129, %p130
    %p132 = scmp.ne.s32.totalorder %s121, %s124
    %p133 = scmp.eq.s32.totalorder %s15, 1
    %p134 = por %p132, %p133
    %p135 = scmp.ne.s32.totalorder %s124, %s125
    %p136 = scmp.eq.s32.totalorder %s15, 0
    %p137 = por %p135, %p136
    %p138 = scmp.ne.s32.totalorder %s124, %s125
    %p139 = scmp.eq.s32.totalorder %s16, 1
    %p140 = por %p138, %p139
    %p142 = scmp.ne.s32.totalorder %s125, %s141
    %p143 = scmp.eq.s32.totalorder %s16, 0
    %p144 = por %p142, %p143
    %p145 = scmp.le.s32.totalorder 1, %s10
    %p146 = scmp.lt.s32.totalorder %s10, 3
    %p147 = pnand %p145, %p146
    %p148 = pneg %p147
    // Predicated region
    $region9: #{discriminator_forward.5} parent=5 // pred_check
      _
    $region10: #{discriminator_forward.5} parent=5 // pred_check_branch
      %150 = sbr.rel (%p147) target = $region12
    $region11: #{discriminator_forward.5} parent=5 // pred_region
      %s151 = ssub.s32 %s10, 1
      // Predicated region
      $region13: #{discriminator_forward.5} parent=11 // pred_check
        %p152 = pneg %p48
      $region14: #{discriminator_forward.5} parent=11 // pred_check_branch
        %154 = sbr.rel (%p152) target = $region16
      $region15: #{discriminator_forward.5} parent=11 // pred_region
        %s155 = smul.u32 64, %s20
        %p156 = scmp.lt.s32.totalorder %s155, 63
        %s157 = scalar_select %p156, %s155, 63
        %s158 = smul.addr %s157, 4
        %s159 = scalar_lea.vmem %s0, %s158
        %s160 = smul.u32 64, %s20
      $region16: #{discriminator_forward.5} parent=11 // pred_fallthru
        _
      // Predicated region
      $region17: #{discriminator_forward.5} parent=11 // pred_check
        %p161 = pneg %p69
      $region18: #{discriminator_forward.5} parent=11 // pred_check_branch
        %163 = sbr.rel (%p161) target = $region20
      $region19: #{discriminator_forward.5} parent=11 // pred_region
        _
      $region20: #{discriminator_forward.5} parent=11 // pred_fallthru
        _
      // Predicated region
      $region21: #{discriminator_forward.5} parent=11 // pred_check
        %p164 = pneg %p90
      $region22: #{discriminator_forward.5} parent=11 // pred_check_branch
        %166 = sbr.rel (%p164) target = $region24
      $region23: #{discriminator_forward.5} parent=11 // pred_region
        _
      $region24: #{discriminator_forward.5} parent=11 // pred_fallthru
        _
      // Predicated region
      $region25: #{discriminator_forward.5} parent=11 // pred_check
        %p167 = pneg %p111
      $region26: #{discriminator_forward.5} parent=11 // pred_check_branch
        %169 = sbr.rel (%p167) target = $region28
      $region27: #{discriminator_forward.5} parent=11 // pred_region
        _
      $region28: #{discriminator_forward.5} parent=11 // pred_fallthru
        _
    $region12: #{discriminator_forward.5} parent=5 // pred_fallthru
      _
    %p170 = scmp.lt.s32.totalorder %s10, 2
    // Predicated region
    $region29: #{discriminator_forward.5} parent=5 // pred_check
      %p171 = pneg %p170
    $region30: #{discriminator_forward.5} parent=5 // pred_check_branch
      %173 = sbr.rel (%p171) target = $region32
    $region31: #{discriminator_forward.5} parent=5 // pred_region
      _
    $region32: #{discriminator_forward.5} parent=5 // pred_fallthru
      _
    %p174 = scmp.le.s32.totalorder 1, %s10
    %p175 = scmp.lt.s32.totalorder %s10, 3
    %p176 = pnand %p174, %p175
    %p177 = pneg %p176
    // Predicated region
    $region33: #{discriminator_forward.5} parent=5 // pred_check
      _
    $region34: #{discriminator_forward.5} parent=5 // pred_check_branch
      %179 = sbr.rel (%p176) target = $region36
    $region35: #{discriminator_forward.5} parent=5 // pred_region
      %s180 = ssub.s32 %s10, 1
      %s181 = smul.u32 64, %s20
      %p182 = scmp.lt.s32.totalorder %s181, 63
      %s183 = scalar_select %p182, %s181, 63
      %s184 = smul.addr %s183, 4
      %s185 = scalar_lea.vmem %s0, %s184
      %p186 = pneg %p48
      %p187 = pneg %p45
      %p188 = pneg %p69
      %p189 = pneg %p66
      %p190 = pneg %p90
      %p191 = pneg %p87
      %p192 = pneg %p111
      %p193 = pneg %p108
      %p194 = pneg %p137
      %p195 = pneg %p134
      %s196 = smul.u32 64, %s20
      %p197 = scmp.lt.s32.totalorder %s196, 63
      %s198 = scalar_select %p197, %s196, 63
      %s199 = smul.addr %s198, 4
      %s200 = scalar_lea.vmem %s4, %s199
      %s201 = smul.u32 64, %s20
      %p202 = scmp.lt.s32.totalorder %s201, 63
      %s203 = scalar_select %p202, %s201, 63
      %s204 = smul.addr %s203, 4
      %s205 = scalar_lea.vmem %s0, %s204
      %s206 = smul.u32 64, %s20
      %s207 = smul.u32 64, %s20
      %p208 = scmp.lt.s32.totalorder %s207, 63
      %s209 = scalar_select %p208, %s207, 63
      %s210 = smul.addr %s209, 4
      %s211 = scalar_lea.vmem %s4, %s210
      %s212 = smul.u32 64, %s20
      %v214 = vld [vmem:[%s205] sm:$0xf]
      %v215 = vld [vmem:[%s205 + $0x4] sm:$0xf]
      %v216 = vld [vmem:[%s205 + $0x8] sm:$0xf]
      %v217 = vld [vmem:[%s205 + $0xc] sm:$0xf]
      %v218 = vld [vmem:[%s205 + $0x10] sm:$0xf]
      %v219 = vld [vmem:[%s205 + $0x14] sm:$0xf]
      %v220 = vld [vmem:[%s205 + $0x18] sm:$0xf]
      %v221 = vld [vmem:[%s205 + $0x1c] sm:$0xf]
      %v222 = vld [vmem:[%s205 + $0x20] sm:$0xf]
      %v223 = vld [vmem:[%s205 + $0x24] sm:$0xf]
      %v224 = vld [vmem:[%s205 + $0x28] sm:$0xf]
      %v225 = vld [vmem:[%s205 + $0x2c] sm:$0xf]
      %v226 = vld [vmem:[%s205 + $0x30] sm:$0xf]
      %v227 = vld [vmem:[%s205 + $0x34] sm:$0xf]
      %v228 = vld [vmem:[%s205 + $0x38] sm:$0xf]
      %v229 = vld [vmem:[%s205 + $0x3c] sm:$0xf]
      %v230 = vld [vmem:[%s205 + $0x40] sm:$0xf]
      %v231 = vld [vmem:[%s205 + $0x44] sm:$0xf]
      %v232 = vld [vmem:[%s205 + $0x48] sm:$0xf]
      %v233 = vld [vmem:[%s205 + $0x4c] sm:$0xf]
      %v234 = vld [vmem:[%s205 + $0x50] sm:$0xf]
      %v235 = vld [vmem:[%s205 + $0x54] sm:$0xf]
      %v236 = vld [vmem:[%s205 + $0x58] sm:$0xf]
      %v237 = vld [vmem:[%s205 + $0x5c] sm:$0xf]
      %v238 = vld [vmem:[%s205 + $0x60] sm:$0xf]
      %v239 = vld [vmem:[%s205 + $0x64] sm:$0xf]
      %v240 = vld [vmem:[%s205 + $0x68] sm:$0xf]
      %v241 = vld [vmem:[%s205 + $0x6c] sm:$0xf]
      %v242 = vld [vmem:[%s205 + $0x70] sm:$0xf]
      %v243 = vld [vmem:[%s205 + $0x74] sm:$0xf]
      %v244 = vld [vmem:[%s205 + $0x78] sm:$0xf]
      %v245 = vld [vmem:[%s205 + $0x7c] sm:$0xf]
      %v246 = vld [vmem:[%s205 + $0x80] sm:$0xf]
      %v247 = vld [vmem:[%s205 + $0x84] sm:$0xf]
      %v248 = vld [vmem:[%s205 + $0x88] sm:$0xf]
      %v249 = vld [vmem:[%s205 + $0x8c] sm:$0xf]
      %v250 = vld [vmem:[%s205 + $0x90] sm:$0xf]
      %v251 = vld [vmem:[%s205 + $0x94] sm:$0xf]
      %v252 = vld [vmem:[%s205 + $0x98] sm:$0xf]
      %v253 = vld [vmem:[%s205 + $0x9c] sm:$0xf]
      %v254 = vld [vmem:[%s205 + $0xa0] sm:$0xf]
      %v255 = vld [vmem:[%s205 + $0xa4] sm:$0xf]
      %v256 = vld [vmem:[%s205 + $0xa8] sm:$0xf]
      %v257 = vld [vmem:[%s205 + $0xac] sm:$0xf]
      %v258 = vld [vmem:[%s205 + $0xb0] sm:$0xf]
      %v259 = vld [vmem:[%s205 + $0xb4] sm:$0xf]
      %v260 = vld [vmem:[%s205 + $0xb8] sm:$0xf]
      %v261 = vld [vmem:[%s205 + $0xbc] sm:$0xf]
      %v262 = vld [vmem:[%s205 + $0xc0] sm:$0xf]
      %v263 = vld [vmem:[%s205 + $0xc4] sm:$0xf]
      %v264 = vld [vmem:[%s205 + $0xc8] sm:$0xf]
      %v265 = vld [vmem:[%s205 + $0xcc] sm:$0xf]
      %v266 = vld [vmem:[%s205 + $0xd0] sm:$0xf]
      %v267 = vld [vmem:[%s205 + $0xd4] sm:$0xf]
      %v268 = vld [vmem:[%s205 + $0xd8] sm:$0xf]
      %v269 = vld [vmem:[%s205 + $0xdc] sm:$0xf]
      %v270 = vld [vmem:[%s205 + $0xe0] sm:$0xf]
      %v271 = vld [vmem:[%s205 + $0xe4] sm:$0xf]
      %v272 = vld [vmem:[%s205 + $0xe8] sm:$0xf]
      %v273 = vld [vmem:[%s205 + $0xec] sm:$0xf]
      %v274 = vld [vmem:[%s205 + $0xf0] sm:$0xf]
      %v275 = vld [vmem:[%s205 + $0xf4] sm:$0xf]
      %v276 = vld [vmem:[%s205 + $0xf8] sm:$0xf]
      %v277 = vld [vmem:[%s205 + $0xfc] sm:$0xf]
      %v278 = vld [vmem:[%s1] sm:$0xf]
      %v279 = vld [vmem:[%s1 + $0x4] sm:$0xf]
      %v280 = vld [vmem:[%s1 + $0x8] sm:$0xf]
      %v281 = vld [vmem:[%s1 + $0xc] sm:$0xf]
      %v282 = vld [vmem:[%s1 + $0x10] sm:$0xf]
      %v283 = vld [vmem:[%s1 + $0x14] sm:$0xf]
      %v284 = vld [vmem:[%s1 + $0x18] sm:$0xf]
      %v285 = vld [vmem:[%s1 + $0x1c] sm:$0xf]
      %v350 = vunpack.c.l.b16 %v214
      %v351 = vunpack.c.l.b16 %v215
      %v352 = vunpack.c.l.b16 %v216
      %v353 = vunpack.c.l.b16 %v217
      %v354 = vunpack.c.l.b16 %v218
      %v355 = vunpack.c.l.b16 %v219
      %v356 = vunpack.c.l.b16 %v220
      %v357 = vunpack.c.l.b16 %v221
      %v358 = vunpack.c.l.b16 %v222
      %v359 = vunpack.c.l.b16 %v223
      %v360 = vunpack.c.l.b16 %v224
      %v361 = vunpack.c.l.b16 %v225
      %v362 = vunpack.c.l.b16 %v226
      %v363 = vunpack.c.l.b16 %v227
      %v364 = vunpack.c.l.b16 %v228
      %v365 = vunpack.c.l.b16 %v229
      %v366 = vunpack.c.l.b16 %v230
      %v367 = vunpack.c.l.b16 %v231
      %v368 = vunpack.c.l.b16 %v232
      %v369 = vunpack.c.l.b16 %v233
      %v370 = vunpack.c.l.b16 %v234
      %v371 = vunpack.c.l.b16 %v235
      %v372 = vunpack.c.l.b16 %v236
      %v373 = vunpack.c.l.b16 %v237
      %v374 = vunpack.c.l.b16 %v238
      %v375 = vunpack.c.l.b16 %v239
      %v376 = vunpack.c.l.b16 %v240
      %v377 = vunpack.c.l.b16 %v241
      %v378 = vunpack.c.l.b16 %v242
      %v379 = vunpack.c.l.b16 %v243
      %v380 = vunpack.c.l.b16 %v244
      %v381 = vunpack.c.l.b16 %v245
      %v382 = vunpack.c.l.b16 %v246
      %v383 = vunpack.c.l.b16 %v247
      %v384 = vunpack.c.l.b16 %v248
      %v385 = vunpack.c.l.b16 %v249
      %v386 = vunpack.c.l.b16 %v250
      %v387 = vunpack.c.l.b16 %v251
      %v388 = vunpack.c.l.b16 %v252
      %v389 = vunpack.c.l.b16 %v253
      %v390 = vunpack.c.l.b16 %v254
      %v391 = vunpack.c.l.b16 %v255
      %v392 = vunpack.c.l.b16 %v256
      %v393 = vunpack.c.l.b16 %v257
      %v394 = vunpack.c.l.b16 %v258
      %v395 = vunpack.c.l.b16 %v259
      %v396 = vunpack.c.l.b16 %v260
      %v397 = vunpack.c.l.b16 %v261
      %v398 = vunpack.c.l.b16 %v262
      %v399 = vunpack.c.l.b16 %v263
      %v400 = vunpack.c.l.b16 %v264
      %v401 = vunpack.c.l.b16 %v265
      %v402 = vunpack.c.l.b16 %v266
      %v403 = vunpack.c.l.b16 %v267
      %v404 = vunpack.c.l.b16 %v268
      %v405 = vunpack.c.l.b16 %v269
      %v406 = vunpack.c.l.b16 %v270
      %v407 = vunpack.c.l.b16 %v271
      %v408 = vunpack.c.l.b16 %v272
      %v409 = vunpack.c.l.b16 %v273
      %v410 = vunpack.c.l.b16 %v274
      %v411 = vunpack.c.l.b16 %v275
      %v412 = vunpack.c.l.b16 %v276
      %v413 = vunpack.c.l.b16 %v277
      %v414 = vpack.c.b16 %v351, %v350
      %v415 = vpack.c.b16 %v353, %v352
      %v416 = vpack.c.b16 %v355, %v354
      %v417 = vpack.c.b16 %v357, %v356
      %v418 = vpack.c.b16 %v359, %v358
      %v419 = vpack.c.b16 %v361, %v360
      %v420 = vpack.c.b16 %v363, %v362
      %v421 = vpack.c.b16 %v365, %v364
      %v422 = vpack.c.b16 %v367, %v366
      %v423 = vpack.c.b16 %v369, %v368
      %v424 = vpack.c.b16 %v371, %v370
      %v425 = vpack.c.b16 %v373, %v372
      %v426 = vpack.c.b16 %v375, %v374
      %v427 = vpack.c.b16 %v377, %v376
      %v428 = vpack.c.b16 %v379, %v378
      %v429 = vpack.c.b16 %v381, %v380
      %v430 = vpack.c.b16 %v383, %v382
      %v431 = vpack.c.b16 %v385, %v384
      %v432 = vpack.c.b16 %v387, %v386
      %v433 = vpack.c.b16 %v389, %v388
      %v434 = vpack.c.b16 %v391, %v390
      %v435 = vpack.c.b16 %v393, %v392
      %v436 = vpack.c.b16 %v395, %v394
      %v437 = vpack.c.b16 %v397, %v396
      %v438 = vpack.c.b16 %v399, %v398
      %v439 = vpack.c.b16 %v401, %v400
      %v440 = vpack.c.b16 %v403, %v402
      %v441 = vpack.c.b16 %v405, %v404
      %v442 = vpack.c.b16 %v407, %v406
      %v443 = vpack.c.b16 %v409, %v408
      %v444 = vpack.c.b16 %v411, %v410
      %v445 = vpack.c.b16 %v413, %v412
      %v454 = vunpack.c.l.b16 %v278
      %v455 = vunpack.c.l.b16 %v279
      %v456 = vunpack.c.l.b16 %v280
      %v457 = vunpack.c.l.b16 %v281
      %v458 = vunpack.c.l.b16 %v282
      %v459 = vunpack.c.l.b16 %v283
      %v460 = vunpack.c.l.b16 %v284
      %v461 = vunpack.c.l.b16 %v285
      %v462 = vpack.c.b16 %v455, %v454
      %v463 = vpack.c.b16 %v457, %v456
      %v464 = vpack.c.b16 %v459, %v458
      %v465 = vpack.c.b16 %v461, %v460
      %vm470 = vcmask 523264
      %v472 = vsel %vm470, %v414, 0
      %v475 = vsel %vm470, %v415, 0
      %v478 = vsel %vm470, %v416, 0
      %v481 = vsel %vm470, %v417, 0
      %v484 = vsel %vm470, %v418, 0
      %v487 = vsel %vm470, %v419, 0
      %v490 = vsel %vm470, %v420, 0
      %v493 = vsel %vm470, %v421, 0
      %v496 = vsel %vm470, %v422, 0
      %v499 = vsel %vm470, %v423, 0
      %v502 = vsel %vm470, %v424, 0
      %v505 = vsel %vm470, %v425, 0
      %v508 = vsel %vm470, %v426, 0
      %v511 = vsel %vm470, %v427, 0
      %v514 = vsel %vm470, %v428, 0
      %v517 = vsel %vm470, %v429, 0
      %v520 = vsel %vm470, %v430, 0
      %v523 = vsel %vm470, %v431, 0
      %v526 = vsel %vm470, %v432, 0
      %v529 = vsel %vm470, %v433, 0
      %v532 = vsel %vm470, %v434, 0
      %v535 = vsel %vm470, %v435, 0
      %v538 = vsel %vm470, %v436, 0
      %v541 = vsel %vm470, %v437, 0
      %v544 = vsel %vm470, %v438, 0
      %v547 = vsel %vm470, %v439, 0
      %v550 = vsel %vm470, %v440, 0
      %v553 = vsel %vm470, %v441, 0
      %v556 = vsel %vm470, %v442, 0
      %v559 = vsel %vm470, %v443, 0
      %v562 = vsel %vm470, %v444, 0
      %v565 = vsel %vm470, %v445, 0
      %567 = vmatprep.subr.bf16.mxu0 0
      %568 = vmatpush1.bf16.msra.mxu0 %v462
      %569 = vmatprep.subr.bf16.mxu0 0
      %570 = vmatpush1.bf16.msra.mxu0 %v463
      %571 = vmatprep.subr.bf16.mxu0 0
      %572 = vmatpush1.bf16.msra.mxu0 %v464
      %573 = vmatprep.subr.bf16.mxu0 0
      %574 = vmatpush1.bf16.msra.mxu0 %v465
      %575 = vmatprep.subr.bf16.mxu0 0
      %576 = vmatpush1.bf16.msra.mxu0 0
      %577 = vmatprep.subr.bf16.mxu0 0
      %578 = vmatpush1.bf16.msra.mxu0 0
      %579 = vmatprep.subr.bf16.mxu0 0
      %580 = vmatpush1.bf16.msra.mxu0 0
      %581 = vmatprep.subr.bf16.mxu0 0
      %582 = vmatpush1.bf16.msra.mxu0 0
      %583 = vmatprep.subr.bf16.mxu0 0
      %584 = vmatpush1.bf16.msra.mxu0 0
      %585 = vmatprep.subr.bf16.mxu0 0
      %586 = vmatpush1.bf16.msra.mxu0 0
      %587 = vmatprep.subr.bf16.mxu0 0
      %588 = vmatpush1.bf16.msra.mxu0 0
      %589 = vmatprep.subr.bf16.mxu0 0
      %590 = vmatpush1.bf16.msra.mxu0 0
      %591 = vmatprep.subr.bf16.mxu0 0
      %592 = vmatpush1.bf16.msra.mxu0 0
      %593 = vmatprep.subr.bf16.mxu0 0
      %594 = vmatpush1.bf16.msra.mxu0 0
      %595 = vmatprep.subr.bf16.mxu0 0
      %596 = vmatpush1.bf16.msra.mxu0 0
      %597 = vmatprep.subr.bf16.mxu0 0
      %598 = vmatpush1.bf16.msra.mxu0 0
      %599 = vmatprep.mubr.bf16.mxu0 0
      %600 = vmatmul.mubr.bf16.gmra.mrb[0].mxu0 %v472
      %v601 = vpop.f32.mrb[0].mxu0
      %v602 = vadd.f32 0.0, %v601
      %v603 = vpop.f32.mrb[0].mxu0
      %v604 = vpop.f32.mrb[0].mxu0
      %v605 = vadd.f32 0.0, %v604
      %v606 = vpop.f32.mrb[0].mxu0
      %607 = vmatprep.mubr.bf16.mxu0 0
      %608 = vmatmul.mubr.bf16.gmra.mrb[0].mxu0 %v475
      %v609 = vpop.f32.mrb[0].mxu0
      %v610 = vadd.f32 0.0, %v609
      %v611 = vpop.f32.mrb[0].mxu0
      %v612 = vpop.f32.mrb[0].mxu0
      %v613 = vadd.f32 0.0, %v612
      %v614 = vpop.f32.mrb[0].mxu0
      %615 = vmatprep.mubr.bf16.mxu0 0
      %616 = vmatmul.mubr.bf16.gmra.mrb[0].mxu0 %v478
      %v617 = vpop.f32.mrb[0].mxu0
      %v618 = vadd.f32 0.0, %v617
      %v619 = vpop.f32.mrb[0].mxu0
      %v620 = vpop.f32.mrb[0].mxu0
      %v621 = vadd.f32 0.0, %v620
      %v622 = vpop.f32.mrb[0].mxu0
      %623 = vmatprep.mubr.bf16.mxu0 0
      %624 = vmatmul.mubr.bf16.gmra.mrb[0].mxu0 %v481
      %v625 = vpop.f32.mrb[0].mxu0
      %v626 = vadd.f32 0.0, %v625
      %v627 = vpop.f32.mrb[0].mxu0
      %v628 = vpop.f32.mrb[0].mxu0
      %v629 = vadd.f32 0.0, %v628
      %v630 = vpop.f32.mrb[0].mxu0
      %631 = vmatprep.mubr.bf16.mxu0 0
      %632 = vmatmul.mubr.bf16.gmra.mrb[0].mxu0 %v484
      %v633 = vpop.f32.mrb[0].mxu0
      %v634 = vadd.f32 0.0, %v633
      %v635 = vpop.f32.mrb[0].mxu0
      %v636 = vpop.f32.mrb[0].mxu0
      %v637 = vadd.f32 0.0, %v636
      %v638 = vpop.f32.mrb[0].mxu0
      %639 = vmatprep.mubr.bf16.mxu0 0
      %640 = vmatmul.mubr.bf16.gmra.mrb[0].mxu0 %v487
      %v641 = vpop.f32.mrb[0].mxu0
      %v642 = vadd.f32 0.0, %v641
      %v643 = vpop.f32.mrb[0].mxu0
      %v644 = vpop.f32.mrb[0].mxu0
      %v645 = vadd.f32 0.0, %v644
      %v646 = vpop.f32.mrb[0].mxu0
      %647 = vmatprep.mubr.bf16.mxu0 0
      %648 = vmatmul.mubr.bf16.gmra.mrb[0].mxu0 %v490
      %v649 = vpop.f32.mrb[0].mxu0
      %v650 = vadd.f32 0.0, %v649
      %v651 = vpop.f32.mrb[0].mxu0
      %v652 = vpop.f32.mrb[0].mxu0
      %v653 = vadd.f32 0.0, %v652
      %v654 = vpop.f32.mrb[0].mxu0
      %655 = vmatprep.mubr.bf16.mxu0 0
      %656 = vmatmul.mubr.bf16.gmra.mrb[0].mxu0 %v493
      %v657 = vpop.f32.mrb[0].mxu0
      %v658 = vadd.f32 0.0, %v657
      %v659 = vpop.f32.mrb[0].mxu0
      %v660 = vpop.f32.mrb[0].mxu0
      %v661 = vadd.f32 0.0, %v660
      %v662 = vpop.f32.mrb[0].mxu0
      %663 = vmatprep.mubr.bf16.mxu0 0
      %664 = vmatmul.mubr.bf16.gmra.mrb[0].mxu0 %v496
      %v665 = vpop.f32.mrb[0].mxu0
      %v666 = vadd.f32 0.0, %v665
      %v667 = vpop.f32.mrb[0].mxu0
      %v668 = vpop.f32.mrb[0].mxu0
      %v669 = vadd.f32 0.0, %v668
      %v670 = vpop.f32.mrb[0].mxu0
      %671 = vmatprep.mubr.bf16.mxu0 0
      %672 = vmatmul.mubr.bf16.gmra.mrb[0].mxu0 %v499
      %v673 = vpop.f32.mrb[0].mxu0
      %v674 = vadd.f32 0.0, %v673
      %v675 = vpop.f32.mrb[0].mxu0
      %v676 = vpop.f32.mrb[0].mxu0
      %v677 = vadd.f32 0.0, %v676
      %v678 = vpop.f32.mrb[0].mxu0
      %679 = vmatprep.mubr.bf16.mxu0 0
      %680 = vmatmul.mubr.bf16.gmra.mrb[0].mxu0 %v502
      %v681 = vpop.f32.mrb[0].mxu0
      %v682 = vadd.f32 0.0, %v681
      %v683 = vpop.f32.mrb[0].mxu0
      %v684 = vpop.f32.mrb[0].mxu0
      %v685 = vadd.f32 0.0, %v684
      %v686 = vpop.f32.mrb[0].mxu0
      %687 = vmatprep.mubr.bf16.mxu0 0
      %688 = vmatmul.mubr.bf16.gmra.mrb[0].mxu0 %v505
      %v689 = vpop.f32.mrb[0].mxu0
      %v690 = vadd.f32 0.0, %v689
      %v691 = vpop.f32.mrb[0].mxu0
      %v692 = vpop.f32.mrb[0].mxu0
      %v693 = vadd.f32 0.0, %v692
      %v694 = vpop.f32.mrb[0].mxu0
      %695 = vmatprep.mubr.bf16.mxu0 0
      %696 = vmatmul.mubr.bf16.gmra.mrb[0].mxu0 %v508
      %v697 = vpop.f32.mrb[0].mxu0
      %v698 = vadd.f32 0.0, %v697
      %v699 = vpop.f32.mrb[0].mxu0
      %v700 = vpop.f32.mrb[0].mxu0
      %v701 = vadd.f32 0.0, %v700
      %v702 = vpop.f32.mrb[0].mxu0
      %703 = vmatprep.mubr.bf16.mxu0 0
      %704 = vmatmul.mubr.bf16.gmra.mrb[0].mxu0 %v511
      %v705 = vpop.f32.mrb[0].mxu0
      %v706 = vadd.f32 0.0, %v705
      %v707 = vpop.f32.mrb[0].mxu0
      %v708 = vpop.f32.mrb[0].mxu0
      %v709 = vadd.f32 0.0, %v708
      %v710 = vpop.f32.mrb[0].mxu0
      %711 = vmatprep.mubr.bf16.mxu0 0
      %712 = vmatmul.mubr.bf16.gmra.mrb[0].mxu0 %v514
      %v713 = vpop.f32.mrb[0].mxu0
      %v714 = vadd.f32 0.0, %v713
      %v715 = vpop.f32.mrb[0].mxu0
      %v716 = vpop.f32.mrb[0].mxu0
      %v717 = vadd.f32 0.0, %v716
      %v718 = vpop.f32.mrb[0].mxu0
      %719 = vmatprep.mubr.bf16.mxu0 0
      %720 = vmatmul.mubr.bf16.gmra.mrb[0].mxu0 %v517
      %v721 = vpop.f32.mrb[0].mxu0
      %v722 = vadd.f32 0.0, %v721
      %v723 = vpop.f32.mrb[0].mxu0
      %v724 = vpop.f32.mrb[0].mxu0
      %v725 = vadd.f32 0.0, %v724
      %v726 = vpop.f32.mrb[0].mxu0
      %727 = vmatprep.mubr.bf16.mxu0 0
      %728 = vmatmul.mubr.bf16.gmra.mrb[0].mxu0 %v520
      %v729 = vpop.f32.mrb[0].mxu0
      %v730 = vadd.f32 0.0, %v729
      %v731 = vpop.f32.mrb[0].mxu0
      %v732 = vpop.f32.mrb[0].mxu0
      %v733 = vadd.f32 0.0, %v732
      %v734 = vpop.f32.mrb[0].mxu0
      %735 = vmatprep.mubr.bf16.mxu0 0
      %736 = vmatmul.mubr.bf16.gmra.mrb[0].mxu0 %v523
      %v737 = vpop.f32.mrb[0].mxu0
      %v738 = vadd.f32 0.0, %v737
      %v739 = vpop.f32.mrb[0].mxu0
      %v740 = vpop.f32.mrb[0].mxu0
      %v741 = vadd.f32 0.0, %v740
      %v742 = vpop.f32.mrb[0].mxu0
      %743 = vmatprep.mubr.bf16.mxu0 0
      %744 = vmatmul.mubr.bf16.gmra.mrb[0].mxu0 %v526
      %v745 = vpop.f32.mrb[0].mxu0
      %v746 = vadd.f32 0.0, %v745
      %v747 = vpop.f32.mrb[0].mxu0
      %v748 = vpop.f32.mrb[0].mxu0
      %v749 = vadd.f32 0.0, %v748
      %v750 = vpop.f32.mrb[0].mxu0
      %751 = vmatprep.mubr.bf16.mxu0 0
      %752 = vmatmul.mubr.bf16.gmra.mrb[0].mxu0 %v529
      %v753 = vpop.f32.mrb[0].mxu0
      %v754 = vadd.f32 0.0, %v753
      %v755 = vpop.f32.mrb[0].mxu0
      %v756 = vpop.f32.mrb[0].mxu0
      %v757 = vadd.f32 0.0, %v756
      %v758 = vpop.f32.mrb[0].mxu0
      %759 = vmatprep.mubr.bf16.mxu0 0
      %760 = vmatmul.mubr.bf16.gmra.mrb[0].mxu0 %v532
      %v761 = vpop.f32.mrb[0].mxu0
      %v762 = vadd.f32 0.0, %v761
      %v763 = vpop.f32.mrb[0].mxu0
      %v764 = vpop.f32.mrb[0].mxu0
      %v765 = vadd.f32 0.0, %v764
      %v766 = vpop.f32.mrb[0].mxu0
      %767 = vmatprep.mubr.bf16.mxu0 0
      %768 = vmatmul.mubr.bf16.gmra.mrb[0].mxu0 %v535
      %v769 = vpop.f32.mrb[0].mxu0
      %v770 = vadd.f32 0.0, %v769
      %v771 = vpop.f32.mrb[0].mxu0
      %v772 = vpop.f32.mrb[0].mxu0
      %v773 = vadd.f32 0.0, %v772
      %v774 = vpop.f32.mrb[0].mxu0
      %775 = vmatprep.mubr.bf16.mxu0 0
      %776 = vmatmul.mubr.bf16.gmra.mrb[0].mxu0 %v538
      %v777 = vpop.f32.mrb[0].mxu0
      %v778 = vadd.f32 0.0, %v777
      %v779 = vpop.f32.mrb[0].mxu0
      %v780 = vpop.f32.mrb[0].mxu0
      %v781 = vadd.f32 0.0, %v780
      %v782 = vpop.f32.mrb[0].mxu0
      %783 = vmatprep.mubr.bf16.mxu0 0
      %784 = vmatmul.mubr.bf16.gmra.mrb[0].mxu0 %v541
      %v785 = vpop.f32.mrb[0].mxu0
      %v786 = vadd.f32 0.0, %v785
      %v787 = vpop.f32.mrb[0].mxu0
      %v788 = vpop.f32.mrb[0].mxu0
      %v789 = vadd.f32 0.0, %v788
      %v790 = vpop.f32.mrb[0].mxu0
      %791 = vmatprep.mubr.bf16.mxu0 0
      %792 = vmatmul.mubr.bf16.gmra.mrb[0].mxu0 %v544
      %v793 = vpop.f32.mrb[0].mxu0
      %v794 = vadd.f32 0.0, %v793
      %v795 = vpop.f32.mrb[0].mxu0
      %v796 = vpop.f32.mrb[0].mxu0
      %v797 = vadd.f32 0.0, %v796
      %v798 = vpop.f32.mrb[0].mxu0
      %799 = vmatprep.mubr.bf16.mxu0 0
      %800 = vmatmul.mubr.bf16.gmra.mrb[0].mxu0 %v547
      %v801 = vpop.f32.mrb[0].mxu0
      %v802 = vadd.f32 0.0, %v801
      %v803 = vpop.f32.mrb[0].mxu0
      %v804 = vpop.f32.mrb[0].mxu0
      %v805 = vadd.f32 0.0, %v804
      %v806 = vpop.f32.mrb[0].mxu0
      %807 = vmatprep.mubr.bf16.mxu0 0
      %808 = vmatmul.mubr.bf16.gmra.mrb[0].mxu0 %v550
      %v809 = vpop.f32.mrb[0].mxu0
      %v810 = vadd.f32 0.0, %v809
      %v811 = vpop.f32.mrb[0].mxu0
      %v812 = vpop.f32.mrb[0].mxu0
      %v813 = vadd.f32 0.0, %v812
      %v814 = vpop.f32.mrb[0].mxu0
      %815 = vmatprep.mubr.bf16.mxu0 0
      %816 = vmatmul.mubr.bf16.gmra.mrb[0].mxu0 %v553
      %v817 = vpop.f32.mrb[0].mxu0
      %v818 = vadd.f32 0.0, %v817
      %v819 = vpop.f32.mrb[0].mxu0
      %v820 = vpop.f32.mrb[0].mxu0
      %v821 = vadd.f32 0.0, %v820
      %v822 = vpop.f32.mrb[0].mxu0
      %823 = vmatprep.mubr.bf16.mxu0 0
      %824 = vmatmul.mubr.bf16.gmra.mrb[0].mxu0 %v556
      %v825 = vpop.f32.mrb[0].mxu0
      %v826 = vadd.f32 0.0, %v825
      %v827 = vpop.f32.mrb[0].mxu0
      %v828 = vpop.f32.mrb[0].mxu0
      %v829 = vadd.f32 0.0, %v828
      %v830 = vpop.f32.mrb[0].mxu0
      %831 = vmatprep.mubr.bf16.mxu0 0
      %832 = vmatmul.mubr.bf16.gmra.mrb[0].mxu0 %v559
      %v833 = vpop.f32.mrb[0].mxu0
      %v834 = vadd.f32 0.0, %v833
      %v835 = vpop.f32.mrb[0].mxu0
      %v836 = vpop.f32.mrb[0].mxu0
      %v837 = vadd.f32 0.0, %v836
      %v838 = vpop.f32.mrb[0].mxu0
      %839 = vmatprep.mubr.bf16.mxu0 0
      %840 = vmatmul.mubr.bf16.gmra.mrb[0].mxu0 %v562
      %v841 = vpop.f32.mrb[0].mxu0
      %v842 = vadd.f32 0.0, %v841
      %v843 = vpop.f32.mrb[0].mxu0
      %v844 = vpop.f32.mrb[0].mxu0
      %v845 = vadd.f32 0.0, %v844
      %v846 = vpop.f32.mrb[0].mxu0
      %847 = vmatprep.mubr.bf16.mxu0 0
      %848 = vmatmul.mubr.bf16.gmra.mrb[0].mxu0 %v565
      %v849 = vpop.f32.mrb[0].mxu0
      %v850 = vadd.f32 0.0, %v849
      %v851 = vpop.f32.mrb[0].mxu0
      %v852 = vpop.f32.mrb[0].mxu0
      %v853 = vadd.f32 0.0, %v852
      %v854 = vpop.f32.mrb[0].mxu0
      %855 = vdwg.mxu0
      %p856 = scmp.eq.s32.totalorder %s19, 0
      %p857 = scmp.eq.s32.totalorder %s20, 0
      %p858 = pnand %p856, %p857
      %p859 = pneg %p858
      // Predicated region
      $region37: #{discriminator_forward.5} parent=35 // pred_check
        _
      $region38: #{discriminator_forward.5} parent=35 // pred_check_branch
        %861 = sbr.rel (%p858) target = $region40
      $region39: #{discriminator_forward.5} parent=35 // pred_region
        %862 = vst [vmem:[#allocation2] sm:$0x3] 0.0
      $region40: #{discriminator_forward.5} parent=35 // pred_fallthru
        _
      // Predicated region
      $region41: #{discriminator_forward.5} parent=35 // pred_check
        %p863 = pneg %p856
      $region42: #{discriminator_forward.5} parent=35 // pred_check_branch
        %865 = sbr.rel (%p863) target = $region44
      $region43: #{discriminator_forward.5} parent=35 // pred_region
        %v866 = vld [vmem:[#allocation2] sm:$0x1]
        %v867 = vadd.f32 %v602, %v605
        %v868 = vadd.f32 %v867, %v610
        %v869 = vadd.f32 %v868, %v613
        %v870 = vadd.f32 %v869, %v618
        %v871 = vadd.f32 %v870, %v621
        %v872 = vadd.f32 %v871, %v626
        %v873 = vadd.f32 %v872, %v629
        %v874 = vadd.f32 %v873, %v634
        %v875 = vadd.f32 %v874, %v637
        %v876 = vadd.f32 %v875, %v642
        %v877 = vadd.f32 %v876, %v645
        %v878 = vadd.f32 %v877, %v650
        %v879 = vadd.f32 %v878, %v653
        %v880 = vadd.f32 %v879, %v658
        %v881 = vadd.f32 %v880, %v661
        %v882 = vadd.f32 %v881, %v666
        %v883 = vadd.f32 %v882, %v669
        %v884 = vadd.f32 %v883, %v674
        %v885 = vadd.f32 %v884, %v677
        %v886 = vadd.f32 %v885, %v682
        %v887 = vadd.f32 %v886, %v685
        %v888 = vadd.f32 %v887, %v690
        %v889 = vadd.f32 %v888, %v693
        %v890 = vadd.f32 %v889, %v698
        %v891 = vadd.f32 %v890, %v701
        %v892 = vadd.f32 %v891, %v706
        %v893 = vadd.f32 %v892, %v709
        %v894 = vadd.f32 %v893, %v714
        %v895 = vadd.f32 %v894, %v717
        %v896 = vadd.f32 %v895, %v722
        %v897 = vadd.f32 %v896, %v725
        %v898 = vadd.f32 %v897, %v730
        %v899 = vadd.f32 %v898, %v733
        %v900 = vadd.f32 %v899, %v738
        %v901 = vadd.f32 %v900, %v741
        %v902 = vadd.f32 %v901, %v746
        %v903 = vadd.f32 %v902, %v749
        %v904 = vadd.f32 %v903, %v754
        %v905 = vadd.f32 %v904, %v757
        %v906 = vadd.f32 %v905, %v762
        %v907 = vadd.f32 %v906, %v765
        %v908 = vadd.f32 %v907, %v770
        %v909 = vadd.f32 %v908, %v773
        %v910 = vadd.f32 %v909, %v778
        %v911 = vadd.f32 %v910, %v781
        %v912 = vadd.f32 %v911, %v786
        %v913 = vadd.f32 %v912, %v789
        %v914 = vadd.f32 %v913, %v794
        %v915 = vadd.f32 %v914, %v797
        %v916 = vadd.f32 %v915, %v802
        %v917 = vadd.f32 %v916, %v805
        %v918 = vadd.f32 %v917, %v810
        %v919 = vadd.f32 %v918, %v813
        %v920 = vadd.f32 %v919, %v818
        %v921 = vadd.f32 %v920, %v821
        %v922 = vadd.f32 %v921, %v826
        %v923 = vadd.f32 %v922, %v829
        %v924 = vadd.f32 %v923, %v834
        %v925 = vadd.f32 %v924, %v837
        %v926 = vadd.f32 %v925, %v842
        %v927 = vadd.f32 %v926, %v845
        %v928 = vadd.f32 %v927, %v850
        %v929 = vadd.f32 %v928, %v853
        %v930 = vrot.slane %v929, 4
        %v931 = vadd.f32 %v929, %v930
        %v932 = vrot.slane %v931, 2
        %v933 = vadd.f32 %v931, %v932
        %v934 = vrot.slane %v933, 1
        %v935 = vadd.f32 %v933, %v934
        %v936 = vadd.f32 %v866, %v935
        %937 = vst [vmem:[#allocation2] sm:$0x1] %v936
        %v938 = vld [vmem:[#allocation2 + $0x1] sm:$0x1]
        %v939 = vmul.f32 %v602, %v602
        %v940 = vmul.f32 %v605, %v605
        %v941 = vmul.f32 %v610, %v610
        %v942 = vmul.f32 %v613, %v613
        %v943 = vmul.f32 %v618, %v618
        %v944 = vmul.f32 %v621, %v621
        %v945 = vmul.f32 %v626, %v626
        %v946 = vmul.f32 %v629, %v629
        %v947 = vmul.f32 %v634, %v634
        %v948 = vmul.f32 %v637, %v637
        %v949 = vmul.f32 %v642, %v642
        %v950 = vmul.f32 %v645, %v645
        %v951 = vmul.f32 %v650, %v650
        %v952 = vmul.f32 %v653, %v653
        %v953 = vmul.f32 %v658, %v658
        %v954 = vmul.f32 %v661, %v661
        %v955 = vmul.f32 %v666, %v666
        %v956 = vmul.f32 %v669, %v669
        %v957 = vmul.f32 %v674, %v674
        %v958 = vmul.f32 %v677, %v677
        %v959 = vmul.f32 %v682, %v682
        %v960 = vmul.f32 %v685, %v685
        %v961 = vmul.f32 %v690, %v690
        %v962 = vmul.f32 %v693, %v693
        %v963 = vmul.f32 %v698, %v698
        %v964 = vmul.f32 %v701, %v701
        %v965 = vmul.f32 %v706, %v706
        %v966 = vmul.f32 %v709, %v709
        %v967 = vmul.f32 %v714, %v714
        %v968 = vmul.f32 %v717, %v717
        %v969 = vmul.f32 %v722, %v722
        %v970 = vmul.f32 %v725, %v725
        %v971 = vmul.f32 %v730, %v730
        %v972 = vmul.f32 %v733, %v733
        %v973 = vmul.f32 %v738, %v738
        %v974 = vmul.f32 %v741, %v741
        %v975 = vmul.f32 %v746, %v746
        %v976 = vmul.f32 %v749, %v749
        %v977 = vmul.f32 %v754, %v754
        %v978 = vmul.f32 %v757, %v757
        %v979 = vmul.f32 %v762, %v762
        %v980 = vmul.f32 %v765, %v765
        %v981 = vmul.f32 %v770, %v770
        %v982 = vmul.f32 %v773, %v773
        %v983 = vmul.f32 %v778, %v778
        %v984 = vmul.f32 %v781, %v781
        %v985 = vmul.f32 %v786, %v786
        %v986 = vmul.f32 %v789, %v789
        %v987 = vmul.f32 %v794, %v794
        %v988 = vmul.f32 %v797, %v797
        %v989 = vmul.f32 %v802, %v802
        %v990 = vmul.f32 %v805, %v805
        %v991 = vmul.f32 %v810, %v810
        %v992 = vmul.f32 %v813, %v813
        %v993 = vmul.f32 %v818, %v818
        %v994 = vmul.f32 %v821, %v821
        %v995 = vmul.f32 %v826, %v826
        %v996 = vmul.f32 %v829, %v829
        %v997 = vmul.f32 %v834, %v834
        %v998 = vmul.f32 %v837, %v837
        %v999 = vmul.f32 %v842, %v842
        %v1000 = vmul.f32 %v845, %v845
        %v1001 = vmul.f32 %v850, %v850
        %v1002 = vmul.f32 %v853, %v853
        %v1003 = vadd.f32 %v939, %v940
        %v1004 = vadd.f32 %v1003, %v941
        %v1005 = vadd.f32 %v1004, %v942
        %v1006 = vadd.f32 %v1005, %v943
        %v1007 = vadd.f32 %v1006, %v944
        %v1008 = vadd.f32 %v1007, %v945
        %v1009 = vadd.f32 %v1008, %v946
        %v1010 = vadd.f32 %v1009, %v947
        %v1011 = vadd.f32 %v1010, %v948
        %v1012 = vadd.f32 %v1011, %v949
        %v1013 = vadd.f32 %v1012, %v950
        %v1014 = vadd.f32 %v1013, %v951
        %v1015 = vadd.f32 %v1014, %v952
        %v1016 = vadd.f32 %v1015, %v953
        %v1017 = vadd.f32 %v1016, %v954
        %v1018 = vadd.f32 %v1017, %v955
        %v1019 = vadd.f32 %v1018, %v956
        %v1020 = vadd.f32 %v1019, %v957
        %v1021 = vadd.f32 %v1020, %v958
        %v1022 = vadd.f32 %v1021, %v959
        %v1023 = vadd.f32 %v1022, %v960
        %v1024 = vadd.f32 %v1023, %v961
        %v1025 = vadd.f32 %v1024, %v962
        %v1026 = vadd.f32 %v1025, %v963
        %v1027 = vadd.f32 %v1026, %v964
        %v1028 = vadd.f32 %v1027, %v965
        %v1029 = vadd.f32 %v1028, %v966
        %v1030 = vadd.f32 %v1029, %v967
        %v1031 = vadd.f32 %v1030, %v968
        %v1032 = vadd.f32 %v1031, %v969
        %v1033 = vadd.f32 %v1032, %v970
        %v1034 = vadd.f32 %v1033, %v971
        %v1035 = vadd.f32 %v1034, %v972
        %v1036 = vadd.f32 %v1035, %v973
        %v1037 = vadd.f32 %v1036, %v974
        %v1038 = vadd.f32 %v1037, %v975
        %v1039 = vadd.f32 %v1038, %v976
        %v1040 = vadd.f32 %v1039, %v977
        %v1041 = vadd.f32 %v1040, %v978
        %v1042 = vadd.f32 %v1041, %v979
        %v1043 = vadd.f32 %v1042, %v980
        %v1044 = vadd.f32 %v1043, %v981
        %v1045 = vadd.f32 %v1044, %v982
        %v1046 = vadd.f32 %v1045, %v983
        %v1047 = vadd.f32 %v1046, %v984
        %v1048 = vadd.f32 %v1047, %v985
        %v1049 = vadd.f32 %v1048, %v986
        %v1050 = vadd.f32 %v1049, %v987
        %v1051 = vadd.f32 %v1050, %v988
        %v1052 = vadd.f32 %v1051, %v989
        %v1053 = vadd.f32 %v1052, %v990
        %v1054 = vadd.f32 %v1053, %v991
        %v1055 = vadd.f32 %v1054, %v992
        %v1056 = vadd.f32 %v1055, %v993
        %v1057 = vadd.f32 %v1056, %v994
        %v1058 = vadd.f32 %v1057, %v995
        %v1059 = vadd.f32 %v1058, %v996
        %v1060 = vadd.f32 %v1059, %v997
        %v1061 = vadd.f32 %v1060, %v998
        %v1062 = vadd.f32 %v1061, %v999
        %v1063 = vadd.f32 %v1062, %v1000
        %v1064 = vadd.f32 %v1063, %v1001
        %v1065 = vadd.f32 %v1064, %v1002
        %v1066 = vrot.slane %v1065, 4
        %v1067 = vadd.f32 %v1065, %v1066
        %v1068 = vrot.slane %v1067, 2
        %v1069 = vadd.f32 %v1067, %v1068
        %v1070 = vrot.slane %v1069, 1
        %v1071 = vadd.f32 %v1069, %v1070
        %v1072 = vadd.f32 %v938, %v1071
        %1073 = vst [vmem:[#allocation2 + $0x1] sm:$0x1] %v1072
      $region44: #{discriminator_forward.5} parent=35 // pred_fallthru
        _
      %p1074 = scmp.eq.s32.totalorder %s19, 1
      // Predicated region
      $region45: #{discriminator_forward.5} parent=35 // pred_check
        %p1075 = pneg %p1074
      $region46: #{discriminator_forward.5} parent=35 // pred_check_branch
        %1077 = sbr.rel (%p1075) target = $region48
      $region47: #{discriminator_forward.5} parent=35 // pred_region
        %v1078 = vld [vmem:[#allocation2] sm:$0x1]
        %v1079 = vmul.f32 %v1078, 0.001953125
        %v1080 = vld [vmem:[#allocation2 + $0x1] sm:$0x1]
        %v1081 = vmul.f32 %v1080, 0.001953125
        %v1082 = vmul.f32 %v1079, %v1079
        %v1083 = vsub.f32 %v1081, %v1082
        %v1084 = vlaneseq
        %v1085 = vshrl.u32 %v1084, 7
        %v1086 = vsub.s32 0, %v1085
        %v1087 = vrot.slane %v1079, %v1086
        %v1088 = vsub.f32 %v602, %v1087
        %v1089 = vsub.f32 %v605, %v1087
        %v1090 = vsub.f32 %v610, %v1087
        %v1091 = vsub.f32 %v613, %v1087
        %v1092 = vsub.f32 %v618, %v1087
        %v1093 = vsub.f32 %v621, %v1087
        %v1094 = vsub.f32 %v626, %v1087
        %v1095 = vsub.f32 %v629, %v1087
        %v1096 = vsub.f32 %v634, %v1087
        %v1097 = vsub.f32 %v637, %v1087
        %v1098 = vsub.f32 %v642, %v1087
        %v1099 = vsub.f32 %v645, %v1087
        %v1100 = vsub.f32 %v650, %v1087
        %v1101 = vsub.f32 %v653, %v1087
        %v1102 = vsub.f32 %v658, %v1087
        %v1103 = vsub.f32 %v661, %v1087
        %v1104 = vsub.f32 %v666, %v1087
        %v1105 = vsub.f32 %v669, %v1087
        %v1106 = vsub.f32 %v674, %v1087
        %v1107 = vsub.f32 %v677, %v1087
        %v1108 = vsub.f32 %v682, %v1087
        %v1109 = vsub.f32 %v685, %v1087
        %v1110 = vsub.f32 %v690, %v1087
        %v1111 = vsub.f32 %v693, %v1087
        %v1112 = vsub.f32 %v698, %v1087
        %v1113 = vsub.f32 %v701, %v1087
        %v1114 = vsub.f32 %v706, %v1087
        %v1115 = vsub.f32 %v709, %v1087
        %v1116 = vsub.f32 %v714, %v1087
        %v1117 = vsub.f32 %v717, %v1087
        %v1118 = vsub.f32 %v722, %v1087
        %v1119 = vsub.f32 %v725, %v1087
        %v1120 = vsub.f32 %v730, %v1087
        %v1121 = vsub.f32 %v733, %v1087
        %v1122 = vsub.f32 %v738, %v1087
        %v1123 = vsub.f32 %v741, %v1087
        %v1124 = vsub.f32 %v746, %v1087
        %v1125 = vsub.f32 %v749, %v1087
        %v1126 = vsub.f32 %v754, %v1087
        %v1127 = vsub.f32 %v757, %v1087
        %v1128 = vsub.f32 %v762, %v1087
        %v1129 = vsub.f32 %v765, %v1087
        %v1130 = vsub.f32 %v770, %v1087
        %v1131 = vsub.f32 %v773, %v1087
        %v1132 = vsub.f32 %v778, %v1087
        %v1133 = vsub.f32 %v781, %v1087
        %v1134 = vsub.f32 %v786, %v1087
        %v1135 = vsub.f32 %v789, %v1087
        %v1136 = vsub.f32 %v794, %v1087
        %v1137 = vsub.f32 %v797, %v1087
        %v1138 = vsub.f32 %v802, %v1087
        %v1139 = vsub.f32 %v805, %v1087
        %v1140 = vsub.f32 %v810, %v1087
        %v1141 = vsub.f32 %v813, %v1087
        %v1142 = vsub.f32 %v818, %v1087
        %v1143 = vsub.f32 %v821, %v1087
        %v1144 = vsub.f32 %v826, %v1087
        %v1145 = vsub.f32 %v829, %v1087
        %v1146 = vsub.f32 %v834, %v1087
        %v1147 = vsub.f32 %v837, %v1087
        %v1148 = vsub.f32 %v842, %v1087
        %v1149 = vsub.f32 %v845, %v1087
        %v1150 = vsub.f32 %v850, %v1087
        %v1151 = vsub.f32 %v853, %v1087
        %v1152 = vadd.f32 %v1083, 1e-05
        %v1153 = vrsqrt.pop %v1152
        %v1154 = vlaneseq
        %v1155 = vshrl.u32 %v1154, 7
        %v1156 = vsub.s32 0, %v1155
        %v1157 = vrot.slane %v1153, %v1156
        %v1158 = vmul.f32 %v1088, %v1157
        %v1159 = vmul.f32 %v1089, %v1157
        %v1160 = vmul.f32 %v1090, %v1157
        %v1161 = vmul.f32 %v1091, %v1157
        %v1162 = vmul.f32 %v1092, %v1157
        %v1163 = vmul.f32 %v1093, %v1157
        %v1164 = vmul.f32 %v1094, %v1157
        %v1165 = vmul.f32 %v1095, %v1157
        %v1166 = vmul.f32 %v1096, %v1157
        %v1167 = vmul.f32 %v1097, %v1157
        %v1168 = vmul.f32 %v1098, %v1157
        %v1169 = vmul.f32 %v1099, %v1157
        %v1170 = vmul.f32 %v1100, %v1157
        %v1171 = vmul.f32 %v1101, %v1157
        %v1172 = vmul.f32 %v1102, %v1157
        %v1173 = vmul.f32 %v1103, %v1157
        %v1174 = vmul.f32 %v1104, %v1157
        %v1175 = vmul.f32 %v1105, %v1157
        %v1176 = vmul.f32 %v1106, %v1157
        %v1177 = vmul.f32 %v1107, %v1157
        %v1178 = vmul.f32 %v1108, %v1157
        %v1179 = vmul.f32 %v1109, %v1157
        %v1180 = vmul.f32 %v1110, %v1157
        %v1181 = vmul.f32 %v1111, %v1157
        %v1182 = vmul.f32 %v1112, %v1157
        %v1183 = vmul.f32 %v1113, %v1157
        %v1184 = vmul.f32 %v1114, %v1157
        %v1185 = vmul.f32 %v1115, %v1157
        %v1186 = vmul.f32 %v1116, %v1157
        %v1187 = vmul.f32 %v1117, %v1157
        %v1188 = vmul.f32 %v1118, %v1157
        %v1189 = vmul.f32 %v1119, %v1157
        %v1190 = vmul.f32 %v1120, %v1157
        %v1191 = vmul.f32 %v1121, %v1157
        %v1192 = vmul.f32 %v1122, %v1157
        %v1193 = vmul.f32 %v1123, %v1157
        %v1194 = vmul.f32 %v1124, %v1157
        %v1195 = vmul.f32 %v1125, %v1157
        %v1196 = vmul.f32 %v1126, %v1157
        %v1197 = vmul.f32 %v1127, %v1157
        %v1198 = vmul.f32 %v1128, %v1157
        %v1199 = vmul.f32 %v1129, %v1157
        %v1200 = vmul.f32 %v1130, %v1157
        %v1201 = vmul.f32 %v1131, %v1157
        %v1202 = vmul.f32 %v1132, %v1157
        %v1203 = vmul.f32 %v1133, %v1157
        %v1204 = vmul.f32 %v1134, %v1157
        %v1205 = vmul.f32 %v1135, %v1157
        %v1206 = vmul.f32 %v1136, %v1157
        %v1207 = vmul.f32 %v1137, %v1157
        %v1208 = vmul.f32 %v1138, %v1157
        %v1209 = vmul.f32 %v1139, %v1157
        %v1210 = vmul.f32 %v1140, %v1157
        %v1211 = vmul.f32 %v1141, %v1157
        %v1212 = vmul.f32 %v1142, %v1157
        %v1213 = vmul.f32 %v1143, %v1157
        %v1214 = vmul.f32 %v1144, %v1157
        %v1215 = vmul.f32 %v1145, %v1157
        %v1216 = vmul.f32 %v1146, %v1157
        %v1217 = vmul.f32 %v1147, %v1157
        %v1218 = vmul.f32 %v1148, %v1157
        %v1219 = vmul.f32 %v1149, %v1157
        %v1220 = vmul.f32 %v1150, %v1157
        %v1221 = vmul.f32 %v1151, %v1157
        %v1222 = vld [vmem:[%s2] sm:$0x1]
        %v1224 = vlaneseq
        %v1225 = vshrl.u32 %v1224, 7
        %v1226 = vsub.s32 0, %v1225
        %v1227 = vrot.slane %v1222, %v1226
        %v1229 = vmul.f32 %v1158, %v1227
        %v1230 = vmul.f32 %v1159, %v1227
        %v1231 = vmul.f32 %v1160, %v1227
        %v1232 = vmul.f32 %v1161, %v1227
        %v1233 = vmul.f32 %v1162, %v1227
        %v1234 = vmul.f32 %v1163, %v1227
        %v1235 = vmul.f32 %v1164, %v1227
        %v1236 = vmul.f32 %v1165, %v1227
        %v1237 = vmul.f32 %v1166, %v1227
        %v1238 = vmul.f32 %v1167, %v1227
        %v1239 = vmul.f32 %v1168, %v1227
        %v1240 = vmul.f32 %v1169, %v1227
        %v1241 = vmul.f32 %v1170, %v1227
        %v1242 = vmul.f32 %v1171, %v1227
        %v1243 = vmul.f32 %v1172, %v1227
        %v1244 = vmul.f32 %v1173, %v1227
        %v1245 = vmul.f32 %v1174, %v1227
        %v1246 = vmul.f32 %v1175, %v1227
        %v1247 = vmul.f32 %v1176, %v1227
        %v1248 = vmul.f32 %v1177, %v1227
        %v1249 = vmul.f32 %v1178, %v1227
        %v1250 = vmul.f32 %v1179, %v1227
        %v1251 = vmul.f32 %v1180, %v1227
        %v1252 = vmul.f32 %v1181, %v1227
        %v1253 = vmul.f32 %v1182, %v1227
        %v1254 = vmul.f32 %v1183, %v1227
        %v1255 = vmul.f32 %v1184, %v1227
        %v1256 = vmul.f32 %v1185, %v1227
        %v1257 = vmul.f32 %v1186, %v1227
        %v1258 = vmul.f32 %v1187, %v1227
        %v1259 = vmul.f32 %v1188, %v1227
        %v1260 = vmul.f32 %v1189, %v1227
        %v1261 = vmul.f32 %v1190, %v1227
        %v1262 = vmul.f32 %v1191, %v1227
        %v1263 = vmul.f32 %v1192, %v1227
        %v1264 = vmul.f32 %v1193, %v1227
        %v1265 = vmul.f32 %v1194, %v1227
        %v1266 = vmul.f32 %v1195, %v1227
        %v1267 = vmul.f32 %v1196, %v1227
        %v1268 = vmul.f32 %v1197, %v1227
        %v1269 = vmul.f32 %v1198, %v1227
        %v1270 = vmul.f32 %v1199, %v1227
        %v1271 = vmul.f32 %v1200, %v1227
        %v1272 = vmul.f32 %v1201, %v1227
        %v1273 = vmul.f32 %v1202, %v1227
        %v1274 = vmul.f32 %v1203, %v1227
        %v1275 = vmul.f32 %v1204, %v1227
        %v1276 = vmul.f32 %v1205, %v1227
        %v1277 = vmul.f32 %v1206, %v1227
        %v1278 = vmul.f32 %v1207, %v1227
        %v1279 = vmul.f32 %v1208, %v1227
        %v1280 = vmul.f32 %v1209, %v1227
        %v1281 = vmul.f32 %v1210, %v1227
        %v1282 = vmul.f32 %v1211, %v1227
        %v1283 = vmul.f32 %v1212, %v1227
        %v1284 = vmul.f32 %v1213, %v1227
        %v1285 = vmul.f32 %v1214, %v1227
        %v1286 = vmul.f32 %v1215, %v1227
        %v1287 = vmul.f32 %v1216, %v1227
        %v1288 = vmul.f32 %v1217, %v1227
        %v1289 = vmul.f32 %v1218, %v1227
        %v1290 = vmul.f32 %v1219, %v1227
        %v1291 = vmul.f32 %v1220, %v1227
        %v1292 = vmul.f32 %v1221, %v1227
        %v1293 = vld [vmem:[%s3] sm:$0x1]
        %v1295 = vlaneseq
        %v1296 = vshrl.u32 %v1295, 7
        %v1297 = vsub.s32 0, %v1296
        %v1298 = vrot.slane %v1293, %v1297
        %v1300 = vadd.f32 %v1229, %v1298
        %v1301 = vadd.f32 %v1230, %v1298
        %v1302 = vadd.f32 %v1231, %v1298
        %v1303 = vadd.f32 %v1232, %v1298
        %v1304 = vadd.f32 %v1233, %v1298
        %v1305 = vadd.f32 %v1234, %v1298
        %v1306 = vadd.f32 %v1235, %v1298
        %v1307 = vadd.f32 %v1236, %v1298
        %v1308 = vadd.f32 %v1237, %v1298
        %v1309 = vadd.f32 %v1238, %v1298
        %v1310 = vadd.f32 %v1239, %v1298
        %v1311 = vadd.f32 %v1240, %v1298
        %v1312 = vadd.f32 %v1241, %v1298
        %v1313 = vadd.f32 %v1242, %v1298
        %v1314 = vadd.f32 %v1243, %v1298
        %v1315 = vadd.f32 %v1244, %v1298
        %v1316 = vadd.f32 %v1245, %v1298
        %v1317 = vadd.f32 %v1246, %v1298
        %v1318 = vadd.f32 %v1247, %v1298
        %v1319 = vadd.f32 %v1248, %v1298
        %v1320 = vadd.f32 %v1249, %v1298
        %v1321 = vadd.f32 %v1250, %v1298
        %v1322 = vadd.f32 %v1251, %v1298
        %v1323 = vadd.f32 %v1252, %v1298
        %v1324 = vadd.f32 %v1253, %v1298
        %v1325 = vadd.f32 %v1254, %v1298
        %v1326 = vadd.f32 %v1255, %v1298
        %v1327 = vadd.f32 %v1256, %v1298
        %v1328 = vadd.f32 %v1257, %v1298
        %v1329 = vadd.f32 %v1258, %v1298
        %v1330 = vadd.f32 %v1259, %v1298
        %v1331 = vadd.f32 %v1260, %v1298
        %v1332 = vadd.f32 %v1261, %v1298
        %v1333 = vadd.f32 %v1262, %v1298
        %v1334 = vadd.f32 %v1263, %v1298
        %v1335 = vadd.f32 %v1264, %v1298
        %v1336 = vadd.f32 %v1265, %v1298
        %v1337 = vadd.f32 %v1266, %v1298
        %v1338 = vadd.f32 %v1267, %v1298
        %v1339 = vadd.f32 %v1268, %v1298
        %v1340 = vadd.f32 %v1269, %v1298
        %v1341 = vadd.f32 %v1270, %v1298
        %v1342 = vadd.f32 %v1271, %v1298
        %v1343 = vadd.f32 %v1272, %v1298
        %v1344 = vadd.f32 %v1273, %v1298
        %v1345 = vadd.f32 %v1274, %v1298
        %v1346 = vadd.f32 %v1275, %v1298
        %v1347 = vadd.f32 %v1276, %v1298
        %v1348 = vadd.f32 %v1277, %v1298
        %v1349 = vadd.f32 %v1278, %v1298
        %v1350 = vadd.f32 %v1279, %v1298
        %v1351 = vadd.f32 %v1280, %v1298
        %v1352 = vadd.f32 %v1281, %v1298
        %v1353 = vadd.f32 %v1282, %v1298
        %v1354 = vadd.f32 %v1283, %v1298
        %v1355 = vadd.f32 %v1284, %v1298
        %v1356 = vadd.f32 %v1285, %v1298
        %v1357 = vadd.f32 %v1286, %v1298
        %v1358 = vadd.f32 %v1287, %v1298
        %v1359 = vadd.f32 %v1288, %v1298
        %v1360 = vadd.f32 %v1289, %v1298
        %v1361 = vadd.f32 %v1290, %v1298
        %v1362 = vadd.f32 %v1291, %v1298
        %v1363 = vadd.f32 %v1292, %v1298
        %vm1364 = vcmp.gt.f32.partialorder %v1300, 0.0
        %vm1365 = vcmp.gt.f32.partialorder %v1301, 0.0
        %vm1366 = vcmp.gt.f32.partialorder %v1302, 0.0
        %vm1367 = vcmp.gt.f32.partialorder %v1303, 0.0
        %vm1368 = vcmp.gt.f32.partialorder %v1304, 0.0
        %vm1369 = vcmp.gt.f32.partialorder %v1305, 0.0
        %vm1370 = vcmp.gt.f32.partialorder %v1306, 0.0
        %vm1371 = vcmp.gt.f32.partialorder %v1307, 0.0
        %vm1372 = vcmp.gt.f32.partialorder %v1308, 0.0
        %vm1373 = vcmp.gt.f32.partialorder %v1309, 0.0
        %vm1374 = vcmp.gt.f32.partialorder %v1310, 0.0
        %vm1375 = vcmp.gt.f32.partialorder %v1311, 0.0
        %vm1376 = vcmp.gt.f32.partialorder %v1312, 0.0
        %vm1377 = vcmp.gt.f32.partialorder %v1313, 0.0
        %vm1378 = vcmp.gt.f32.partialorder %v1314, 0.0
        %vm1379 = vcmp.gt.f32.partialorder %v1315, 0.0
        %vm1380 = vcmp.gt.f32.partialorder %v1316, 0.0
        %vm1381 = vcmp.gt.f32.partialorder %v1317, 0.0
        %vm1382 = vcmp.gt.f32.partialorder %v1318, 0.0
        %vm1383 = vcmp.gt.f32.partialorder %v1319, 0.0
        %vm1384 = vcmp.gt.f32.partialorder %v1320, 0.0
        %vm1385 = vcmp.gt.f32.partialorder %v1321, 0.0
        %vm1386 = vcmp.gt.f32.partialorder %v1322, 0.0
        %vm1387 = vcmp.gt.f32.partialorder %v1323, 0.0
        %vm1388 = vcmp.gt.f32.partialorder %v1324, 0.0
        %vm1389 = vcmp.gt.f32.partialorder %v1325, 0.0
        %vm1390 = vcmp.gt.f32.partialorder %v1326, 0.0
        %vm1391 = vcmp.gt.f32.partialorder %v1327, 0.0
        %vm1392 = vcmp.gt.f32.partialorder %v1328, 0.0
        %vm1393 = vcmp.gt.f32.partialorder %v1329, 0.0
        %vm1394 = vcmp.gt.f32.partialorder %v1330, 0.0
        %vm1395 = vcmp.gt.f32.partialorder %v1331, 0.0
        %vm1396 = vcmp.gt.f32.partialorder %v1332, 0.0
        %vm1397 = vcmp.gt.f32.partialorder %v1333, 0.0
        %vm1398 = vcmp.gt.f32.partialorder %v1334, 0.0
        %vm1399 = vcmp.gt.f32.partialorder %v1335, 0.0
        %vm1400 = vcmp.gt.f32.partialorder %v1336, 0.0
        %vm1401 = vcmp.gt.f32.partialorder %v1337, 0.0
        %vm1402 = vcmp.gt.f32.partialorder %v1338, 0.0
        %vm1403 = vcmp.gt.f32.partialorder %v1339, 0.0
        %vm1404 = vcmp.gt.f32.partialorder %v1340, 0.0
        %vm1405 = vcmp.gt.f32.partialorder %v1341, 0.0
        %vm1406 = vcmp.gt.f32.partialorder %v1342, 0.0
        %vm1407 = vcmp.gt.f32.partialorder %v1343, 0.0
        %vm1408 = vcmp.gt.f32.partialorder %v1344, 0.0
        %vm1409 = vcmp.gt.f32.partialorder %v1345, 0.0
        %vm1410 = vcmp.gt.f32.partialorder %v1346, 0.0
        %vm1411 = vcmp.gt.f32.partialorder %v1347, 0.0
        %vm1412 = vcmp.gt.f32.partialorder %v1348, 0.0
        %vm1413 = vcmp.gt.f32.partialorder %v1349, 0.0
        %vm1414 = vcmp.gt.f32.partialorder %v1350, 0.0
        %vm1415 = vcmp.gt.f32.partialorder %v1351, 0.0
        %vm1416 = vcmp.gt.f32.partialorder %v1352, 0.0
        %vm1417 = vcmp.gt.f32.partialorder %v1353, 0.0
        %vm1418 = vcmp.gt.f32.partialorder %v1354, 0.0
        %vm1419 = vcmp.gt.f32.partialorder %v1355, 0.0
        %vm1420 = vcmp.gt.f32.partialorder %v1356, 0.0
        %vm1421 = vcmp.gt.f32.partialorder %v1357, 0.0
        %vm1422 = vcmp.gt.f32.partialorder %v1358, 0.0
        %vm1423 = vcmp.gt.f32.partialorder %v1359, 0.0
        %vm1424 = vcmp.gt.f32.partialorder %v1360, 0.0
        %vm1425 = vcmp.gt.f32.partialorder %v1361, 0.0
        %vm1426 = vcmp.gt.f32.partialorder %v1362, 0.0
        %vm1427 = vcmp.gt.f32.partialorder %v1363, 0.0
        %v1428 = vmul.f32 %v1300, 0.2
        %v1429 = vmul.f32 %v1301, 0.2
        %v1430 = vmul.f32 %v1302, 0.2
        %v1431 = vmul.f32 %v1303, 0.2
        %v1432 = vmul.f32 %v1304, 0.2
        %v1433 = vmul.f32 %v1305, 0.2
        %v1434 = vmul.f32 %v1306, 0.2
        %v1435 = vmul.f32 %v1307, 0.2
        %v1436 = vmul.f32 %v1308, 0.2
        %v1437 = vmul.f32 %v1309, 0.2
        %v1438 = vmul.f32 %v1310, 0.2
        %v1439 = vmul.f32 %v1311, 0.2
        %v1440 = vmul.f32 %v1312, 0.2
        %v1441 = vmul.f32 %v1313, 0.2
        %v1442 = vmul.f32 %v1314, 0.2
        %v1443 = vmul.f32 %v1315, 0.2
        %v1444 = vmul.f32 %v1316, 0.2
        %v1445 = vmul.f32 %v1317, 0.2
        %v1446 = vmul.f32 %v1318, 0.2
        %v1447 = vmul.f32 %v1319, 0.2
        %v1448 = vmul.f32 %v1320, 0.2
        %v1449 = vmul.f32 %v1321, 0.2
        %v1450 = vmul.f32 %v1322, 0.2
        %v1451 = vmul.f32 %v1323, 0.2
        %v1452 = vmul.f32 %v1324, 0.2
        %v1453 = vmul.f32 %v1325, 0.2
        %v1454 = vmul.f32 %v1326, 0.2
        %v1455 = vmul.f32 %v1327, 0.2
        %v1456 = vmul.f32 %v1328, 0.2
        %v1457 = vmul.f32 %v1329, 0.2
        %v1458 = vmul.f32 %v1330, 0.2
        %v1459 = vmul.f32 %v1331, 0.2
        %v1460 = vmul.f32 %v1332, 0.2
        %v1461 = vmul.f32 %v1333, 0.2
        %v1462 = vmul.f32 %v1334, 0.2
        %v1463 = vmul.f32 %v1335, 0.2
        %v1464 = vmul.f32 %v1336, 0.2
        %v1465 = vmul.f32 %v1337, 0.2
        %v1466 = vmul.f32 %v1338, 0.2
        %v1467 = vmul.f32 %v1339, 0.2
        %v1468 = vmul.f32 %v1340, 0.2
        %v1469 = vmul.f32 %v1341, 0.2
        %v1470 = vmul.f32 %v1342, 0.2
        %v1471 = vmul.f32 %v1343, 0.2
        %v1472 = vmul.f32 %v1344, 0.2
        %v1473 = vmul.f32 %v1345, 0.2
        %v1474 = vmul.f32 %v1346, 0.2
        %v1475 = vmul.f32 %v1347, 0.2
        %v1476 = vmul.f32 %v1348, 0.2
        %v1477 = vmul.f32 %v1349, 0.2
        %v1478 = vmul.f32 %v1350, 0.2
        %v1479 = vmul.f32 %v1351, 0.2
        %v1480 = vmul.f32 %v1352, 0.2
        %v1481 = vmul.f32 %v1353, 0.2
        %v1482 = vmul.f32 %v1354, 0.2
        %v1483 = vmul.f32 %v1355, 0.2
        %v1484 = vmul.f32 %v1356, 0.2
        %v1485 = vmul.f32 %v1357, 0.2
        %v1486 = vmul.f32 %v1358, 0.2
        %v1487 = vmul.f32 %v1359, 0.2
        %v1488 = vmul.f32 %v1360, 0.2
        %v1489 = vmul.f32 %v1361, 0.2
        %v1490 = vmul.f32 %v1362, 0.2
        %v1491 = vmul.f32 %v1363, 0.2
        %v1492 = vsel %vm1364, %v1300, %v1428
        %v1493 = vsel %vm1365, %v1301, %v1429
        %v1494 = vsel %vm1366, %v1302, %v1430
        %v1495 = vsel %vm1367, %v1303, %v1431
        %v1496 = vsel %vm1368, %v1304, %v1432
        %v1497 = vsel %vm1369, %v1305, %v1433
        %v1498 = vsel %vm1370, %v1306, %v1434
        %v1499 = vsel %vm1371, %v1307, %v1435
        %v1500 = vsel %vm1372, %v1308, %v1436
        %v1501 = vsel %vm1373, %v1309, %v1437
        %v1502 = vsel %vm1374, %v1310, %v1438
        %v1503 = vsel %vm1375, %v1311, %v1439
        %v1504 = vsel %vm1376, %v1312, %v1440
        %v1505 = vsel %vm1377, %v1313, %v1441
        %v1506 = vsel %vm1378, %v1314, %v1442
        %v1507 = vsel %vm1379, %v1315, %v1443
        %v1508 = vsel %vm1380, %v1316, %v1444
        %v1509 = vsel %vm1381, %v1317, %v1445
        %v1510 = vsel %vm1382, %v1318, %v1446
        %v1511 = vsel %vm1383, %v1319, %v1447
        %v1512 = vsel %vm1384, %v1320, %v1448
        %v1513 = vsel %vm1385, %v1321, %v1449
        %v1514 = vsel %vm1386, %v1322, %v1450
        %v1515 = vsel %vm1387, %v1323, %v1451
        %v1516 = vsel %vm1388, %v1324, %v1452
        %v1517 = vsel %vm1389, %v1325, %v1453
        %v1518 = vsel %vm1390, %v1326, %v1454
        %v1519 = vsel %vm1391, %v1327, %v1455
        %v1520 = vsel %vm1392, %v1328, %v1456
        %v1521 = vsel %vm1393, %v1329, %v1457
        %v1522 = vsel %vm1394, %v1330, %v1458
        %v1523 = vsel %vm1395, %v1331, %v1459
        %v1524 = vsel %vm1396, %v1332, %v1460
        %v1525 = vsel %vm1397, %v1333, %v1461
        %v1526 = vsel %vm1398, %v1334, %v1462
        %v1527 = vsel %vm1399, %v1335, %v1463
        %v1528 = vsel %vm1400, %v1336, %v1464
        %v1529 = vsel %vm1401, %v1337, %v1465
        %v1530 = vsel %vm1402, %v1338, %v1466
        %v1531 = vsel %vm1403, %v1339, %v1467
        %v1532 = vsel %vm1404, %v1340, %v1468
        %v1533 = vsel %vm1405, %v1341, %v1469
        %v1534 = vsel %vm1406, %v1342, %v1470
        %v1535 = vsel %vm1407, %v1343, %v1471
        %v1536 = vsel %vm1408, %v1344, %v1472
        %v1537 = vsel %vm1409, %v1345, %v1473
        %v1538 = vsel %vm1410, %v1346, %v1474
        %v1539 = vsel %vm1411, %v1347, %v1475
        %v1540 = vsel %vm1412, %v1348, %v1476
        %v1541 = vsel %vm1413, %v1349, %v1477
        %v1542 = vsel %vm1414, %v1350, %v1478
        %v1543 = vsel %vm1415, %v1351, %v1479
        %v1544 = vsel %vm1416, %v1352, %v1480
        %v1545 = vsel %vm1417, %v1353, %v1481
        %v1546 = vsel %vm1418, %v1354, %v1482
        %v1547 = vsel %vm1419, %v1355, %v1483
        %v1548 = vsel %vm1420, %v1356, %v1484
        %v1549 = vsel %vm1421, %v1357, %v1485
        %v1550 = vsel %vm1422, %v1358, %v1486
        %v1551 = vsel %vm1423, %v1359, %v1487
        %v1552 = vsel %vm1424, %v1360, %v1488
        %v1553 = vsel %vm1425, %v1361, %v1489
        %v1554 = vsel %vm1426, %v1362, %v1490
        %v1555 = vsel %vm1427, %v1363, %v1491
        %v1556 = vpack.c.bf16 %v1493, %v1492
        %v1557 = vpack.c.bf16 %v1495, %v1494
        %v1558 = vpack.c.bf16 %v1497, %v1496
        %v1559 = vpack.c.bf16 %v1499, %v1498
        %v1560 = vpack.c.bf16 %v1501, %v1500
        %v1561 = vpack.c.bf16 %v1503, %v1502
        %v1562 = vpack.c.bf16 %v1505, %v1504
        %v1563 = vpack.c.bf16 %v1507, %v1506
        %v1564 = vpack.c.bf16 %v1509, %v1508
        %v1565 = vpack.c.bf16 %v1511, %v1510
        %v1566 = vpack.c.bf16 %v1513, %v1512
        %v1567 = vpack.c.bf16 %v1515, %v1514
        %v1568 = vpack.c.bf16 %v1517, %v1516
        %v1569 = vpack.c.bf16 %v1519, %v1518
        %v1570 = vpack.c.bf16 %v1521, %v1520
        %v1571 = vpack.c.bf16 %v1523, %v1522
        %v1572 = vpack.c.bf16 %v1525, %v1524
        %v1573 = vpack.c.bf16 %v1527, %v1526
        %v1574 = vpack.c.bf16 %v1529, %v1528
        %v1575 = vpack.c.bf16 %v1531, %v1530
        %v1576 = vpack.c.bf16 %v1533, %v1532
        %v1577 = vpack.c.bf16 %v1535, %v1534
        %v1578 = vpack.c.bf16 %v1537, %v1536
        %v1579 = vpack.c.bf16 %v1539, %v1538
        %v1580 = vpack.c.bf16 %v1541, %v1540
        %v1581 = vpack.c.bf16 %v1543, %v1542
        %v1582 = vpack.c.bf16 %v1545, %v1544
        %v1583 = vpack.c.bf16 %v1547, %v1546
        %v1584 = vpack.c.bf16 %v1549, %v1548
        %v1585 = vpack.c.bf16 %v1551, %v1550
        %v1586 = vpack.c.bf16 %v1553, %v1552
        %v1587 = vpack.c.bf16 %v1555, %v1554
        %v1620 = vunpack.c.l.b16 %v1556
        %v1621 = vunpack.c.h.b16 %v1556
        %v1622 = vunpack.c.l.b16 %v1557
        %v1623 = vunpack.c.h.b16 %v1557
        %v1624 = vunpack.c.l.b16 %v1558
        %v1625 = vunpack.c.h.b16 %v1558
        %v1626 = vunpack.c.l.b16 %v1559
        %v1627 = vunpack.c.h.b16 %v1559
        %v1628 = vunpack.c.l.b16 %v1560
        %v1629 = vunpack.c.h.b16 %v1560
        %v1630 = vunpack.c.l.b16 %v1561
        %v1631 = vunpack.c.h.b16 %v1561
        %v1632 = vunpack.c.l.b16 %v1562
        %v1633 = vunpack.c.h.b16 %v1562
        %v1634 = vunpack.c.l.b16 %v1563
        %v1635 = vunpack.c.h.b16 %v1563
        %v1636 = vunpack.c.l.b16 %v1564
        %v1637 = vunpack.c.h.b16 %v1564
        %v1638 = vunpack.c.l.b16 %v1565
        %v1639 = vunpack.c.h.b16 %v1565
        %v1640 = vunpack.c.l.b16 %v1566
        %v1641 = vunpack.c.h.b16 %v1566
        %v1642 = vunpack.c.l.b16 %v1567
        %v1643 = vunpack.c.h.b16 %v1567
        %v1644 = vunpack.c.l.b16 %v1568
        %v1645 = vunpack.c.h.b16 %v1568
        %v1646 = vunpack.c.l.b16 %v1569
        %v1647 = vunpack.c.h.b16 %v1569
        %v1648 = vunpack.c.l.b16 %v1570
        %v1649 = vunpack.c.h.b16 %v1570
        %v1650 = vunpack.c.l.b16 %v1571
        %v1651 = vunpack.c.h.b16 %v1571
        %v1652 = vunpack.c.l.b16 %v1572
        %v1653 = vunpack.c.h.b16 %v1572
        %v1654 = vunpack.c.l.b16 %v1573
        %v1655 = vunpack.c.h.b16 %v1573
        %v1656 = vunpack.c.l.b16 %v1574
        %v1657 = vunpack.c.h.b16 %v1574
        %v1658 = vunpack.c.l.b16 %v1575
        %v1659 = vunpack.c.h.b16 %v1575
        %v1660 = vunpack.c.l.b16 %v1576
        %v1661 = vunpack.c.h.b16 %v1576
        %v1662 = vunpack.c.l.b16 %v1577
        %v1663 = vunpack.c.h.b16 %v1577
        %v1664 = vunpack.c.l.b16 %v1578
        %v1665 = vunpack.c.h.b16 %v1578
        %v1666 = vunpack.c.l.b16 %v1579
        %v1667 = vunpack.c.h.b16 %v1579
        %v1668 = vunpack.c.l.b16 %v1580
        %v1669 = vunpack.c.h.b16 %v1580
        %v1670 = vunpack.c.l.b16 %v1581
        %v1671 = vunpack.c.h.b16 %v1581
        %v1672 = vunpack.c.l.b16 %v1582
        %v1673 = vunpack.c.h.b16 %v1582
        %v1674 = vunpack.c.l.b16 %v1583
        %v1675 = vunpack.c.h.b16 %v1583
        %v1676 = vunpack.c.l.b16 %v1584
        %v1677 = vunpack.c.h.b16 %v1584
        %v1678 = vunpack.c.l.b16 %v1585
        %v1679 = vunpack.c.h.b16 %v1585
        %v1680 = vunpack.c.l.b16 %v1586
        %v1681 = vunpack.c.h.b16 %v1586
        %v1682 = vunpack.c.l.b16 %v1587
        %v1683 = vunpack.c.h.b16 %v1587
        %v1684 = vpack.c.b16 %v1620, %v1620
        %v1685 = vpack.c.b16 %v1621, %v1621
        %v1686 = vpack.c.b16 %v1622, %v1622
        %v1687 = vpack.c.b16 %v1623, %v1623
        %v1688 = vpack.c.b16 %v1624, %v1624
        %v1689 = vpack.c.b16 %v1625, %v1625
        %v1690 = vpack.c.b16 %v1626, %v1626
        %v1691 = vpack.c.b16 %v1627, %v1627
        %v1692 = vpack.c.b16 %v1628, %v1628
        %v1693 = vpack.c.b16 %v1629, %v1629
        %v1694 = vpack.c.b16 %v1630, %v1630
        %v1695 = vpack.c.b16 %v1631, %v1631
        %v1696 = vpack.c.b16 %v1632, %v1632
        %v1697 = vpack.c.b16 %v1633, %v1633
        %v1698 = vpack.c.b16 %v1634, %v1634
        %v1699 = vpack.c.b16 %v1635, %v1635
        %v1700 = vpack.c.b16 %v1636, %v1636
        %v1701 = vpack.c.b16 %v1637, %v1637
        %v1702 = vpack.c.b16 %v1638, %v1638
        %v1703 = vpack.c.b16 %v1639, %v1639
        %v1704 = vpack.c.b16 %v1640, %v1640
        %v1705 = vpack.c.b16 %v1641, %v1641
        %v1706 = vpack.c.b16 %v1642, %v1642
        %v1707 = vpack.c.b16 %v1643, %v1643
        %v1708 = vpack.c.b16 %v1644, %v1644
        %v1709 = vpack.c.b16 %v1645, %v1645
        %v1710 = vpack.c.b16 %v1646, %v1646
        %v1711 = vpack.c.b16 %v1647, %v1647
        %v1712 = vpack.c.b16 %v1648, %v1648
        %v1713 = vpack.c.b16 %v1649, %v1649
        %v1714 = vpack.c.b16 %v1650, %v1650
        %v1715 = vpack.c.b16 %v1651, %v1651
        %v1716 = vpack.c.b16 %v1652, %v1652
        %v1717 = vpack.c.b16 %v1653, %v1653
        %v1718 = vpack.c.b16 %v1654, %v1654
        %v1719 = vpack.c.b16 %v1655, %v1655
        %v1720 = vpack.c.b16 %v1656, %v1656
        %v1721 = vpack.c.b16 %v1657, %v1657
        %v1722 = vpack.c.b16 %v1658, %v1658
        %v1723 = vpack.c.b16 %v1659, %v1659
        %v1724 = vpack.c.b16 %v1660, %v1660
        %v1725 = vpack.c.b16 %v1661, %v1661
        %v1726 = vpack.c.b16 %v1662, %v1662
        %v1727 = vpack.c.b16 %v1663, %v1663
        %v1728 = vpack.c.b16 %v1664, %v1664
        %v1729 = vpack.c.b16 %v1665, %v1665
        %v1730 = vpack.c.b16 %v1666, %v1666
        %v1731 = vpack.c.b16 %v1667, %v1667
        %v1732 = vpack.c.b16 %v1668, %v1668
        %v1733 = vpack.c.b16 %v1669, %v1669
        %v1734 = vpack.c.b16 %v1670, %v1670
        %v1735 = vpack.c.b16 %v1671, %v1671
        %v1736 = vpack.c.b16 %v1672, %v1672
        %v1737 = vpack.c.b16 %v1673, %v1673
        %v1738 = vpack.c.b16 %v1674, %v1674
        %v1739 = vpack.c.b16 %v1675, %v1675
        %v1740 = vpack.c.b16 %v1676, %v1676
        %v1741 = vpack.c.b16 %v1677, %v1677
        %v1742 = vpack.c.b16 %v1678, %v1678
        %v1743 = vpack.c.b16 %v1679, %v1679
        %v1744 = vpack.c.b16 %v1680, %v1680
        %v1745 = vpack.c.b16 %v1681, %v1681
        %v1746 = vpack.c.b16 %v1682, %v1682
        %v1747 = vpack.c.b16 %v1683, %v1683
        %1812 = vst [vmem:[%s211] sm:$0xf] %v1684
        %1813 = vst [vmem:[%s211 + $0x4] sm:$0xf] %v1685
        %1814 = vst [vmem:[%s211 + $0x8] sm:$0xf] %v1686
        %1815 = vst [vmem:[%s211 + $0xc] sm:$0xf] %v1687
        %1816 = vst [vmem:[%s211 + $0x10] sm:$0xf] %v1688
        %1817 = vst [vmem:[%s211 + $0x14] sm:$0xf] %v1689
        %1818 = vst [vmem:[%s211 + $0x18] sm:$0xf] %v1690
        %1819 = vst [vmem:[%s211 + $0x1c] sm:$0xf] %v1691
        %1820 = vst [vmem:[%s211 + $0x20] sm:$0xf] %v1692
        %1821 = vst [vmem:[%s211 + $0x24] sm:$0xf] %v1693
        %1822 = vst [vmem:[%s211 + $0x28] sm:$0xf] %v1694
        %1823 = vst [vmem:[%s211 + $0x2c] sm:$0xf] %v1695
        %1824 = vst [vmem:[%s211 + $0x30] sm:$0xf] %v1696
        %1825 = vst [vmem:[%s211 + $0x34] sm:$0xf] %v1697
        %1826 = vst [vmem:[%s211 + $0x38] sm:$0xf] %v1698
        %1827 = vst [vmem:[%s211 + $0x3c] sm:$0xf] %v1699
        %1828 = vst [vmem:[%s211 + $0x40] sm:$0xf] %v1700
        %1829 = vst [vmem:[%s211 + $0x44] sm:$0xf] %v1701
        %1830 = vst [vmem:[%s211 + $0x48] sm:$0xf] %v1702
        %1831 = vst [vmem:[%s211 + $0x4c] sm:$0xf] %v1703
        %1832 = vst [vmem:[%s211 + $0x50] sm:$0xf] %v1704
        %1833 = vst [vmem:[%s211 + $0x54] sm:$0xf] %v1705
        %1834 = vst [vmem:[%s211 + $0x58] sm:$0xf] %v1706
        %1835 = vst [vmem:[%s211 + $0x5c] sm:$0xf] %v1707
        %1836 = vst [vmem:[%s211 + $0x60] sm:$0xf] %v1708
        %1837 = vst [vmem:[%s211 + $0x64] sm:$0xf] %v1709
        %1838 = vst [vmem:[%s211 + $0x68] sm:$0xf] %v1710
        %1839 = vst [vmem:[%s211 + $0x6c] sm:$0xf] %v1711
        %1840 = vst [vmem:[%s211 + $0x70] sm:$0xf] %v1712
        %1841 = vst [vmem:[%s211 + $0x74] sm:$0xf] %v1713
        %1842 = vst [vmem:[%s211 + $0x78] sm:$0xf] %v1714
        %1843 = vst [vmem:[%s211 + $0x7c] sm:$0xf] %v1715
        %1844 = vst [vmem:[%s211 + $0x80] sm:$0xf] %v1716
        %1845 = vst [vmem:[%s211 + $0x84] sm:$0xf] %v1717
        %1846 = vst [vmem:[%s211 + $0x88] sm:$0xf] %v1718
        %1847 = vst [vmem:[%s211 + $0x8c] sm:$0xf] %v1719
        %1848 = vst [vmem:[%s211 + $0x90] sm:$0xf] %v1720
        %1849 = vst [vmem:[%s211 + $0x94] sm:$0xf] %v1721
        %1850 = vst [vmem:[%s211 + $0x98] sm:$0xf] %v1722
        %1851 = vst [vmem:[%s211 + $0x9c] sm:$0xf] %v1723
        %1852 = vst [vmem:[%s211 + $0xa0] sm:$0xf] %v1724
        %1853 = vst [vmem:[%s211 + $0xa4] sm:$0xf] %v1725
        %1854 = vst [vmem:[%s211 + $0xa8] sm:$0xf] %v1726
        %1855 = vst [vmem:[%s211 + $0xac] sm:$0xf] %v1727
        %1856 = vst [vmem:[%s211 + $0xb0] sm:$0xf] %v1728
        %1857 = vst [vmem:[%s211 + $0xb4] sm:$0xf] %v1729
        %1858 = vst [vmem:[%s211 + $0xb8] sm:$0xf] %v1730
        %1859 = vst [vmem:[%s211 + $0xbc] sm:$0xf] %v1731
        %1860 = vst [vmem:[%s211 + $0xc0] sm:$0xf] %v1732
        %1861 = vst [vmem:[%s211 + $0xc4] sm:$0xf] %v1733
        %1862 = vst [vmem:[%s211 + $0xc8] sm:$0xf] %v1734
        %1863 = vst [vmem:[%s211 + $0xcc] sm:$0xf] %v1735
        %1864 = vst [vmem:[%s211 + $0xd0] sm:$0xf] %v1736
        %1865 = vst [vmem:[%s211 + $0xd4] sm:$0xf] %v1737
        %1866 = vst [vmem:[%s211 + $0xd8] sm:$0xf] %v1738
        %1867 = vst [vmem:[%s211 + $0xdc] sm:$0xf] %v1739
        %1868 = vst [vmem:[%s211 + $0xe0] sm:$0xf] %v1740
        %1869 = vst [vmem:[%s211 + $0xe4] sm:$0xf] %v1741
        %1870 = vst [vmem:[%s211 + $0xe8] sm:$0xf] %v1742
        %1871 = vst [vmem:[%s211 + $0xec] sm:$0xf] %v1743
        %1872 = vst [vmem:[%s211 + $0xf0] sm:$0xf] %v1744
        %1873 = vst [vmem:[%s211 + $0xf4] sm:$0xf] %v1745
        %1874 = vst [vmem:[%s211 + $0xf8] sm:$0xf] %v1746
        %1875 = vst [vmem:[%s211 + $0xfc] sm:$0xf] %v1747
      $region48: #{discriminator_forward.5} parent=35 // pred_fallthru
        _
      %s1876 = smul.u32 64, %s20
      %p1877 = scmp.lt.s32.totalorder %s1876, 63
      %s1878 = scalar_select %p1877, %s1876, 63
      %s1879 = smul.addr %s1878, 4
      %s1880 = scalar_lea.vmem %s4, %s1879
      // Predicated region
      $region49: #{discriminator_forward.5} parent=35 // pred_check
        %p1881 = pneg %p134
      $region50: #{discriminator_forward.5} parent=35 // pred_check_branch
        %1883 = sbr.rel (%p1881) target = $region52
      $region51: #{discriminator_forward.5} parent=35 // pred_region
        %s1884 = smul.u32 64, %s20
      $region52: #{discriminator_forward.5} parent=35 // pred_fallthru
        _
      // Predicated region
      $region53: #{discriminator_forward.5} parent=35 // pred_check
        %p1885 = pneg %p134
      $region54: #{discriminator_forward.5} parent=35 // pred_check_branch
        %1887 = sbr.rel (%p1885) target = $region56
      $region55: #{discriminator_forward.5} parent=35 // pred_region
        %s1888 = smul.u32 64, %s20
        %p1889 = scmp.lt.s32.totalorder %s1888, 63
        %s1890 = scalar_select %p1889, %s1888, 63
        %s1891 = smul.addr %s1890, 4
        %s1892 = scalar_lea.vmem %s4, %s1891
      $region56: #{discriminator_forward.5} parent=35 // pred_fallthru
        _
    $region36: #{discriminator_forward.5} parent=5 // pred_fallthru
      _
    %p1893 = scmp.le.s32.totalorder 2, %s10
    // Predicated region
    $region57: #{discriminator_forward.5} parent=5 // pred_check
      %p1894 = pneg %p1893
    $region58: #{discriminator_forward.5} parent=5 // pred_check_branch
      %1896 = sbr.rel (%p1894) target = $region60
    $region59: #{discriminator_forward.5} parent=5 // pred_region
      %s1897 = ssub.s32 %s10, 2
    $region60: #{discriminator_forward.5} parent=5 // pred_fallthru
      _
  $region6: #{discriminator_forward.5} parent=0 // loop_footer
    %s14 = sadd.s32 1, %s10
  $region7: #{discriminator_forward.5} parent=0 // loop_footer_branch
    %9 = sbr.rel target = $region3
  $region8: #{discriminator_forward.5} parent=0 // loop_exit
    _

// kernel: discriminator_forward.6
$region0: #{discriminator_forward.6}
  #allocation0 [shape = 'u32[]', space=smem, size = 0x4, offset = 0x4, fixed_abs, tag = 'smem constant byte address 0x4 - core index']
  #allocation1 [shape = 'u32[144,128]{1,0:T(1,128)}', space=vmem, size = 0x12000, scoped, tag = 'internal scratch']
  #allocation2 [shape = 'f32[2,128]{1,0:T(2,128)}', space=vmem, size = 0x400, scoped, tag = 'scratch operand']
  %s0 = inlined_call_operand.vmem [shape: bf16[128,128], index: 0, kind: input, shape index: {}]
  %s1 = inlined_call_operand.vmem [shape: bf16[128,128], index: 1, kind: input, shape index: {}]
  %s2 = inlined_call_operand.vmem [shape: f32[1,128], index: 2, kind: input, shape index: {}]
  %s3 = inlined_call_operand.vmem [shape: f32[1,128], index: 3, kind: input, shape index: {}]
  %s4 = inlined_call_operand.vmem [shape: bf16[128,128], index: 4, kind: output, shape index: {}]
  %s5 = sld [smem:[#allocation0]]
  $region61: #{discriminator_forward.6} parent=0
    _
  %s7 = ssub.s32 1, %s5
  %s8 = scalar_select 0, %s7, %s5
  loop: start=0, step=1, limit=4
  $region2: #{discriminator_forward.6} parent=0 // loop_pre_header
    _
  $region3: #{discriminator_forward.6} parent=0 // loop_header
    %s10 = sphi 0, %s14
    %p11 = scmp.ge.s32.totalorder %s10, 4
    %s17 = sphi 0, %s29
    %s18 = sphi 0, %s25
    %s19 = sphi 0, %s17
    %s20 = sphi 0, %s18
    %s21 = sphi 0, %s19
    %s22 = sphi 0, %s20
    %s32 = sphi 0, %s34
    %s35 = sphi 0, %s32
    %s36 = sphi 0, %s35
    %s52 = sphi 0, %s36
    %s56 = sphi 0, %s56
    %s58 = sphi 0, %s56
    %s59 = sphi 0, %s58
    %s73 = sphi 0, %s59
    %s77 = sphi 0, %s77
    %s79 = sphi 0, %s77
    %s80 = sphi 0, %s79
    %s94 = sphi 0, %s80
    %s98 = sphi 0, %s98
    %s100 = sphi 0, %s98
    %s101 = sphi 0, %s100
    %s115 = sphi 0, %s101
    %s121 = sphi 0, %s123
    %s124 = sphi 0, %s121
    %s125 = sphi 0, %s124
    %s141 = sphi 0, %s125
  $region4: #{discriminator_forward.6} parent=0 // loop_header_branch
    %13 = sbr.rel (%p11) target = $region8
  $region5: #{discriminator_forward.6} parent=0 // loop_body
    %s15 = ssub.s32 %s10, 1
    %s16 = ssub.s32 %s10, 2
    %s23 = sadd.s32 1, %s18
    %p24 = scmp.ge.s32.totalorder %s23, 1
    %s25 = scalar_select %p24, 0, %s23
    %s26 = sadd.s32 1, %s17
    %s27 = scalar_select %p24, %s26, %s17
    %p28 = scmp.ge.s32.totalorder %s27, 2
    %s29 = scalar_select %p28, 0, %s27
    %s30 = ssub.s32 %s18, %s25
    %p31 = scmp.eq.s32.totalorder %s30, 0
    %s33 = sadd.s32 %s32, 1
    %s34 = scalar_select %p31, %s32, %s33
    %p37 = pneg %p31
    %p38 = scmp.eq.s32.totalorder %s10, 1
    %p39 = por %p37, %p38
    %p40 = scmp.ne.s32.totalorder %s32, %s35
    %p41 = scmp.eq.s32.totalorder %s10, 0
    %p42 = por %p40, %p41
    %p43 = scmp.ne.s32.totalorder %s32, %s35
    %p44 = scmp.eq.s32.totalorder %s15, 1
    %p45 = por %p43, %p44
    %p46 = scmp.ne.s32.totalorder %s35, %s36
    %p47 = scmp.eq.s32.totalorder %s15, 0
    %p48 = por %p46, %p47
    %p49 = scmp.ne.s32.totalorder %s35, %s36
    %p50 = scmp.eq.s32.totalorder %s16, 1
    %p51 = por %p49, %p50
    %p53 = scmp.ne.s32.totalorder %s36, %s52
    %p54 = scmp.eq.s32.totalorder %s16, 0
    %p55 = por %p53, %p54
    %s57 = sadd.s32 %s56, 1
    %p60 = scmp.eq.s32.totalorder %s10, 1
    %p61 = scmp.ne.s32.totalorder %s56, %s58
    %p62 = scmp.eq.s32.totalorder %s10, 0
    %p63 = por %p61, %p62
    %p64 = scmp.ne.s32.totalorder %s56, %s58
    %p65 = scmp.eq.s32.totalorder %s15, 1
    %p66 = por %p64, %p65
    %p67 = scmp.ne.s32.totalorder %s58, %s59
    %p68 = scmp.eq.s32.totalorder %s15, 0
    %p69 = por %p67, %p68
    %p70 = scmp.ne.s32.totalorder %s58, %s59
    %p71 = scmp.eq.s32.totalorder %s16, 1
    %p72 = por %p70, %p71
    %p74 = scmp.ne.s32.totalorder %s59, %s73
    %p75 = scmp.eq.s32.totalorder %s16, 0
    %p76 = por %p74, %p75
    %s78 = sadd.s32 %s77, 1
    %p81 = scmp.eq.s32.totalorder %s10, 1
    %p82 = scmp.ne.s32.totalorder %s77, %s79
    %p83 = scmp.eq.s32.totalorder %s10, 0
    %p84 = por %p82, %p83
    %p85 = scmp.ne.s32.totalorder %s77, %s79
    %p86 = scmp.eq.s32.totalorder %s15, 1
    %p87 = por %p85, %p86
    %p88 = scmp.ne.s32.totalorder %s79, %s80
    %p89 = scmp.eq.s32.totalorder %s15, 0
    %p90 = por %p88, %p89
    %p91 = scmp.ne.s32.totalorder %s79, %s80
    %p92 = scmp.eq.s32.totalorder %s16, 1
    %p93 = por %p91, %p92
    %p95 = scmp.ne.s32.totalorder %s80, %s94
    %p96 = scmp.eq.s32.totalorder %s16, 0
    %p97 = por %p95, %p96
    %s99 = sadd.s32 %s98, 1
    %p102 = scmp.eq.s32.totalorder %s10, 1
    %p103 = scmp.ne.s32.totalorder %s98, %s100
    %p104 = scmp.eq.s32.totalorder %s10, 0
    %p105 = por %p103, %p104
    %p106 = scmp.ne.s32.totalorder %s98, %s100
    %p107 = scmp.eq.s32.totalorder %s15, 1
    %p108 = por %p106, %p107
    %p109 = scmp.ne.s32.totalorder %s100, %s101
    %p110 = scmp.eq.s32.totalorder %s15, 0
    %p111 = por %p109, %p110
    %p112 = scmp.ne.s32.totalorder %s100, %s101
    %p113 = scmp.eq.s32.totalorder %s16, 1
    %p114 = por %p112, %p113
    %p116 = scmp.ne.s32.totalorder %s101, %s115
    %p117 = scmp.eq.s32.totalorder %s16, 0
    %p118 = por %p116, %p117
    %s119 = ssub.s32 %s18, %s25
    %p120 = scmp.eq.s32.totalorder %s119, 0
    %s122 = sadd.s32 %s121, 1
    %s123 = scalar_select %p120, %s121, %s122
    %p126 = pneg %p120
    %p127 = scmp.eq.s32.totalorder %s10, 1
    %p128 = por %p126, %p127
    %p129 = scmp.ne.s32.totalorder %s121, %s124
    %p130 = scmp.eq.s32.totalorder %s10, 0
    %p131 = por %p129, %p130
    %p132 = scmp.ne.s32.totalorder %s121, %s124
    %p133 = scmp.eq.s32.totalorder %s15, 1
    %p134 = por %p132, %p133
    %p135 = scmp.ne.s32.totalorder %s124, %s125
    %p136 = scmp.eq.s32.totalorder %s15, 0
    %p137 = por %p135, %p136
    %p138 = scmp.ne.s32.totalorder %s124, %s125
    %p139 = scmp.eq.s32.totalorder %s16, 1
    %p140 = por %p138, %p139
    %p142 = scmp.ne.s32.totalorder %s125, %s141
    %p143 = scmp.eq.s32.totalorder %s16, 0
    %p144 = por %p142, %p143
    %p145 = scmp.le.s32.totalorder 1, %s10
    %p146 = scmp.lt.s32.totalorder %s10, 3
    %p147 = pnand %p145, %p146
    %p148 = pneg %p147
    // Predicated region
    $region9: #{discriminator_forward.6} parent=5 // pred_check
      _
    $region10: #{discriminator_forward.6} parent=5 // pred_check_branch
      %150 = sbr.rel (%p147) target = $region12
    $region11: #{discriminator_forward.6} parent=5 // pred_region
      %s151 = ssub.s32 %s10, 1
      // Predicated region
      $region13: #{discriminator_forward.6} parent=11 // pred_check
        %p152 = pneg %p48
      $region14: #{discriminator_forward.6} parent=11 // pred_check_branch
        %154 = sbr.rel (%p152) target = $region16
      $region15: #{discriminator_forward.6} parent=11 // pred_region
        %s155 = smul.u32 16, %s20
        %p156 = scmp.lt.s32.totalorder %s155, 15
        %s157 = scalar_select %p156, %s155, 15
        %s158 = smul.addr %s157, 4
        %s159 = scalar_lea.vmem %s0, %s158
        %s160 = smul.u32 16, %s20
      $region16: #{discriminator_forward.6} parent=11 // pred_fallthru
        _
      // Predicated region
      $region17: #{discriminator_forward.6} parent=11 // pred_check
        %p161 = pneg %p69
      $region18: #{discriminator_forward.6} parent=11 // pred_check_branch
        %163 = sbr.rel (%p161) target = $region20
      $region19: #{discriminator_forward.6} parent=11 // pred_region
        _
      $region20: #{discriminator_forward.6} parent=11 // pred_fallthru
        _
      // Predicated region
      $region21: #{discriminator_forward.6} parent=11 // pred_check
        %p164 = pneg %p90
      $region22: #{discriminator_forward.6} parent=11 // pred_check_branch
        %166 = sbr.rel (%p164) target = $region24
      $region23: #{discriminator_forward.6} parent=11 // pred_region
        _
      $region24: #{discriminator_forward.6} parent=11 // pred_fallthru
        _
      // Predicated region
      $region25: #{discriminator_forward.6} parent=11 // pred_check
        %p167 = pneg %p111
      $region26: #{discriminator_forward.6} parent=11 // pred_check_branch
        %169 = sbr.rel (%p167) target = $region28
      $region27: #{discriminator_forward.6} parent=11 // pred_region
        _
      $region28: #{discriminator_forward.6} parent=11 // pred_fallthru
        _
    $region12: #{discriminator_forward.6} parent=5 // pred_fallthru
      _
    %p170 = scmp.lt.s32.totalorder %s10, 2
    // Predicated region
    $region29: #{discriminator_forward.6} parent=5 // pred_check
      %p171 = pneg %p170
    $region30: #{discriminator_forward.6} parent=5 // pred_check_branch
      %173 = sbr.rel (%p171) target = $region32
    $region31: #{discriminator_forward.6} parent=5 // pred_region
      _
    $region32: #{discriminator_forward.6} parent=5 // pred_fallthru
      _
    %p174 = scmp.le.s32.totalorder 1, %s10
    %p175 = scmp.lt.s32.totalorder %s10, 3
    %p176 = pnand %p174, %p175
    %p177 = pneg %p176
    // Predicated region
    $region33: #{discriminator_forward.6} parent=5 // pred_check
      _
    $region34: #{discriminator_forward.6} parent=5 // pred_check_branch
      %179 = sbr.rel (%p176) target = $region36
    $region35: #{discriminator_forward.6} parent=5 // pred_region
      %s180 = ssub.s32 %s10, 1
      %s181 = smul.u32 16, %s20
      %p182 = scmp.lt.s32.totalorder %s181, 15
      %s183 = scalar_select %p182, %s181, 15
      %s184 = smul.addr %s183, 4
      %s185 = scalar_lea.vmem %s0, %s184
      %p186 = pneg %p48
      %p187 = pneg %p45
      %p188 = pneg %p69
      %p189 = pneg %p66
      %p190 = pneg %p90
      %p191 = pneg %p87
      %p192 = pneg %p111
      %p193 = pneg %p108
      %p194 = pneg %p137
      %p195 = pneg %p134
      %s196 = smul.u32 16, %s20
      %p197 = scmp.lt.s32.totalorder %s196, 15
      %s198 = scalar_select %p197, %s196, 15
      %s199 = smul.addr %s198, 4
      %s200 = scalar_lea.vmem %s4, %s199
      %s201 = smul.u32 16, %s20
      %p202 = scmp.lt.s32.totalorder %s201, 15
      %s203 = scalar_select %p202, %s201, 15
      %s204 = smul.addr %s203, 4
      %s205 = scalar_lea.vmem %s0, %s204
      %s206 = smul.u32 16, %s20
      %s207 = smul.u32 16, %s20
      %p208 = scmp.lt.s32.totalorder %s207, 15
      %s209 = scalar_select %p208, %s207, 15
      %s210 = smul.addr %s209, 4
      %s211 = scalar_lea.vmem %s4, %s210
      %s212 = smul.u32 16, %s20
      %v214 = vld [vmem:[%s205] sm:$0xf]
      %v215 = vld [vmem:[%s205 + $0x4] sm:$0xf]
      %v216 = vld [vmem:[%s205 + $0x8] sm:$0xf]
      %v217 = vld [vmem:[%s205 + $0xc] sm:$0xf]
      %v218 = vld [vmem:[%s205 + $0x10] sm:$0xf]
      %v219 = vld [vmem:[%s205 + $0x14] sm:$0xf]
      %v220 = vld [vmem:[%s205 + $0x18] sm:$0xf]
      %v221 = vld [vmem:[%s205 + $0x1c] sm:$0xf]
      %v222 = vld [vmem:[%s205 + $0x20] sm:$0xf]
      %v223 = vld [vmem:[%s205 + $0x24] sm:$0xf]
      %v224 = vld [vmem:[%s205 + $0x28] sm:$0xf]
      %v225 = vld [vmem:[%s205 + $0x2c] sm:$0xf]
      %v226 = vld [vmem:[%s205 + $0x30] sm:$0xf]
      %v227 = vld [vmem:[%s205 + $0x34] sm:$0xf]
      %v228 = vld [vmem:[%s205 + $0x38] sm:$0xf]
      %v229 = vld [vmem:[%s205 + $0x3c] sm:$0xf]
      %v230 = vld [vmem:[%s1] sm:$0xf]
      %v231 = vld [vmem:[%s1 + $0x4] sm:$0xf]
      %v232 = vld [vmem:[%s1 + $0x8] sm:$0xf]
      %v233 = vld [vmem:[%s1 + $0xc] sm:$0xf]
      %v234 = vld [vmem:[%s1 + $0x10] sm:$0xf]
      %v235 = vld [vmem:[%s1 + $0x14] sm:$0xf]
      %v236 = vld [vmem:[%s1 + $0x18] sm:$0xf]
      %v237 = vld [vmem:[%s1 + $0x1c] sm:$0xf]
      %v238 = vld [vmem:[%s1 + $0x20] sm:$0xf]
      %v239 = vld [vmem:[%s1 + $0x24] sm:$0xf]
      %v240 = vld [vmem:[%s1 + $0x28] sm:$0xf]
      %v241 = vld [vmem:[%s1 + $0x2c] sm:$0xf]
      %v242 = vld [vmem:[%s1 + $0x30] sm:$0xf]
      %v243 = vld [vmem:[%s1 + $0x34] sm:$0xf]
      %v244 = vld [vmem:[%s1 + $0x38] sm:$0xf]
      %v245 = vld [vmem:[%s1 + $0x3c] sm:$0xf]
      %v262 = vunpack.c.l.b16 %v214
      %v263 = vunpack.c.l.b16 %v215
      %v264 = vunpack.c.l.b16 %v216
      %v265 = vunpack.c.l.b16 %v217
      %v266 = vunpack.c.l.b16 %v218
      %v267 = vunpack.c.l.b16 %v219
      %v268 = vunpack.c.l.b16 %v220
      %v269 = vunpack.c.l.b16 %v221
      %v270 = vunpack.c.l.b16 %v222
      %v271 = vunpack.c.l.b16 %v223
      %v272 = vunpack.c.l.b16 %v224
      %v273 = vunpack.c.l.b16 %v225
      %v274 = vunpack.c.l.b16 %v226
      %v275 = vunpack.c.l.b16 %v227
      %v276 = vunpack.c.l.b16 %v228
      %v277 = vunpack.c.l.b16 %v229
      %v278 = vpack.c.b16 %v263, %v262
      %v279 = vpack.c.b16 %v265, %v264
      %v280 = vpack.c.b16 %v267, %v266
      %v281 = vpack.c.b16 %v269, %v268
      %v282 = vpack.c.b16 %v271, %v270
      %v283 = vpack.c.b16 %v273, %v272
      %v284 = vpack.c.b16 %v275, %v274
      %v285 = vpack.c.b16 %v277, %v276
      %v310 = vunpack.c.l.b16 %v230
      %v311 = vunpack.c.l.b16 %v231
      %v312 = vunpack.c.l.b16 %v232
      %v313 = vunpack.c.l.b16 %v233
      %v314 = vunpack.c.l.b16 %v234
      %v315 = vunpack.c.l.b16 %v235
      %v316 = vunpack.c.l.b16 %v236
      %v317 = vunpack.c.l.b16 %v237
      %v318 = vunpack.c.l.b16 %v238
      %v319 = vunpack.c.l.b16 %v239
      %v320 = vunpack.c.l.b16 %v240
      %v321 = vunpack.c.l.b16 %v241
      %v322 = vunpack.c.l.b16 %v242
      %v323 = vunpack.c.l.b16 %v243
      %v324 = vunpack.c.l.b16 %v244
      %v325 = vunpack.c.l.b16 %v245
      %v326 = vpack.c.b16 %v311, %v310
      %v327 = vpack.c.b16 %v313, %v312
      %v328 = vpack.c.b16 %v315, %v314
      %v329 = vpack.c.b16 %v317, %v316
      %v330 = vpack.c.b16 %v319, %v318
      %v331 = vpack.c.b16 %v321, %v320
      %v332 = vpack.c.b16 %v323, %v322
      %v333 = vpack.c.b16 %v325, %v324
      %342 = vmatprep.subr.bf16.mxu0 0
      %343 = vmatpush1.bf16.msra.mxu0 %v326
      %344 = vmatprep.subr.bf16.mxu0 0
      %345 = vmatpush1.bf16.msra.mxu0 %v327
      %346 = vmatprep.subr.bf16.mxu0 0
      %347 = vmatpush1.bf16.msra.mxu0 %v328
      %348 = vmatprep.subr.bf16.mxu0 0
      %349 = vmatpush1.bf16.msra.mxu0 %v329
      %350 = vmatprep.subr.bf16.mxu0 0
      %351 = vmatpush1.bf16.msra.mxu0 %v330
      %352 = vmatprep.subr.bf16.mxu0 0
      %353 = vmatpush1.bf16.msra.mxu0 %v331
      %354 = vmatprep.subr.bf16.mxu0 0
      %355 = vmatpush1.bf16.msra.mxu0 %v332
      %356 = vmatprep.subr.bf16.mxu0 0
      %357 = vmatpush1.bf16.msra.mxu0 %v333
      %358 = vmatprep.subr.bf16.mxu0 0
      %359 = vmatpush1.bf16.msra.mxu0 0
      %360 = vmatprep.subr.bf16.mxu0 0
      %361 = vmatpush1.bf16.msra.mxu0 0
      %362 = vmatprep.subr.bf16.mxu0 0
      %363 = vmatpush1.bf16.msra.mxu0 0
      %364 = vmatprep.subr.bf16.mxu0 0
      %365 = vmatpush1.bf16.msra.mxu0 0
      %366 = vmatprep.subr.bf16.mxu0 0
      %367 = vmatpush1.bf16.msra.mxu0 0
      %368 = vmatprep.subr.bf16.mxu0 0
      %369 = vmatpush1.bf16.msra.mxu0 0
      %370 = vmatprep.subr.bf16.mxu0 0
      %371 = vmatpush1.bf16.msra.mxu0 0
      %372 = vmatprep.subr.bf16.mxu0 0
      %373 = vmatpush1.bf16.msra.mxu0 0
      %374 = vmatprep.mubr.bf16.mxu0 0
      %375 = vmatmul.mubr.bf16.gmra.mrb[0].mxu0 %v278
      %v376 = vpop.f32.mrb[0].mxu0
      %v377 = vadd.f32 0.0, %v376
      %v378 = vpop.f32.mrb[0].mxu0
      %v379 = vpop.f32.mrb[0].mxu0
      %v380 = vadd.f32 0.0, %v379
      %v381 = vpop.f32.mrb[0].mxu0
      %382 = vmatprep.mubr.bf16.mxu0 0
      %383 = vmatmul.mubr.bf16.gmra.mrb[0].mxu0 %v279
      %v384 = vpop.f32.mrb[0].mxu0
      %v385 = vadd.f32 0.0, %v384
      %v386 = vpop.f32.mrb[0].mxu0
      %v387 = vpop.f32.mrb[0].mxu0
      %v388 = vadd.f32 0.0, %v387
      %v389 = vpop.f32.mrb[0].mxu0
      %390 = vmatprep.mubr.bf16.mxu0 0
      %391 = vmatmul.mubr.bf16.gmra.mrb[0].mxu0 %v280
      %v392 = vpop.f32.mrb[0].mxu0
      %v393 = vadd.f32 0.0, %v392
      %v394 = vpop.f32.mrb[0].mxu0
      %v395 = vpop.f32.mrb[0].mxu0
      %v396 = vadd.f32 0.0, %v395
      %v397 = vpop.f32.mrb[0].mxu0
      %398 = vmatprep.mubr.bf16.mxu0 0
      %399 = vmatmul.mubr.bf16.gmra.mrb[0].mxu0 %v281
      %v400 = vpop.f32.mrb[0].mxu0
      %v401 = vadd.f32 0.0, %v400
      %v402 = vpop.f32.mrb[0].mxu0
      %v403 = vpop.f32.mrb[0].mxu0
      %v404 = vadd.f32 0.0, %v403
      %v405 = vpop.f32.mrb[0].mxu0
      %406 = vmatprep.mubr.bf16.mxu0 0
      %407 = vmatmul.mubr.bf16.gmra.mrb[0].mxu0 %v282
      %v408 = vpop.f32.mrb[0].mxu0
      %v409 = vadd.f32 0.0, %v408
      %v410 = vpop.f32.mrb[0].mxu0
      %v411 = vpop.f32.mrb[0].mxu0
      %v412 = vadd.f32 0.0, %v411
      %v413 = vpop.f32.mrb[0].mxu0
      %414 = vmatprep.mubr.bf16.mxu0 0
      %415 = vmatmul.mubr.bf16.gmra.mrb[0].mxu0 %v283
      %v416 = vpop.f32.mrb[0].mxu0
      %v417 = vadd.f32 0.0, %v416
      %v418 = vpop.f32.mrb[0].mxu0
      %v419 = vpop.f32.mrb[0].mxu0
      %v420 = vadd.f32 0.0, %v419
      %v421 = vpop.f32.mrb[0].mxu0
      %422 = vmatprep.mubr.bf16.mxu0 0
      %423 = vmatmul.mubr.bf16.gmra.mrb[0].mxu0 %v284
      %v424 = vpop.f32.mrb[0].mxu0
      %v425 = vadd.f32 0.0, %v424
      %v426 = vpop.f32.mrb[0].mxu0
      %v427 = vpop.f32.mrb[0].mxu0
      %v428 = vadd.f32 0.0, %v427
      %v429 = vpop.f32.mrb[0].mxu0
      %430 = vmatprep.mubr.bf16.mxu0 0
      %431 = vmatmul.mubr.bf16.gmra.mrb[0].mxu0 %v285
      %v432 = vpop.f32.mrb[0].mxu0
      %v433 = vadd.f32 0.0, %v432
      %v434 = vpop.f32.mrb[0].mxu0
      %v435 = vpop.f32.mrb[0].mxu0
      %v436 = vadd.f32 0.0, %v435
      %v437 = vpop.f32.mrb[0].mxu0
      %438 = vdwg.mxu0
      %p439 = scmp.eq.s32.totalorder %s19, 0
      %p440 = scmp.eq.s32.totalorder %s20, 0
      %p441 = pnand %p439, %p440
      %p442 = pneg %p441
      // Predicated region
      $region37: #{discriminator_forward.6} parent=35 // pred_check
        _
      $region38: #{discriminator_forward.6} parent=35 // pred_check_branch
        %444 = sbr.rel (%p441) target = $region40
      $region39: #{discriminator_forward.6} parent=35 // pred_region
        %445 = vst [vmem:[#allocation2] sm:$0x3] 0.0
      $region40: #{discriminator_forward.6} parent=35 // pred_fallthru
        _
      // Predicated region
      $region41: #{discriminator_forward.6} parent=35 // pred_check
        %p446 = pneg %p439
      $region42: #{discriminator_forward.6} parent=35 // pred_check_branch
        %448 = sbr.rel (%p446) target = $region44
      $region43: #{discriminator_forward.6} parent=35 // pred_region
        %v449 = vld [vmem:[#allocation2] sm:$0x1]
        %v450 = vadd.f32 %v377, %v380
        %v451 = vadd.f32 %v450, %v385
        %v452 = vadd.f32 %v451, %v388
        %v453 = vadd.f32 %v452, %v393
        %v454 = vadd.f32 %v453, %v396
        %v455 = vadd.f32 %v454, %v401
        %v456 = vadd.f32 %v455, %v404
        %v457 = vadd.f32 %v456, %v409
        %v458 = vadd.f32 %v457, %v412
        %v459 = vadd.f32 %v458, %v417
        %v460 = vadd.f32 %v459, %v420
        %v461 = vadd.f32 %v460, %v425
        %v462 = vadd.f32 %v461, %v428
        %v463 = vadd.f32 %v462, %v433
        %v464 = vadd.f32 %v463, %v436
        %v465 = vrot.slane %v464, 4
        %v466 = vadd.f32 %v464, %v465
        %v467 = vrot.slane %v466, 2
        %v468 = vadd.f32 %v466, %v467
        %v469 = vrot.slane %v468, 1
        %v470 = vadd.f32 %v468, %v469
        %v471 = vadd.f32 %v449, %v470
        %472 = vst [vmem:[#allocation2] sm:$0x1] %v471
        %v473 = vld [vmem:[#allocation2 + $0x1] sm:$0x1]
        %v474 = vmul.f32 %v377, %v377
        %v475 = vmul.f32 %v380, %v380
        %v476 = vmul.f32 %v385, %v385
        %v477 = vmul.f32 %v388, %v388
        %v478 = vmul.f32 %v393, %v393
        %v479 = vmul.f32 %v396, %v396
        %v480 = vmul.f32 %v401, %v401
        %v481 = vmul.f32 %v404, %v404
        %v482 = vmul.f32 %v409, %v409
        %v483 = vmul.f32 %v412, %v412
        %v484 = vmul.f32 %v417, %v417
        %v485 = vmul.f32 %v420, %v420
        %v486 = vmul.f32 %v425, %v425
        %v487 = vmul.f32 %v428, %v428
        %v488 = vmul.f32 %v433, %v433
        %v489 = vmul.f32 %v436, %v436
        %v490 = vadd.f32 %v474, %v475
        %v491 = vadd.f32 %v490, %v476
        %v492 = vadd.f32 %v491, %v477
        %v493 = vadd.f32 %v492, %v478
        %v494 = vadd.f32 %v493, %v479
        %v495 = vadd.f32 %v494, %v480
        %v496 = vadd.f32 %v495, %v481
        %v497 = vadd.f32 %v496, %v482
        %v498 = vadd.f32 %v497, %v483
        %v499 = vadd.f32 %v498, %v484
        %v500 = vadd.f32 %v499, %v485
        %v501 = vadd.f32 %v500, %v486
        %v502 = vadd.f32 %v501, %v487
        %v503 = vadd.f32 %v502, %v488
        %v504 = vadd.f32 %v503, %v489
        %v505 = vrot.slane %v504, 4
        %v506 = vadd.f32 %v504, %v505
        %v507 = vrot.slane %v506, 2
        %v508 = vadd.f32 %v506, %v507
        %v509 = vrot.slane %v508, 1
        %v510 = vadd.f32 %v508, %v509
        %v511 = vadd.f32 %v473, %v510
        %512 = vst [vmem:[#allocation2 + $0x1] sm:$0x1] %v511
      $region44: #{discriminator_forward.6} parent=35 // pred_fallthru
        _
      %p513 = scmp.eq.s32.totalorder %s19, 1
      // Predicated region
      $region45: #{discriminator_forward.6} parent=35 // pred_check
        %p514 = pneg %p513
      $region46: #{discriminator_forward.6} parent=35 // pred_check_branch
        %516 = sbr.rel (%p514) target = $region48
      $region47: #{discriminator_forward.6} parent=35 // pred_region
        %v517 = vld [vmem:[#allocation2] sm:$0x1]
        %v518 = vmul.f32 %v517, 0.0078125
        %v519 = vld [vmem:[#allocation2 + $0x1] sm:$0x1]
        %v520 = vmul.f32 %v519, 0.0078125
        %v521 = vmul.f32 %v518, %v518
        %v522 = vsub.f32 %v520, %v521
        %v523 = vlaneseq
        %v524 = vshrl.u32 %v523, 7
        %v525 = vsub.s32 0, %v524
        %v526 = vrot.slane %v518, %v525
        %v527 = vsub.f32 %v377, %v526
        %v528 = vsub.f32 %v380, %v526
        %v529 = vsub.f32 %v385, %v526
        %v530 = vsub.f32 %v388, %v526
        %v531 = vsub.f32 %v393, %v526
        %v532 = vsub.f32 %v396, %v526
        %v533 = vsub.f32 %v401, %v526
        %v534 = vsub.f32 %v404, %v526
        %v535 = vsub.f32 %v409, %v526
        %v536 = vsub.f32 %v412, %v526
        %v537 = vsub.f32 %v417, %v526
        %v538 = vsub.f32 %v420, %v526
        %v539 = vsub.f32 %v425, %v526
        %v540 = vsub.f32 %v428, %v526
        %v541 = vsub.f32 %v433, %v526
        %v542 = vsub.f32 %v436, %v526
        %v543 = vadd.f32 %v522, 1e-05
        %v544 = vrsqrt.pop %v543
        %v545 = vlaneseq
        %v546 = vshrl.u32 %v545, 7
        %v547 = vsub.s32 0, %v546
        %v548 = vrot.slane %v544, %v547
        %v549 = vmul.f32 %v527, %v548
        %v550 = vmul.f32 %v528, %v548
        %v551 = vmul.f32 %v529, %v548
        %v552 = vmul.f32 %v530, %v548
        %v553 = vmul.f32 %v531, %v548
        %v554 = vmul.f32 %v532, %v548
        %v555 = vmul.f32 %v533, %v548
        %v556 = vmul.f32 %v534, %v548
        %v557 = vmul.f32 %v535, %v548
        %v558 = vmul.f32 %v536, %v548
        %v559 = vmul.f32 %v537, %v548
        %v560 = vmul.f32 %v538, %v548
        %v561 = vmul.f32 %v539, %v548
        %v562 = vmul.f32 %v540, %v548
        %v563 = vmul.f32 %v541, %v548
        %v564 = vmul.f32 %v542, %v548
        %v565 = vld [vmem:[%s2] sm:$0x1]
        %v567 = vlaneseq
        %v568 = vshrl.u32 %v567, 7
        %v569 = vsub.s32 0, %v568
        %v570 = vrot.slane %v565, %v569
        %v572 = vmul.f32 %v549, %v570
        %v573 = vmul.f32 %v550, %v570
        %v574 = vmul.f32 %v551, %v570
        %v575 = vmul.f32 %v552, %v570
        %v576 = vmul.f32 %v553, %v570
        %v577 = vmul.f32 %v554, %v570
        %v578 = vmul.f32 %v555, %v570
        %v579 = vmul.f32 %v556, %v570
        %v580 = vmul.f32 %v557, %v570
        %v581 = vmul.f32 %v558, %v570
        %v582 = vmul.f32 %v559, %v570
        %v583 = vmul.f32 %v560, %v570
        %v584 = vmul.f32 %v561, %v570
        %v585 = vmul.f32 %v562, %v570
        %v586 = vmul.f32 %v563, %v570
        %v587 = vmul.f32 %v564, %v570
        %v588 = vld [vmem:[%s3] sm:$0x1]
        %v590 = vlaneseq
        %v591 = vshrl.u32 %v590, 7
        %v592 = vsub.s32 0, %v591
        %v593 = vrot.slane %v588, %v592
        %v595 = vadd.f32 %v572, %v593
        %v596 = vadd.f32 %v573, %v593
        %v597 = vadd.f32 %v574, %v593
        %v598 = vadd.f32 %v575, %v593
        %v599 = vadd.f32 %v576, %v593
        %v600 = vadd.f32 %v577, %v593
        %v601 = vadd.f32 %v578, %v593
        %v602 = vadd.f32 %v579, %v593
        %v603 = vadd.f32 %v580, %v593
        %v604 = vadd.f32 %v581, %v593
        %v605 = vadd.f32 %v582, %v593
        %v606 = vadd.f32 %v583, %v593
        %v607 = vadd.f32 %v584, %v593
        %v608 = vadd.f32 %v585, %v593
        %v609 = vadd.f32 %v586, %v593
        %v610 = vadd.f32 %v587, %v593
        %vm611 = vcmp.gt.f32.partialorder %v595, 0.0
        %vm612 = vcmp.gt.f32.partialorder %v596, 0.0
        %vm613 = vcmp.gt.f32.partialorder %v597, 0.0
        %vm614 = vcmp.gt.f32.partialorder %v598, 0.0
        %vm615 = vcmp.gt.f32.partialorder %v599, 0.0
        %vm616 = vcmp.gt.f32.partialorder %v600, 0.0
        %vm617 = vcmp.gt.f32.partialorder %v601, 0.0
        %vm618 = vcmp.gt.f32.partialorder %v602, 0.0
        %vm619 = vcmp.gt.f32.partialorder %v603, 0.0
        %vm620 = vcmp.gt.f32.partialorder %v604, 0.0
        %vm621 = vcmp.gt.f32.partialorder %v605, 0.0
        %vm622 = vcmp.gt.f32.partialorder %v606, 0.0
        %vm623 = vcmp.gt.f32.partialorder %v607, 0.0
        %vm624 = vcmp.gt.f32.partialorder %v608, 0.0
        %vm625 = vcmp.gt.f32.partialorder %v609, 0.0
        %vm626 = vcmp.gt.f32.partialorder %v610, 0.0
        %v627 = vmul.f32 %v595, 0.2
        %v628 = vmul.f32 %v596, 0.2
        %v629 = vmul.f32 %v597, 0.2
        %v630 = vmul.f32 %v598, 0.2
        %v631 = vmul.f32 %v599, 0.2
        %v632 = vmul.f32 %v600, 0.2
        %v633 = vmul.f32 %v601, 0.2
        %v634 = vmul.f32 %v602, 0.2
        %v635 = vmul.f32 %v603, 0.2
        %v636 = vmul.f32 %v604, 0.2
        %v637 = vmul.f32 %v605, 0.2
        %v638 = vmul.f32 %v606, 0.2
        %v639 = vmul.f32 %v607, 0.2
        %v640 = vmul.f32 %v608, 0.2
        %v641 = vmul.f32 %v609, 0.2
        %v642 = vmul.f32 %v610, 0.2
        %v643 = vsel %vm611, %v595, %v627
        %v644 = vsel %vm612, %v596, %v628
        %v645 = vsel %vm613, %v597, %v629
        %v646 = vsel %vm614, %v598, %v630
        %v647 = vsel %vm615, %v599, %v631
        %v648 = vsel %vm616, %v600, %v632
        %v649 = vsel %vm617, %v601, %v633
        %v650 = vsel %vm618, %v602, %v634
        %v651 = vsel %vm619, %v603, %v635
        %v652 = vsel %vm620, %v604, %v636
        %v653 = vsel %vm621, %v605, %v637
        %v654 = vsel %vm622, %v606, %v638
        %v655 = vsel %vm623, %v607, %v639
        %v656 = vsel %vm624, %v608, %v640
        %v657 = vsel %vm625, %v609, %v641
        %v658 = vsel %vm626, %v610, %v642
        %v659 = vpack.c.bf16 %v644, %v643
        %v660 = vpack.c.bf16 %v646, %v645
        %v661 = vpack.c.bf16 %v648, %v647
        %v662 = vpack.c.bf16 %v650, %v649
        %v663 = vpack.c.bf16 %v652, %v651
        %v664 = vpack.c.bf16 %v654, %v653
        %v665 = vpack.c.bf16 %v656, %v655
        %v666 = vpack.c.bf16 %v658, %v657
        %v675 = vunpack.c.l.b16 %v659
        %v676 = vunpack.c.h.b16 %v659
        %v677 = vunpack.c.l.b16 %v660
        %v678 = vunpack.c.h.b16 %v660
        %v679 = vunpack.c.l.b16 %v661
        %v680 = vunpack.c.h.b16 %v661
        %v681 = vunpack.c.l.b16 %v662
        %v682 = vunpack.c.h.b16 %v662
        %v683 = vunpack.c.l.b16 %v663
        %v684 = vunpack.c.h.b16 %v663
        %v685 = vunpack.c.l.b16 %v664
        %v686 = vunpack.c.h.b16 %v664
        %v687 = vunpack.c.l.b16 %v665
        %v688 = vunpack.c.h.b16 %v665
        %v689 = vunpack.c.l.b16 %v666
        %v690 = vunpack.c.h.b16 %v666
        %v691 = vpack.c.b16 %v675, %v675
        %v692 = vpack.c.b16 %v676, %v676
        %v693 = vpack.c.b16 %v677, %v677
        %v694 = vpack.c.b16 %v678, %v678
        %v695 = vpack.c.b16 %v679, %v679
        %v696 = vpack.c.b16 %v680, %v680
        %v697 = vpack.c.b16 %v681, %v681
        %v698 = vpack.c.b16 %v682, %v682
        %v699 = vpack.c.b16 %v683, %v683
        %v700 = vpack.c.b16 %v684, %v684
        %v701 = vpack.c.b16 %v685, %v685
        %v702 = vpack.c.b16 %v686, %v686
        %v703 = vpack.c.b16 %v687, %v687
        %v704 = vpack.c.b16 %v688, %v688
        %v705 = vpack.c.b16 %v689, %v689
        %v706 = vpack.c.b16 %v690, %v690
        %723 = vst [vmem:[%s211] sm:$0xf] %v691
        %724 = vst [vmem:[%s211 + $0x4] sm:$0xf] %v692
        %725 = vst [vmem:[%s211 + $0x8] sm:$0xf] %v693
        %726 = vst [vmem:[%s211 + $0xc] sm:$0xf] %v694
        %727 = vst [vmem:[%s211 + $0x10] sm:$0xf] %v695
        %728 = vst [vmem:[%s211 + $0x14] sm:$0xf] %v696
        %729 = vst [vmem:[%s211 + $0x18] sm:$0xf] %v697
        %730 = vst [vmem:[%s211 + $0x1c] sm:$0xf] %v698
        %731 = vst [vmem:[%s211 + $0x20] sm:$0xf] %v699
        %732 = vst [vmem:[%s211 + $0x24] sm:$0xf] %v700
        %733 = vst [vmem:[%s211 + $0x28] sm:$0xf] %v701
        %734 = vst [vmem:[%s211 + $0x2c] sm:$0xf] %v702
        %735 = vst [vmem:[%s211 + $0x30] sm:$0xf] %v703
        %736 = vst [vmem:[%s211 + $0x34] sm:$0xf] %v704
        %737 = vst [vmem:[%s211 + $0x38] sm:$0xf] %v705
        %738 = vst [vmem:[%s211 + $0x3c] sm:$0xf] %v706
      $region48: #{discriminator_forward.6} parent=35 // pred_fallthru
        _
      %s739 = smul.u32 16, %s20
      %p740 = scmp.lt.s32.totalorder %s739, 15
      %s741 = scalar_select %p740, %s739, 15
      %s742 = smul.addr %s741, 4
      %s743 = scalar_lea.vmem %s4, %s742
      // Predicated region
      $region49: #{discriminator_forward.6} parent=35 // pred_check
        %p744 = pneg %p134
      $region50: #{discriminator_forward.6} parent=35 // pred_check_branch
        %746 = sbr.rel (%p744) target = $region52
      $region51: #{discriminator_forward.6} parent=35 // pred_region
        %s747 = smul.u32 16, %s20
      $region52: #{discriminator_forward.6} parent=35 // pred_fallthru
        _
      // Predicated region
      $region53: #{discriminator_forward.6} parent=35 // pred_check
        %p748 = pneg %p134
      $region54: #{discriminator_forward.6} parent=35 // pred_check_branch
        %750 = sbr.rel (%p748) target = $region56
      $region55: #{discriminator_forward.6} parent=35 // pred_region
        %s751 = smul.u32 16, %s20
        %p752 = scmp.lt.s32.totalorder %s751, 15
        %s753 = scalar_select %p752, %s751, 15
        %s754 = smul.addr %s753, 4
        %s755 = scalar_lea.vmem %s4, %s754
      $region56: #{discriminator_forward.6} parent=35 // pred_fallthru
        _
    $region36: #{discriminator_forward.6} parent=5 // pred_fallthru
      _
    %p756 = scmp.le.s32.totalorder 2, %s10
    // Predicated region
    $region57: #{discriminator_forward.6} parent=5 // pred_check
      %p757 = pneg %p756
    $region58: #{discriminator_forward.6} parent=5 // pred_check_branch
      %759 = sbr.rel (%p757) target = $region60
    $region59: #{discriminator_forward.6} parent=5 // pred_region
      %s760 = ssub.s32 %s10, 2
    $region60: #{discriminator_forward.6} parent=5 // pred_fallthru
      _
  $region6: #{discriminator_forward.6} parent=0 // loop_footer
    %s14 = sadd.s32 1, %s10
  $region7: #{discriminator_forward.6} parent=0 // loop_footer_branch
    %9 = sbr.rel target = $region3
  $region8: #{discriminator_forward.6} parent=0 // loop_exit
    _

// kernel: discriminator_forward.7
$region0: #{discriminator_forward.7}
  #allocation0 [shape = 'u32[]', space=smem, size = 0x4, offset = 0x4, fixed_abs, tag = 'smem constant byte address 0x4 - core index']
  #allocation1 [shape = 'u32[144,128]{1,0:T(1,128)}', space=vmem, size = 0x12000, scoped, tag = 'internal scratch']
  %s0 = inlined_call_operand.vmem [shape: bf16[32,256], index: 0, kind: input, shape index: {}]
  %s1 = inlined_call_operand.vmem [shape: bf16[256,128], index: 1, kind: input, shape index: {}]
  %s2 = inlined_call_operand.vmem [shape: f32[1,128], index: 2, kind: input, shape index: {}]
  %s3 = inlined_call_operand.vmem [shape: f32[1,128], index: 3, kind: input, shape index: {}]
  %s4 = inlined_call_operand.vmem [shape: bf16[16,128,128], index: 4, kind: input, shape index: {}]
  %s5 = inlined_call_operand.vmem [shape: f32[1,128], index: 5, kind: input, shape index: {}]
  %s6 = inlined_call_operand.vmem [shape: f32[2,128], index: 6, kind: output, shape index: {}]
  %s7 = sld [smem:[#allocation0]]
  $region34: #{discriminator_forward.7} parent=0
    _
  %s9 = ssub.s32 1, %s7
  %s10 = scalar_select 0, %s9, %s7
  // Predicated region
  $region2: #{discriminator_forward.7} parent=0 // pred_check
    _
  $region3: #{discriminator_forward.7} parent=0 // pred_check_branch
    %12 = sbr.rel (0) target = $region5
  $region4: #{discriminator_forward.7} parent=0 // pred_region
    _
  $region5: #{discriminator_forward.7} parent=0 // pred_fallthru
    _
  // Predicated region
  $region6: #{discriminator_forward.7} parent=0 // pred_check
    _
  $region7: #{discriminator_forward.7} parent=0 // pred_check_branch
    %14 = sbr.rel (0) target = $region9
  $region8: #{discriminator_forward.7} parent=0 // pred_region
    _
  $region9: #{discriminator_forward.7} parent=0 // pred_fallthru
    _
  // Predicated region
  $region10: #{discriminator_forward.7} parent=0 // pred_check
    _
  $region11: #{discriminator_forward.7} parent=0 // pred_check_branch
    %16 = sbr.rel (0) target = $region13
  $region12: #{discriminator_forward.7} parent=0 // pred_region
    _
  $region13: #{discriminator_forward.7} parent=0 // pred_fallthru
    _
  // Predicated region
  $region14: #{discriminator_forward.7} parent=0 // pred_check
    _
  $region15: #{discriminator_forward.7} parent=0 // pred_check_branch
    %18 = sbr.rel (0) target = $region17
  $region16: #{discriminator_forward.7} parent=0 // pred_region
    _
  $region17: #{discriminator_forward.7} parent=0 // pred_fallthru
    _
  // Predicated region
  $region18: #{discriminator_forward.7} parent=0 // pred_check
    _
  $region19: #{discriminator_forward.7} parent=0 // pred_check_branch
    %20 = sbr.rel (0) target = $region21
  $region20: #{discriminator_forward.7} parent=0 // pred_region
    _
  $region21: #{discriminator_forward.7} parent=0 // pred_fallthru
    _
  // Predicated region
  $region22: #{discriminator_forward.7} parent=0 // pred_check
    _
  $region23: #{discriminator_forward.7} parent=0 // pred_check_branch
    %22 = sbr.rel (0) target = $region25
  $region24: #{discriminator_forward.7} parent=0 // pred_region
    _
  $region25: #{discriminator_forward.7} parent=0 // pred_fallthru
    _
  %v24 = vld [vmem:[%s0] sm:$0xff]
  %v25 = vld [vmem:[%s0 + $0x8] sm:$0xff]
  %v26 = vld [vmem:[%s0 + $0x10] sm:$0xff]
  %v27 = vld [vmem:[%s0 + $0x18] sm:$0xff]
  %v28 = vld [vmem:[%s1] sm:$0xf]
  %v29 = vld [vmem:[%s1 + $0x4] sm:$0xf]
  %v30 = vld [vmem:[%s1 + $0x8] sm:$0xf]
  %v31 = vld [vmem:[%s1 + $0xc] sm:$0xf]
  %v32 = vld [vmem:[%s1 + $0x10] sm:$0xf]
  %v33 = vld [vmem:[%s1 + $0x14] sm:$0xf]
  %v34 = vld [vmem:[%s1 + $0x18] sm:$0xf]
  %v35 = vld [vmem:[%s1 + $0x1c] sm:$0xf]
  %v36 = vld [vmem:[%s1 + $0x20] sm:$0xf]
  %v37 = vld [vmem:[%s1 + $0x24] sm:$0xf]
  %v38 = vld [vmem:[%s1 + $0x28] sm:$0xf]
  %v39 = vld [vmem:[%s1 + $0x2c] sm:$0xf]
  %v40 = vld [vmem:[%s1 + $0x30] sm:$0xf]
  %v41 = vld [vmem:[%s1 + $0x34] sm:$0xf]
  %v42 = vld [vmem:[%s1 + $0x38] sm:$0xf]
  %v43 = vld [vmem:[%s1 + $0x3c] sm:$0xf]
  %v44 = vld [vmem:[%s1 + $0x40] sm:$0xf]
  %v45 = vld [vmem:[%s1 + $0x44] sm:$0xf]
  %v46 = vld [vmem:[%s1 + $0x48] sm:$0xf]
  %v47 = vld [vmem:[%s1 + $0x4c] sm:$0xf]
  %v48 = vld [vmem:[%s1 + $0x50] sm:$0xf]
  %v49 = vld [vmem:[%s1 + $0x54] sm:$0xf]
  %v50 = vld [vmem:[%s1 + $0x58] sm:$0xf]
  %v51 = vld [vmem:[%s1 + $0x5c] sm:$0xf]
  %v52 = vld [vmem:[%s1 + $0x60] sm:$0xf]
  %v53 = vld [vmem:[%s1 + $0x64] sm:$0xf]
  %v54 = vld [vmem:[%s1 + $0x68] sm:$0xf]
  %v55 = vld [vmem:[%s1 + $0x6c] sm:$0xf]
  %v56 = vld [vmem:[%s1 + $0x70] sm:$0xf]
  %v57 = vld [vmem:[%s1 + $0x74] sm:$0xf]
  %v58 = vld [vmem:[%s1 + $0x78] sm:$0xf]
  %v59 = vld [vmem:[%s1 + $0x7c] sm:$0xf]
  %v64 = vunpack.c.l.b16 %v24
  %v65 = vunpack.c.h.b16 %v24
  %v66 = vunpack.c.l.b16 %v25
  %v67 = vunpack.c.h.b16 %v25
  %v68 = vunpack.c.l.b16 %v26
  %v69 = vunpack.c.h.b16 %v26
  %v70 = vunpack.c.l.b16 %v27
  %v71 = vunpack.c.h.b16 %v27
  %v72 = vpack.c.b16 %v66, %v64
  %v73 = vpack.c.b16 %v67, %v65
  %v74 = vpack.c.b16 %v70, %v68
  %v75 = vpack.c.b16 %v71, %v69
  %v112 = vunpack.c.l.b16 %v28
  %v113 = vunpack.c.l.b16 %v29
  %v114 = vunpack.c.l.b16 %v30
  %v115 = vunpack.c.l.b16 %v31
  %v116 = vunpack.c.l.b16 %v32
  %v117 = vunpack.c.l.b16 %v33
  %v118 = vunpack.c.l.b16 %v34
  %v119 = vunpack.c.l.b16 %v35
  %v120 = vunpack.c.l.b16 %v36
  %v121 = vunpack.c.l.b16 %v37
  %v122 = vunpack.c.l.b16 %v38
  %v123 = vunpack.c.l.b16 %v39
  %v124 = vunpack.c.l.b16 %v40
  %v125 = vunpack.c.l.b16 %v41
  %v126 = vunpack.c.l.b16 %v42
  %v127 = vunpack.c.l.b16 %v43
  %v128 = vunpack.c.l.b16 %v44
  %v129 = vunpack.c.l.b16 %v45
  %v130 = vunpack.c.l.b16 %v46
  %v131 = vunpack.c.l.b16 %v47
  %v132 = vunpack.c.l.b16 %v48
  %v133 = vunpack.c.l.b16 %v49
  %v134 = vunpack.c.l.b16 %v50
  %v135 = vunpack.c.l.b16 %v51
  %v136 = vunpack.c.l.b16 %v52
  %v137 = vunpack.c.l.b16 %v53
  %v138 = vunpack.c.l.b16 %v54
  %v139 = vunpack.c.l.b16 %v55
  %v140 = vunpack.c.l.b16 %v56
  %v141 = vunpack.c.l.b16 %v57
  %v142 = vunpack.c.l.b16 %v58
  %v143 = vunpack.c.l.b16 %v59
  %v144 = vpack.c.b16 %v113, %v112
  %v145 = vpack.c.b16 %v115, %v114
  %v146 = vpack.c.b16 %v117, %v116
  %v147 = vpack.c.b16 %v119, %v118
  %v148 = vpack.c.b16 %v121, %v120
  %v149 = vpack.c.b16 %v123, %v122
  %v150 = vpack.c.b16 %v125, %v124
  %v151 = vpack.c.b16 %v127, %v126
  %v152 = vpack.c.b16 %v129, %v128
  %v153 = vpack.c.b16 %v131, %v130
  %v154 = vpack.c.b16 %v133, %v132
  %v155 = vpack.c.b16 %v135, %v134
  %v156 = vpack.c.b16 %v137, %v136
  %v157 = vpack.c.b16 %v139, %v138
  %v158 = vpack.c.b16 %v141, %v140
  %v159 = vpack.c.b16 %v143, %v142
  %176 = vmatprep.subr.bf16.mxu0 0
  %177 = vmatpush1.bf16.msra.mxu0 %v144
  %178 = vmatprep.subr.bf16.mxu0 0
  %179 = vmatpush1.bf16.msra.mxu0 %v145
  %180 = vmatprep.subr.bf16.mxu0 0
  %181 = vmatpush1.bf16.msra.mxu0 %v146
  %182 = vmatprep.subr.bf16.mxu0 0
  %183 = vmatpush1.bf16.msra.mxu0 %v147
  %184 = vmatprep.subr.bf16.mxu0 0
  %185 = vmatpush1.bf16.msra.mxu0 %v148
  %186 = vmatprep.subr.bf16.mxu0 0
  %187 = vmatpush1.bf16.msra.mxu0 %v149
  %188 = vmatprep.subr.bf16.mxu0 0
  %189 = vmatpush1.bf16.msra.mxu0 %v150
  %190 = vmatprep.subr.bf16.mxu0 0
  %191 = vmatpush1.bf16.msra.mxu0 %v151
  %192 = vmatprep.subr.bf16.mxu0 0
  %193 = vmatpush1.bf16.msra.mxu0 %v152
  %194 = vmatprep.subr.bf16.mxu0 0
  %195 = vmatpush1.bf16.msra.mxu0 %v153
  %196 = vmatprep.subr.bf16.mxu0 0
  %197 = vmatpush1.bf16.msra.mxu0 %v154
  %198 = vmatprep.subr.bf16.mxu0 0
  %199 = vmatpush1.bf16.msra.mxu0 %v155
  %200 = vmatprep.subr.bf16.mxu0 0
  %201 = vmatpush1.bf16.msra.mxu0 %v156
  %202 = vmatprep.subr.bf16.mxu0 0
  %203 = vmatpush1.bf16.msra.mxu0 %v157
  %204 = vmatprep.subr.bf16.mxu0 0
  %205 = vmatpush1.bf16.msra.mxu0 %v158
  %206 = vmatprep.subr.bf16.mxu0 0
  %207 = vmatpush1.bf16.msra.mxu0 %v159
  %208 = vmatprep.mubr.bf16.mxu0 %v73
  %209 = vmatmul.mubr.bf16.gmra.mrb[0].mxu0 %v72
  %v210 = vpop.f32.mrb[0].mxu0
  %v211 = vadd.f32 0.0, %v210
  %v212 = vpop.f32.mrb[0].mxu0
  %v213 = vpop.f32.mrb[0].mxu0
  %v214 = vadd.f32 0.0, %v213
  %v215 = vpop.f32.mrb[0].mxu0
  %216 = vmatprep.mubr.bf16.mxu0 %v75
  %217 = vmatmul.mubr.bf16.gmra.mrb[0].mxu0 %v74
  %v218 = vpop.f32.mrb[0].mxu0
  %v219 = vadd.f32 0.0, %v218
  %v220 = vpop.f32.mrb[0].mxu0
  %v221 = vpop.f32.mrb[0].mxu0
  %v222 = vadd.f32 0.0, %v221
  %v223 = vpop.f32.mrb[0].mxu0
  %224 = vdwg.mxu0
  %v225 = vadd.f32 %v211, %v214
  %v226 = vadd.f32 %v225, %v219
  %v227 = vadd.f32 %v226, %v222
  %v228 = vrot.slane %v227, 4
  %v229 = vadd.f32 %v227, %v228
  %v230 = vrot.slane %v229, 2
  %v231 = vadd.f32 %v229, %v230
  %v232 = vrot.slane %v231, 1
  %v233 = vadd.f32 %v231, %v232
  %v234 = vrcp.pop 32.0
  %v235 = vmul.f32 %v233, %v234
  %v236 = vmul.f32 %v211, %v211
  %v237 = vmul.f32 %v214, %v214
  %v238 = vmul.f32 %v219, %v219
  %v239 = vmul.f32 %v222, %v222
  %v240 = vadd.f32 %v236, %v237
  %v241 = vadd.f32 %v240, %v238
  %v242 = vadd.f32 %v241, %v239
  %v243 = vrot.slane %v242, 4
  %v244 = vadd.f32 %v242, %v243
  %v245 = vrot.slane %v244, 2
  %v246 = vadd.f32 %v244, %v245
  %v247 = vrot.slane %v246, 1
  %v248 = vadd.f32 %v246, %v247
  %v249 = vmul.f32 %v248, %v234
  %v250 = vmul.f32 %v235, %v235
  %v251 = vsub.f32 %v249, %v250
  %v252 = vsub.f32 %v211, %v235
  %v253 = vsub.f32 %v214, %v235
  %v254 = vsub.f32 %v219, %v235
  %v255 = vsub.f32 %v222, %v235
  %v256 = vadd.f32 %v251, 1e-05
  %v257 = vrsqrt.pop %v256
  %v258 = vmul.f32 %v252, %v257
  %v259 = vmul.f32 %v253, %v257
  %v260 = vmul.f32 %v254, %v257
  %v261 = vmul.f32 %v255, %v257
  %v262 = vld [vmem:[%s2] sm:$0x1]
  %v264 = vlaneseq
  %v265 = vshrl.u32 %v264, 7
  %v266 = vsub.s32 0, %v265
  %v267 = vrot.slane %v262, %v266
  %v269 = vmul.f32 %v258, %v267
  %v270 = vmul.f32 %v259, %v267
  %v271 = vmul.f32 %v260, %v267
  %v272 = vmul.f32 %v261, %v267
  %v273 = vld [vmem:[%s3] sm:$0x1]
  %v275 = vlaneseq
  %v276 = vshrl.u32 %v275, 7
  %v277 = vsub.s32 0, %v276
  %v278 = vrot.slane %v273, %v277
  %v280 = vadd.f32 %v269, %v278
  %v281 = vadd.f32 %v270, %v278
  %v282 = vadd.f32 %v271, %v278
  %v283 = vadd.f32 %v272, %v278
  %vm284 = vcmp.gt.f32.partialorder %v280, 0.0
  %vm285 = vcmp.gt.f32.partialorder %v281, 0.0
  %vm286 = vcmp.gt.f32.partialorder %v282, 0.0
  %vm287 = vcmp.gt.f32.partialorder %v283, 0.0
  %v288 = vmul.f32 %v280, 0.2
  %v289 = vmul.f32 %v281, 0.2
  %v290 = vmul.f32 %v282, 0.2
  %v291 = vmul.f32 %v283, 0.2
  %v292 = vsel %vm284, %v280, %v288
  %v293 = vsel %vm285, %v281, %v289
  %v294 = vsel %vm286, %v282, %v290
  %v295 = vsel %vm287, %v283, %v291
  %v296 = vpack.c.bf16 %v293, %v292
  %v297 = vpack.c.bf16 %v295, %v294
  %v298 = vld [vmem:[%s4] sm:$0xf]
  %v299 = vld [vmem:[%s4 + $0x4] sm:$0xf]
  %v300 = vld [vmem:[%s4 + $0x8] sm:$0xf]
  %v301 = vld [vmem:[%s4 + $0xc] sm:$0xf]
  %v302 = vld [vmem:[%s4 + $0x10] sm:$0xf]
  %v303 = vld [vmem:[%s4 + $0x14] sm:$0xf]
  %v304 = vld [vmem:[%s4 + $0x18] sm:$0xf]
  %v305 = vld [vmem:[%s4 + $0x1c] sm:$0xf]
  %v306 = vld [vmem:[%s4 + $0x20] sm:$0xf]
  %v307 = vld [vmem:[%s4 + $0x24] sm:$0xf]
  %v308 = vld [vmem:[%s4 + $0x28] sm:$0xf]
  %v309 = vld [vmem:[%s4 + $0x2c] sm:$0xf]
  %v310 = vld [vmem:[%s4 + $0x30] sm:$0xf]
  %v311 = vld [vmem:[%s4 + $0x34] sm:$0xf]
  %v312 = vld [vmem:[%s4 + $0x38] sm:$0xf]
  %v313 = vld [vmem:[%s4 + $0x3c] sm:$0xf]
  %s314 = scalar_lea.vmem %s4, 64
  %v315 = vld [vmem:[%s314] sm:$0xf]
  %v316 = vld [vmem:[%s314 + $0x4] sm:$0xf]
  %v317 = vld [vmem:[%s314 + $0x8] sm:$0xf]
  %v318 = vld [vmem:[%s314 + $0xc] sm:$0xf]
  %v319 = vld [vmem:[%s314 + $0x10] sm:$0xf]
  %v320 = vld [vmem:[%s314 + $0x14] sm:$0xf]
  %v321 = vld [vmem:[%s314 + $0x18] sm:$0xf]
  %v322 = vld [vmem:[%s314 + $0x1c] sm:$0xf]
  %v323 = vld [vmem:[%s314 + $0x20] sm:$0xf]
  %v324 = vld [vmem:[%s314 + $0x24] sm:$0xf]
  %v325 = vld [vmem:[%s314 + $0x28] sm:$0xf]
  %v326 = vld [vmem:[%s314 + $0x2c] sm:$0xf]
  %v327 = vld [vmem:[%s314 + $0x30] sm:$0xf]
  %v328 = vld [vmem:[%s314 + $0x34] sm:$0xf]
  %v329 = vld [vmem:[%s314 + $0x38] sm:$0xf]
  %v330 = vld [vmem:[%s314 + $0x3c] sm:$0xf]
  %v332 = vrot.slane %v296, 1
  %v350 = vunpack.c.l.b16 %v315
  %v351 = vunpack.c.l.b16 %v316
  %v352 = vunpack.c.l.b16 %v317
  %v353 = vunpack.c.l.b16 %v318
  %v354 = vunpack.c.l.b16 %v319
  %v355 = vunpack.c.l.b16 %v320
  %v356 = vunpack.c.l.b16 %v321
  %v357 = vunpack.c.l.b16 %v322
  %v358 = vunpack.c.l.b16 %v323
  %v359 = vunpack.c.l.b16 %v324
  %v360 = vunpack.c.l.b16 %v325
  %v361 = vunpack.c.l.b16 %v326
  %v362 = vunpack.c.l.b16 %v327
  %v363 = vunpack.c.l.b16 %v328
  %v364 = vunpack.c.l.b16 %v329
  %v365 = vunpack.c.l.b16 %v330
  %v366 = vpack.c.b16 %v351, %v350
  %v367 = vpack.c.b16 %v353, %v352
  %v368 = vpack.c.b16 %v355, %v354
  %v369 = vpack.c.b16 %v357, %v356
  %v370 = vpack.c.b16 %v359, %v358
  %v371 = vpack.c.b16 %v361, %v360
  %v372 = vpack.c.b16 %v363, %v362
  %v373 = vpack.c.b16 %v365, %v364
  %382 = vmatprep.subr.bf16.mxu0 0
  %383 = vmatpush1.bf16.msra.mxu0 %v366
  %384 = vmatprep.subr.bf16.mxu0 0
  %385 = vmatpush1.bf16.msra.mxu0 %v367
  %386 = vmatprep.subr.bf16.mxu0 0
  %387 = vmatpush1.bf16.msra.mxu0 %v368
  %388 = vmatprep.subr.bf16.mxu0 0
  %389 = vmatpush1.bf16.msra.mxu0 %v369
  %390 = vmatprep.subr.bf16.mxu0 0
  %391 = vmatpush1.bf16.msra.mxu0 %v370
  %392 = vmatprep.subr.bf16.mxu0 0
  %393 = vmatpush1.bf16.msra.mxu0 %v371
  %394 = vmatprep.subr.bf16.mxu0 0
  %395 = vmatpush1.bf16.msra.mxu0 %v372
  %396 = vmatprep.subr.bf16.mxu0 0
  %397 = vmatpush1.bf16.msra.mxu0 %v373
  %398 = vmatprep.subr.bf16.mxu0 0
  %399 = vmatpush1.bf16.msra.mxu0 0
  %400 = vmatprep.subr.bf16.mxu0 0
  %401 = vmatpush1.bf16.msra.mxu0 0
  %402 = vmatprep.subr.bf16.mxu0 0
  %403 = vmatpush1.bf16.msra.mxu0 0
  %404 = vmatprep.subr.bf16.mxu0 0
  %405 = vmatpush1.bf16.msra.mxu0 0
  %406 = vmatprep.subr.bf16.mxu0 0
  %407 = vmatpush1.bf16.msra.mxu0 0
  %408 = vmatprep.subr.bf16.mxu0 0
  %409 = vmatpush1.bf16.msra.mxu0 0
  %410 = vmatprep.subr.bf16.mxu0 0
  %411 = vmatpush1.bf16.msra.mxu0 0
  %412 = vmatprep.subr.bf16.mxu0 0
  %413 = vmatpush1.bf16.msra.mxu0 0
  %414 = vmatprep.mubr.bf16.mxu0 0
  %415 = vmatmul.mubr.bf16.gmra.mrb[0].mxu0 %v332
  %v416 = vpop.f32.mrb[0].mxu0
  %v417 = vadd.f32 0.0, %v416
  %v418 = vpop.f32.mrb[0].mxu0
  %v419 = vpop.f32.mrb[0].mxu0
  %v420 = vpop.f32.mrb[0].mxu0
  %421 = vdwg.mxu0
  %v438 = vunpack.c.l.b16 %v298
  %v439 = vunpack.c.l.b16 %v299
  %v440 = vunpack.c.l.b16 %v300
  %v441 = vunpack.c.l.b16 %v301
  %v442 = vunpack.c.l.b16 %v302
  %v443 = vunpack.c.l.b16 %v303
  %v444 = vunpack.c.l.b16 %v304
  %v445 = vunpack.c.l.b16 %v305
  %v446 = vunpack.c.l.b16 %v306
  %v447 = vunpack.c.l.b16 %v307
  %v448 = vunpack.c.l.b16 %v308
  %v449 = vunpack.c.l.b16 %v309
  %v450 = vunpack.c.l.b16 %v310
  %v451 = vunpack.c.l.b16 %v311
  %v452 = vunpack.c.l.b16 %v312
  %v453 = vunpack.c.l.b16 %v313
  %v454 = vpack.c.b16 %v439, %v438
  %v455 = vpack.c.b16 %v441, %v440
  %v456 = vpack.c.b16 %v443, %v442
  %v457 = vpack.c.b16 %v445, %v444
  %v458 = vpack.c.b16 %v447, %v446
  %v459 = vpack.c.b16 %v449, %v448
  %v460 = vpack.c.b16 %v451, %v450
  %v461 = vpack.c.b16 %v453, %v452
  %470 = vmatprep.subr.bf16.mxu0 0
  %471 = vmatpush1.bf16.msra.mxu0 %v454
  %472 = vmatprep.subr.bf16.mxu0 0
  %473 = vmatpush1.bf16.msra.mxu0 %v455
  %474 = vmatprep.subr.bf16.mxu0 0
  %475 = vmatpush1.bf16.msra.mxu0 %v456
  %476 = vmatprep.subr.bf16.mxu0 0
  %477 = vmatpush1.bf16.msra.mxu0 %v457
  %478 = vmatprep.subr.bf16.mxu0 0
  %479 = vmatpush1.bf16.msra.mxu0 %v458
  %480 = vmatprep.subr.bf16.mxu0 0
  %481 = vmatpush1.bf16.msra.mxu0 %v459
  %482 = vmatprep.subr.bf16.mxu0 0
  %483 = vmatpush1.bf16.msra.mxu0 %v460
  %484 = vmatprep.subr.bf16.mxu0 0
  %485 = vmatpush1.bf16.msra.mxu0 %v461
  %486 = vmatprep.subr.bf16.mxu0 0
  %487 = vmatpush1.bf16.msra.mxu0 0
  %488 = vmatprep.subr.bf16.mxu0 0
  %489 = vmatpush1.bf16.msra.mxu0 0
  %490 = vmatprep.subr.bf16.mxu0 0
  %491 = vmatpush1.bf16.msra.mxu0 0
  %492 = vmatprep.subr.bf16.mxu0 0
  %493 = vmatpush1.bf16.msra.mxu0 0
  %494 = vmatprep.subr.bf16.mxu0 0
  %495 = vmatpush1.bf16.msra.mxu0 0
  %496 = vmatprep.subr.bf16.mxu0 0
  %497 = vmatpush1.bf16.msra.mxu0 0
  %498 = vmatprep.subr.bf16.mxu0 0
  %499 = vmatpush1.bf16.msra.mxu0 0
  %500 = vmatprep.subr.bf16.mxu0 0
  %501 = vmatpush1.bf16.msra.mxu0 0
  %502 = vmatprep.mubr.bf16.mxu0 0
  %503 = vmatmul.mubr.bf16.gmra.mrb[0].mxu0 %v296
  %v504 = vpop.f32.mrb[0].mxu0
  %v505 = vadd.f32 %v417, %v504
  %v506 = vpop.f32.mrb[0].mxu0
  %v507 = vpop.f32.mrb[0].mxu0
  %v508 = vpop.f32.mrb[0].mxu0
  %509 = vdwg.mxu0
  %s510 = scalar_lea.vmem %s4, 128
  %v511 = vld [vmem:[%s510] sm:$0xf]
  %v512 = vld [vmem:[%s510 + $0x4] sm:$0xf]
  %v513 = vld [vmem:[%s510 + $0x8] sm:$0xf]
  %v514 = vld [vmem:[%s510 + $0xc] sm:$0xf]
  %v515 = vld [vmem:[%s510 + $0x10] sm:$0xf]
  %v516 = vld [vmem:[%s510 + $0x14] sm:$0xf]
  %v517 = vld [vmem:[%s510 + $0x18] sm:$0xf]
  %v518 = vld [vmem:[%s510 + $0x1c] sm:$0xf]
  %v519 = vld [vmem:[%s510 + $0x20] sm:$0xf]
  %v520 = vld [vmem:[%s510 + $0x24] sm:$0xf]
  %v521 = vld [vmem:[%s510 + $0x28] sm:$0xf]
  %v522 = vld [vmem:[%s510 + $0x2c] sm:$0xf]
  %v523 = vld [vmem:[%s510 + $0x30] sm:$0xf]
  %v524 = vld [vmem:[%s510 + $0x34] sm:$0xf]
  %v525 = vld [vmem:[%s510 + $0x38] sm:$0xf]
  %v526 = vld [vmem:[%s510 + $0x3c] sm:$0xf]
  %v527 = vrot.slane %v296, 2
  %v545 = vunpack.c.l.b16 %v511
  %v546 = vunpack.c.l.b16 %v512
  %v547 = vunpack.c.l.b16 %v513
  %v548 = vunpack.c.l.b16 %v514
  %v549 = vunpack.c.l.b16 %v515
  %v550 = vunpack.c.l.b16 %v516
  %v551 = vunpack.c.l.b16 %v517
  %v552 = vunpack.c.l.b16 %v518
  %v553 = vunpack.c.l.b16 %v519
  %v554 = vunpack.c.l.b16 %v520
  %v555 = vunpack.c.l.b16 %v521
  %v556 = vunpack.c.l.b16 %v522
  %v557 = vunpack.c.l.b16 %v523
  %v558 = vunpack.c.l.b16 %v524
  %v559 = vunpack.c.l.b16 %v525
  %v560 = vunpack.c.l.b16 %v526
  %v561 = vpack.c.b16 %v546, %v545
  %v562 = vpack.c.b16 %v548, %v547
  %v563 = vpack.c.b16 %v550, %v549
  %v564 = vpack.c.b16 %v552, %v551
  %v565 = vpack.c.b16 %v554, %v553
  %v566 = vpack.c.b16 %v556, %v555
  %v567 = vpack.c.b16 %v558, %v557
  %v568 = vpack.c.b16 %v560, %v559
  %577 = vmatprep.subr.bf16.mxu0 0
  %578 = vmatpush1.bf16.msra.mxu0 %v561
  %579 = vmatprep.subr.bf16.mxu0 0
  %580 = vmatpush1.bf16.msra.mxu0 %v562
  %581 = vmatprep.subr.bf16.mxu0 0
  %582 = vmatpush1.bf16.msra.mxu0 %v563
  %583 = vmatprep.subr.bf16.mxu0 0
  %584 = vmatpush1.bf16.msra.mxu0 %v564
  %585 = vmatprep.subr.bf16.mxu0 0
  %586 = vmatpush1.bf16.msra.mxu0 %v565
  %587 = vmatprep.subr.bf16.mxu0 0
  %588 = vmatpush1.bf16.msra.mxu0 %v566
  %589 = vmatprep.subr.bf16.mxu0 0
  %590 = vmatpush1.bf16.msra.mxu0 %v567
  %591 = vmatprep.subr.bf16.mxu0 0
  %592 = vmatpush1.bf16.msra.mxu0 %v568
  %593 = vmatprep.subr.bf16.mxu0 0
  %594 = vmatpush1.bf16.msra.mxu0 0
  %595 = vmatprep.subr.bf16.mxu0 0
  %596 = vmatpush1.bf16.msra.mxu0 0
  %597 = vmatprep.subr.bf16.mxu0 0
  %598 = vmatpush1.bf16.msra.mxu0 0
  %599 = vmatprep.subr.bf16.mxu0 0
  %600 = vmatpush1.bf16.msra.mxu0 0
  %601 = vmatprep.subr.bf16.mxu0 0
  %602 = vmatpush1.bf16.msra.mxu0 0
  %603 = vmatprep.subr.bf16.mxu0 0
  %604 = vmatpush1.bf16.msra.mxu0 0
  %605 = vmatprep.subr.bf16.mxu0 0
  %606 = vmatpush1.bf16.msra.mxu0 0
  %607 = vmatprep.subr.bf16.mxu0 0
  %608 = vmatpush1.bf16.msra.mxu0 0
  %609 = vmatprep.mubr.bf16.mxu0 0
  %610 = vmatmul.mubr.bf16.gmra.mrb[0].mxu0 %v527
  %v611 = vpop.f32.mrb[0].mxu0
  %v612 = vadd.f32 0.0, %v611
  %v613 = vpop.f32.mrb[0].mxu0
  %v614 = vpop.f32.mrb[0].mxu0
  %v615 = vpop.f32.mrb[0].mxu0
  %616 = vdwg.mxu0
  %v617 = vadd.f32 %v505, %v612
  %s618 = scalar_lea.vmem %s4, 192
  %v619 = vld [vmem:[%s618] sm:$0xf]
  %v620 = vld [vmem:[%s618 + $0x4] sm:$0xf]
  %v621 = vld [vmem:[%s618 + $0x8] sm:$0xf]
  %v622 = vld [vmem:[%s618 + $0xc] sm:$0xf]
  %v623 = vld [vmem:[%s618 + $0x10] sm:$0xf]
  %v624 = vld [vmem:[%s618 + $0x14] sm:$0xf]
  %v625 = vld [vmem:[%s618 + $0x18] sm:$0xf]
  %v626 = vld [vmem:[%s618 + $0x1c] sm:$0xf]
  %v627 = vld [vmem:[%s618 + $0x20] sm:$0xf]
  %v628 = vld [vmem:[%s618 + $0x24] sm:$0xf]
  %v629 = vld [vmem:[%s618 + $0x28] sm:$0xf]
  %v630 = vld [vmem:[%s618 + $0x2c] sm:$0xf]
  %v631 = vld [vmem:[%s618 + $0x30] sm:$0xf]
  %v632 = vld [vmem:[%s618 + $0x34] sm:$0xf]
  %v633 = vld [vmem:[%s618 + $0x38] sm:$0xf]
  %v634 = vld [vmem:[%s618 + $0x3c] sm:$0xf]
  %v635 = vrot.slane %v296, 3
  %v653 = vunpack.c.l.b16 %v619
  %v654 = vunpack.c.l.b16 %v620
  %v655 = vunpack.c.l.b16 %v621
  %v656 = vunpack.c.l.b16 %v622
  %v657 = vunpack.c.l.b16 %v623
  %v658 = vunpack.c.l.b16 %v624
  %v659 = vunpack.c.l.b16 %v625
  %v660 = vunpack.c.l.b16 %v626
  %v661 = vunpack.c.l.b16 %v627
  %v662 = vunpack.c.l.b16 %v628
  %v663 = vunpack.c.l.b16 %v629
  %v664 = vunpack.c.l.b16 %v630
  %v665 = vunpack.c.l.b16 %v631
  %v666 = vunpack.c.l.b16 %v632
  %v667 = vunpack.c.l.b16 %v633
  %v668 = vunpack.c.l.b16 %v634
  %v669 = vpack.c.b16 %v654, %v653
  %v670 = vpack.c.b16 %v656, %v655
  %v671 = vpack.c.b16 %v658, %v657
  %v672 = vpack.c.b16 %v660, %v659
  %v673 = vpack.c.b16 %v662, %v661
  %v674 = vpack.c.b16 %v664, %v663
  %v675 = vpack.c.b16 %v666, %v665
  %v676 = vpack.c.b16 %v668, %v667
  %685 = vmatprep.subr.bf16.mxu0 0
  %686 = vmatpush1.bf16.msra.mxu0 %v669
  %687 = vmatprep.subr.bf16.mxu0 0
  %688 = vmatpush1.bf16.msra.mxu0 %v670
  %689 = vmatprep.subr.bf16.mxu0 0
  %690 = vmatpush1.bf16.msra.mxu0 %v671
  %691 = vmatprep.subr.bf16.mxu0 0
  %692 = vmatpush1.bf16.msra.mxu0 %v672
  %693 = vmatprep.subr.bf16.mxu0 0
  %694 = vmatpush1.bf16.msra.mxu0 %v673
  %695 = vmatprep.subr.bf16.mxu0 0
  %696 = vmatpush1.bf16.msra.mxu0 %v674
  %697 = vmatprep.subr.bf16.mxu0 0
  %698 = vmatpush1.bf16.msra.mxu0 %v675
  %699 = vmatprep.subr.bf16.mxu0 0
  %700 = vmatpush1.bf16.msra.mxu0 %v676
  %701 = vmatprep.subr.bf16.mxu0 0
  %702 = vmatpush1.bf16.msra.mxu0 0
  %703 = vmatprep.subr.bf16.mxu0 0
  %704 = vmatpush1.bf16.msra.mxu0 0
  %705 = vmatprep.subr.bf16.mxu0 0
  %706 = vmatpush1.bf16.msra.mxu0 0
  %707 = vmatprep.subr.bf16.mxu0 0
  %708 = vmatpush1.bf16.msra.mxu0 0
  %709 = vmatprep.subr.bf16.mxu0 0
  %710 = vmatpush1.bf16.msra.mxu0 0
  %711 = vmatprep.subr.bf16.mxu0 0
  %712 = vmatpush1.bf16.msra.mxu0 0
  %713 = vmatprep.subr.bf16.mxu0 0
  %714 = vmatpush1.bf16.msra.mxu0 0
  %715 = vmatprep.subr.bf16.mxu0 0
  %716 = vmatpush1.bf16.msra.mxu0 0
  %717 = vmatprep.mubr.bf16.mxu0 0
  %718 = vmatmul.mubr.bf16.gmra.mrb[0].mxu0 %v635
  %v719 = vpop.f32.mrb[0].mxu0
  %v720 = vadd.f32 0.0, %v719
  %v721 = vpop.f32.mrb[0].mxu0
  %v722 = vpop.f32.mrb[0].mxu0
  %v723 = vpop.f32.mrb[0].mxu0
  %724 = vdwg.mxu0
  %v725 = vadd.f32 %v617, %v720
  %s726 = scalar_lea.vmem %s4, 256
  %v727 = vld [vmem:[%s726] sm:$0xf]
  %v728 = vld [vmem:[%s726 + $0x4] sm:$0xf]
  %v729 = vld [vmem:[%s726 + $0x8] sm:$0xf]
  %v730 = vld [vmem:[%s726 + $0xc] sm:$0xf]
  %v731 = vld [vmem:[%s726 + $0x10] sm:$0xf]
  %v732 = vld [vmem:[%s726 + $0x14] sm:$0xf]
  %v733 = vld [vmem:[%s726 + $0x18] sm:$0xf]
  %v734 = vld [vmem:[%s726 + $0x1c] sm:$0xf]
  %v735 = vld [vmem:[%s726 + $0x20] sm:$0xf]
  %v736 = vld [vmem:[%s726 + $0x24] sm:$0xf]
  %v737 = vld [vmem:[%s726 + $0x28] sm:$0xf]
  %v738 = vld [vmem:[%s726 + $0x2c] sm:$0xf]
  %v739 = vld [vmem:[%s726 + $0x30] sm:$0xf]
  %v740 = vld [vmem:[%s726 + $0x34] sm:$0xf]
  %v741 = vld [vmem:[%s726 + $0x38] sm:$0xf]
  %v742 = vld [vmem:[%s726 + $0x3c] sm:$0xf]
  %v743 = vrot.slane %v296, 4
  %v761 = vunpack.c.l.b16 %v727
  %v762 = vunpack.c.l.b16 %v728
  %v763 = vunpack.c.l.b16 %v729
  %v764 = vunpack.c.l.b16 %v730
  %v765 = vunpack.c.l.b16 %v731
  %v766 = vunpack.c.l.b16 %v732
  %v767 = vunpack.c.l.b16 %v733
  %v768 = vunpack.c.l.b16 %v734
  %v769 = vunpack.c.l.b16 %v735
  %v770 = vunpack.c.l.b16 %v736
  %v771 = vunpack.c.l.b16 %v737
  %v772 = vunpack.c.l.b16 %v738
  %v773 = vunpack.c.l.b16 %v739
  %v774 = vunpack.c.l.b16 %v740
  %v775 = vunpack.c.l.b16 %v741
  %v776 = vunpack.c.l.b16 %v742
  %v777 = vpack.c.b16 %v762, %v761
  %v778 = vpack.c.b16 %v764, %v763
  %v779 = vpack.c.b16 %v766, %v765
  %v780 = vpack.c.b16 %v768, %v767
  %v781 = vpack.c.b16 %v770, %v769
  %v782 = vpack.c.b16 %v772, %v771
  %v783 = vpack.c.b16 %v774, %v773
  %v784 = vpack.c.b16 %v776, %v775
  %793 = vmatprep.subr.bf16.mxu0 0
  %794 = vmatpush1.bf16.msra.mxu0 %v777
  %795 = vmatprep.subr.bf16.mxu0 0
  %796 = vmatpush1.bf16.msra.mxu0 %v778
  %797 = vmatprep.subr.bf16.mxu0 0
  %798 = vmatpush1.bf16.msra.mxu0 %v779
  %799 = vmatprep.subr.bf16.mxu0 0
  %800 = vmatpush1.bf16.msra.mxu0 %v780
  %801 = vmatprep.subr.bf16.mxu0 0
  %802 = vmatpush1.bf16.msra.mxu0 %v781
  %803 = vmatprep.subr.bf16.mxu0 0
  %804 = vmatpush1.bf16.msra.mxu0 %v782
  %805 = vmatprep.subr.bf16.mxu0 0
  %806 = vmatpush1.bf16.msra.mxu0 %v783
  %807 = vmatprep.subr.bf16.mxu0 0
  %808 = vmatpush1.bf16.msra.mxu0 %v784
  %809 = vmatprep.subr.bf16.mxu0 0
  %810 = vmatpush1.bf16.msra.mxu0 0
  %811 = vmatprep.subr.bf16.mxu0 0
  %812 = vmatpush1.bf16.msra.mxu0 0
  %813 = vmatprep.subr.bf16.mxu0 0
  %814 = vmatpush1.bf16.msra.mxu0 0
  %815 = vmatprep.subr.bf16.mxu0 0
  %816 = vmatpush1.bf16.msra.mxu0 0
  %817 = vmatprep.subr.bf16.mxu0 0
  %818 = vmatpush1.bf16.msra.mxu0 0
  %819 = vmatprep.subr.bf16.mxu0 0
  %820 = vmatpush1.bf16.msra.mxu0 0
  %821 = vmatprep.subr.bf16.mxu0 0
  %822 = vmatpush1.bf16.msra.mxu0 0
  %823 = vmatprep.subr.bf16.mxu0 0
  %824 = vmatpush1.bf16.msra.mxu0 0
  %825 = vmatprep.mubr.bf16.mxu0 0
  %826 = vmatmul.mubr.bf16.gmra.mrb[0].mxu0 %v743
  %v827 = vpop.f32.mrb[0].mxu0
  %v828 = vadd.f32 0.0, %v827
  %v829 = vpop.f32.mrb[0].mxu0
  %v830 = vpop.f32.mrb[0].mxu0
  %v831 = vpop.f32.mrb[0].mxu0
  %832 = vdwg.mxu0
  %v833 = vadd.f32 %v725, %v828
  %s834 = scalar_lea.vmem %s4, 320
  %v835 = vld [vmem:[%s834] sm:$0xf]
  %v836 = vld [vmem:[%s834 + $0x4] sm:$0xf]
  %v837 = vld [vmem:[%s834 + $0x8] sm:$0xf]
  %v838 = vld [vmem:[%s834 + $0xc] sm:$0xf]
  %v839 = vld [vmem:[%s834 + $0x10] sm:$0xf]
  %v840 = vld [vmem:[%s834 + $0x14] sm:$0xf]
  %v841 = vld [vmem:[%s834 + $0x18] sm:$0xf]
  %v842 = vld [vmem:[%s834 + $0x1c] sm:$0xf]
  %v843 = vld [vmem:[%s834 + $0x20] sm:$0xf]
  %v844 = vld [vmem:[%s834 + $0x24] sm:$0xf]
  %v845 = vld [vmem:[%s834 + $0x28] sm:$0xf]
  %v846 = vld [vmem:[%s834 + $0x2c] sm:$0xf]
  %v847 = vld [vmem:[%s834 + $0x30] sm:$0xf]
  %v848 = vld [vmem:[%s834 + $0x34] sm:$0xf]
  %v849 = vld [vmem:[%s834 + $0x38] sm:$0xf]
  %v850 = vld [vmem:[%s834 + $0x3c] sm:$0xf]
  %v851 = vrot.slane %v296, 5
  %v869 = vunpack.c.l.b16 %v835
  %v870 = vunpack.c.l.b16 %v836
  %v871 = vunpack.c.l.b16 %v837
  %v872 = vunpack.c.l.b16 %v838
  %v873 = vunpack.c.l.b16 %v839
  %v874 = vunpack.c.l.b16 %v840
  %v875 = vunpack.c.l.b16 %v841
  %v876 = vunpack.c.l.b16 %v842
  %v877 = vunpack.c.l.b16 %v843
  %v878 = vunpack.c.l.b16 %v844
  %v879 = vunpack.c.l.b16 %v845
  %v880 = vunpack.c.l.b16 %v846
  %v881 = vunpack.c.l.b16 %v847
  %v882 = vunpack.c.l.b16 %v848
  %v883 = vunpack.c.l.b16 %v849
  %v884 = vunpack.c.l.b16 %v850
  %v885 = vpack.c.b16 %v870, %v869
  %v886 = vpack.c.b16 %v872, %v871
  %v887 = vpack.c.b16 %v874, %v873
  %v888 = vpack.c.b16 %v876, %v875
  %v889 = vpack.c.b16 %v878, %v877
  %v890 = vpack.c.b16 %v880, %v879
  %v891 = vpack.c.b16 %v882, %v881
  %v892 = vpack.c.b16 %v884, %v883
  %901 = vmatprep.subr.bf16.mxu0 0
  %902 = vmatpush1.bf16.msra.mxu0 %v885
  %903 = vmatprep.subr.bf16.mxu0 0
  %904 = vmatpush1.bf16.msra.mxu0 %v886
  %905 = vmatprep.subr.bf16.mxu0 0
  %906 = vmatpush1.bf16.msra.mxu0 %v887
  %907 = vmatprep.subr.bf16.mxu0 0
  %908 = vmatpush1.bf16.msra.mxu0 %v888
  %909 = vmatprep.subr.bf16.mxu0 0
  %910 = vmatpush1.bf16.msra.mxu0 %v889
  %911 = vmatprep.subr.bf16.mxu0 0
  %912 = vmatpush1.bf16.msra.mxu0 %v890
  %913 = vmatprep.subr.bf16.mxu0 0
  %914 = vmatpush1.bf16.msra.mxu0 %v891
  %915 = vmatprep.subr.bf16.mxu0 0
  %916 = vmatpush1.bf16.msra.mxu0 %v892
  %917 = vmatprep.subr.bf16.mxu0 0
  %918 = vmatpush1.bf16.msra.mxu0 0
  %919 = vmatprep.subr.bf16.mxu0 0
  %920 = vmatpush1.bf16.msra.mxu0 0
  %921 = vmatprep.subr.bf16.mxu0 0
  %922 = vmatpush1.bf16.msra.mxu0 0
  %923 = vmatprep.subr.bf16.mxu0 0
  %924 = vmatpush1.bf16.msra.mxu0 0
  %925 = vmatprep.subr.bf16.mxu0 0
  %926 = vmatpush1.bf16.msra.mxu0 0
  %927 = vmatprep.subr.bf16.mxu0 0
  %928 = vmatpush1.bf16.msra.mxu0 0
  %929 = vmatprep.subr.bf16.mxu0 0
  %930 = vmatpush1.bf16.msra.mxu0 0
  %931 = vmatprep.subr.bf16.mxu0 0
  %932 = vmatpush1.bf16.msra.mxu0 0
  %933 = vmatprep.mubr.bf16.mxu0 0
  %934 = vmatmul.mubr.bf16.gmra.mrb[0].mxu0 %v851
  %v935 = vpop.f32.mrb[0].mxu0
  %v936 = vadd.f32 0.0, %v935
  %v937 = vpop.f32.mrb[0].mxu0
  %v938 = vpop.f32.mrb[0].mxu0
  %v939 = vpop.f32.mrb[0].mxu0
  %940 = vdwg.mxu0
  %v941 = vadd.f32 %v833, %v936
  %s942 = scalar_lea.vmem %s4, 384
  %v943 = vld [vmem:[%s942] sm:$0xf]
  %v944 = vld [vmem:[%s942 + $0x4] sm:$0xf]
  %v945 = vld [vmem:[%s942 + $0x8] sm:$0xf]
  %v946 = vld [vmem:[%s942 + $0xc] sm:$0xf]
  %v947 = vld [vmem:[%s942 + $0x10] sm:$0xf]
  %v948 = vld [vmem:[%s942 + $0x14] sm:$0xf]
  %v949 = vld [vmem:[%s942 + $0x18] sm:$0xf]
  %v950 = vld [vmem:[%s942 + $0x1c] sm:$0xf]
  %v951 = vld [vmem:[%s942 + $0x20] sm:$0xf]
  %v952 = vld [vmem:[%s942 + $0x24] sm:$0xf]
  %v953 = vld [vmem:[%s942 + $0x28] sm:$0xf]
  %v954 = vld [vmem:[%s942 + $0x2c] sm:$0xf]
  %v955 = vld [vmem:[%s942 + $0x30] sm:$0xf]
  %v956 = vld [vmem:[%s942 + $0x34] sm:$0xf]
  %v957 = vld [vmem:[%s942 + $0x38] sm:$0xf]
  %v958 = vld [vmem:[%s942 + $0x3c] sm:$0xf]
  %v959 = vrot.slane %v296, 6
  %v977 = vunpack.c.l.b16 %v943
  %v978 = vunpack.c.l.b16 %v944
  %v979 = vunpack.c.l.b16 %v945
  %v980 = vunpack.c.l.b16 %v946
  %v981 = vunpack.c.l.b16 %v947
  %v982 = vunpack.c.l.b16 %v948
  %v983 = vunpack.c.l.b16 %v949
  %v984 = vunpack.c.l.b16 %v950
  %v985 = vunpack.c.l.b16 %v951
  %v986 = vunpack.c.l.b16 %v952
  %v987 = vunpack.c.l.b16 %v953
  %v988 = vunpack.c.l.b16 %v954
  %v989 = vunpack.c.l.b16 %v955
  %v990 = vunpack.c.l.b16 %v956
  %v991 = vunpack.c.l.b16 %v957
  %v992 = vunpack.c.l.b16 %v958
  %v993 = vpack.c.b16 %v978, %v977
  %v994 = vpack.c.b16 %v980, %v979
  %v995 = vpack.c.b16 %v982, %v981
  %v996 = vpack.c.b16 %v984, %v983
  %v997 = vpack.c.b16 %v986, %v985
  %v998 = vpack.c.b16 %v988, %v987
  %v999 = vpack.c.b16 %v990, %v989
  %v1000 = vpack.c.b16 %v992, %v991
  %1009 = vmatprep.subr.bf16.mxu0 0
  %1010 = vmatpush1.bf16.msra.mxu0 %v993
  %1011 = vmatprep.subr.bf16.mxu0 0
  %1012 = vmatpush1.bf16.msra.mxu0 %v994
  %1013 = vmatprep.subr.bf16.mxu0 0
  %1014 = vmatpush1.bf16.msra.mxu0 %v995
  %1015 = vmatprep.subr.bf16.mxu0 0
  %1016 = vmatpush1.bf16.msra.mxu0 %v996
  %1017 = vmatprep.subr.bf16.mxu0 0
  %1018 = vmatpush1.bf16.msra.mxu0 %v997
  %1019 = vmatprep.subr.bf16.mxu0 0
  %1020 = vmatpush1.bf16.msra.mxu0 %v998
  %1021 = vmatprep.subr.bf16.mxu0 0
  %1022 = vmatpush1.bf16.msra.mxu0 %v999
  %1023 = vmatprep.subr.bf16.mxu0 0
  %1024 = vmatpush1.bf16.msra.mxu0 %v1000
  %1025 = vmatprep.subr.bf16.mxu0 0
  %1026 = vmatpush1.bf16.msra.mxu0 0
  %1027 = vmatprep.subr.bf16.mxu0 0
  %1028 = vmatpush1.bf16.msra.mxu0 0
  %1029 = vmatprep.subr.bf16.mxu0 0
  %1030 = vmatpush1.bf16.msra.mxu0 0
  %1031 = vmatprep.subr.bf16.mxu0 0
  %1032 = vmatpush1.bf16.msra.mxu0 0
  %1033 = vmatprep.subr.bf16.mxu0 0
  %1034 = vmatpush1.bf16.msra.mxu0 0
  %1035 = vmatprep.subr.bf16.mxu0 0
  %1036 = vmatpush1.bf16.msra.mxu0 0
  %1037 = vmatprep.subr.bf16.mxu0 0
  %1038 = vmatpush1.bf16.msra.mxu0 0
  %1039 = vmatprep.subr.bf16.mxu0 0
  %1040 = vmatpush1.bf16.msra.mxu0 0
  %1041 = vmatprep.mubr.bf16.mxu0 0
  %1042 = vmatmul.mubr.bf16.gmra.mrb[0].mxu0 %v959
  %v1043 = vpop.f32.mrb[0].mxu0
  %v1044 = vadd.f32 0.0, %v1043
  %v1045 = vpop.f32.mrb[0].mxu0
  %v1046 = vpop.f32.mrb[0].mxu0
  %v1047 = vpop.f32.mrb[0].mxu0
  %1048 = vdwg.mxu0
  %v1049 = vadd.f32 %v941, %v1044
  %s1050 = scalar_lea.vmem %s4, 448
  %v1051 = vld [vmem:[%s1050] sm:$0xf]
  %v1052 = vld [vmem:[%s1050 + $0x4] sm:$0xf]
  %v1053 = vld [vmem:[%s1050 + $0x8] sm:$0xf]
  %v1054 = vld [vmem:[%s1050 + $0xc] sm:$0xf]
  %v1055 = vld [vmem:[%s1050 + $0x10] sm:$0xf]
  %v1056 = vld [vmem:[%s1050 + $0x14] sm:$0xf]
  %v1057 = vld [vmem:[%s1050 + $0x18] sm:$0xf]
  %v1058 = vld [vmem:[%s1050 + $0x1c] sm:$0xf]
  %v1059 = vld [vmem:[%s1050 + $0x20] sm:$0xf]
  %v1060 = vld [vmem:[%s1050 + $0x24] sm:$0xf]
  %v1061 = vld [vmem:[%s1050 + $0x28] sm:$0xf]
  %v1062 = vld [vmem:[%s1050 + $0x2c] sm:$0xf]
  %v1063 = vld [vmem:[%s1050 + $0x30] sm:$0xf]
  %v1064 = vld [vmem:[%s1050 + $0x34] sm:$0xf]
  %v1065 = vld [vmem:[%s1050 + $0x38] sm:$0xf]
  %v1066 = vld [vmem:[%s1050 + $0x3c] sm:$0xf]
  %v1067 = vrot.slane %v296, 7
  %v1085 = vunpack.c.l.b16 %v1051
  %v1086 = vunpack.c.l.b16 %v1052
  %v1087 = vunpack.c.l.b16 %v1053
  %v1088 = vunpack.c.l.b16 %v1054
  %v1089 = vunpack.c.l.b16 %v1055
  %v1090 = vunpack.c.l.b16 %v1056
  %v1091 = vunpack.c.l.b16 %v1057
  %v1092 = vunpack.c.l.b16 %v1058
  %v1093 = vunpack.c.l.b16 %v1059
  %v1094 = vunpack.c.l.b16 %v1060
  %v1095 = vunpack.c.l.b16 %v1061
  %v1096 = vunpack.c.l.b16 %v1062
  %v1097 = vunpack.c.l.b16 %v1063
  %v1098 = vunpack.c.l.b16 %v1064
  %v1099 = vunpack.c.l.b16 %v1065
  %v1100 = vunpack.c.l.b16 %v1066
  %v1101 = vpack.c.b16 %v1086, %v1085
  %v1102 = vpack.c.b16 %v1088, %v1087
  %v1103 = vpack.c.b16 %v1090, %v1089
  %v1104 = vpack.c.b16 %v1092, %v1091
  %v1105 = vpack.c.b16 %v1094, %v1093
  %v1106 = vpack.c.b16 %v1096, %v1095
  %v1107 = vpack.c.b16 %v1098, %v1097
  %v1108 = vpack.c.b16 %v1100, %v1099
  %1117 = vmatprep.subr.bf16.mxu0 0
  %1118 = vmatpush1.bf16.msra.mxu0 %v1101
  %1119 = vmatprep.subr.bf16.mxu0 0
  %1120 = vmatpush1.bf16.msra.mxu0 %v1102
  %1121 = vmatprep.subr.bf16.mxu0 0
  %1122 = vmatpush1.bf16.msra.mxu0 %v1103
  %1123 = vmatprep.subr.bf16.mxu0 0
  %1124 = vmatpush1.bf16.msra.mxu0 %v1104
  %1125 = vmatprep.subr.bf16.mxu0 0
  %1126 = vmatpush1.bf16.msra.mxu0 %v1105
  %1127 = vmatprep.subr.bf16.mxu0 0
  %1128 = vmatpush1.bf16.msra.mxu0 %v1106
  %1129 = vmatprep.subr.bf16.mxu0 0
  %1130 = vmatpush1.bf16.msra.mxu0 %v1107
  %1131 = vmatprep.subr.bf16.mxu0 0
  %1132 = vmatpush1.bf16.msra.mxu0 %v1108
  %1133 = vmatprep.subr.bf16.mxu0 0
  %1134 = vmatpush1.bf16.msra.mxu0 0
  %1135 = vmatprep.subr.bf16.mxu0 0
  %1136 = vmatpush1.bf16.msra.mxu0 0
  %1137 = vmatprep.subr.bf16.mxu0 0
  %1138 = vmatpush1.bf16.msra.mxu0 0
  %1139 = vmatprep.subr.bf16.mxu0 0
  %1140 = vmatpush1.bf16.msra.mxu0 0
  %1141 = vmatprep.subr.bf16.mxu0 0
  %1142 = vmatpush1.bf16.msra.mxu0 0
  %1143 = vmatprep.subr.bf16.mxu0 0
  %1144 = vmatpush1.bf16.msra.mxu0 0
  %1145 = vmatprep.subr.bf16.mxu0 0
  %1146 = vmatpush1.bf16.msra.mxu0 0
  %1147 = vmatprep.subr.bf16.mxu0 0
  %1148 = vmatpush1.bf16.msra.mxu0 0
  %1149 = vmatprep.mubr.bf16.mxu0 0
  %1150 = vmatmul.mubr.bf16.gmra.mrb[0].mxu0 %v1067
  %v1151 = vpop.f32.mrb[0].mxu0
  %v1152 = vadd.f32 0.0, %v1151
  %v1153 = vpop.f32.mrb[0].mxu0
  %v1154 = vpop.f32.mrb[0].mxu0
  %v1155 = vpop.f32.mrb[0].mxu0
  %1156 = vdwg.mxu0
  %v1157 = vadd.f32 %v1049, %v1152
  %s1158 = scalar_lea.vmem %s4, 512
  %v1159 = vld [vmem:[%s1158] sm:$0xf]
  %v1160 = vld [vmem:[%s1158 + $0x4] sm:$0xf]
  %v1161 = vld [vmem:[%s1158 + $0x8] sm:$0xf]
  %v1162 = vld [vmem:[%s1158 + $0xc] sm:$0xf]
  %v1163 = vld [vmem:[%s1158 + $0x10] sm:$0xf]
  %v1164 = vld [vmem:[%s1158 + $0x14] sm:$0xf]
  %v1165 = vld [vmem:[%s1158 + $0x18] sm:$0xf]
  %v1166 = vld [vmem:[%s1158 + $0x1c] sm:$0xf]
  %v1167 = vld [vmem:[%s1158 + $0x20] sm:$0xf]
  %v1168 = vld [vmem:[%s1158 + $0x24] sm:$0xf]
  %v1169 = vld [vmem:[%s1158 + $0x28] sm:$0xf]
  %v1170 = vld [vmem:[%s1158 + $0x2c] sm:$0xf]
  %v1171 = vld [vmem:[%s1158 + $0x30] sm:$0xf]
  %v1172 = vld [vmem:[%s1158 + $0x34] sm:$0xf]
  %v1173 = vld [vmem:[%s1158 + $0x38] sm:$0xf]
  %v1174 = vld [vmem:[%s1158 + $0x3c] sm:$0xf]
  %v1191 = vunpack.c.l.b16 %v1159
  %v1192 = vunpack.c.l.b16 %v1160
  %v1193 = vunpack.c.l.b16 %v1161
  %v1194 = vunpack.c.l.b16 %v1162
  %v1195 = vunpack.c.l.b16 %v1163
  %v1196 = vunpack.c.l.b16 %v1164
  %v1197 = vunpack.c.l.b16 %v1165
  %v1198 = vunpack.c.l.b16 %v1166
  %v1199 = vunpack.c.l.b16 %v1167
  %v1200 = vunpack.c.l.b16 %v1168
  %v1201 = vunpack.c.l.b16 %v1169
  %v1202 = vunpack.c.l.b16 %v1170
  %v1203 = vunpack.c.l.b16 %v1171
  %v1204 = vunpack.c.l.b16 %v1172
  %v1205 = vunpack.c.l.b16 %v1173
  %v1206 = vunpack.c.l.b16 %v1174
  %v1207 = vpack.c.b16 %v1192, %v1191
  %v1208 = vpack.c.b16 %v1194, %v1193
  %v1209 = vpack.c.b16 %v1196, %v1195
  %v1210 = vpack.c.b16 %v1198, %v1197
  %v1211 = vpack.c.b16 %v1200, %v1199
  %v1212 = vpack.c.b16 %v1202, %v1201
  %v1213 = vpack.c.b16 %v1204, %v1203
  %v1214 = vpack.c.b16 %v1206, %v1205
  %1223 = vmatprep.subr.bf16.mxu0 0
  %1224 = vmatpush1.bf16.msra.mxu0 %v1207
  %1225 = vmatprep.subr.bf16.mxu0 0
  %1226 = vmatpush1.bf16.msra.mxu0 %v1208
  %1227 = vmatprep.subr.bf16.mxu0 0
  %1228 = vmatpush1.bf16.msra.mxu0 %v1209
  %1229 = vmatprep.subr.bf16.mxu0 0
  %1230 = vmatpush1.bf16.msra.mxu0 %v1210
  %1231 = vmatprep.subr.bf16.mxu0 0
  %1232 = vmatpush1.bf16.msra.mxu0 %v1211
  %1233 = vmatprep.subr.bf16.mxu0 0
  %1234 = vmatpush1.bf16.msra.mxu0 %v1212
  %1235 = vmatprep.subr.bf16.mxu0 0
  %1236 = vmatpush1.bf16.msra.mxu0 %v1213
  %1237 = vmatprep.subr.bf16.mxu0 0
  %1238 = vmatpush1.bf16.msra.mxu0 %v1214
  %1239 = vmatprep.subr.bf16.mxu0 0
  %1240 = vmatpush1.bf16.msra.mxu0 0
  %1241 = vmatprep.subr.bf16.mxu0 0
  %1242 = vmatpush1.bf16.msra.mxu0 0
  %1243 = vmatprep.subr.bf16.mxu0 0
  %1244 = vmatpush1.bf16.msra.mxu0 0
  %1245 = vmatprep.subr.bf16.mxu0 0
  %1246 = vmatpush1.bf16.msra.mxu0 0
  %1247 = vmatprep.subr.bf16.mxu0 0
  %1248 = vmatpush1.bf16.msra.mxu0 0
  %1249 = vmatprep.subr.bf16.mxu0 0
  %1250 = vmatpush1.bf16.msra.mxu0 0
  %1251 = vmatprep.subr.bf16.mxu0 0
  %1252 = vmatpush1.bf16.msra.mxu0 0
  %1253 = vmatprep.subr.bf16.mxu0 0
  %1254 = vmatpush1.bf16.msra.mxu0 0
  %1255 = vmatprep.mubr.bf16.mxu0 0
  %1256 = vmatmul.mubr.bf16.gmra.mrb[0].mxu0 %v297
  %v1257 = vpop.f32.mrb[0].mxu0
  %v1258 = vadd.f32 0.0, %v1257
  %v1259 = vpop.f32.mrb[0].mxu0
  %v1260 = vpop.f32.mrb[0].mxu0
  %v1261 = vpop.f32.mrb[0].mxu0
  %1262 = vdwg.mxu0
  %v1263 = vadd.f32 %v1157, %v1258
  %s1264 = scalar_lea.vmem %s4, 576
  %v1265 = vld [vmem:[%s1264] sm:$0xf]
  %v1266 = vld [vmem:[%s1264 + $0x4] sm:$0xf]
  %v1267 = vld [vmem:[%s1264 + $0x8] sm:$0xf]
  %v1268 = vld [vmem:[%s1264 + $0xc] sm:$0xf]
  %v1269 = vld [vmem:[%s1264 + $0x10] sm:$0xf]
  %v1270 = vld [vmem:[%s1264 + $0x14] sm:$0xf]
  %v1271 = vld [vmem:[%s1264 + $0x18] sm:$0xf]
  %v1272 = vld [vmem:[%s1264 + $0x1c] sm:$0xf]
  %v1273 = vld [vmem:[%s1264 + $0x20] sm:$0xf]
  %v1274 = vld [vmem:[%s1264 + $0x24] sm:$0xf]
  %v1275 = vld [vmem:[%s1264 + $0x28] sm:$0xf]
  %v1276 = vld [vmem:[%s1264 + $0x2c] sm:$0xf]
  %v1277 = vld [vmem:[%s1264 + $0x30] sm:$0xf]
  %v1278 = vld [vmem:[%s1264 + $0x34] sm:$0xf]
  %v1279 = vld [vmem:[%s1264 + $0x38] sm:$0xf]
  %v1280 = vld [vmem:[%s1264 + $0x3c] sm:$0xf]
  %v1282 = vrot.slane %v297, 1
  %v1300 = vunpack.c.l.b16 %v1265
  %v1301 = vunpack.c.l.b16 %v1266
  %v1302 = vunpack.c.l.b16 %v1267
  %v1303 = vunpack.c.l.b16 %v1268
  %v1304 = vunpack.c.l.b16 %v1269
  %v1305 = vunpack.c.l.b16 %v1270
  %v1306 = vunpack.c.l.b16 %v1271
  %v1307 = vunpack.c.l.b16 %v1272
  %v1308 = vunpack.c.l.b16 %v1273
  %v1309 = vunpack.c.l.b16 %v1274
  %v1310 = vunpack.c.l.b16 %v1275
  %v1311 = vunpack.c.l.b16 %v1276
  %v1312 = vunpack.c.l.b16 %v1277
  %v1313 = vunpack.c.l.b16 %v1278
  %v1314 = vunpack.c.l.b16 %v1279
  %v1315 = vunpack.c.l.b16 %v1280
  %v1316 = vpack.c.b16 %v1301, %v1300
  %v1317 = vpack.c.b16 %v1303, %v1302
  %v1318 = vpack.c.b16 %v1305, %v1304
  %v1319 = vpack.c.b16 %v1307, %v1306
  %v1320 = vpack.c.b16 %v1309, %v1308
  %v1321 = vpack.c.b16 %v1311, %v1310
  %v1322 = vpack.c.b16 %v1313, %v1312
  %v1323 = vpack.c.b16 %v1315, %v1314
  %1332 = vmatprep.subr.bf16.mxu0 0
  %1333 = vmatpush1.bf16.msra.mxu0 %v1316
  %1334 = vmatprep.subr.bf16.mxu0 0
  %1335 = vmatpush1.bf16.msra.mxu0 %v1317
  %1336 = vmatprep.subr.bf16.mxu0 0
  %1337 = vmatpush1.bf16.msra.mxu0 %v1318
  %1338 = vmatprep.subr.bf16.mxu0 0
  %1339 = vmatpush1.bf16.msra.mxu0 %v1319
  %1340 = vmatprep.subr.bf16.mxu0 0
  %1341 = vmatpush1.bf16.msra.mxu0 %v1320
  %1342 = vmatprep.subr.bf16.mxu0 0
  %1343 = vmatpush1.bf16.msra.mxu0 %v1321
  %1344 = vmatprep.subr.bf16.mxu0 0
  %1345 = vmatpush1.bf16.msra.mxu0 %v1322
  %1346 = vmatprep.subr.bf16.mxu0 0
  %1347 = vmatpush1.bf16.msra.mxu0 %v1323
  %1348 = vmatprep.subr.bf16.mxu0 0
  %1349 = vmatpush1.bf16.msra.mxu0 0
  %1350 = vmatprep.subr.bf16.mxu0 0
  %1351 = vmatpush1.bf16.msra.mxu0 0
  %1352 = vmatprep.subr.bf16.mxu0 0
  %1353 = vmatpush1.bf16.msra.mxu0 0
  %1354 = vmatprep.subr.bf16.mxu0 0
  %1355 = vmatpush1.bf16.msra.mxu0 0
  %1356 = vmatprep.subr.bf16.mxu0 0
  %1357 = vmatpush1.bf16.msra.mxu0 0
  %1358 = vmatprep.subr.bf16.mxu0 0
  %1359 = vmatpush1.bf16.msra.mxu0 0
  %1360 = vmatprep.subr.bf16.mxu0 0
  %1361 = vmatpush1.bf16.msra.mxu0 0
  %1362 = vmatprep.subr.bf16.mxu0 0
  %1363 = vmatpush1.bf16.msra.mxu0 0
  %1364 = vmatprep.mubr.bf16.mxu0 0
  %1365 = vmatmul.mubr.bf16.gmra.mrb[0].mxu0 %v1282
  %v1366 = vpop.f32.mrb[0].mxu0
  %v1367 = vadd.f32 0.0, %v1366
  %v1368 = vpop.f32.mrb[0].mxu0
  %v1369 = vpop.f32.mrb[0].mxu0
  %v1370 = vpop.f32.mrb[0].mxu0
  %1371 = vdwg.mxu0
  %v1372 = vadd.f32 %v1263, %v1367
  %s1373 = scalar_lea.vmem %s4, 640
  %v1374 = vld [vmem:[%s1373] sm:$0xf]
  %v1375 = vld [vmem:[%s1373 + $0x4] sm:$0xf]
  %v1376 = vld [vmem:[%s1373 + $0x8] sm:$0xf]
  %v1377 = vld [vmem:[%s1373 + $0xc] sm:$0xf]
  %v1378 = vld [vmem:[%s1373 + $0x10] sm:$0xf]
  %v1379 = vld [vmem:[%s1373 + $0x14] sm:$0xf]
  %v1380 = vld [vmem:[%s1373 + $0x18] sm:$0xf]
  %v1381 = vld [vmem:[%s1373 + $0x1c] sm:$0xf]
  %v1382 = vld [vmem:[%s1373 + $0x20] sm:$0xf]
  %v1383 = vld [vmem:[%s1373 + $0x24] sm:$0xf]
  %v1384 = vld [vmem:[%s1373 + $0x28] sm:$0xf]
  %v1385 = vld [vmem:[%s1373 + $0x2c] sm:$0xf]
  %v1386 = vld [vmem:[%s1373 + $0x30] sm:$0xf]
  %v1387 = vld [vmem:[%s1373 + $0x34] sm:$0xf]
  %v1388 = vld [vmem:[%s1373 + $0x38] sm:$0xf]
  %v1389 = vld [vmem:[%s1373 + $0x3c] sm:$0xf]
  %v1390 = vrot.slane %v297, 2
  %v1408 = vunpack.c.l.b16 %v1374
  %v1409 = vunpack.c.l.b16 %v1375
  %v1410 = vunpack.c.l.b16 %v1376
  %v1411 = vunpack.c.l.b16 %v1377
  %v1412 = vunpack.c.l.b16 %v1378
  %v1413 = vunpack.c.l.b16 %v1379
  %v1414 = vunpack.c.l.b16 %v1380
  %v1415 = vunpack.c.l.b16 %v1381
  %v1416 = vunpack.c.l.b16 %v1382
  %v1417 = vunpack.c.l.b16 %v1383
  %v1418 = vunpack.c.l.b16 %v1384
  %v1419 = vunpack.c.l.b16 %v1385
  %v1420 = vunpack.c.l.b16 %v1386
  %v1421 = vunpack.c.l.b16 %v1387
  %v1422 = vunpack.c.l.b16 %v1388
  %v1423 = vunpack.c.l.b16 %v1389
  %v1424 = vpack.c.b16 %v1409, %v1408
  %v1425 = vpack.c.b16 %v1411, %v1410
  %v1426 = vpack.c.b16 %v1413, %v1412
  %v1427 = vpack.c.b16 %v1415, %v1414
  %v1428 = vpack.c.b16 %v1417, %v1416
  %v1429 = vpack.c.b16 %v1419, %v1418
  %v1430 = vpack.c.b16 %v1421, %v1420
  %v1431 = vpack.c.b16 %v1423, %v1422
  %1440 = vmatprep.subr.bf16.mxu0 0
  %1441 = vmatpush1.bf16.msra.mxu0 %v1424
  %1442 = vmatprep.subr.bf16.mxu0 0
  %1443 = vmatpush1.bf16.msra.mxu0 %v1425
  %1444 = vmatprep.subr.bf16.mxu0 0
  %1445 = vmatpush1.bf16.msra.mxu0 %v1426
  %1446 = vmatprep.subr.bf16.mxu0 0
  %1447 = vmatpush1.bf16.msra.mxu0 %v1427
  %1448 = vmatprep.subr.bf16.mxu0 0
  %1449 = vmatpush1.bf16.msra.mxu0 %v1428
  %1450 = vmatprep.subr.bf16.mxu0 0
  %1451 = vmatpush1.bf16.msra.mxu0 %v1429
  %1452 = vmatprep.subr.bf16.mxu0 0
  %1453 = vmatpush1.bf16.msra.mxu0 %v1430
  %1454 = vmatprep.subr.bf16.mxu0 0
  %1455 = vmatpush1.bf16.msra.mxu0 %v1431
  %1456 = vmatprep.subr.bf16.mxu0 0
  %1457 = vmatpush1.bf16.msra.mxu0 0
  %1458 = vmatprep.subr.bf16.mxu0 0
  %1459 = vmatpush1.bf16.msra.mxu0 0
  %1460 = vmatprep.subr.bf16.mxu0 0
  %1461 = vmatpush1.bf16.msra.mxu0 0
  %1462 = vmatprep.subr.bf16.mxu0 0
  %1463 = vmatpush1.bf16.msra.mxu0 0
  %1464 = vmatprep.subr.bf16.mxu0 0
  %1465 = vmatpush1.bf16.msra.mxu0 0
  %1466 = vmatprep.subr.bf16.mxu0 0
  %1467 = vmatpush1.bf16.msra.mxu0 0
  %1468 = vmatprep.subr.bf16.mxu0 0
  %1469 = vmatpush1.bf16.msra.mxu0 0
  %1470 = vmatprep.subr.bf16.mxu0 0
  %1471 = vmatpush1.bf16.msra.mxu0 0
  %1472 = vmatprep.mubr.bf16.mxu0 0
  %1473 = vmatmul.mubr.bf16.gmra.mrb[0].mxu0 %v1390
  %v1474 = vpop.f32.mrb[0].mxu0
  %v1475 = vadd.f32 0.0, %v1474
  %v1476 = vpop.f32.mrb[0].mxu0
  %v1477 = vpop.f32.mrb[0].mxu0
  %v1478 = vpop.f32.mrb[0].mxu0
  %1479 = vdwg.mxu0
  %v1480 = vadd.f32 %v1372, %v1475
  %s1481 = scalar_lea.vmem %s4, 704
  %v1482 = vld [vmem:[%s1481] sm:$0xf]
  %v1483 = vld [vmem:[%s1481 + $0x4] sm:$0xf]
  %v1484 = vld [vmem:[%s1481 + $0x8] sm:$0xf]
  %v1485 = vld [vmem:[%s1481 + $0xc] sm:$0xf]
  %v1486 = vld [vmem:[%s1481 + $0x10] sm:$0xf]
  %v1487 = vld [vmem:[%s1481 + $0x14] sm:$0xf]
  %v1488 = vld [vmem:[%s1481 + $0x18] sm:$0xf]
  %v1489 = vld [vmem:[%s1481 + $0x1c] sm:$0xf]
  %v1490 = vld [vmem:[%s1481 + $0x20] sm:$0xf]
  %v1491 = vld [vmem:[%s1481 + $0x24] sm:$0xf]
  %v1492 = vld [vmem:[%s1481 + $0x28] sm:$0xf]
  %v1493 = vld [vmem:[%s1481 + $0x2c] sm:$0xf]
  %v1494 = vld [vmem:[%s1481 + $0x30] sm:$0xf]
  %v1495 = vld [vmem:[%s1481 + $0x34] sm:$0xf]
  %v1496 = vld [vmem:[%s1481 + $0x38] sm:$0xf]
  %v1497 = vld [vmem:[%s1481 + $0x3c] sm:$0xf]
  %v1498 = vrot.slane %v297, 3
  %v1516 = vunpack.c.l.b16 %v1482
  %v1517 = vunpack.c.l.b16 %v1483
  %v1518 = vunpack.c.l.b16 %v1484
  %v1519 = vunpack.c.l.b16 %v1485
  %v1520 = vunpack.c.l.b16 %v1486
  %v1521 = vunpack.c.l.b16 %v1487
  %v1522 = vunpack.c.l.b16 %v1488
  %v1523 = vunpack.c.l.b16 %v1489
  %v1524 = vunpack.c.l.b16 %v1490
  %v1525 = vunpack.c.l.b16 %v1491
  %v1526 = vunpack.c.l.b16 %v1492
  %v1527 = vunpack.c.l.b16 %v1493
  %v1528 = vunpack.c.l.b16 %v1494
  %v1529 = vunpack.c.l.b16 %v1495
  %v1530 = vunpack.c.l.b16 %v1496
  %v1531 = vunpack.c.l.b16 %v1497
  %v1532 = vpack.c.b16 %v1517, %v1516
  %v1533 = vpack.c.b16 %v1519, %v1518
  %v1534 = vpack.c.b16 %v1521, %v1520
  %v1535 = vpack.c.b16 %v1523, %v1522
  %v1536 = vpack.c.b16 %v1525, %v1524
  %v1537 = vpack.c.b16 %v1527, %v1526
  %v1538 = vpack.c.b16 %v1529, %v1528
  %v1539 = vpack.c.b16 %v1531, %v1530
  %1548 = vmatprep.subr.bf16.mxu0 0
  %1549 = vmatpush1.bf16.msra.mxu0 %v1532
  %1550 = vmatprep.subr.bf16.mxu0 0
  %1551 = vmatpush1.bf16.msra.mxu0 %v1533
  %1552 = vmatprep.subr.bf16.mxu0 0
  %1553 = vmatpush1.bf16.msra.mxu0 %v1534
  %1554 = vmatprep.subr.bf16.mxu0 0
  %1555 = vmatpush1.bf16.msra.mxu0 %v1535
  %1556 = vmatprep.subr.bf16.mxu0 0
  %1557 = vmatpush1.bf16.msra.mxu0 %v1536
  %1558 = vmatprep.subr.bf16.mxu0 0
  %1559 = vmatpush1.bf16.msra.mxu0 %v1537
  %1560 = vmatprep.subr.bf16.mxu0 0
  %1561 = vmatpush1.bf16.msra.mxu0 %v1538
  %1562 = vmatprep.subr.bf16.mxu0 0
  %1563 = vmatpush1.bf16.msra.mxu0 %v1539
  %1564 = vmatprep.subr.bf16.mxu0 0
  %1565 = vmatpush1.bf16.msra.mxu0 0
  %1566 = vmatprep.subr.bf16.mxu0 0
  %1567 = vmatpush1.bf16.msra.mxu0 0
  %1568 = vmatprep.subr.bf16.mxu0 0
  %1569 = vmatpush1.bf16.msra.mxu0 0
  %1570 = vmatprep.subr.bf16.mxu0 0
  %1571 = vmatpush1.bf16.msra.mxu0 0
  %1572 = vmatprep.subr.bf16.mxu0 0
  %1573 = vmatpush1.bf16.msra.mxu0 0
  %1574 = vmatprep.subr.bf16.mxu0 0
  %1575 = vmatpush1.bf16.msra.mxu0 0
  %1576 = vmatprep.subr.bf16.mxu0 0
  %1577 = vmatpush1.bf16.msra.mxu0 0
  %1578 = vmatprep.subr.bf16.mxu0 0
  %1579 = vmatpush1.bf16.msra.mxu0 0
  %1580 = vmatprep.mubr.bf16.mxu0 0
  %1581 = vmatmul.mubr.bf16.gmra.mrb[0].mxu0 %v1498
  %v1582 = vpop.f32.mrb[0].mxu0
  %v1583 = vadd.f32 0.0, %v1582
  %v1584 = vpop.f32.mrb[0].mxu0
  %v1585 = vpop.f32.mrb[0].mxu0
  %v1586 = vpop.f32.mrb[0].mxu0
  %1587 = vdwg.mxu0
  %v1588 = vadd.f32 %v1480, %v1583
  %s1589 = scalar_lea.vmem %s4, 768
  %v1590 = vld [vmem:[%s1589] sm:$0xf]
  %v1591 = vld [vmem:[%s1589 + $0x4] sm:$0xf]
  %v1592 = vld [vmem:[%s1589 + $0x8] sm:$0xf]
  %v1593 = vld [vmem:[%s1589 + $0xc] sm:$0xf]
  %v1594 = vld [vmem:[%s1589 + $0x10] sm:$0xf]
  %v1595 = vld [vmem:[%s1589 + $0x14] sm:$0xf]
  %v1596 = vld [vmem:[%s1589 + $0x18] sm:$0xf]
  %v1597 = vld [vmem:[%s1589 + $0x1c] sm:$0xf]
  %v1598 = vld [vmem:[%s1589 + $0x20] sm:$0xf]
  %v1599 = vld [vmem:[%s1589 + $0x24] sm:$0xf]
  %v1600 = vld [vmem:[%s1589 + $0x28] sm:$0xf]
  %v1601 = vld [vmem:[%s1589 + $0x2c] sm:$0xf]
  %v1602 = vld [vmem:[%s1589 + $0x30] sm:$0xf]
  %v1603 = vld [vmem:[%s1589 + $0x34] sm:$0xf]
  %v1604 = vld [vmem:[%s1589 + $0x38] sm:$0xf]
  %v1605 = vld [vmem:[%s1589 + $0x3c] sm:$0xf]
  %v1606 = vrot.slane %v297, 4
  %v1624 = vunpack.c.l.b16 %v1590
  %v1625 = vunpack.c.l.b16 %v1591
  %v1626 = vunpack.c.l.b16 %v1592
  %v1627 = vunpack.c.l.b16 %v1593
  %v1628 = vunpack.c.l.b16 %v1594
  %v1629 = vunpack.c.l.b16 %v1595
  %v1630 = vunpack.c.l.b16 %v1596
  %v1631 = vunpack.c.l.b16 %v1597
  %v1632 = vunpack.c.l.b16 %v1598
  %v1633 = vunpack.c.l.b16 %v1599
  %v1634 = vunpack.c.l.b16 %v1600
  %v1635 = vunpack.c.l.b16 %v1601
  %v1636 = vunpack.c.l.b16 %v1602
  %v1637 = vunpack.c.l.b16 %v1603
  %v1638 = vunpack.c.l.b16 %v1604
  %v1639 = vunpack.c.l.b16 %v1605
  %v1640 = vpack.c.b16 %v1625, %v1624
  %v1641 = vpack.c.b16 %v1627, %v1626
  %v1642 = vpack.c.b16 %v1629, %v1628
  %v1643 = vpack.c.b16 %v1631, %v1630
  %v1644 = vpack.c.b16 %v1633, %v1632
  %v1645 = vpack.c.b16 %v1635, %v1634
  %v1646 = vpack.c.b16 %v1637, %v1636
  %v1647 = vpack.c.b16 %v1639, %v1638
  %1656 = vmatprep.subr.bf16.mxu0 0
  %1657 = vmatpush1.bf16.msra.mxu0 %v1640
  %1658 = vmatprep.subr.bf16.mxu0 0
  %1659 = vmatpush1.bf16.msra.mxu0 %v1641
  %1660 = vmatprep.subr.bf16.mxu0 0
  %1661 = vmatpush1.bf16.msra.mxu0 %v1642
  %1662 = vmatprep.subr.bf16.mxu0 0
  %1663 = vmatpush1.bf16.msra.mxu0 %v1643
  %1664 = vmatprep.subr.bf16.mxu0 0
  %1665 = vmatpush1.bf16.msra.mxu0 %v1644
  %1666 = vmatprep.subr.bf16.mxu0 0
  %1667 = vmatpush1.bf16.msra.mxu0 %v1645
  %1668 = vmatprep.subr.bf16.mxu0 0
  %1669 = vmatpush1.bf16.msra.mxu0 %v1646
  %1670 = vmatprep.subr.bf16.mxu0 0
  %1671 = vmatpush1.bf16.msra.mxu0 %v1647
  %1672 = vmatprep.subr.bf16.mxu0 0
  %1673 = vmatpush1.bf16.msra.mxu0 0
  %1674 = vmatprep.subr.bf16.mxu0 0
  %1675 = vmatpush1.bf16.msra.mxu0 0
  %1676 = vmatprep.subr.bf16.mxu0 0
  %1677 = vmatpush1.bf16.msra.mxu0 0
  %1678 = vmatprep.subr.bf16.mxu0 0
  %1679 = vmatpush1.bf16.msra.mxu0 0
  %1680 = vmatprep.subr.bf16.mxu0 0
  %1681 = vmatpush1.bf16.msra.mxu0 0
  %1682 = vmatprep.subr.bf16.mxu0 0
  %1683 = vmatpush1.bf16.msra.mxu0 0
  %1684 = vmatprep.subr.bf16.mxu0 0
  %1685 = vmatpush1.bf16.msra.mxu0 0
  %1686 = vmatprep.subr.bf16.mxu0 0
  %1687 = vmatpush1.bf16.msra.mxu0 0
  %1688 = vmatprep.mubr.bf16.mxu0 0
  %1689 = vmatmul.mubr.bf16.gmra.mrb[0].mxu0 %v1606
  %v1690 = vpop.f32.mrb[0].mxu0
  %v1691 = vadd.f32 0.0, %v1690
  %v1692 = vpop.f32.mrb[0].mxu0
  %v1693 = vpop.f32.mrb[0].mxu0
  %v1694 = vpop.f32.mrb[0].mxu0
  %1695 = vdwg.mxu0
  %v1696 = vadd.f32 %v1588, %v1691
  %s1697 = scalar_lea.vmem %s4, 832
  %v1698 = vld [vmem:[%s1697] sm:$0xf]
  %v1699 = vld [vmem:[%s1697 + $0x4] sm:$0xf]
  %v1700 = vld [vmem:[%s1697 + $0x8] sm:$0xf]
  %v1701 = vld [vmem:[%s1697 + $0xc] sm:$0xf]
  %v1702 = vld [vmem:[%s1697 + $0x10] sm:$0xf]
  %v1703 = vld [vmem:[%s1697 + $0x14] sm:$0xf]
  %v1704 = vld [vmem:[%s1697 + $0x18] sm:$0xf]
  %v1705 = vld [vmem:[%s1697 + $0x1c] sm:$0xf]
  %v1706 = vld [vmem:[%s1697 + $0x20] sm:$0xf]
  %v1707 = vld [vmem:[%s1697 + $0x24] sm:$0xf]
  %v1708 = vld [vmem:[%s1697 + $0x28] sm:$0xf]
  %v1709 = vld [vmem:[%s1697 + $0x2c] sm:$0xf]
  %v1710 = vld [vmem:[%s1697 + $0x30] sm:$0xf]
  %v1711 = vld [vmem:[%s1697 + $0x34] sm:$0xf]
  %v1712 = vld [vmem:[%s1697 + $0x38] sm:$0xf]
  %v1713 = vld [vmem:[%s1697 + $0x3c] sm:$0xf]
  %v1714 = vrot.slane %v297, 5
  %v1732 = vunpack.c.l.b16 %v1698
  %v1733 = vunpack.c.l.b16 %v1699
  %v1734 = vunpack.c.l.b16 %v1700
  %v1735 = vunpack.c.l.b16 %v1701
  %v1736 = vunpack.c.l.b16 %v1702
  %v1737 = vunpack.c.l.b16 %v1703
  %v1738 = vunpack.c.l.b16 %v1704
  %v1739 = vunpack.c.l.b16 %v1705
  %v1740 = vunpack.c.l.b16 %v1706
  %v1741 = vunpack.c.l.b16 %v1707
  %v1742 = vunpack.c.l.b16 %v1708
  %v1743 = vunpack.c.l.b16 %v1709
  %v1744 = vunpack.c.l.b16 %v1710
  %v1745 = vunpack.c.l.b16 %v1711
  %v1746 = vunpack.c.l.b16 %v1712
  %v1747 = vunpack.c.l.b16 %v1713
  %v1748 = vpack.c.b16 %v1733, %v1732
  %v1749 = vpack.c.b16 %v1735, %v1734
  %v1750 = vpack.c.b16 %v1737, %v1736
  %v1751 = vpack.c.b16 %v1739, %v1738
  %v1752 = vpack.c.b16 %v1741, %v1740
  %v1753 = vpack.c.b16 %v1743, %v1742
  %v1754 = vpack.c.b16 %v1745, %v1744
  %v1755 = vpack.c.b16 %v1747, %v1746
  %1764 = vmatprep.subr.bf16.mxu0 0
  %1765 = vmatpush1.bf16.msra.mxu0 %v1748
  %1766 = vmatprep.subr.bf16.mxu0 0
  %1767 = vmatpush1.bf16.msra.mxu0 %v1749
  %1768 = vmatprep.subr.bf16.mxu0 0
  %1769 = vmatpush1.bf16.msra.mxu0 %v1750
  %1770 = vmatprep.subr.bf16.mxu0 0
  %1771 = vmatpush1.bf16.msra.mxu0 %v1751
  %1772 = vmatprep.subr.bf16.mxu0 0
  %1773 = vmatpush1.bf16.msra.mxu0 %v1752
  %1774 = vmatprep.subr.bf16.mxu0 0
  %1775 = vmatpush1.bf16.msra.mxu0 %v1753
  %1776 = vmatprep.subr.bf16.mxu0 0
  %1777 = vmatpush1.bf16.msra.mxu0 %v1754
  %1778 = vmatprep.subr.bf16.mxu0 0
  %1779 = vmatpush1.bf16.msra.mxu0 %v1755
  %1780 = vmatprep.subr.bf16.mxu0 0
  %1781 = vmatpush1.bf16.msra.mxu0 0
  %1782 = vmatprep.subr.bf16.mxu0 0
  %1783 = vmatpush1.bf16.msra.mxu0 0
  %1784 = vmatprep.subr.bf16.mxu0 0
  %1785 = vmatpush1.bf16.msra.mxu0 0
  %1786 = vmatprep.subr.bf16.mxu0 0
  %1787 = vmatpush1.bf16.msra.mxu0 0
  %1788 = vmatprep.subr.bf16.mxu0 0
  %1789 = vmatpush1.bf16.msra.mxu0 0
  %1790 = vmatprep.subr.bf16.mxu0 0
  %1791 = vmatpush1.bf16.msra.mxu0 0
  %1792 = vmatprep.subr.bf16.mxu0 0
  %1793 = vmatpush1.bf16.msra.mxu0 0
  %1794 = vmatprep.subr.bf16.mxu0 0
  %1795 = vmatpush1.bf16.msra.mxu0 0
  %1796 = vmatprep.mubr.bf16.mxu0 0
  %1797 = vmatmul.mubr.bf16.gmra.mrb[0].mxu0 %v1714
  %v1798 = vpop.f32.mrb[0].mxu0
  %v1799 = vadd.f32 0.0, %v1798
  %v1800 = vpop.f32.mrb[0].mxu0
  %v1801 = vpop.f32.mrb[0].mxu0
  %v1802 = vpop.f32.mrb[0].mxu0
  %1803 = vdwg.mxu0
  %v1804 = vadd.f32 %v1696, %v1799
  %s1805 = scalar_lea.vmem %s4, 896
  %v1806 = vld [vmem:[%s1805] sm:$0xf]
  %v1807 = vld [vmem:[%s1805 + $0x4] sm:$0xf]
  %v1808 = vld [vmem:[%s1805 + $0x8] sm:$0xf]
  %v1809 = vld [vmem:[%s1805 + $0xc] sm:$0xf]
  %v1810 = vld [vmem:[%s1805 + $0x10] sm:$0xf]
  %v1811 = vld [vmem:[%s1805 + $0x14] sm:$0xf]
  %v1812 = vld [vmem:[%s1805 + $0x18] sm:$0xf]
  %v1813 = vld [vmem:[%s1805 + $0x1c] sm:$0xf]
  %v1814 = vld [vmem:[%s1805 + $0x20] sm:$0xf]
  %v1815 = vld [vmem:[%s1805 + $0x24] sm:$0xf]
  %v1816 = vld [vmem:[%s1805 + $0x28] sm:$0xf]
  %v1817 = vld [vmem:[%s1805 + $0x2c] sm:$0xf]
  %v1818 = vld [vmem:[%s1805 + $0x30] sm:$0xf]
  %v1819 = vld [vmem:[%s1805 + $0x34] sm:$0xf]
  %v1820 = vld [vmem:[%s1805 + $0x38] sm:$0xf]
  %v1821 = vld [vmem:[%s1805 + $0x3c] sm:$0xf]
  %v1822 = vrot.slane %v297, 6
  %v1840 = vunpack.c.l.b16 %v1806
  %v1841 = vunpack.c.l.b16 %v1807
  %v1842 = vunpack.c.l.b16 %v1808
  %v1843 = vunpack.c.l.b16 %v1809
  %v1844 = vunpack.c.l.b16 %v1810
  %v1845 = vunpack.c.l.b16 %v1811
  %v1846 = vunpack.c.l.b16 %v1812
  %v1847 = vunpack.c.l.b16 %v1813
  %v1848 = vunpack.c.l.b16 %v1814
  %v1849 = vunpack.c.l.b16 %v1815
  %v1850 = vunpack.c.l.b16 %v1816
  %v1851 = vunpack.c.l.b16 %v1817
  %v1852 = vunpack.c.l.b16 %v1818
  %v1853 = vunpack.c.l.b16 %v1819
  %v1854 = vunpack.c.l.b16 %v1820
  %v1855 = vunpack.c.l.b16 %v1821
  %v1856 = vpack.c.b16 %v1841, %v1840
  %v1857 = vpack.c.b16 %v1843, %v1842
  %v1858 = vpack.c.b16 %v1845, %v1844
  %v1859 = vpack.c.b16 %v1847, %v1846
  %v1860 = vpack.c.b16 %v1849, %v1848
  %v1861 = vpack.c.b16 %v1851, %v1850
  %v1862 = vpack.c.b16 %v1853, %v1852
  %v1863 = vpack.c.b16 %v1855, %v1854
  %1872 = vmatprep.subr.bf16.mxu0 0
  %1873 = vmatpush1.bf16.msra.mxu0 %v1856
  %1874 = vmatprep.subr.bf16.mxu0 0
  %1875 = vmatpush1.bf16.msra.mxu0 %v1857
  %1876 = vmatprep.subr.bf16.mxu0 0
  %1877 = vmatpush1.bf16.msra.mxu0 %v1858
  %1878 = vmatprep.subr.bf16.mxu0 0
  %1879 = vmatpush1.bf16.msra.mxu0 %v1859
  %1880 = vmatprep.subr.bf16.mxu0 0
  %1881 = vmatpush1.bf16.msra.mxu0 %v1860
  %1882 = vmatprep.subr.bf16.mxu0 0
  %1883 = vmatpush1.bf16.msra.mxu0 %v1861
  %1884 = vmatprep.subr.bf16.mxu0 0
  %1885 = vmatpush1.bf16.msra.mxu0 %v1862
  %1886 = vmatprep.subr.bf16.mxu0 0
  %1887 = vmatpush1.bf16.msra.mxu0 %v1863
  %1888 = vmatprep.subr.bf16.mxu0 0
  %1889 = vmatpush1.bf16.msra.mxu0 0
  %1890 = vmatprep.subr.bf16.mxu0 0
  %1891 = vmatpush1.bf16.msra.mxu0 0
  %1892 = vmatprep.subr.bf16.mxu0 0
  %1893 = vmatpush1.bf16.msra.mxu0 0
  %1894 = vmatprep.subr.bf16.mxu0 0
  %1895 = vmatpush1.bf16.msra.mxu0 0
  %1896 = vmatprep.subr.bf16.mxu0 0
  %1897 = vmatpush1.bf16.msra.mxu0 0
  %1898 = vmatprep.subr.bf16.mxu0 0
  %1899 = vmatpush1.bf16.msra.mxu0 0
  %1900 = vmatprep.subr.bf16.mxu0 0
  %1901 = vmatpush1.bf16.msra.mxu0 0
  %1902 = vmatprep.subr.bf16.mxu0 0
  %1903 = vmatpush1.bf16.msra.mxu0 0
  %1904 = vmatprep.mubr.bf16.mxu0 0
  %1905 = vmatmul.mubr.bf16.gmra.mrb[0].mxu0 %v1822
  %v1906 = vpop.f32.mrb[0].mxu0
  %v1907 = vadd.f32 0.0, %v1906
  %v1908 = vpop.f32.mrb[0].mxu0
  %v1909 = vpop.f32.mrb[0].mxu0
  %v1910 = vpop.f32.mrb[0].mxu0
  %1911 = vdwg.mxu0
  %v1912 = vadd.f32 %v1804, %v1907
  %s1913 = scalar_lea.vmem %s4, 960
  %v1914 = vld [vmem:[%s1913] sm:$0xf]
  %v1915 = vld [vmem:[%s1913 + $0x4] sm:$0xf]
  %v1916 = vld [vmem:[%s1913 + $0x8] sm:$0xf]
  %v1917 = vld [vmem:[%s1913 + $0xc] sm:$0xf]
  %v1918 = vld [vmem:[%s1913 + $0x10] sm:$0xf]
  %v1919 = vld [vmem:[%s1913 + $0x14] sm:$0xf]
  %v1920 = vld [vmem:[%s1913 + $0x18] sm:$0xf]
  %v1921 = vld [vmem:[%s1913 + $0x1c] sm:$0xf]
  %v1922 = vld [vmem:[%s1913 + $0x20] sm:$0xf]
  %v1923 = vld [vmem:[%s1913 + $0x24] sm:$0xf]
  %v1924 = vld [vmem:[%s1913 + $0x28] sm:$0xf]
  %v1925 = vld [vmem:[%s1913 + $0x2c] sm:$0xf]
  %v1926 = vld [vmem:[%s1913 + $0x30] sm:$0xf]
  %v1927 = vld [vmem:[%s1913 + $0x34] sm:$0xf]
  %v1928 = vld [vmem:[%s1913 + $0x38] sm:$0xf]
  %v1929 = vld [vmem:[%s1913 + $0x3c] sm:$0xf]
  %v1930 = vrot.slane %v297, 7
  %v1948 = vunpack.c.l.b16 %v1914
  %v1949 = vunpack.c.l.b16 %v1915
  %v1950 = vunpack.c.l.b16 %v1916
  %v1951 = vunpack.c.l.b16 %v1917
  %v1952 = vunpack.c.l.b16 %v1918
  %v1953 = vunpack.c.l.b16 %v1919
  %v1954 = vunpack.c.l.b16 %v1920
  %v1955 = vunpack.c.l.b16 %v1921
  %v1956 = vunpack.c.l.b16 %v1922
  %v1957 = vunpack.c.l.b16 %v1923
  %v1958 = vunpack.c.l.b16 %v1924
  %v1959 = vunpack.c.l.b16 %v1925
  %v1960 = vunpack.c.l.b16 %v1926
  %v1961 = vunpack.c.l.b16 %v1927
  %v1962 = vunpack.c.l.b16 %v1928
  %v1963 = vunpack.c.l.b16 %v1929
  %v1964 = vpack.c.b16 %v1949, %v1948
  %v1965 = vpack.c.b16 %v1951, %v1950
  %v1966 = vpack.c.b16 %v1953, %v1952
  %v1967 = vpack.c.b16 %v1955, %v1954
  %v1968 = vpack.c.b16 %v1957, %v1956
  %v1969 = vpack.c.b16 %v1959, %v1958
  %v1970 = vpack.c.b16 %v1961, %v1960
  %v1971 = vpack.c.b16 %v1963, %v1962
  %1980 = vmatprep.subr.bf16.mxu0 0
  %1981 = vmatpush1.bf16.msra.mxu0 %v1964
  %1982 = vmatprep.subr.bf16.mxu0 0
  %1983 = vmatpush1.bf16.msra.mxu0 %v1965
  %1984 = vmatprep.subr.bf16.mxu0 0
  %1985 = vmatpush1.bf16.msra.mxu0 %v1966
  %1986 = vmatprep.subr.bf16.mxu0 0
  %1987 = vmatpush1.bf16.msra.mxu0 %v1967
  %1988 = vmatprep.subr.bf16.mxu0 0
  %1989 = vmatpush1.bf16.msra.mxu0 %v1968
  %1990 = vmatprep.subr.bf16.mxu0 0
  %1991 = vmatpush1.bf16.msra.mxu0 %v1969
  %1992 = vmatprep.subr.bf16.mxu0 0
  %1993 = vmatpush1.bf16.msra.mxu0 %v1970
  %1994 = vmatprep.subr.bf16.mxu0 0
  %1995 = vmatpush1.bf16.msra.mxu0 %v1971
  %1996 = vmatprep.subr.bf16.mxu0 0
  %1997 = vmatpush1.bf16.msra.mxu0 0
  %1998 = vmatprep.subr.bf16.mxu0 0
  %1999 = vmatpush1.bf16.msra.mxu0 0
  %2000 = vmatprep.subr.bf16.mxu0 0
  %2001 = vmatpush1.bf16.msra.mxu0 0
  %2002 = vmatprep.subr.bf16.mxu0 0
  %2003 = vmatpush1.bf16.msra.mxu0 0
  %2004 = vmatprep.subr.bf16.mxu0 0
  %2005 = vmatpush1.bf16.msra.mxu0 0
  %2006 = vmatprep.subr.bf16.mxu0 0
  %2007 = vmatpush1.bf16.msra.mxu0 0
  %2008 = vmatprep.subr.bf16.mxu0 0
  %2009 = vmatpush1.bf16.msra.mxu0 0
  %2010 = vmatprep.subr.bf16.mxu0 0
  %2011 = vmatpush1.bf16.msra.mxu0 0
  %2012 = vmatprep.mubr.bf16.mxu0 0
  %2013 = vmatmul.mubr.bf16.gmra.mrb[0].mxu0 %v1930
  %v2014 = vpop.f32.mrb[0].mxu0
  %v2015 = vadd.f32 0.0, %v2014
  %v2016 = vpop.f32.mrb[0].mxu0
  %v2017 = vpop.f32.mrb[0].mxu0
  %v2018 = vpop.f32.mrb[0].mxu0
  %2019 = vdwg.mxu0
  %v2020 = vadd.f32 %v1912, %v2015
  %v2021 = vld [vmem:[%s5] sm:$0x1]
  %v2023 = vlaneseq
  %v2024 = vshrl.u32 %v2023, 7
  %v2025 = vsub.s32 0, %v2024
  %v2026 = vrot.slane %v2021, %v2025
  %v2028 = vadd.f32 %v2020, %v2026
  %v2029 = vxor.u32 %v2028, 2147483648
  %v2030 = vmul.f32 %v2029, 1.442695
  %v2031 = vpow.pop %v2030
  %v2032 = vadd.f32 %v2031, 1.0
  %v2033 = vrcp.pop %v2032
  %v2034 = vmul.f32 1.0, %v2033
  %2035 = vst [vmem:[%s6] sm:$0x3] %v2034
  // Predicated region
  $region26: #{discriminator_forward.7} parent=0 // pred_check
    _
  $region27: #{discriminator_forward.7} parent=0 // pred_check_branch
    %2037 = sbr.rel (0) target = $region29
  $region28: #{discriminator_forward.7} parent=0 // pred_region
    _
  $region29: #{discriminator_forward.7} parent=0 // pred_fallthru
    _
  // Predicated region
  $region30: #{discriminator_forward.7} parent=0 // pred_check
    _
  $region31: #{discriminator_forward.7} parent=0 // pred_check_branch
    %2039 = sbr.rel (0) target = $region33
  $region32: #{discriminator_forward.7} parent=0 // pred_region
    _
  $region33: #{discriminator_forward.7} parent=0 // pred_fallthru
    _

</llo_original>
